<compile_context>
chip_gen: v5e
topology: v5e:2x2
jax: 0.10.0
libtpu: 0.0.40
codegen_flags: <defaults>
</compile_context>

<pallas_src>
import functools

import jax
import jax.numpy as jnp
from jax.experimental import pallas as pl
from jax.experimental.pallas import tpu as pltpu

_VMEM_LIMIT = 48 * 1024 * 1024   # generous headroom even under v7x's 64 MiB


# ----------------------------------------------------------------------------
# Tile selection (full K, wide N, >=2 grid blocks when possible for v7x)
# ----------------------------------------------------------------------------
def _pick_tm(m):
    tm = m
    while tm > 256 and tm % 2 == 0 and (tm // 2) % 8 == 0:
        tm //= 2
    if tm == m and m % 2 == 0 and (m // 2) % 8 == 0:
        tm = m // 2            # split rows so v7x's two TCs both get a block
    return tm


def _pick_tn(n):
    tn = n
    while tn > 1024 and tn % 2 == 0:
        tn //= 2
    return tn


# ----------------------------------------------------------------------------
# Fused conv-as-matmul kernel:  out = act(A @ W' + shift [+ residual])
# (W' has the BN scale folded in; shift is the BN shift.)  Single K step ->
# no accumulator scratch, no init/finalize phases.
# ----------------------------------------------------------------------------
def _fused_matmul_kernel(a_ref, b_ref, shift_ref, *rest, relu, has_res):
    if has_res:
        res_ref, o_ref = rest
    else:
        (o_ref,) = rest
    y = jnp.dot(a_ref[...], b_ref[...], preferred_element_type=jnp.float32)
    y = y + shift_ref[...]                              # BN shift (1, tn)
    if has_res:
        y = y + res_ref[...].astype(jnp.float32)        # fused residual add
    if relu:
        y = jnp.maximum(y, 0.0)
    o_ref[...] = y.astype(o_ref.dtype)                  # f32 epilogue, cast out


def fused_matmul(a, w, shift, *, residual=None, relu=True,
                 out_dtype=jnp.bfloat16):
    """A:(M,K) @ W:(K,N) + shift(1,N) [+ residual(M,N)] -> act -> (M,N)."""
    M, K = a.shape
    K2, N = w.shape
    assert K == K2 and shift.shape == (1, N)
    assert M % 8 == 0 and N % 128 == 0
    # Full-K tiles: max K in this net is 1152 (3x3x128) -> a (tm,K) + (K,tn)
    # pair is << 1 MiB, easily double-buffered in VMEM on every generation.
    tm = _pick_tm(M)
    tn = _pick_tn(N)
    grid = (M // tm, N // tn)

    has_res = residual is not None
    inputs = [a, w, shift]
    in_specs = [
        pl.BlockSpec((tm, K), lambda i, j: (i, 0)),
        pl.BlockSpec((K, tn), lambda i, j: (0, j)),
        pl.BlockSpec((1, tn), lambda i, j: (0, j)),
    ]
    if has_res:
        inputs.append(residual)
        in_specs.append(pl.BlockSpec((tm, tn), lambda i, j: (i, j)))

    flops = 2 * M * N * K
    bytes_accessed = 2 * (M * K + K * N + (2 if has_res else 1) * M * N) + 4 * N

    return pl.pallas_call(
        functools.partial(_fused_matmul_kernel, relu=relu, has_res=has_res),
        out_shape=jax.ShapeDtypeStruct((M, N), out_dtype),
        grid=grid,
        in_specs=in_specs,
        out_specs=pl.BlockSpec((tm, tn), lambda i, j: (i, j)),
        compiler_params=pltpu.CompilerParams(
            dimension_semantics=("parallel", "parallel"),
            vmem_limit_bytes=_VMEM_LIMIT),
        cost_estimate=pl.CostEstimate(flops=flops, transcendentals=0,
                                      bytes_accessed=bytes_accessed),
    )(*inputs)


# ----------------------------------------------------------------------------
# Maxpool 3x3 / stride 2 / pad 1 — single pallas_call, no tap slab in HBM.
# The padded map is presented as (N, Hp, Wp, 1, C): H and W are untiled
# leading dims, so all slices/reshapes below are layout-free.
# ----------------------------------------------------------------------------
def _maxpool3x3s2_kernel(x_ref, o_ref, *, ho, wo):
    x = x_ref[...]                                   # (2*ho+2, 2*wo+2, 1, C)
    c = x.shape[-1]
    xh = x.reshape(ho + 1, 2, 2 * wo + 2, 1, c)      # split rows -> even/odd
    he, hod = xh[:, 0], xh[:, 1]
    hm = jnp.maximum(jnp.maximum(he[:ho], hod[:ho]), he[1:ho + 1])
    xw = hm.reshape(ho, wo + 1, 2, 1, c)             # split cols -> even/odd
    we, wod = xw[:, :, 0], xw[:, :, 1]
    o_ref[...] = jnp.maximum(jnp.maximum(we[:, :wo], wod[:, :wo]),
                             we[:, 1:wo + 1])


def maxpool3x3s2(x_nhwc):
    n, h, w, c = x_nhwc.shape
    ho, wo = h // 2, w // 2
    neg = jnp.finfo(x_nhwc.dtype).min
    xp = jnp.pad(x_nhwc.reshape(n, h, w, 1, c),
                 ((0, 0), (1, 1), (1, 1), (0, 0), (0, 0)),
                 constant_values=neg)
    out = pl.pallas_call(
        functools.partial(_maxpool3x3s2_kernel, ho=ho, wo=wo),
        out_shape=jax.ShapeDtypeStruct((n, ho, wo, 1, c), x_nhwc.dtype),
        grid=(n,),
        in_specs=[pl.BlockSpec((None, h + 2, w + 2, 1, c),
                               lambda b: (b, 0, 0, 0, 0))],
        out_specs=pl.BlockSpec((None, ho, wo, 1, c),
                               lambda b: (b, 0, 0, 0, 0)),
        compiler_params=pltpu.CompilerParams(
            dimension_semantics=("parallel",),
            vmem_limit_bytes=_VMEM_LIMIT),
    )(xp)
    return out.reshape(n, ho, wo, c)


# ----------------------------------------------------------------------------
# Conv glue (layout plumbing; all hot compute in the fused Pallas matmul)
# ----------------------------------------------------------------------------
def _im2col(x_nhwc, kh, kw, stride, pad):
    # TODO(synk): kxk (k>1) convs still build an im2col slab in HBM; an
    # in-kernel tap accumulation would remove the kh*kw read amplification.
    n, h, w, c = x_nhwc.shape
    xp = jnp.pad(x_nhwc, ((0, 0), (pad, pad), (pad, pad), (0, 0)))
    ho = (h + 2 * pad - kh) // stride + 1
    wo = (w + 2 * pad - kw) // stride + 1
    cols = []
    for ky in range(kh):
        for kx in range(kw):
            cols.append(xp[:, ky:ky + stride * ho:stride,
                           kx:kx + stride * wo:stride, :])
    cols = jnp.stack(cols, axis=3)                      # (n, ho, wo, kh*kw, c)
    return cols.reshape(n * ho * wo, kh * kw * c), (n, ho, wo)


def conv_bn_act(x_nhwc, layer, *, kh, kw, stride=1, pad=0, relu=True,
                residual=None, out_dtype=jnp.bfloat16):
    """Conv2d (no bias) + folded inference-BN + optional residual + ReLU."""
    wt, shift = layer["w"], layer["shift"]
    cout = wt.shape[1]
    cin = x_nhwc.shape[-1]
    if kh == 1 and kw == 1:
        if stride > 1:
            # TODO(synk): small host-side strided gather; could be folded into
            # the matmul A-block DMA.
            x_nhwc = x_nhwc[:, ::stride, ::stride, :]
        n, ho, wo, _ = x_nhwc.shape
        a = x_nhwc.reshape(n * ho * wo, cin)
    else:
        a, (n, ho, wo) = _im2col(x_nhwc, kh, kw, stride, pad)
        k_pad = wt.shape[0] - a.shape[1]                # stem: 147 -> 256
        if k_pad:
            a = jnp.pad(a, ((0, 0), (0, k_pad)))
    res = None if residual is None else residual.reshape(n * ho * wo, cout)
    out = fused_matmul(a, wt, shift, residual=res, relu=relu,
                       out_dtype=out_dtype)
    return out.reshape(n, ho, wo, cout)


# ----------------------------------------------------------------------------
# Parameters: deterministic synthetic init + one-time prep (BN fold, reshape,
# bf16 cast, K padding) hoisted out of the jitted forward.
# ----------------------------------------------------------------------------
def _init_conv(key, kh, kw, cin, cout):
    fan_in = kh * kw * cin
    return jax.random.normal(key, (kh, kw, cin, cout), jnp.float32) * \
        (2.0 / fan_in) ** 0.5


def _init_bn(key, c):
    k1, k2 = jax.random.split(key)
    scale = 1.0 + 0.1 * jax.random.normal(k1, (1, c), jnp.float32)
    shift = 0.1 * jax.random.normal(k2, (1, c), jnp.float32)
    return scale, shift


def _prep_conv(w, bn_scale, bn_shift, k_pad_to=None):
    kh, kw, cin, cout = w.shape
    k = kh * kw * cin
    w2 = w.reshape(k, cout) * bn_scale                  # fold BN scale into W
    if k_pad_to is not None and k_pad_to > k:
        w2 = jnp.pad(w2, ((0, k_pad_to - k), (0, 0)))
    return {"w": w2.astype(jnp.bfloat16), "shift": bn_shift.astype(jnp.float32)}


def make_bottleneck_params(key, cin, cmid, cout):
    ks = jax.random.split(key, 8)
    return {
        "c1": _prep_conv(_init_conv(ks[0], 1, 1, cin, cmid), *_init_bn(ks[1], cmid)),
        "c2": _prep_conv(_init_conv(ks[2], 3, 3, cmid, cmid), *_init_bn(ks[3], cmid)),
        "c3": _prep_conv(_init_conv(ks[4], 1, 1, cmid, cout), *_init_bn(ks[5], cout)),
        "cd": _prep_conv(_init_conv(ks[6], 1, 1, cin, cout), *_init_bn(ks[7], cout)),
    }


def make_encoder_params(key):
    ks = jax.random.split(key, 4)
    return {
        "stem": _prep_conv(_init_conv(ks[0], 7, 7, 3, 128),
                           *_init_bn(ks[1], 128), k_pad_to=256),
        "block1": make_bottleneck_params(ks[2], 128, 128, 256),
        "block2": make_bottleneck_params(ks[3], 256, 128, 2048),
    }


# ----------------------------------------------------------------------------
# Encoder forward (mirrors Encoder.forward)
# ----------------------------------------------------------------------------
def bottleneck(x, p, stride, out_dtype=jnp.bfloat16):
    y = conv_bn_act(x, p["c1"], kh=1, kw=1, relu=True)
    y = conv_bn_act(y, p["c2"], kh=3, kw=3, stride=stride, pad=1, relu=True)
    s = conv_bn_act(x, p["cd"], kh=1, kw=1, stride=stride, relu=False)
    # BN3 + residual add + ReLU fused into the third conv's epilogue.
    return conv_bn_act(y, p["c3"], kh=1, kw=1, relu=True, residual=s,
                       out_dtype=out_dtype)


def encoder_forward(img_nchw, params):
    # PyTorch conv input is NCHW -> convert to NHWC (bf16 storage) for kernels.
    x = jnp.transpose(img_nchw, (0, 2, 3, 1)).astype(jnp.bfloat16)
    x = conv_bn_act(x, params["stem"], kh=7, kw=7, stride=2, pad=3, relu=True)
    x = maxpool3x3s2(x)                                 # maxpool 3x3 / 2
    x = bottleneck(x, params["block1"], stride=1)
    x = bottleneck(x, params["block2"], stride=2,
                   out_dtype=jnp.float32)               # -> 2048 channels, f32
    n, h, w, c = x.shape
    # == feats.permute(0, 2, 3, 1).contiguous().view(N, H*W, C)
    return x.reshape(n, h * w, c)


if __name__ == "__main__":
    key = jax.random.PRNGKey(0)
    k_params, k_img = jax.random.split(key)
    params = make_encoder_params(k_params)              # one-time prep, not jitted
    img = jax.random.normal(k_img, (2, 3, 32, 32), jnp.float32)   # NCHW

    feats = jax.jit(encoder_forward)(img, params)
    feats = jax.block_until_ready(feats)

    assert feats.shape == (2, 16, 2048), feats.shape
    assert feats.dtype == jnp.float32
    assert bool(jnp.all(jnp.isfinite(feats)))
    print("KERNEL_OK")
</pallas_src>

<mosaic_0001>
module attributes {stable_mosaic.version = 11 : i64} {
  func.func @_fused_matmul_kernel(%arg0: i32, %arg1: i32, %arg2: memref<256x256xbf16, #tpu.memory_space<vmem>>, %arg3: memref<256x128xbf16, #tpu.memory_space<vmem>>, %arg4: memref<1x128xf32, #tpu.memory_space<vmem>>, %arg5: memref<256x128xbf16, #tpu.memory_space<vmem>>) attributes {dimension_semantics = [#tpu.dimension_semantics<parallel>, #tpu.dimension_semantics<parallel>], iteration_bounds = array<i64: 2, 1>, scalar_prefetch = 0 : i64, scratch_operands = 0 : i64, tpu.core_type = #tpu.core_type<tc>, window_params = [{transform_indices = @transform_0, window_bounds = array<i64: 256, 256>}, {transform_indices = @transform_1, window_bounds = array<i64: 256, 128>}, {transform_indices = @transform_2, window_bounds = array<i64: 1, 128>}, {transform_indices = @transform_3, window_bounds = array<i64: 256, 128>}]} {
    %c0 = arith.constant 0 : index
    %c0_0 = arith.constant 0 : index
    %0 = vector.load %arg2[%c0, %c0_0] : memref<256x256xbf16, #tpu.memory_space<vmem>>, vector<256x256xbf16>
    %c0_1 = arith.constant 0 : index
    %c0_2 = arith.constant 0 : index
    %1 = vector.load %arg3[%c0_1, %c0_2] : memref<256x128xbf16, #tpu.memory_space<vmem>>, vector<256x128xbf16>
    %cst = arith.constant dense<0.000000e+00> : vector<256x128xf32>
    %2 = tpu.matmul %0, %1, %cst {dimension_numbers = #tpu.dot_dimension_numbers<[1], [0], [0], [1], [0, 0, 1, 1], [], []>} : vector<256x256xbf16>, vector<256x128xbf16>, vector<256x128xf32> -> vector<256x128xf32>
    %c0_3 = arith.constant 0 : index
    %c0_4 = arith.constant 0 : index
    %3 = vector.load %arg4[%c0_3, %c0_4] : memref<1x128xf32, #tpu.memory_space<vmem>>, vector<1x128xf32>
    %4 = vector.broadcast %3 : vector<1x128xf32> to vector<256x128xf32>
    %5 = arith.addf %2, %4 : vector<256x128xf32>
    %cst_5 = arith.constant 0.000000e+00 : f32
    %6 = vector.broadcast %cst_5 : f32 to vector<256x128xf32>
    %7 = arith.maximumf %5, %6 : vector<256x128xf32>
    %8 = arith.truncf %7 : vector<256x128xf32> to vector<256x128xbf16>
    %c0_6 = arith.constant 0 : index
    %c0_7 = arith.constant 0 : index
    %9 = vector.load %arg5[%c0_6, %c0_7] : memref<256x128xbf16, #tpu.memory_space<vmem>>, vector<256x128xbf16>
    tpu.vector_store %arg5[%c0_6, %c0_7], %8 {strides = array<i32>} : memref<256x128xbf16, #tpu.memory_space<vmem>>, vector<256x128xbf16>,
    return
  }
  func.func @transform_0(%arg0: i32, %arg1: i32) -> (i32, i32) {
    %c0_i32 = arith.constant 0 : i32
    %c0_i32_0 = arith.constant 0 : i32
    return %arg0, %c0_i32 : i32, i32
  }
  func.func @transform_1(%arg0: i32, %arg1: i32) -> (i32, i32) {
    %c0_i32 = arith.constant 0 : i32
    %c0_i32_0 = arith.constant 0 : i32
    return %c0_i32, %arg1 : i32, i32
  }
  func.func @transform_2(%arg0: i32, %arg1: i32) -> (i32, i32) {
    %c0_i32 = arith.constant 0 : i32
    %c0_i32_0 = arith.constant 0 : i32
    return %c0_i32, %arg1 : i32, i32
  }
  func.func @transform_3(%arg0: i32, %arg1: i32) -> (i32, i32) {
    %c0_i32 = arith.constant 0 : i32
    return %arg0, %arg1 : i32, i32
  }
}

module attributes {stable_mosaic.version = 11 : i64} {
  func.func @_maxpool3x3s2_kernel(%arg0: i32, %arg1: memref<1x18x18x1x128xbf16, #tpu.memory_space<vmem>>, %arg2: memref<1x8x8x1x128xbf16, #tpu.memory_space<vmem>>) attributes {dimension_semantics = [#tpu.dimension_semantics<parallel>], iteration_bounds = array<i64: 2>, scalar_prefetch = 0 : i64, scratch_operands = 0 : i64, tpu.core_type = #tpu.core_type<tc>, window_params = [{transform_indices = @transform_0, window_bounds = array<i64: 1, 18, 18, 1, 128>}, {transform_indices = @transform_1, window_bounds = array<i64: 1, 8, 8, 1, 128>}]} {
    %c0 = arith.constant 0 : index
    %c0_0 = arith.constant 0 : index
    %c0_1 = arith.constant 0 : index
    %c0_2 = arith.constant 0 : index
    %c0_3 = arith.constant 0 : index
    %0 = vector.load %arg1[%c0, %c0_0, %c0_1, %c0_2, %c0_3] : memref<1x18x18x1x128xbf16, #tpu.memory_space<vmem>>, vector<1x18x18x1x128xbf16>
    %1 = vector.shape_cast %0 : vector<1x18x18x1x128xbf16> to vector<18x18x1x128xbf16>
    %2 = vector.shape_cast %1 : vector<18x18x1x128xbf16> to vector<9x2x18x1x128xbf16>
    %3 = vector.extract_strided_slice %2 {offsets = [0, 0, 0, 0, 0], sizes = [9, 1, 18, 1, 128], strides = [1, 1, 1, 1, 1]} : vector<9x2x18x1x128xbf16> to vector<9x1x18x1x128xbf16>
    %4 = vector.shape_cast %3 : vector<9x1x18x1x128xbf16> to vector<9x18x1x128xbf16>
    %5 = vector.extract_strided_slice %2 {offsets = [0, 1, 0, 0, 0], sizes = [9, 1, 18, 1, 128], strides = [1, 1, 1, 1, 1]} : vector<9x2x18x1x128xbf16> to vector<9x1x18x1x128xbf16>
    %6 = vector.shape_cast %5 : vector<9x1x18x1x128xbf16> to vector<9x18x1x128xbf16>
    %7 = vector.extract_strided_slice %4 {offsets = [0, 0, 0, 0], sizes = [8, 18, 1, 128], strides = [1, 1, 1, 1]} : vector<9x18x1x128xbf16> to vector<8x18x1x128xbf16>
    %8 = vector.extract_strided_slice %6 {offsets = [0, 0, 0, 0], sizes = [8, 18, 1, 128], strides = [1, 1, 1, 1]} : vector<9x18x1x128xbf16> to vector<8x18x1x128xbf16>
    %9 = arith.maximumf %7, %8 : vector<8x18x1x128xbf16>
    %10 = vector.extract_strided_slice %4 {offsets = [1, 0, 0, 0], sizes = [8, 18, 1, 128], strides = [1, 1, 1, 1]} : vector<9x18x1x128xbf16> to vector<8x18x1x128xbf16>
    %11 = arith.maximumf %9, %10 : vector<8x18x1x128xbf16>
    %12 = vector.shape_cast %11 : vector<8x18x1x128xbf16> to vector<8x9x2x1x128xbf16>
    %13 = vector.extract_strided_slice %12 {offsets = [0, 0, 0, 0, 0], sizes = [8, 9, 1, 1, 128], strides = [1, 1, 1, 1, 1]} : vector<8x9x2x1x128xbf16> to vector<8x9x1x1x128xbf16>
    %14 = vector.shape_cast %13 : vector<8x9x1x1x128xbf16> to vector<8x9x1x128xbf16>
    %15 = vector.extract_strided_slice %12 {offsets = [0, 0, 1, 0, 0], sizes = [8, 9, 1, 1, 128], strides = [1, 1, 1, 1, 1]} : vector<8x9x2x1x128xbf16> to vector<8x9x1x1x128xbf16>
    %16 = vector.shape_cast %15 : vector<8x9x1x1x128xbf16> to vector<8x9x1x128xbf16>
    %17 = vector.extract_strided_slice %14 {offsets = [0, 0, 0, 0], sizes = [8, 8, 1, 128], strides = [1, 1, 1, 1]} : vector<8x9x1x128xbf16> to vector<8x8x1x128xbf16>
    %18 = vector.extract_strided_slice %16 {offsets = [0, 0, 0, 0], sizes = [8, 8, 1, 128], strides = [1, 1, 1, 1]} : vector<8x9x1x128xbf16> to vector<8x8x1x128xbf16>
    %19 = arith.maximumf %17, %18 : vector<8x8x1x128xbf16>
    %20 = vector.extract_strided_slice %14 {offsets = [0, 1, 0, 0], sizes = [8, 8, 1, 128], strides = [1, 1, 1, 1]} : vector<8x9x1x128xbf16> to vector<8x8x1x128xbf16>
    %21 = arith.maximumf %19, %20 : vector<8x8x1x128xbf16>
    %c0_4 = arith.constant 0 : index
    %c0_5 = arith.constant 0 : index
    %c0_6 = arith.constant 0 : index
    %c0_7 = arith.constant 0 : index
    %c0_8 = arith.constant 0 : index
    %22 = vector.load %arg2[%c0_4, %c0_5, %c0_6, %c0_7, %c0_8] : memref<1x8x8x1x128xbf16, #tpu.memory_space<vmem>>, vector<1x8x8x1x128xbf16>
    %23 = vector.shape_cast %22 : vector<1x8x8x1x128xbf16> to vector<8x8x1x128xbf16>
    %24 = vector.shape_cast %21 : vector<8x8x1x128xbf16> to vector<1x8x8x1x128xbf16>
    tpu.vector_store %arg2[%c0_4, %c0_5, %c0_6, %c0_7, %c0_8], %24 {strides = array<i32>} : memref<1x8x8x1x128xbf16, #tpu.memory_space<vmem>>, vector<1x8x8x1x128xbf16>,
    return
  }
  func.func @transform_0(%arg0: i32) -> (i32, i32, i32, i32, i32) {
    %c0_i32 = arith.constant 0 : i32
    %c0_i32_0 = arith.constant 0 : i32
    %c0_i32_1 = arith.constant 0 : i32
    %c0_i32_2 = arith.constant 0 : i32
    %c0_i32_3 = arith.constant 0 : i32
    return %arg0, %c0_i32, %c0_i32_0, %c0_i32_1, %c0_i32_2 : i32, i32, i32, i32, i32
  }
  func.func @transform_1(%arg0: i32) -> (i32, i32, i32, i32, i32) {
    %c0_i32 = arith.constant 0 : i32
    %c0_i32_0 = arith.constant 0 : i32
    %c0_i32_1 = arith.constant 0 : i32
    %c0_i32_2 = arith.constant 0 : i32
    %c0_i32_3 = arith.constant 0 : i32
    return %arg0, %c0_i32, %c0_i32_0, %c0_i32_1, %c0_i32_2 : i32, i32, i32, i32, i32
  }
}

module attributes {stable_mosaic.version = 11 : i64} {
  func.func @_fused_matmul_kernel(%arg0: i32, %arg1: i32, %arg2: memref<64x128xbf16, #tpu.memory_space<vmem>>, %arg3: memref<128x128xbf16, #tpu.memory_space<vmem>>, %arg4: memref<1x128xf32, #tpu.memory_space<vmem>>, %arg5: memref<64x128xbf16, #tpu.memory_space<vmem>>) attributes {dimension_semantics = [#tpu.dimension_semantics<parallel>, #tpu.dimension_semantics<parallel>], iteration_bounds = array<i64: 2, 1>, scalar_prefetch = 0 : i64, scratch_operands = 0 : i64, tpu.core_type = #tpu.core_type<tc>, window_params = [{transform_indices = @transform_0, window_bounds = array<i64: 64, 128>}, {transform_indices = @transform_1, window_bounds = array<i64: 128, 128>}, {transform_indices = @transform_2, window_bounds = array<i64: 1, 128>}, {transform_indices = @transform_3, window_bounds = array<i64: 64, 128>}]} {
    %c0 = arith.constant 0 : index
    %c0_0 = arith.constant 0 : index
    %0 = vector.load %arg2[%c0, %c0_0] : memref<64x128xbf16, #tpu.memory_space<vmem>>, vector<64x128xbf16>
    %c0_1 = arith.constant 0 : index
    %c0_2 = arith.constant 0 : index
    %1 = vector.load %arg3[%c0_1, %c0_2] : memref<128x128xbf16, #tpu.memory_space<vmem>>, vector<128x128xbf16>
    %cst = arith.constant dense<0.000000e+00> : vector<64x128xf32>
    %2 = tpu.matmul %0, %1, %cst {dimension_numbers = #tpu.dot_dimension_numbers<[1], [0], [0], [1], [0, 0, 1, 1], [], []>} : vector<64x128xbf16>, vector<128x128xbf16>, vector<64x128xf32> -> vector<64x128xf32>
    %c0_3 = arith.constant 0 : index
    %c0_4 = arith.constant 0 : index
    %3 = vector.load %arg4[%c0_3, %c0_4] : memref<1x128xf32, #tpu.memory_space<vmem>>, vector<1x128xf32>
    %4 = vector.broadcast %3 : vector<1x128xf32> to vector<64x128xf32>
    %5 = arith.addf %2, %4 : vector<64x128xf32>
    %cst_5 = arith.constant 0.000000e+00 : f32
    %6 = vector.broadcast %cst_5 : f32 to vector<64x128xf32>
    %7 = arith.maximumf %5, %6 : vector<64x128xf32>
    %8 = arith.truncf %7 : vector<64x128xf32> to vector<64x128xbf16>
    %c0_6 = arith.constant 0 : index
    %c0_7 = arith.constant 0 : index
    %9 = vector.load %arg5[%c0_6, %c0_7] : memref<64x128xbf16, #tpu.memory_space<vmem>>, vector<64x128xbf16>
    tpu.vector_store %arg5[%c0_6, %c0_7], %8 {strides = array<i32>} : memref<64x128xbf16, #tpu.memory_space<vmem>>, vector<64x128xbf16>,
    return
  }
  func.func @transform_0(%arg0: i32, %arg1: i32) -> (i32, i32) {
    %c0_i32 = arith.constant 0 : i32
    %c0_i32_0 = arith.constant 0 : i32
    return %arg0, %c0_i32 : i32, i32
  }
  func.func @transform_1(%arg0: i32, %arg1: i32) -> (i32, i32) {
    %c0_i32 = arith.constant 0 : i32
    %c0_i32_0 = arith.constant 0 : i32
    return %c0_i32, %arg1 : i32, i32
  }
  func.func @transform_2(%arg0: i32, %arg1: i32) -> (i32, i32) {
    %c0_i32 = arith.constant 0 : i32
    %c0_i32_0 = arith.constant 0 : i32
    return %c0_i32, %arg1 : i32, i32
  }
  func.func @transform_3(%arg0: i32, %arg1: i32) -> (i32, i32) {
    %c0_i32 = arith.constant 0 : i32
    return %arg0, %arg1 : i32, i32
  }
}

module attributes {stable_mosaic.version = 11 : i64} {
  func.func @_fused_matmul_kernel(%arg0: i32, %arg1: i32, %arg2: memref<64x128xbf16, #tpu.memory_space<vmem>>, %arg3: memref<128x256xbf16, #tpu.memory_space<vmem>>, %arg4: memref<1x256xf32, #tpu.memory_space<vmem>>, %arg5: memref<64x256xbf16, #tpu.memory_space<vmem>>) attributes {dimension_semantics = [#tpu.dimension_semantics<parallel>, #tpu.dimension_semantics<parallel>], iteration_bounds = array<i64: 2, 1>, scalar_prefetch = 0 : i64, scratch_operands = 0 : i64, tpu.core_type = #tpu.core_type<tc>, window_params = [{transform_indices = @transform_0, window_bounds = array<i64: 64, 128>}, {transform_indices = @transform_1, window_bounds = array<i64: 128, 256>}, {transform_indices = @transform_2, window_bounds = array<i64: 1, 256>}, {transform_indices = @transform_3, window_bounds = array<i64: 64, 256>}]} {
    %c0 = arith.constant 0 : index
    %c0_0 = arith.constant 0 : index
    %0 = vector.load %arg2[%c0, %c0_0] : memref<64x128xbf16, #tpu.memory_space<vmem>>, vector<64x128xbf16>
    %c0_1 = arith.constant 0 : index
    %c0_2 = arith.constant 0 : index
    %1 = vector.load %arg3[%c0_1, %c0_2] : memref<128x256xbf16, #tpu.memory_space<vmem>>, vector<128x256xbf16>
    %cst = arith.constant dense<0.000000e+00> : vector<64x256xf32>
    %2 = tpu.matmul %0, %1, %cst {dimension_numbers = #tpu.dot_dimension_numbers<[1], [0], [0], [1], [0, 0, 1, 1], [], []>} : vector<64x128xbf16>, vector<128x256xbf16>, vector<64x256xf32> -> vector<64x256xf32>
    %c0_3 = arith.constant 0 : index
    %c0_4 = arith.constant 0 : index
    %3 = vector.load %arg4[%c0_3, %c0_4] : memref<1x256xf32, #tpu.memory_space<vmem>>, vector<1x256xf32>
    %4 = vector.broadcast %3 : vector<1x256xf32> to vector<64x256xf32>
    %5 = arith.addf %2, %4 : vector<64x256xf32>
    %6 = arith.truncf %5 : vector<64x256xf32> to vector<64x256xbf16>
    %c0_5 = arith.constant 0 : index
    %c0_6 = arith.constant 0 : index
    %7 = vector.load %arg5[%c0_5, %c0_6] : memref<64x256xbf16, #tpu.memory_space<vmem>>, vector<64x256xbf16>
    tpu.vector_store %arg5[%c0_5, %c0_6], %6 {strides = array<i32>} : memref<64x256xbf16, #tpu.memory_space<vmem>>, vector<64x256xbf16>,
    return
  }
  func.func @transform_0(%arg0: i32, %arg1: i32) -> (i32, i32) {
    %c0_i32 = arith.constant 0 : i32
    %c0_i32_0 = arith.constant 0 : i32
    return %arg0, %c0_i32 : i32, i32
  }
  func.func @transform_1(%arg0: i32, %arg1: i32) -> (i32, i32) {
    %c0_i32 = arith.constant 0 : i32
    %c0_i32_0 = arith.constant 0 : i32
    return %c0_i32, %arg1 : i32, i32
  }
  func.func @transform_2(%arg0: i32, %arg1: i32) -> (i32, i32) {
    %c0_i32 = arith.constant 0 : i32
    %c0_i32_0 = arith.constant 0 : i32
    return %c0_i32, %arg1 : i32, i32
  }
  func.func @transform_3(%arg0: i32, %arg1: i32) -> (i32, i32) {
    %c0_i32 = arith.constant 0 : i32
    return %arg0, %arg1 : i32, i32
  }
}

module attributes {stable_mosaic.version = 11 : i64} {
  func.func @_fused_matmul_kernel(%arg0: i32, %arg1: i32, %arg2: memref<64x1152xbf16, #tpu.memory_space<vmem>>, %arg3: memref<1152x128xbf16, #tpu.memory_space<vmem>>, %arg4: memref<1x128xf32, #tpu.memory_space<vmem>>, %arg5: memref<64x128xbf16, #tpu.memory_space<vmem>>) attributes {dimension_semantics = [#tpu.dimension_semantics<parallel>, #tpu.dimension_semantics<parallel>], iteration_bounds = array<i64: 2, 1>, scalar_prefetch = 0 : i64, scratch_operands = 0 : i64, tpu.core_type = #tpu.core_type<tc>, window_params = [{transform_indices = @transform_0, window_bounds = array<i64: 64, 1152>}, {transform_indices = @transform_1, window_bounds = array<i64: 1152, 128>}, {transform_indices = @transform_2, window_bounds = array<i64: 1, 128>}, {transform_indices = @transform_3, window_bounds = array<i64: 64, 128>}]} {
    %c0 = arith.constant 0 : index
    %c0_0 = arith.constant 0 : index
    %0 = vector.load %arg2[%c0, %c0_0] : memref<64x1152xbf16, #tpu.memory_space<vmem>>, vector<64x1152xbf16>
    %c0_1 = arith.constant 0 : index
    %c0_2 = arith.constant 0 : index
    %1 = vector.load %arg3[%c0_1, %c0_2] : memref<1152x128xbf16, #tpu.memory_space<vmem>>, vector<1152x128xbf16>
    %cst = arith.constant dense<0.000000e+00> : vector<64x128xf32>
    %2 = tpu.matmul %0, %1, %cst {dimension_numbers = #tpu.dot_dimension_numbers<[1], [0], [0], [1], [0, 0, 1, 1], [], []>} : vector<64x1152xbf16>, vector<1152x128xbf16>, vector<64x128xf32> -> vector<64x128xf32>
    %c0_3 = arith.constant 0 : index
    %c0_4 = arith.constant 0 : index
    %3 = vector.load %arg4[%c0_3, %c0_4] : memref<1x128xf32, #tpu.memory_space<vmem>>, vector<1x128xf32>
    %4 = vector.broadcast %3 : vector<1x128xf32> to vector<64x128xf32>
    %5 = arith.addf %2, %4 : vector<64x128xf32>
    %cst_5 = arith.constant 0.000000e+00 : f32
    %6 = vector.broadcast %cst_5 : f32 to vector<64x128xf32>
    %7 = arith.maximumf %5, %6 : vector<64x128xf32>
    %8 = arith.truncf %7 : vector<64x128xf32> to vector<64x128xbf16>
    %c0_6 = arith.constant 0 : index
    %c0_7 = arith.constant 0 : index
    %9 = vector.load %arg5[%c0_6, %c0_7] : memref<64x128xbf16, #tpu.memory_space<vmem>>, vector<64x128xbf16>
    tpu.vector_store %arg5[%c0_6, %c0_7], %8 {strides = array<i32>} : memref<64x128xbf16, #tpu.memory_space<vmem>>, vector<64x128xbf16>,
    return
  }
  func.func @transform_0(%arg0: i32, %arg1: i32) -> (i32, i32) {
    %c0_i32 = arith.constant 0 : i32
    %c0_i32_0 = arith.constant 0 : i32
    return %arg0, %c0_i32 : i32, i32
  }
  func.func @transform_1(%arg0: i32, %arg1: i32) -> (i32, i32) {
    %c0_i32 = arith.constant 0 : i32
    %c0_i32_0 = arith.constant 0 : i32
    return %c0_i32, %arg1 : i32, i32
  }
  func.func @transform_2(%arg0: i32, %arg1: i32) -> (i32, i32) {
    %c0_i32 = arith.constant 0 : i32
    %c0_i32_0 = arith.constant 0 : i32
    return %c0_i32, %arg1 : i32, i32
  }
  func.func @transform_3(%arg0: i32, %arg1: i32) -> (i32, i32) {
    %c0_i32 = arith.constant 0 : i32
    return %arg0, %arg1 : i32, i32
  }
}

module attributes {stable_mosaic.version = 11 : i64} {
  func.func @_fused_matmul_kernel(%arg0: i32, %arg1: i32, %arg2: memref<64x128xbf16, #tpu.memory_space<vmem>>, %arg3: memref<128x256xbf16, #tpu.memory_space<vmem>>, %arg4: memref<1x256xf32, #tpu.memory_space<vmem>>, %arg5: memref<64x256xbf16, #tpu.memory_space<vmem>>, %arg6: memref<64x256xbf16, #tpu.memory_space<vmem>>) attributes {dimension_semantics = [#tpu.dimension_semantics<parallel>, #tpu.dimension_semantics<parallel>], iteration_bounds = array<i64: 2, 1>, scalar_prefetch = 0 : i64, scratch_operands = 0 : i64, tpu.core_type = #tpu.core_type<tc>, window_params = [{transform_indices = @transform_0, window_bounds = array<i64: 64, 128>}, {transform_indices = @transform_1, window_bounds = array<i64: 128, 256>}, {transform_indices = @transform_2, window_bounds = array<i64: 1, 256>}, {transform_indices = @transform_3, window_bounds = array<i64: 64, 256>}, {transform_indices = @transform_4, window_bounds = array<i64: 64, 256>}]} {
    %c0 = arith.constant 0 : index
    %c0_0 = arith.constant 0 : index
    %0 = vector.load %arg2[%c0, %c0_0] : memref<64x128xbf16, #tpu.memory_space<vmem>>, vector<64x128xbf16>
    %c0_1 = arith.constant 0 : index
    %c0_2 = arith.constant 0 : index
    %1 = vector.load %arg3[%c0_1, %c0_2] : memref<128x256xbf16, #tpu.memory_space<vmem>>, vector<128x256xbf16>
    %cst = arith.constant dense<0.000000e+00> : vector<64x256xf32>
    %2 = tpu.matmul %0, %1, %cst {dimension_numbers = #tpu.dot_dimension_numbers<[1], [0], [0], [1], [0, 0, 1, 1], [], []>} : vector<64x128xbf16>, vector<128x256xbf16>, vector<64x256xf32> -> vector<64x256xf32>
    %c0_3 = arith.constant 0 : index
    %c0_4 = arith.constant 0 : index
    %3 = vector.load %arg4[%c0_3, %c0_4] : memref<1x256xf32, #tpu.memory_space<vmem>>, vector<1x256xf32>
    %4 = vector.broadcast %3 : vector<1x256xf32> to vector<64x256xf32>
    %5 = arith.addf %2, %4 : vector<64x256xf32>
    %c0_5 = arith.constant 0 : index
    %c0_6 = arith.constant 0 : index
    %6 = vector.load %arg5[%c0_5, %c0_6] : memref<64x256xbf16, #tpu.memory_space<vmem>>, vector<64x256xbf16>
    %7 = arith.extf %6 : vector<64x256xbf16> to vector<64x256xf32>
    %8 = arith.addf %5, %7 : vector<64x256xf32>
    %cst_7 = arith.constant 0.000000e+00 : f32
    %9 = vector.broadcast %cst_7 : f32 to vector<64x256xf32>
    %10 = arith.maximumf %8, %9 : vector<64x256xf32>
    %11 = arith.truncf %10 : vector<64x256xf32> to vector<64x256xbf16>
    %c0_8 = arith.constant 0 : index
    %c0_9 = arith.constant 0 : index
    %12 = vector.load %arg6[%c0_8, %c0_9] : memref<64x256xbf16, #tpu.memory_space<vmem>>, vector<64x256xbf16>
    tpu.vector_store %arg6[%c0_8, %c0_9], %11 {strides = array<i32>} : memref<64x256xbf16, #tpu.memory_space<vmem>>, vector<64x256xbf16>,
    return
  }
  func.func @transform_0(%arg0: i32, %arg1: i32) -> (i32, i32) {
    %c0_i32 = arith.constant 0 : i32
    %c0_i32_0 = arith.constant 0 : i32
    return %arg0, %c0_i32 : i32, i32
  }
  func.func @transform_1(%arg0: i32, %arg1: i32) -> (i32, i32) {
    %c0_i32 = arith.constant 0 : i32
    %c0_i32_0 = arith.constant 0 : i32
    return %c0_i32, %arg1 : i32, i32
  }
  func.func @transform_2(%arg0: i32, %arg1: i32) -> (i32, i32) {
    %c0_i32 = arith.constant 0 : i32
    %c0_i32_0 = arith.constant 0 : i32
    return %c0_i32, %arg1 : i32, i32
  }
  func.func @transform_3(%arg0: i32, %arg1: i32) -> (i32, i32) {
    %c0_i32 = arith.constant 0 : i32
    return %arg0, %arg1 : i32, i32
  }
  func.func @transform_4(%arg0: i32, %arg1: i32) -> (i32, i32) {
    %c0_i32 = arith.constant 0 : i32
    return %arg0, %arg1 : i32, i32
  }
}

module attributes {stable_mosaic.version = 11 : i64} {
  func.func @_fused_matmul_kernel(%arg0: i32, %arg1: i32, %arg2: memref<64x256xbf16, #tpu.memory_space<vmem>>, %arg3: memref<256x128xbf16, #tpu.memory_space<vmem>>, %arg4: memref<1x128xf32, #tpu.memory_space<vmem>>, %arg5: memref<64x128xbf16, #tpu.memory_space<vmem>>) attributes {dimension_semantics = [#tpu.dimension_semantics<parallel>, #tpu.dimension_semantics<parallel>], iteration_bounds = array<i64: 2, 1>, scalar_prefetch = 0 : i64, scratch_operands = 0 : i64, tpu.core_type = #tpu.core_type<tc>, window_params = [{transform_indices = @transform_0, window_bounds = array<i64: 64, 256>}, {transform_indices = @transform_1, window_bounds = array<i64: 256, 128>}, {transform_indices = @transform_2, window_bounds = array<i64: 1, 128>}, {transform_indices = @transform_3, window_bounds = array<i64: 64, 128>}]} {
    %c0 = arith.constant 0 : index
    %c0_0 = arith.constant 0 : index
    %0 = vector.load %arg2[%c0, %c0_0] : memref<64x256xbf16, #tpu.memory_space<vmem>>, vector<64x256xbf16>
    %c0_1 = arith.constant 0 : index
    %c0_2 = arith.constant 0 : index
    %1 = vector.load %arg3[%c0_1, %c0_2] : memref<256x128xbf16, #tpu.memory_space<vmem>>, vector<256x128xbf16>
    %cst = arith.constant dense<0.000000e+00> : vector<64x128xf32>
    %2 = tpu.matmul %0, %1, %cst {dimension_numbers = #tpu.dot_dimension_numbers<[1], [0], [0], [1], [0, 0, 1, 1], [], []>} : vector<64x256xbf16>, vector<256x128xbf16>, vector<64x128xf32> -> vector<64x128xf32>
    %c0_3 = arith.constant 0 : index
    %c0_4 = arith.constant 0 : index
    %3 = vector.load %arg4[%c0_3, %c0_4] : memref<1x128xf32, #tpu.memory_space<vmem>>, vector<1x128xf32>
    %4 = vector.broadcast %3 : vector<1x128xf32> to vector<64x128xf32>
    %5 = arith.addf %2, %4 : vector<64x128xf32>
    %cst_5 = arith.constant 0.000000e+00 : f32
    %6 = vector.broadcast %cst_5 : f32 to vector<64x128xf32>
    %7 = arith.maximumf %5, %6 : vector<64x128xf32>
    %8 = arith.truncf %7 : vector<64x128xf32> to vector<64x128xbf16>
    %c0_6 = arith.constant 0 : index
    %c0_7 = arith.constant 0 : index
    %9 = vector.load %arg5[%c0_6, %c0_7] : memref<64x128xbf16, #tpu.memory_space<vmem>>, vector<64x128xbf16>
    tpu.vector_store %arg5[%c0_6, %c0_7], %8 {strides = array<i32>} : memref<64x128xbf16, #tpu.memory_space<vmem>>, vector<64x128xbf16>,
    return
  }
  func.func @transform_0(%arg0: i32, %arg1: i32) -> (i32, i32) {
    %c0_i32 = arith.constant 0 : i32
    %c0_i32_0 = arith.constant 0 : i32
    return %arg0, %c0_i32 : i32, i32
  }
  func.func @transform_1(%arg0: i32, %arg1: i32) -> (i32, i32) {
    %c0_i32 = arith.constant 0 : i32
    %c0_i32_0 = arith.constant 0 : i32
    return %c0_i32, %arg1 : i32, i32
  }
  func.func @transform_2(%arg0: i32, %arg1: i32) -> (i32, i32) {
    %c0_i32 = arith.constant 0 : i32
    %c0_i32_0 = arith.constant 0 : i32
    return %c0_i32, %arg1 : i32, i32
  }
  func.func @transform_3(%arg0: i32, %arg1: i32) -> (i32, i32) {
    %c0_i32 = arith.constant 0 : i32
    return %arg0, %arg1 : i32, i32
  }
}

module attributes {stable_mosaic.version = 11 : i64} {
  func.func @_fused_matmul_kernel(%arg0: i32, %arg1: i32, %arg2: memref<16x1152xbf16, #tpu.memory_space<vmem>>, %arg3: memref<1152x128xbf16, #tpu.memory_space<vmem>>, %arg4: memref<1x128xf32, #tpu.memory_space<vmem>>, %arg5: memref<16x128xbf16, #tpu.memory_space<vmem>>) attributes {dimension_semantics = [#tpu.dimension_semantics<parallel>, #tpu.dimension_semantics<parallel>], iteration_bounds = array<i64: 2, 1>, scalar_prefetch = 0 : i64, scratch_operands = 0 : i64, tpu.core_type = #tpu.core_type<tc>, window_params = [{transform_indices = @transform_0, window_bounds = array<i64: 16, 1152>}, {transform_indices = @transform_1, window_bounds = array<i64: 1152, 128>}, {transform_indices = @transform_2, window_bounds = array<i64: 1, 128>}, {transform_indices = @transform_3, window_bounds = array<i64: 16, 128>}]} {
    %c0 = arith.constant 0 : index
    %c0_0 = arith.constant 0 : index
    %0 = vector.load %arg2[%c0, %c0_0] : memref<16x1152xbf16, #tpu.memory_space<vmem>>, vector<16x1152xbf16>
    %c0_1 = arith.constant 0 : index
    %c0_2 = arith.constant 0 : index
    %1 = vector.load %arg3[%c0_1, %c0_2] : memref<1152x128xbf16, #tpu.memory_space<vmem>>, vector<1152x128xbf16>
    %cst = arith.constant dense<0.000000e+00> : vector<16x128xf32>
    %2 = tpu.matmul %0, %1, %cst {dimension_numbers = #tpu.dot_dimension_numbers<[1], [0], [0], [1], [0, 0, 1, 1], [], []>} : vector<16x1152xbf16>, vector<1152x128xbf16>, vector<16x128xf32> -> vector<16x128xf32>
    %c0_3 = arith.constant 0 : index
    %c0_4 = arith.constant 0 : index
    %3 = vector.load %arg4[%c0_3, %c0_4] : memref<1x128xf32, #tpu.memory_space<vmem>>, vector<1x128xf32>
    %4 = vector.broadcast %3 : vector<1x128xf32> to vector<16x128xf32>
    %5 = arith.addf %2, %4 : vector<16x128xf32>
    %cst_5 = arith.constant 0.000000e+00 : f32
    %6 = vector.broadcast %cst_5 : f32 to vector<16x128xf32>
    %7 = arith.maximumf %5, %6 : vector<16x128xf32>
    %8 = arith.truncf %7 : vector<16x128xf32> to vector<16x128xbf16>
    %c0_6 = arith.constant 0 : index
    %c0_7 = arith.constant 0 : index
    %9 = vector.load %arg5[%c0_6, %c0_7] : memref<16x128xbf16, #tpu.memory_space<vmem>>, vector<16x128xbf16>
    tpu.vector_store %arg5[%c0_6, %c0_7], %8 {strides = array<i32>} : memref<16x128xbf16, #tpu.memory_space<vmem>>, vector<16x128xbf16>,
    return
  }
  func.func @transform_0(%arg0: i32, %arg1: i32) -> (i32, i32) {
    %c0_i32 = arith.constant 0 : i32
    %c0_i32_0 = arith.constant 0 : i32
    return %arg0, %c0_i32 : i32, i32
  }
  func.func @transform_1(%arg0: i32, %arg1: i32) -> (i32, i32) {
    %c0_i32 = arith.constant 0 : i32
    %c0_i32_0 = arith.constant 0 : i32
    return %c0_i32, %arg1 : i32, i32
  }
  func.func @transform_2(%arg0: i32, %arg1: i32) -> (i32, i32) {
    %c0_i32 = arith.constant 0 : i32
    %c0_i32_0 = arith.constant 0 : i32
    return %c0_i32, %arg1 : i32, i32
  }
  func.func @transform_3(%arg0: i32, %arg1: i32) -> (i32, i32) {
    %c0_i32 = arith.constant 0 : i32
    return %arg0, %arg1 : i32, i32
  }
}

module attributes {stable_mosaic.version = 11 : i64} {
  func.func @_fused_matmul_kernel(%arg0: i32, %arg1: i32, %arg2: memref<16x128xbf16, #tpu.memory_space<vmem>>, %arg3: memref<128x1024xbf16, #tpu.memory_space<vmem>>, %arg4: memref<1x1024xf32, #tpu.memory_space<vmem>>, %arg5: memref<16x1024xbf16, #tpu.memory_space<vmem>>, %arg6: memref<16x1024xf32, #tpu.memory_space<vmem>>) attributes {dimension_semantics = [#tpu.dimension_semantics<parallel>, #tpu.dimension_semantics<parallel>], iteration_bounds = array<i64: 2, 2>, scalar_prefetch = 0 : i64, scratch_operands = 0 : i64, tpu.core_type = #tpu.core_type<tc>, window_params = [{transform_indices = @transform_0, window_bounds = array<i64: 16, 128>}, {transform_indices = @transform_1, window_bounds = array<i64: 128, 1024>}, {transform_indices = @transform_2, window_bounds = array<i64: 1, 1024>}, {transform_indices = @transform_3, window_bounds = array<i64: 16, 1024>}, {transform_indices = @transform_4, window_bounds = array<i64: 16, 1024>}]} {
    %c0 = arith.constant 0 : index
    %c0_0 = arith.constant 0 : index
    %0 = vector.load %arg2[%c0, %c0_0] : memref<16x128xbf16, #tpu.memory_space<vmem>>, vector<16x128xbf16>
    %c0_1 = arith.constant 0 : index
    %c0_2 = arith.constant 0 : index
    %1 = vector.load %arg3[%c0_1, %c0_2] : memref<128x1024xbf16, #tpu.memory_space<vmem>>, vector<128x1024xbf16>
    %cst = arith.constant dense<0.000000e+00> : vector<16x1024xf32>
    %2 = tpu.matmul %0, %1, %cst {dimension_numbers = #tpu.dot_dimension_numbers<[1], [0], [0], [1], [0, 0, 1, 1], [], []>} : vector<16x128xbf16>, vector<128x1024xbf16>, vector<16x1024xf32> -> vector<16x1024xf32>
    %c0_3 = arith.constant 0 : index
    %c0_4 = arith.constant 0 : index
    %3 = vector.load %arg4[%c0_3, %c0_4] : memref<1x1024xf32, #tpu.memory_space<vmem>>, vector<1x1024xf32>
    %4 = vector.broadcast %3 : vector<1x1024xf32> to vector<16x1024xf32>
    %5 = arith.addf %2, %4 : vector<16x1024xf32>
    %c0_5 = arith.constant 0 : index
    %c0_6 = arith.constant 0 : index
    %6 = vector.load %arg5[%c0_5, %c0_6] : memref<16x1024xbf16, #tpu.memory_space<vmem>>, vector<16x1024xbf16>
    %7 = arith.extf %6 : vector<16x1024xbf16> to vector<16x1024xf32>
    %8 = arith.addf %5, %7 : vector<16x1024xf32>
    %cst_7 = arith.constant 0.000000e+00 : f32
    %9 = vector.broadcast %cst_7 : f32 to vector<16x1024xf32>
    %10 = arith.maximumf %8, %9 : vector<16x1024xf32>
    %c0_8 = arith.constant 0 : index
    %c0_9 = arith.constant 0 : index
    %11 = vector.load %arg6[%c0_8, %c0_9] : memref<16x1024xf32, #tpu.memory_space<vmem>>, vector<16x1024xf32>
    tpu.vector_store %arg6[%c0_8, %c0_9], %10 {strides = array<i32>} : memref<16x1024xf32, #tpu.memory_space<vmem>>, vector<16x1024xf32>,
    return
  }
  func.func @transform_0(%arg0: i32, %arg1: i32) -> (i32, i32) {
    %c0_i32 = arith.constant 0 : i32
    %c0_i32_0 = arith.constant 0 : i32
    return %arg0, %c0_i32 : i32, i32
  }
  func.func @transform_1(%arg0: i32, %arg1: i32) -> (i32, i32) {
    %c0_i32 = arith.constant 0 : i32
    %c0_i32_0 = arith.constant 0 : i32
    return %c0_i32, %arg1 : i32, i32
  }
  func.func @transform_2(%arg0: i32, %arg1: i32) -> (i32, i32) {
    %c0_i32 = arith.constant 0 : i32
    %c0_i32_0 = arith.constant 0 : i32
    return %c0_i32, %arg1 : i32, i32
  }
  func.func @transform_3(%arg0: i32, %arg1: i32) -> (i32, i32) {
    %c0_i32 = arith.constant 0 : i32
    return %arg0, %arg1 : i32, i32
  }
  func.func @transform_4(%arg0: i32, %arg1: i32) -> (i32, i32) {
    %c0_i32 = arith.constant 0 : i32
    return %arg0, %arg1 : i32, i32
  }
}

module attributes {stable_mosaic.version = 11 : i64} {
  func.func @_fused_matmul_kernel(%arg0: i32, %arg1: i32, %arg2: memref<16x256xbf16, #tpu.memory_space<vmem>>, %arg3: memref<256x1024xbf16, #tpu.memory_space<vmem>>, %arg4: memref<1x1024xf32, #tpu.memory_space<vmem>>, %arg5: memref<16x1024xbf16, #tpu.memory_space<vmem>>) attributes {dimension_semantics = [#tpu.dimension_semantics<parallel>, #tpu.dimension_semantics<parallel>], iteration_bounds = array<i64: 2, 2>, scalar_prefetch = 0 : i64, scratch_operands = 0 : i64, tpu.core_type = #tpu.core_type<tc>, window_params = [{transform_indices = @transform_0, window_bounds = array<i64: 16, 256>}, {transform_indices = @transform_1, window_bounds = array<i64: 256, 1024>}, {transform_indices = @transform_2, window_bounds = array<i64: 1, 1024>}, {transform_indices = @transform_3, window_bounds = array<i64: 16, 1024>}]} {
    %c0 = arith.constant 0 : index
    %c0_0 = arith.constant 0 : index
    %0 = vector.load %arg2[%c0, %c0_0] : memref<16x256xbf16, #tpu.memory_space<vmem>>, vector<16x256xbf16>
    %c0_1 = arith.constant 0 : index
    %c0_2 = arith.constant 0 : index
    %1 = vector.load %arg3[%c0_1, %c0_2] : memref<256x1024xbf16, #tpu.memory_space<vmem>>, vector<256x1024xbf16>
    %cst = arith.constant dense<0.000000e+00> : vector<16x1024xf32>
    %2 = tpu.matmul %0, %1, %cst {dimension_numbers = #tpu.dot_dimension_numbers<[1], [0], [0], [1], [0, 0, 1, 1], [], []>} : vector<16x256xbf16>, vector<256x1024xbf16>, vector<16x1024xf32> -> vector<16x1024xf32>
    %c0_3 = arith.constant 0 : index
    %c0_4 = arith.constant 0 : index
    %3 = vector.load %arg4[%c0_3, %c0_4] : memref<1x1024xf32, #tpu.memory_space<vmem>>, vector<1x1024xf32>
    %4 = vector.broadcast %3 : vector<1x1024xf32> to vector<16x1024xf32>
    %5 = arith.addf %2, %4 : vector<16x1024xf32>
    %6 = arith.truncf %5 : vector<16x1024xf32> to vector<16x1024xbf16>
    %c0_5 = arith.constant 0 : index
    %c0_6 = arith.constant 0 : index
    %7 = vector.load %arg5[%c0_5, %c0_6] : memref<16x1024xbf16, #tpu.memory_space<vmem>>, vector<16x1024xbf16>
    tpu.vector_store %arg5[%c0_5, %c0_6], %6 {strides = array<i32>} : memref<16x1024xbf16, #tpu.memory_space<vmem>>, vector<16x1024xbf16>,
    return
  }
  func.func @transform_0(%arg0: i32, %arg1: i32) -> (i32, i32) {
    %c0_i32 = arith.constant 0 : i32
    %c0_i32_0 = arith.constant 0 : i32
    return %arg0, %c0_i32 : i32, i32
  }
  func.func @transform_1(%arg0: i32, %arg1: i32) -> (i32, i32) {
    %c0_i32 = arith.constant 0 : i32
    %c0_i32_0 = arith.constant 0 : i32
    return %c0_i32, %arg1 : i32, i32
  }
  func.func @transform_2(%arg0: i32, %arg1: i32) -> (i32, i32) {
    %c0_i32 = arith.constant 0 : i32
    %c0_i32_0 = arith.constant 0 : i32
    return %c0_i32, %arg1 : i32, i32
  }
  func.func @transform_3(%arg0: i32, %arg1: i32) -> (i32, i32) {
    %c0_i32 = arith.constant 0 : i32
    return %arg0, %arg1 : i32, i32
  }
}

</mosaic_0001>

<llo_original>
// kernel: encoder_forward.10
$region0: #{encoder_forward.10}
  #allocation0 [shape = 'u32[]', space=smem, size = 0x4, offset = 0x4, fixed_abs, tag = 'smem constant byte address 0x4 - core index']
  #allocation1 [shape = 'u32[72,128]{1,0:T(1,128)}', space=vmem, size = 0x9000, scoped, tag = 'internal scratch']
  %s0 = inlined_call_operand.vmem [shape: bf16[512,256], index: 0, kind: input, shape index: {}]
  %s1 = inlined_call_operand.vmem [shape: bf16[256,128], index: 1, kind: input, shape index: {}]
  %s2 = inlined_call_operand.vmem [shape: f32[1,128], index: 2, kind: input, shape index: {}]
  %s3 = inlined_call_operand.vmem [shape: bf16[512,128], index: 3, kind: output, shape index: {}]
  %s4 = sld [smem:[#allocation0]]
  $region45: #{encoder_forward.10} parent=0
    _
  %s6 = ssub.s32 1, %s4
  %s7 = scalar_select 0, %s6, %s4
  loop: start=0, step=1, limit=4
  $region2: #{encoder_forward.10} parent=0 // loop_pre_header
    _
  $region3: #{encoder_forward.10} parent=0 // loop_header
    %s9 = sphi 0, %s13
    %p10 = scmp.ge.s32.totalorder %s9, 4
    %s16 = sphi 0, %s28
    %s17 = sphi 0, %s24
    %s18 = sphi 0, %s16
    %s19 = sphi 0, %s17
    %s20 = sphi 0, %s18
    %s21 = sphi 0, %s19
    %s31 = sphi 0, %s33
    %s34 = sphi 0, %s31
    %s35 = sphi 0, %s34
    %s51 = sphi 0, %s35
    %s57 = sphi 0, %s59
    %s60 = sphi 0, %s57
    %s61 = sphi 0, %s60
    %s77 = sphi 0, %s61
    %s83 = sphi 0, %s85
    %s86 = sphi 0, %s83
    %s87 = sphi 0, %s86
    %s103 = sphi 0, %s87
    %s111 = sphi 0, %s113
    %s114 = sphi 0, %s111
    %s115 = sphi 0, %s114
    %s131 = sphi 0, %s115
  $region4: #{encoder_forward.10} parent=0 // loop_header_branch
    %12 = sbr.rel (%p10) target = $region8
  $region5: #{encoder_forward.10} parent=0 // loop_body
    %s14 = ssub.s32 %s9, 1
    %s15 = ssub.s32 %s9, 2
    %s22 = sadd.s32 1, %s17
    %p23 = scmp.ge.s32.totalorder %s22, 1
    %s24 = scalar_select %p23, 0, %s22
    %s25 = sadd.s32 1, %s16
    %s26 = scalar_select %p23, %s25, %s16
    %p27 = scmp.ge.s32.totalorder %s26, 2
    %s28 = scalar_select %p27, 0, %s26
    %s29 = ssub.s32 %s16, %s28
    %p30 = scmp.eq.s32.totalorder %s29, 0
    %s32 = sadd.s32 %s31, 1
    %s33 = scalar_select %p30, %s31, %s32
    %p36 = pneg %p30
    %p37 = scmp.eq.s32.totalorder %s9, 1
    %p38 = por %p36, %p37
    %p39 = scmp.ne.s32.totalorder %s31, %s34
    %p40 = scmp.eq.s32.totalorder %s9, 0
    %p41 = por %p39, %p40
    %p42 = scmp.ne.s32.totalorder %s31, %s34
    %p43 = scmp.eq.s32.totalorder %s14, 1
    %p44 = por %p42, %p43
    %p45 = scmp.ne.s32.totalorder %s34, %s35
    %p46 = scmp.eq.s32.totalorder %s14, 0
    %p47 = por %p45, %p46
    %p48 = scmp.ne.s32.totalorder %s34, %s35
    %p49 = scmp.eq.s32.totalorder %s15, 1
    %p50 = por %p48, %p49
    %p52 = scmp.ne.s32.totalorder %s35, %s51
    %p53 = scmp.eq.s32.totalorder %s15, 0
    %p54 = por %p52, %p53
    %s55 = ssub.s32 %s17, %s24
    %p56 = scmp.eq.s32.totalorder %s55, 0
    %s58 = sadd.s32 %s57, 1
    %s59 = scalar_select %p56, %s57, %s58
    %p62 = pneg %p56
    %p63 = scmp.eq.s32.totalorder %s9, 1
    %p64 = por %p62, %p63
    %p65 = scmp.ne.s32.totalorder %s57, %s60
    %p66 = scmp.eq.s32.totalorder %s9, 0
    %p67 = por %p65, %p66
    %p68 = scmp.ne.s32.totalorder %s57, %s60
    %p69 = scmp.eq.s32.totalorder %s14, 1
    %p70 = por %p68, %p69
    %p71 = scmp.ne.s32.totalorder %s60, %s61
    %p72 = scmp.eq.s32.totalorder %s14, 0
    %p73 = por %p71, %p72
    %p74 = scmp.ne.s32.totalorder %s60, %s61
    %p75 = scmp.eq.s32.totalorder %s15, 1
    %p76 = por %p74, %p75
    %p78 = scmp.ne.s32.totalorder %s61, %s77
    %p79 = scmp.eq.s32.totalorder %s15, 0
    %p80 = por %p78, %p79
    %s81 = ssub.s32 %s17, %s24
    %p82 = scmp.eq.s32.totalorder %s81, 0
    %s84 = sadd.s32 %s83, 1
    %s85 = scalar_select %p82, %s83, %s84
    %p88 = pneg %p82
    %p89 = scmp.eq.s32.totalorder %s9, 1
    %p90 = por %p88, %p89
    %p91 = scmp.ne.s32.totalorder %s83, %s86
    %p92 = scmp.eq.s32.totalorder %s9, 0
    %p93 = por %p91, %p92
    %p94 = scmp.ne.s32.totalorder %s83, %s86
    %p95 = scmp.eq.s32.totalorder %s14, 1
    %p96 = por %p94, %p95
    %p97 = scmp.ne.s32.totalorder %s86, %s87
    %p98 = scmp.eq.s32.totalorder %s14, 0
    %p99 = por %p97, %p98
    %p100 = scmp.ne.s32.totalorder %s86, %s87
    %p101 = scmp.eq.s32.totalorder %s15, 1
    %p102 = por %p100, %p101
    %p104 = scmp.ne.s32.totalorder %s87, %s103
    %p105 = scmp.eq.s32.totalorder %s15, 0
    %p106 = por %p104, %p105
    %s107 = ssub.s32 %s16, %s28
    %s108 = ssub.s32 %s17, %s24
    %s109 = sor.u32 %s107, %s108
    %p110 = scmp.eq.s32.totalorder %s109, 0
    %s112 = sadd.s32 %s111, 1
    %s113 = scalar_select %p110, %s111, %s112
    %p116 = pneg %p110
    %p117 = scmp.eq.s32.totalorder %s9, 1
    %p118 = por %p116, %p117
    %p119 = scmp.ne.s32.totalorder %s111, %s114
    %p120 = scmp.eq.s32.totalorder %s9, 0
    %p121 = por %p119, %p120
    %p122 = scmp.ne.s32.totalorder %s111, %s114
    %p123 = scmp.eq.s32.totalorder %s14, 1
    %p124 = por %p122, %p123
    %p125 = scmp.ne.s32.totalorder %s114, %s115
    %p126 = scmp.eq.s32.totalorder %s14, 0
    %p127 = por %p125, %p126
    %p128 = scmp.ne.s32.totalorder %s114, %s115
    %p129 = scmp.eq.s32.totalorder %s15, 1
    %p130 = por %p128, %p129
    %p132 = scmp.ne.s32.totalorder %s115, %s131
    %p133 = scmp.eq.s32.totalorder %s15, 0
    %p134 = por %p132, %p133
    %p135 = scmp.le.s32.totalorder 1, %s9
    %p136 = scmp.lt.s32.totalorder %s9, 3
    %p137 = pnand %p135, %p136
    %p138 = pneg %p137
    // Predicated region
    $region9: #{encoder_forward.10} parent=5 // pred_check
      _
    $region10: #{encoder_forward.10} parent=5 // pred_check_branch
      %140 = sbr.rel (%p137) target = $region12
    $region11: #{encoder_forward.10} parent=5 // pred_region
      %s141 = ssub.s32 %s9, 1
      // Predicated region
      $region13: #{encoder_forward.10} parent=11 // pred_check
        %p142 = pneg %p73
      $region14: #{encoder_forward.10} parent=11 // pred_check_branch
        %144 = sbr.rel (%p142) target = $region16
      $region15: #{encoder_forward.10} parent=11 // pred_region
        %p145 = scmp.lt.s32.totalorder %s19, 0
        %s146 = scalar_select %p145, %s19, 0
        %s147 = smul.addr %s146, 4
        %s148 = scalar_lea.vmem %s1, %s147
      $region16: #{encoder_forward.10} parent=11 // pred_fallthru
        _
      // Predicated region
      $region17: #{encoder_forward.10} parent=11 // pred_check
        %p149 = pneg %p99
      $region18: #{encoder_forward.10} parent=11 // pred_check_branch
        %151 = sbr.rel (%p149) target = $region20
      $region19: #{encoder_forward.10} parent=11 // pred_region
        %p152 = scmp.lt.s32.totalorder %s19, 0
        %s153 = scalar_select %p152, %s19, 0
        %s154 = scalar_lea.vmem %s2, %s153
      $region20: #{encoder_forward.10} parent=11 // pred_fallthru
        _
    $region12: #{encoder_forward.10} parent=5 // pred_fallthru
      _
    %p155 = scmp.lt.s32.totalorder %s9, 2
    // Predicated region
    $region21: #{encoder_forward.10} parent=5 // pred_check
      %p156 = pneg %p155
    $region22: #{encoder_forward.10} parent=5 // pred_check_branch
      %158 = sbr.rel (%p156) target = $region24
    $region23: #{encoder_forward.10} parent=5 // pred_region
      // Predicated region
      $region25: #{encoder_forward.10} parent=23 // pred_check
        %p159 = pneg %p41
      $region26: #{encoder_forward.10} parent=23 // pred_check_branch
        %161 = sbr.rel (%p159) target = $region28
      $region27: #{encoder_forward.10} parent=23 // pred_region
        %s162 = smul.u32 32, %s16
        %p163 = scmp.lt.s32.totalorder %s162, 63
        %s164 = scalar_select %p163, %s162, 63
        %s165 = smul.addr %s164, 2
        %s166 = smul.addr %s165, 4
        %s167 = scalar_lea.vmem %s0, %s166
        %s168 = smul.u32 32, %s16
      $region28: #{encoder_forward.10} parent=23 // pred_fallthru
        _
    $region24: #{encoder_forward.10} parent=5 // pred_fallthru
      _
    %p169 = scmp.le.s32.totalorder 1, %s9
    %p170 = scmp.lt.s32.totalorder %s9, 3
    %p171 = pnand %p169, %p170
    %p172 = pneg %p171
    // Predicated region
    $region29: #{encoder_forward.10} parent=5 // pred_check
      _
    $region30: #{encoder_forward.10} parent=5 // pred_check_branch
      %174 = sbr.rel (%p171) target = $region32
    $region31: #{encoder_forward.10} parent=5 // pred_region
      %s175 = ssub.s32 %s9, 1
      %s176 = smul.u32 32, %s18
      %p177 = scmp.lt.s32.totalorder %s176, 63
      %s178 = scalar_select %p177, %s176, 63
      %s179 = smul.addr %s178, 2
      %s180 = smul.addr %s179, 4
      %s181 = scalar_lea.vmem %s0, %s180
      %p182 = pneg %p47
      %p183 = pneg %p44
      %p184 = scmp.lt.s32.totalorder %s19, 0
      %s185 = scalar_select %p184, %s19, 0
      %s186 = smul.addr %s185, 4
      %s187 = scalar_lea.vmem %s1, %s186
      %p188 = pneg %p73
      %p189 = pneg %p70
      %p190 = scmp.lt.s32.totalorder %s19, 0
      %s191 = scalar_select %p190, %s19, 0
      %s192 = scalar_lea.vmem %s2, %s191
      %p193 = pneg %p99
      %p194 = pneg %p96
      %p195 = pneg %p127
      %p196 = pneg %p124
      %s197 = smul.u32 32, %s18
      %p198 = scmp.lt.s32.totalorder %s197, 63
      %s199 = scalar_select %p198, %s197, 63
      %p200 = scmp.lt.s32.totalorder %s19, 0
      %s201 = scalar_select %p200, %s19, 0
      %s202 = sadd.s32 %s201, %s199
      %s203 = smul.addr %s202, 4
      %s204 = scalar_lea.vmem %s3, %s203
      %s205 = smul.u32 32, %s18
      %p206 = scmp.lt.s32.totalorder %s205, 63
      %s207 = scalar_select %p206, %s205, 63
      %s208 = smul.addr %s207, 2
      %s209 = smul.addr %s208, 4
      %s210 = scalar_lea.vmem %s0, %s209
      %s211 = smul.u32 32, %s18
      %p212 = scmp.lt.s32.totalorder %s19, 0
      %s213 = scalar_select %p212, %s19, 0
      %s214 = smul.addr %s213, 4
      %s215 = scalar_lea.vmem %s1, %s214
      %p216 = scmp.lt.s32.totalorder %s19, 0
      %s217 = scalar_select %p216, %s19, 0
      %s218 = scalar_lea.vmem %s2, %s217
      %s219 = smul.u32 32, %s18
      %p220 = scmp.lt.s32.totalorder %s219, 63
      %s221 = scalar_select %p220, %s219, 63
      %p222 = scmp.lt.s32.totalorder %s19, 0
      %s223 = scalar_select %p222, %s19, 0
      %s224 = sadd.s32 %s223, %s221
      %s225 = smul.addr %s224, 4
      %s226 = scalar_lea.vmem %s3, %s225
      %s227 = smul.u32 32, %s18
      %v228 = vld [vmem:[%s210] sm:$0xff]
      %v229 = vld [vmem:[%s210 + $0x8] sm:$0xff]
      %v230 = vld [vmem:[%s210 + $0x10] sm:$0xff]
      %v231 = vld [vmem:[%s210 + $0x18] sm:$0xff]
      %v232 = vld [vmem:[%s210 + $0x20] sm:$0xff]
      %v233 = vld [vmem:[%s210 + $0x28] sm:$0xff]
      %v234 = vld [vmem:[%s210 + $0x30] sm:$0xff]
      %v235 = vld [vmem:[%s210 + $0x38] sm:$0xff]
      %v236 = vld [vmem:[%s210 + $0x40] sm:$0xff]
      %v237 = vld [vmem:[%s210 + $0x48] sm:$0xff]
      %v238 = vld [vmem:[%s210 + $0x50] sm:$0xff]
      %v239 = vld [vmem:[%s210 + $0x58] sm:$0xff]
      %v240 = vld [vmem:[%s210 + $0x60] sm:$0xff]
      %v241 = vld [vmem:[%s210 + $0x68] sm:$0xff]
      %v242 = vld [vmem:[%s210 + $0x70] sm:$0xff]
      %v243 = vld [vmem:[%s210 + $0x78] sm:$0xff]
      %v244 = vld [vmem:[%s210 + $0x80] sm:$0xff]
      %v245 = vld [vmem:[%s210 + $0x88] sm:$0xff]
      %v246 = vld [vmem:[%s210 + $0x90] sm:$0xff]
      %v247 = vld [vmem:[%s210 + $0x98] sm:$0xff]
      %v248 = vld [vmem:[%s210 + $0xa0] sm:$0xff]
      %v249 = vld [vmem:[%s210 + $0xa8] sm:$0xff]
      %v250 = vld [vmem:[%s210 + $0xb0] sm:$0xff]
      %v251 = vld [vmem:[%s210 + $0xb8] sm:$0xff]
      %v252 = vld [vmem:[%s210 + $0xc0] sm:$0xff]
      %v253 = vld [vmem:[%s210 + $0xc8] sm:$0xff]
      %v254 = vld [vmem:[%s210 + $0xd0] sm:$0xff]
      %v255 = vld [vmem:[%s210 + $0xd8] sm:$0xff]
      %v256 = vld [vmem:[%s210 + $0xe0] sm:$0xff]
      %v257 = vld [vmem:[%s210 + $0xe8] sm:$0xff]
      %v258 = vld [vmem:[%s210 + $0xf0] sm:$0xff]
      %v259 = vld [vmem:[%s210 + $0xf8] sm:$0xff]
      %v260 = vld [vmem:[%s215] sm:$0xf]
      %v261 = vld [vmem:[%s215 + $0x4] sm:$0xf]
      %v262 = vld [vmem:[%s215 + $0x8] sm:$0xf]
      %v263 = vld [vmem:[%s215 + $0xc] sm:$0xf]
      %v264 = vld [vmem:[%s215 + $0x10] sm:$0xf]
      %v265 = vld [vmem:[%s215 + $0x14] sm:$0xf]
      %v266 = vld [vmem:[%s215 + $0x18] sm:$0xf]
      %v267 = vld [vmem:[%s215 + $0x1c] sm:$0xf]
      %v268 = vld [vmem:[%s215 + $0x20] sm:$0xf]
      %v269 = vld [vmem:[%s215 + $0x24] sm:$0xf]
      %v270 = vld [vmem:[%s215 + $0x28] sm:$0xf]
      %v271 = vld [vmem:[%s215 + $0x2c] sm:$0xf]
      %v272 = vld [vmem:[%s215 + $0x30] sm:$0xf]
      %v273 = vld [vmem:[%s215 + $0x34] sm:$0xf]
      %v274 = vld [vmem:[%s215 + $0x38] sm:$0xf]
      %v275 = vld [vmem:[%s215 + $0x3c] sm:$0xf]
      %v276 = vld [vmem:[%s215 + $0x40] sm:$0xf]
      %v277 = vld [vmem:[%s215 + $0x44] sm:$0xf]
      %v278 = vld [vmem:[%s215 + $0x48] sm:$0xf]
      %v279 = vld [vmem:[%s215 + $0x4c] sm:$0xf]
      %v280 = vld [vmem:[%s215 + $0x50] sm:$0xf]
      %v281 = vld [vmem:[%s215 + $0x54] sm:$0xf]
      %v282 = vld [vmem:[%s215 + $0x58] sm:$0xf]
      %v283 = vld [vmem:[%s215 + $0x5c] sm:$0xf]
      %v284 = vld [vmem:[%s215 + $0x60] sm:$0xf]
      %v285 = vld [vmem:[%s215 + $0x64] sm:$0xf]
      %v286 = vld [vmem:[%s215 + $0x68] sm:$0xf]
      %v287 = vld [vmem:[%s215 + $0x6c] sm:$0xf]
      %v288 = vld [vmem:[%s215 + $0x70] sm:$0xf]
      %v289 = vld [vmem:[%s215 + $0x74] sm:$0xf]
      %v290 = vld [vmem:[%s215 + $0x78] sm:$0xf]
      %v291 = vld [vmem:[%s215 + $0x7c] sm:$0xf]
      %v292 = vld [vmem:[%s218] sm:$0x1]
      %v294 = vperm.slane %v292, 0
      %v328 = vunpack.c.l.b16 %v228
      %v329 = vunpack.c.h.b16 %v228
      %v330 = vunpack.c.l.b16 %v229
      %v331 = vunpack.c.h.b16 %v229
      %v332 = vunpack.c.l.b16 %v230
      %v333 = vunpack.c.h.b16 %v230
      %v334 = vunpack.c.l.b16 %v231
      %v335 = vunpack.c.h.b16 %v231
      %v336 = vunpack.c.l.b16 %v232
      %v337 = vunpack.c.h.b16 %v232
      %v338 = vunpack.c.l.b16 %v233
      %v339 = vunpack.c.h.b16 %v233
      %v340 = vunpack.c.l.b16 %v234
      %v341 = vunpack.c.h.b16 %v234
      %v342 = vunpack.c.l.b16 %v235
      %v343 = vunpack.c.h.b16 %v235
      %v344 = vunpack.c.l.b16 %v236
      %v345 = vunpack.c.h.b16 %v236
      %v346 = vunpack.c.l.b16 %v237
      %v347 = vunpack.c.h.b16 %v237
      %v348 = vunpack.c.l.b16 %v238
      %v349 = vunpack.c.h.b16 %v238
      %v350 = vunpack.c.l.b16 %v239
      %v351 = vunpack.c.h.b16 %v239
      %v352 = vunpack.c.l.b16 %v240
      %v353 = vunpack.c.h.b16 %v240
      %v354 = vunpack.c.l.b16 %v241
      %v355 = vunpack.c.h.b16 %v241
      %v356 = vunpack.c.l.b16 %v242
      %v357 = vunpack.c.h.b16 %v242
      %v358 = vunpack.c.l.b16 %v243
      %v359 = vunpack.c.h.b16 %v243
      %v360 = vunpack.c.l.b16 %v244
      %v361 = vunpack.c.h.b16 %v244
      %v362 = vunpack.c.l.b16 %v245
      %v363 = vunpack.c.h.b16 %v245
      %v364 = vunpack.c.l.b16 %v246
      %v365 = vunpack.c.h.b16 %v246
      %v366 = vunpack.c.l.b16 %v247
      %v367 = vunpack.c.h.b16 %v247
      %v368 = vunpack.c.l.b16 %v248
      %v369 = vunpack.c.h.b16 %v248
      %v370 = vunpack.c.l.b16 %v249
      %v371 = vunpack.c.h.b16 %v249
      %v372 = vunpack.c.l.b16 %v250
      %v373 = vunpack.c.h.b16 %v250
      %v374 = vunpack.c.l.b16 %v251
      %v375 = vunpack.c.h.b16 %v251
      %v376 = vunpack.c.l.b16 %v252
      %v377 = vunpack.c.h.b16 %v252
      %v378 = vunpack.c.l.b16 %v253
      %v379 = vunpack.c.h.b16 %v253
      %v380 = vunpack.c.l.b16 %v254
      %v381 = vunpack.c.h.b16 %v254
      %v382 = vunpack.c.l.b16 %v255
      %v383 = vunpack.c.h.b16 %v255
      %v384 = vunpack.c.l.b16 %v256
      %v385 = vunpack.c.h.b16 %v256
      %v386 = vunpack.c.l.b16 %v257
      %v387 = vunpack.c.h.b16 %v257
      %v388 = vunpack.c.l.b16 %v258
      %v389 = vunpack.c.h.b16 %v258
      %v390 = vunpack.c.l.b16 %v259
      %v391 = vunpack.c.h.b16 %v259
      %v392 = vpack.c.b16 %v330, %v328
      %v393 = vpack.c.b16 %v331, %v329
      %v394 = vpack.c.b16 %v334, %v332
      %v395 = vpack.c.b16 %v335, %v333
      %v396 = vpack.c.b16 %v338, %v336
      %v397 = vpack.c.b16 %v339, %v337
      %v398 = vpack.c.b16 %v342, %v340
      %v399 = vpack.c.b16 %v343, %v341
      %v400 = vpack.c.b16 %v346, %v344
      %v401 = vpack.c.b16 %v347, %v345
      %v402 = vpack.c.b16 %v350, %v348
      %v403 = vpack.c.b16 %v351, %v349
      %v404 = vpack.c.b16 %v354, %v352
      %v405 = vpack.c.b16 %v355, %v353
      %v406 = vpack.c.b16 %v358, %v356
      %v407 = vpack.c.b16 %v359, %v357
      %v408 = vpack.c.b16 %v362, %v360
      %v409 = vpack.c.b16 %v363, %v361
      %v410 = vpack.c.b16 %v366, %v364
      %v411 = vpack.c.b16 %v367, %v365
      %v412 = vpack.c.b16 %v370, %v368
      %v413 = vpack.c.b16 %v371, %v369
      %v414 = vpack.c.b16 %v374, %v372
      %v415 = vpack.c.b16 %v375, %v373
      %v416 = vpack.c.b16 %v378, %v376
      %v417 = vpack.c.b16 %v379, %v377
      %v418 = vpack.c.b16 %v382, %v380
      %v419 = vpack.c.b16 %v383, %v381
      %v420 = vpack.c.b16 %v386, %v384
      %v421 = vpack.c.b16 %v387, %v385
      %v422 = vpack.c.b16 %v390, %v388
      %v423 = vpack.c.b16 %v391, %v389
      %v488 = vunpack.c.l.b16 %v260
      %v489 = vunpack.c.l.b16 %v261
      %v490 = vunpack.c.l.b16 %v262
      %v491 = vunpack.c.l.b16 %v263
      %v492 = vunpack.c.l.b16 %v264
      %v493 = vunpack.c.l.b16 %v265
      %v494 = vunpack.c.l.b16 %v266
      %v495 = vunpack.c.l.b16 %v267
      %v496 = vunpack.c.l.b16 %v268
      %v497 = vunpack.c.l.b16 %v269
      %v498 = vunpack.c.l.b16 %v270
      %v499 = vunpack.c.l.b16 %v271
      %v500 = vunpack.c.l.b16 %v272
      %v501 = vunpack.c.l.b16 %v273
      %v502 = vunpack.c.l.b16 %v274
      %v503 = vunpack.c.l.b16 %v275
      %v504 = vunpack.c.l.b16 %v276
      %v505 = vunpack.c.l.b16 %v277
      %v506 = vunpack.c.l.b16 %v278
      %v507 = vunpack.c.l.b16 %v279
      %v508 = vunpack.c.l.b16 %v280
      %v509 = vunpack.c.l.b16 %v281
      %v510 = vunpack.c.l.b16 %v282
      %v511 = vunpack.c.l.b16 %v283
      %v512 = vunpack.c.l.b16 %v284
      %v513 = vunpack.c.l.b16 %v285
      %v514 = vunpack.c.l.b16 %v286
      %v515 = vunpack.c.l.b16 %v287
      %v516 = vunpack.c.l.b16 %v288
      %v517 = vunpack.c.l.b16 %v289
      %v518 = vunpack.c.l.b16 %v290
      %v519 = vunpack.c.l.b16 %v291
      %v520 = vpack.c.b16 %v489, %v488
      %v521 = vpack.c.b16 %v491, %v490
      %v522 = vpack.c.b16 %v493, %v492
      %v523 = vpack.c.b16 %v495, %v494
      %v524 = vpack.c.b16 %v497, %v496
      %v525 = vpack.c.b16 %v499, %v498
      %v526 = vpack.c.b16 %v501, %v500
      %v527 = vpack.c.b16 %v503, %v502
      %v528 = vpack.c.b16 %v505, %v504
      %v529 = vpack.c.b16 %v507, %v506
      %v530 = vpack.c.b16 %v509, %v508
      %v531 = vpack.c.b16 %v511, %v510
      %v532 = vpack.c.b16 %v513, %v512
      %v533 = vpack.c.b16 %v515, %v514
      %v534 = vpack.c.b16 %v517, %v516
      %v535 = vpack.c.b16 %v519, %v518
      %552 = vmatpush.bf16.msra.mxu0 %v527
      %553 = vmatpush.bf16.msra.mxu0 %v526
      %554 = vmatpush.bf16.msra.mxu0 %v525
      %555 = vmatpush.bf16.msra.mxu0 %v524
      %556 = vmatpush.bf16.msra.mxu0 %v523
      %557 = vmatpush.bf16.msra.mxu0 %v522
      %558 = vmatpush.bf16.msra.mxu0 %v521
      %559 = vmatpush.bf16.msra.mxu0 %v520
      %560 = vmatmul.bf16.gmra.mxu0 %v392
      %v561 = vpop.f32.mrf.mxu0
      %v562 = vadd.f32 %v294, %v561
      %v563 = vpop.f32.mrf.mxu0
      %v564 = vadd.f32 %v294, %v563
      %565 = vmatmul.bf16.gmra.mxu0 %v394
      %v566 = vpop.f32.mrf.mxu0
      %v567 = vadd.f32 %v294, %v566
      %v568 = vpop.f32.mrf.mxu0
      %v569 = vadd.f32 %v294, %v568
      %570 = vmatmul.bf16.gmra.mxu0 %v396
      %v571 = vpop.f32.mrf.mxu0
      %v572 = vadd.f32 %v294, %v571
      %v573 = vpop.f32.mrf.mxu0
      %v574 = vadd.f32 %v294, %v573
      %575 = vmatmul.bf16.gmra.mxu0 %v398
      %v576 = vpop.f32.mrf.mxu0
      %v577 = vadd.f32 %v294, %v576
      %v578 = vpop.f32.mrf.mxu0
      %v579 = vadd.f32 %v294, %v578
      %580 = vmatmul.bf16.gmra.mxu0 %v400
      %v581 = vpop.f32.mrf.mxu0
      %v582 = vadd.f32 %v294, %v581
      %v583 = vpop.f32.mrf.mxu0
      %v584 = vadd.f32 %v294, %v583
      %585 = vmatmul.bf16.gmra.mxu0 %v402
      %v586 = vpop.f32.mrf.mxu0
      %v587 = vadd.f32 %v294, %v586
      %v588 = vpop.f32.mrf.mxu0
      %v589 = vadd.f32 %v294, %v588
      %590 = vmatmul.bf16.gmra.mxu0 %v404
      %v591 = vpop.f32.mrf.mxu0
      %v592 = vadd.f32 %v294, %v591
      %v593 = vpop.f32.mrf.mxu0
      %v594 = vadd.f32 %v294, %v593
      %595 = vmatmul.bf16.gmra.mxu0 %v406
      %v596 = vpop.f32.mrf.mxu0
      %v597 = vadd.f32 %v294, %v596
      %v598 = vpop.f32.mrf.mxu0
      %v599 = vadd.f32 %v294, %v598
      %600 = vmatmul.bf16.gmra.mxu0 %v408
      %v601 = vpop.f32.mrf.mxu0
      %v602 = vadd.f32 %v294, %v601
      %v603 = vpop.f32.mrf.mxu0
      %v604 = vadd.f32 %v294, %v603
      %605 = vmatmul.bf16.gmra.mxu0 %v410
      %v606 = vpop.f32.mrf.mxu0
      %v607 = vadd.f32 %v294, %v606
      %v608 = vpop.f32.mrf.mxu0
      %v609 = vadd.f32 %v294, %v608
      %610 = vmatmul.bf16.gmra.mxu0 %v412
      %v611 = vpop.f32.mrf.mxu0
      %v612 = vadd.f32 %v294, %v611
      %v613 = vpop.f32.mrf.mxu0
      %v614 = vadd.f32 %v294, %v613
      %615 = vmatmul.bf16.gmra.mxu0 %v414
      %v616 = vpop.f32.mrf.mxu0
      %v617 = vadd.f32 %v294, %v616
      %v618 = vpop.f32.mrf.mxu0
      %v619 = vadd.f32 %v294, %v618
      %620 = vmatmul.bf16.gmra.mxu0 %v416
      %v621 = vpop.f32.mrf.mxu0
      %v622 = vadd.f32 %v294, %v621
      %v623 = vpop.f32.mrf.mxu0
      %v624 = vadd.f32 %v294, %v623
      %625 = vmatmul.bf16.gmra.mxu0 %v418
      %v626 = vpop.f32.mrf.mxu0
      %v627 = vadd.f32 %v294, %v626
      %v628 = vpop.f32.mrf.mxu0
      %v629 = vadd.f32 %v294, %v628
      %630 = vmatmul.bf16.gmra.mxu0 %v420
      %v631 = vpop.f32.mrf.mxu0
      %v632 = vadd.f32 %v294, %v631
      %v633 = vpop.f32.mrf.mxu0
      %v634 = vadd.f32 %v294, %v633
      %635 = vmatmul.bf16.gmra.mxu0 %v422
      %v636 = vpop.f32.mrf.mxu0
      %v637 = vadd.f32 %v294, %v636
      %v638 = vpop.f32.mrf.mxu0
      %v639 = vadd.f32 %v294, %v638
      %640 = vdwg.mxu0
      %641 = vmatpush.bf16.msra.mxu0 %v535
      %642 = vmatpush.bf16.msra.mxu0 %v534
      %643 = vmatpush.bf16.msra.mxu0 %v533
      %644 = vmatpush.bf16.msra.mxu0 %v532
      %645 = vmatpush.bf16.msra.mxu0 %v531
      %646 = vmatpush.bf16.msra.mxu0 %v530
      %647 = vmatpush.bf16.msra.mxu0 %v529
      %648 = vmatpush.bf16.msra.mxu0 %v528
      %649 = vmatmul.bf16.gmra.mxu0 %v393
      %v650 = vpop.f32.mrf.mxu0
      %v651 = vadd.f32 %v562, %v650
      %v652 = vpop.f32.mrf.mxu0
      %v653 = vadd.f32 %v564, %v652
      %654 = vmatmul.bf16.gmra.mxu0 %v395
      %v655 = vpop.f32.mrf.mxu0
      %v656 = vadd.f32 %v567, %v655
      %v657 = vpop.f32.mrf.mxu0
      %v658 = vadd.f32 %v569, %v657
      %659 = vmatmul.bf16.gmra.mxu0 %v397
      %v660 = vpop.f32.mrf.mxu0
      %v661 = vadd.f32 %v572, %v660
      %v662 = vpop.f32.mrf.mxu0
      %v663 = vadd.f32 %v574, %v662
      %664 = vmatmul.bf16.gmra.mxu0 %v399
      %v665 = vpop.f32.mrf.mxu0
      %v666 = vadd.f32 %v577, %v665
      %v667 = vpop.f32.mrf.mxu0
      %v668 = vadd.f32 %v579, %v667
      %669 = vmatmul.bf16.gmra.mxu0 %v401
      %v670 = vpop.f32.mrf.mxu0
      %v671 = vadd.f32 %v582, %v670
      %v672 = vpop.f32.mrf.mxu0
      %v673 = vadd.f32 %v584, %v672
      %674 = vmatmul.bf16.gmra.mxu0 %v403
      %v675 = vpop.f32.mrf.mxu0
      %v676 = vadd.f32 %v587, %v675
      %v677 = vpop.f32.mrf.mxu0
      %v678 = vadd.f32 %v589, %v677
      %679 = vmatmul.bf16.gmra.mxu0 %v405
      %v680 = vpop.f32.mrf.mxu0
      %v681 = vadd.f32 %v592, %v680
      %v682 = vpop.f32.mrf.mxu0
      %v683 = vadd.f32 %v594, %v682
      %684 = vmatmul.bf16.gmra.mxu0 %v407
      %v685 = vpop.f32.mrf.mxu0
      %v686 = vadd.f32 %v597, %v685
      %v687 = vpop.f32.mrf.mxu0
      %v688 = vadd.f32 %v599, %v687
      %689 = vmatmul.bf16.gmra.mxu0 %v409
      %v690 = vpop.f32.mrf.mxu0
      %v691 = vadd.f32 %v602, %v690
      %v692 = vpop.f32.mrf.mxu0
      %v693 = vadd.f32 %v604, %v692
      %694 = vmatmul.bf16.gmra.mxu0 %v411
      %v695 = vpop.f32.mrf.mxu0
      %v696 = vadd.f32 %v607, %v695
      %v697 = vpop.f32.mrf.mxu0
      %v698 = vadd.f32 %v609, %v697
      %699 = vmatmul.bf16.gmra.mxu0 %v413
      %v700 = vpop.f32.mrf.mxu0
      %v701 = vadd.f32 %v612, %v700
      %v702 = vpop.f32.mrf.mxu0
      %v703 = vadd.f32 %v614, %v702
      %704 = vmatmul.bf16.gmra.mxu0 %v415
      %v705 = vpop.f32.mrf.mxu0
      %v706 = vadd.f32 %v617, %v705
      %v707 = vpop.f32.mrf.mxu0
      %v708 = vadd.f32 %v619, %v707
      %709 = vmatmul.bf16.gmra.mxu0 %v417
      %v710 = vpop.f32.mrf.mxu0
      %v711 = vadd.f32 %v622, %v710
      %v712 = vpop.f32.mrf.mxu0
      %v713 = vadd.f32 %v624, %v712
      %714 = vmatmul.bf16.gmra.mxu0 %v419
      %v715 = vpop.f32.mrf.mxu0
      %v716 = vadd.f32 %v627, %v715
      %v717 = vpop.f32.mrf.mxu0
      %v718 = vadd.f32 %v629, %v717
      %719 = vmatmul.bf16.gmra.mxu0 %v421
      %v720 = vpop.f32.mrf.mxu0
      %v721 = vadd.f32 %v632, %v720
      %v722 = vpop.f32.mrf.mxu0
      %v723 = vadd.f32 %v634, %v722
      %724 = vmatmul.bf16.gmra.mxu0 %v423
      %v725 = vpop.f32.mrf.mxu0
      %v726 = vadd.f32 %v637, %v725
      %v727 = vpop.f32.mrf.mxu0
      %v728 = vadd.f32 %v639, %v727
      %729 = vdwg.mxu0
      %v730 = vmax.f32 %v651, 0.0
      %v731 = vmax.f32 %v653, 0.0
      %v732 = vmax.f32 %v656, 0.0
      %v733 = vmax.f32 %v658, 0.0
      %v734 = vmax.f32 %v661, 0.0
      %v735 = vmax.f32 %v663, 0.0
      %v736 = vmax.f32 %v666, 0.0
      %v737 = vmax.f32 %v668, 0.0
      %v738 = vmax.f32 %v671, 0.0
      %v739 = vmax.f32 %v673, 0.0
      %v740 = vmax.f32 %v676, 0.0
      %v741 = vmax.f32 %v678, 0.0
      %v742 = vmax.f32 %v681, 0.0
      %v743 = vmax.f32 %v683, 0.0
      %v744 = vmax.f32 %v686, 0.0
      %v745 = vmax.f32 %v688, 0.0
      %v746 = vmax.f32 %v691, 0.0
      %v747 = vmax.f32 %v693, 0.0
      %v748 = vmax.f32 %v696, 0.0
      %v749 = vmax.f32 %v698, 0.0
      %v750 = vmax.f32 %v701, 0.0
      %v751 = vmax.f32 %v703, 0.0
      %v752 = vmax.f32 %v706, 0.0
      %v753 = vmax.f32 %v708, 0.0
      %v754 = vmax.f32 %v711, 0.0
      %v755 = vmax.f32 %v713, 0.0
      %v756 = vmax.f32 %v716, 0.0
      %v757 = vmax.f32 %v718, 0.0
      %v758 = vmax.f32 %v721, 0.0
      %v759 = vmax.f32 %v723, 0.0
      %v760 = vmax.f32 %v726, 0.0
      %v761 = vmax.f32 %v728, 0.0
      %v762 = vpack.c.bf16 %v730, %v730
      %v763 = vpack.c.bf16 %v731, %v731
      %v764 = vpack.c.bf16 %v732, %v732
      %v765 = vpack.c.bf16 %v733, %v733
      %v766 = vpack.c.bf16 %v734, %v734
      %v767 = vpack.c.bf16 %v735, %v735
      %v768 = vpack.c.bf16 %v736, %v736
      %v769 = vpack.c.bf16 %v737, %v737
      %v770 = vpack.c.bf16 %v738, %v738
      %v771 = vpack.c.bf16 %v739, %v739
      %v772 = vpack.c.bf16 %v740, %v740
      %v773 = vpack.c.bf16 %v741, %v741
      %v774 = vpack.c.bf16 %v742, %v742
      %v775 = vpack.c.bf16 %v743, %v743
      %v776 = vpack.c.bf16 %v744, %v744
      %v777 = vpack.c.bf16 %v745, %v745
      %v778 = vpack.c.bf16 %v746, %v746
      %v779 = vpack.c.bf16 %v747, %v747
      %v780 = vpack.c.bf16 %v748, %v748
      %v781 = vpack.c.bf16 %v749, %v749
      %v782 = vpack.c.bf16 %v750, %v750
      %v783 = vpack.c.bf16 %v751, %v751
      %v784 = vpack.c.bf16 %v752, %v752
      %v785 = vpack.c.bf16 %v753, %v753
      %v786 = vpack.c.bf16 %v754, %v754
      %v787 = vpack.c.bf16 %v755, %v755
      %v788 = vpack.c.bf16 %v756, %v756
      %v789 = vpack.c.bf16 %v757, %v757
      %v790 = vpack.c.bf16 %v758, %v758
      %v791 = vpack.c.bf16 %v759, %v759
      %v792 = vpack.c.bf16 %v760, %v760
      %v793 = vpack.c.bf16 %v761, %v761
      %794 = vst [vmem:[%s226] sm:$0xf] %v762
      %795 = vst [vmem:[%s226 + $0x4] sm:$0xf] %v763
      %796 = vst [vmem:[%s226 + $0x8] sm:$0xf] %v764
      %797 = vst [vmem:[%s226 + $0xc] sm:$0xf] %v765
      %798 = vst [vmem:[%s226 + $0x10] sm:$0xf] %v766
      %799 = vst [vmem:[%s226 + $0x14] sm:$0xf] %v767
      %800 = vst [vmem:[%s226 + $0x18] sm:$0xf] %v768
      %801 = vst [vmem:[%s226 + $0x1c] sm:$0xf] %v769
      %802 = vst [vmem:[%s226 + $0x20] sm:$0xf] %v770
      %803 = vst [vmem:[%s226 + $0x24] sm:$0xf] %v771
      %804 = vst [vmem:[%s226 + $0x28] sm:$0xf] %v772
      %805 = vst [vmem:[%s226 + $0x2c] sm:$0xf] %v773
      %806 = vst [vmem:[%s226 + $0x30] sm:$0xf] %v774
      %807 = vst [vmem:[%s226 + $0x34] sm:$0xf] %v775
      %808 = vst [vmem:[%s226 + $0x38] sm:$0xf] %v776
      %809 = vst [vmem:[%s226 + $0x3c] sm:$0xf] %v777
      %810 = vst [vmem:[%s226 + $0x40] sm:$0xf] %v778
      %811 = vst [vmem:[%s226 + $0x44] sm:$0xf] %v779
      %812 = vst [vmem:[%s226 + $0x48] sm:$0xf] %v780
      %813 = vst [vmem:[%s226 + $0x4c] sm:$0xf] %v781
      %814 = vst [vmem:[%s226 + $0x50] sm:$0xf] %v782
      %815 = vst [vmem:[%s226 + $0x54] sm:$0xf] %v783
      %816 = vst [vmem:[%s226 + $0x58] sm:$0xf] %v784
      %817 = vst [vmem:[%s226 + $0x5c] sm:$0xf] %v785
      %818 = vst [vmem:[%s226 + $0x60] sm:$0xf] %v786
      %819 = vst [vmem:[%s226 + $0x64] sm:$0xf] %v787
      %820 = vst [vmem:[%s226 + $0x68] sm:$0xf] %v788
      %821 = vst [vmem:[%s226 + $0x6c] sm:$0xf] %v789
      %822 = vst [vmem:[%s226 + $0x70] sm:$0xf] %v790
      %823 = vst [vmem:[%s226 + $0x74] sm:$0xf] %v791
      %824 = vst [vmem:[%s226 + $0x78] sm:$0xf] %v792
      %825 = vst [vmem:[%s226 + $0x7c] sm:$0xf] %v793
      %s826 = smul.u32 32, %s18
      %p827 = scmp.lt.s32.totalorder %s826, 63
      %s828 = scalar_select %p827, %s826, 63
      %p829 = scmp.lt.s32.totalorder %s19, 0
      %s830 = scalar_select %p829, %s19, 0
      %s831 = sadd.s32 %s830, %s828
      %s832 = smul.addr %s831, 4
      %s833 = scalar_lea.vmem %s3, %s832
      // Predicated region
      $region33: #{encoder_forward.10} parent=31 // pred_check
        %p834 = pneg %p124
      $region34: #{encoder_forward.10} parent=31 // pred_check_branch
        %836 = sbr.rel (%p834) target = $region36
      $region35: #{encoder_forward.10} parent=31 // pred_region
        %s837 = smul.u32 32, %s18
      $region36: #{encoder_forward.10} parent=31 // pred_fallthru
        _
    $region32: #{encoder_forward.10} parent=5 // pred_fallthru
      _
    %p838 = scmp.le.s32.totalorder 2, %s9
    // Predicated region
    $region37: #{encoder_forward.10} parent=5 // pred_check
      %p839 = pneg %p838
    $region38: #{encoder_forward.10} parent=5 // pred_check_branch
      %841 = sbr.rel (%p839) target = $region40
    $region39: #{encoder_forward.10} parent=5 // pred_region
      %s842 = ssub.s32 %s9, 2
      // Predicated region
      $region41: #{encoder_forward.10} parent=39 // pred_check
        %p843 = pneg %p130
      $region42: #{encoder_forward.10} parent=39 // pred_check_branch
        %845 = sbr.rel (%p843) target = $region44
      $region43: #{encoder_forward.10} parent=39 // pred_region
        %s846 = smul.u32 32, %s20
        %p847 = scmp.lt.s32.totalorder %s846, 63
        %s848 = scalar_select %p847, %s846, 63
        %p849 = scmp.lt.s32.totalorder %s21, 0
        %s850 = scalar_select %p849, %s21, 0
        %s851 = sadd.s32 %s850, %s848
        %s852 = smul.addr %s851, 4
        %s853 = scalar_lea.vmem %s3, %s852
      $region44: #{encoder_forward.10} parent=39 // pred_fallthru
        _
    $region40: #{encoder_forward.10} parent=5 // pred_fallthru
      _
  $region6: #{encoder_forward.10} parent=0 // loop_footer
    %s13 = sadd.s32 1, %s9
  $region7: #{encoder_forward.10} parent=0 // loop_footer_branch
    %8 = sbr.rel target = $region3
  $region8: #{encoder_forward.10} parent=0 // loop_exit
    _

// kernel: encoder_forward.12
$region0: #{encoder_forward.12}
  #allocation0 [shape = 'u32[]', space=smem, size = 0x4, offset = 0x4, fixed_abs, tag = 'smem constant byte address 0x4 - core index']
  #allocation1 [shape = 'u32[72,128]{1,0:T(1,128)}', space=vmem, size = 0x9000, scoped, tag = 'internal scratch']
  %s0 = inlined_call_operand.vmem [shape: bf16[128,128], index: 0, kind: input, shape index: {}]
  %s1 = inlined_call_operand.vmem [shape: bf16[128,128], index: 1, kind: input, shape index: {}]
  %s2 = inlined_call_operand.vmem [shape: f32[1,128], index: 2, kind: input, shape index: {}]
  %s3 = inlined_call_operand.vmem [shape: bf16[128,128], index: 3, kind: output, shape index: {}]
  %s4 = sld [smem:[#allocation0]]
  $region45: #{encoder_forward.12} parent=0
    _
  %s6 = ssub.s32 1, %s4
  %s7 = scalar_select 0, %s6, %s4
  loop: start=0, step=1, limit=4
  $region2: #{encoder_forward.12} parent=0 // loop_pre_header
    _
  $region3: #{encoder_forward.12} parent=0 // loop_header
    %s9 = sphi 0, %s13
    %p10 = scmp.ge.s32.totalorder %s9, 4
    %s16 = sphi 0, %s28
    %s17 = sphi 0, %s24
    %s18 = sphi 0, %s16
    %s19 = sphi 0, %s17
    %s20 = sphi 0, %s18
    %s21 = sphi 0, %s19
    %s31 = sphi 0, %s33
    %s34 = sphi 0, %s31
    %s35 = sphi 0, %s34
    %s51 = sphi 0, %s35
    %s57 = sphi 0, %s59
    %s60 = sphi 0, %s57
    %s61 = sphi 0, %s60
    %s77 = sphi 0, %s61
    %s83 = sphi 0, %s85
    %s86 = sphi 0, %s83
    %s87 = sphi 0, %s86
    %s103 = sphi 0, %s87
    %s111 = sphi 0, %s113
    %s114 = sphi 0, %s111
    %s115 = sphi 0, %s114
    %s131 = sphi 0, %s115
  $region4: #{encoder_forward.12} parent=0 // loop_header_branch
    %12 = sbr.rel (%p10) target = $region8
  $region5: #{encoder_forward.12} parent=0 // loop_body
    %s14 = ssub.s32 %s9, 1
    %s15 = ssub.s32 %s9, 2
    %s22 = sadd.s32 1, %s17
    %p23 = scmp.ge.s32.totalorder %s22, 1
    %s24 = scalar_select %p23, 0, %s22
    %s25 = sadd.s32 1, %s16
    %s26 = scalar_select %p23, %s25, %s16
    %p27 = scmp.ge.s32.totalorder %s26, 2
    %s28 = scalar_select %p27, 0, %s26
    %s29 = ssub.s32 %s16, %s28
    %p30 = scmp.eq.s32.totalorder %s29, 0
    %s32 = sadd.s32 %s31, 1
    %s33 = scalar_select %p30, %s31, %s32
    %p36 = pneg %p30
    %p37 = scmp.eq.s32.totalorder %s9, 1
    %p38 = por %p36, %p37
    %p39 = scmp.ne.s32.totalorder %s31, %s34
    %p40 = scmp.eq.s32.totalorder %s9, 0
    %p41 = por %p39, %p40
    %p42 = scmp.ne.s32.totalorder %s31, %s34
    %p43 = scmp.eq.s32.totalorder %s14, 1
    %p44 = por %p42, %p43
    %p45 = scmp.ne.s32.totalorder %s34, %s35
    %p46 = scmp.eq.s32.totalorder %s14, 0
    %p47 = por %p45, %p46
    %p48 = scmp.ne.s32.totalorder %s34, %s35
    %p49 = scmp.eq.s32.totalorder %s15, 1
    %p50 = por %p48, %p49
    %p52 = scmp.ne.s32.totalorder %s35, %s51
    %p53 = scmp.eq.s32.totalorder %s15, 0
    %p54 = por %p52, %p53
    %s55 = ssub.s32 %s17, %s24
    %p56 = scmp.eq.s32.totalorder %s55, 0
    %s58 = sadd.s32 %s57, 1
    %s59 = scalar_select %p56, %s57, %s58
    %p62 = pneg %p56
    %p63 = scmp.eq.s32.totalorder %s9, 1
    %p64 = por %p62, %p63
    %p65 = scmp.ne.s32.totalorder %s57, %s60
    %p66 = scmp.eq.s32.totalorder %s9, 0
    %p67 = por %p65, %p66
    %p68 = scmp.ne.s32.totalorder %s57, %s60
    %p69 = scmp.eq.s32.totalorder %s14, 1
    %p70 = por %p68, %p69
    %p71 = scmp.ne.s32.totalorder %s60, %s61
    %p72 = scmp.eq.s32.totalorder %s14, 0
    %p73 = por %p71, %p72
    %p74 = scmp.ne.s32.totalorder %s60, %s61
    %p75 = scmp.eq.s32.totalorder %s15, 1
    %p76 = por %p74, %p75
    %p78 = scmp.ne.s32.totalorder %s61, %s77
    %p79 = scmp.eq.s32.totalorder %s15, 0
    %p80 = por %p78, %p79
    %s81 = ssub.s32 %s17, %s24
    %p82 = scmp.eq.s32.totalorder %s81, 0
    %s84 = sadd.s32 %s83, 1
    %s85 = scalar_select %p82, %s83, %s84
    %p88 = pneg %p82
    %p89 = scmp.eq.s32.totalorder %s9, 1
    %p90 = por %p88, %p89
    %p91 = scmp.ne.s32.totalorder %s83, %s86
    %p92 = scmp.eq.s32.totalorder %s9, 0
    %p93 = por %p91, %p92
    %p94 = scmp.ne.s32.totalorder %s83, %s86
    %p95 = scmp.eq.s32.totalorder %s14, 1
    %p96 = por %p94, %p95
    %p97 = scmp.ne.s32.totalorder %s86, %s87
    %p98 = scmp.eq.s32.totalorder %s14, 0
    %p99 = por %p97, %p98
    %p100 = scmp.ne.s32.totalorder %s86, %s87
    %p101 = scmp.eq.s32.totalorder %s15, 1
    %p102 = por %p100, %p101
    %p104 = scmp.ne.s32.totalorder %s87, %s103
    %p105 = scmp.eq.s32.totalorder %s15, 0
    %p106 = por %p104, %p105
    %s107 = ssub.s32 %s16, %s28
    %s108 = ssub.s32 %s17, %s24
    %s109 = sor.u32 %s107, %s108
    %p110 = scmp.eq.s32.totalorder %s109, 0
    %s112 = sadd.s32 %s111, 1
    %s113 = scalar_select %p110, %s111, %s112
    %p116 = pneg %p110
    %p117 = scmp.eq.s32.totalorder %s9, 1
    %p118 = por %p116, %p117
    %p119 = scmp.ne.s32.totalorder %s111, %s114
    %p120 = scmp.eq.s32.totalorder %s9, 0
    %p121 = por %p119, %p120
    %p122 = scmp.ne.s32.totalorder %s111, %s114
    %p123 = scmp.eq.s32.totalorder %s14, 1
    %p124 = por %p122, %p123
    %p125 = scmp.ne.s32.totalorder %s114, %s115
    %p126 = scmp.eq.s32.totalorder %s14, 0
    %p127 = por %p125, %p126
    %p128 = scmp.ne.s32.totalorder %s114, %s115
    %p129 = scmp.eq.s32.totalorder %s15, 1
    %p130 = por %p128, %p129
    %p132 = scmp.ne.s32.totalorder %s115, %s131
    %p133 = scmp.eq.s32.totalorder %s15, 0
    %p134 = por %p132, %p133
    %p135 = scmp.le.s32.totalorder 1, %s9
    %p136 = scmp.lt.s32.totalorder %s9, 3
    %p137 = pnand %p135, %p136
    %p138 = pneg %p137
    // Predicated region
    $region9: #{encoder_forward.12} parent=5 // pred_check
      _
    $region10: #{encoder_forward.12} parent=5 // pred_check_branch
      %140 = sbr.rel (%p137) target = $region12
    $region11: #{encoder_forward.12} parent=5 // pred_region
      %s141 = ssub.s32 %s9, 1
      // Predicated region
      $region13: #{encoder_forward.12} parent=11 // pred_check
        %p142 = pneg %p73
      $region14: #{encoder_forward.12} parent=11 // pred_check_branch
        %144 = sbr.rel (%p142) target = $region16
      $region15: #{encoder_forward.12} parent=11 // pred_region
        %p145 = scmp.lt.s32.totalorder %s19, 0
        %s146 = scalar_select %p145, %s19, 0
        %s147 = smul.addr %s146, 4
        %s148 = scalar_lea.vmem %s1, %s147
      $region16: #{encoder_forward.12} parent=11 // pred_fallthru
        _
      // Predicated region
      $region17: #{encoder_forward.12} parent=11 // pred_check
        %p149 = pneg %p99
      $region18: #{encoder_forward.12} parent=11 // pred_check_branch
        %151 = sbr.rel (%p149) target = $region20
      $region19: #{encoder_forward.12} parent=11 // pred_region
        %p152 = scmp.lt.s32.totalorder %s19, 0
        %s153 = scalar_select %p152, %s19, 0
        %s154 = scalar_lea.vmem %s2, %s153
      $region20: #{encoder_forward.12} parent=11 // pred_fallthru
        _
    $region12: #{encoder_forward.12} parent=5 // pred_fallthru
      _
    %p155 = scmp.lt.s32.totalorder %s9, 2
    // Predicated region
    $region21: #{encoder_forward.12} parent=5 // pred_check
      %p156 = pneg %p155
    $region22: #{encoder_forward.12} parent=5 // pred_check_branch
      %158 = sbr.rel (%p156) target = $region24
    $region23: #{encoder_forward.12} parent=5 // pred_region
      // Predicated region
      $region25: #{encoder_forward.12} parent=23 // pred_check
        %p159 = pneg %p41
      $region26: #{encoder_forward.12} parent=23 // pred_check_branch
        %161 = sbr.rel (%p159) target = $region28
      $region27: #{encoder_forward.12} parent=23 // pred_region
        %s162 = smul.u32 8, %s16
        %p163 = scmp.lt.s32.totalorder %s162, 15
        %s164 = scalar_select %p163, %s162, 15
        %s165 = smul.addr %s164, 4
        %s166 = scalar_lea.vmem %s0, %s165
        %s167 = smul.u32 8, %s16
      $region28: #{encoder_forward.12} parent=23 // pred_fallthru
        _
    $region24: #{encoder_forward.12} parent=5 // pred_fallthru
      _
    %p168 = scmp.le.s32.totalorder 1, %s9
    %p169 = scmp.lt.s32.totalorder %s9, 3
    %p170 = pnand %p168, %p169
    %p171 = pneg %p170
    // Predicated region
    $region29: #{encoder_forward.12} parent=5 // pred_check
      _
    $region30: #{encoder_forward.12} parent=5 // pred_check_branch
      %173 = sbr.rel (%p170) target = $region32
    $region31: #{encoder_forward.12} parent=5 // pred_region
      %s174 = ssub.s32 %s9, 1
      %s175 = smul.u32 8, %s18
      %p176 = scmp.lt.s32.totalorder %s175, 15
      %s177 = scalar_select %p176, %s175, 15
      %s178 = smul.addr %s177, 4
      %s179 = scalar_lea.vmem %s0, %s178
      %p180 = pneg %p47
      %p181 = pneg %p44
      %p182 = scmp.lt.s32.totalorder %s19, 0
      %s183 = scalar_select %p182, %s19, 0
      %s184 = smul.addr %s183, 4
      %s185 = scalar_lea.vmem %s1, %s184
      %p186 = pneg %p73
      %p187 = pneg %p70
      %p188 = scmp.lt.s32.totalorder %s19, 0
      %s189 = scalar_select %p188, %s19, 0
      %s190 = scalar_lea.vmem %s2, %s189
      %p191 = pneg %p99
      %p192 = pneg %p96
      %p193 = pneg %p127
      %p194 = pneg %p124
      %s195 = smul.u32 8, %s18
      %p196 = scmp.lt.s32.totalorder %s195, 15
      %s197 = scalar_select %p196, %s195, 15
      %p198 = scmp.lt.s32.totalorder %s19, 0
      %s199 = scalar_select %p198, %s19, 0
      %s200 = sadd.s32 %s199, %s197
      %s201 = smul.addr %s200, 4
      %s202 = scalar_lea.vmem %s3, %s201
      %s203 = smul.u32 8, %s18
      %p204 = scmp.lt.s32.totalorder %s203, 15
      %s205 = scalar_select %p204, %s203, 15
      %s206 = smul.addr %s205, 4
      %s207 = scalar_lea.vmem %s0, %s206
      %s208 = smul.u32 8, %s18
      %p209 = scmp.lt.s32.totalorder %s19, 0
      %s210 = scalar_select %p209, %s19, 0
      %s211 = smul.addr %s210, 4
      %s212 = scalar_lea.vmem %s1, %s211
      %p213 = scmp.lt.s32.totalorder %s19, 0
      %s214 = scalar_select %p213, %s19, 0
      %s215 = scalar_lea.vmem %s2, %s214
      %s216 = smul.u32 8, %s18
      %p217 = scmp.lt.s32.totalorder %s216, 15
      %s218 = scalar_select %p217, %s216, 15
      %p219 = scmp.lt.s32.totalorder %s19, 0
      %s220 = scalar_select %p219, %s19, 0
      %s221 = sadd.s32 %s220, %s218
      %s222 = smul.addr %s221, 4
      %s223 = scalar_lea.vmem %s3, %s222
      %s224 = smul.u32 8, %s18
      %v225 = vld [vmem:[%s207] sm:$0xf]
      %v226 = vld [vmem:[%s207 + $0x4] sm:$0xf]
      %v227 = vld [vmem:[%s207 + $0x8] sm:$0xf]
      %v228 = vld [vmem:[%s207 + $0xc] sm:$0xf]
      %v229 = vld [vmem:[%s207 + $0x10] sm:$0xf]
      %v230 = vld [vmem:[%s207 + $0x14] sm:$0xf]
      %v231 = vld [vmem:[%s207 + $0x18] sm:$0xf]
      %v232 = vld [vmem:[%s207 + $0x1c] sm:$0xf]
      %v233 = vld [vmem:[%s212] sm:$0xf]
      %v234 = vld [vmem:[%s212 + $0x4] sm:$0xf]
      %v235 = vld [vmem:[%s212 + $0x8] sm:$0xf]
      %v236 = vld [vmem:[%s212 + $0xc] sm:$0xf]
      %v237 = vld [vmem:[%s212 + $0x10] sm:$0xf]
      %v238 = vld [vmem:[%s212 + $0x14] sm:$0xf]
      %v239 = vld [vmem:[%s212 + $0x18] sm:$0xf]
      %v240 = vld [vmem:[%s212 + $0x1c] sm:$0xf]
      %v241 = vld [vmem:[%s212 + $0x20] sm:$0xf]
      %v242 = vld [vmem:[%s212 + $0x24] sm:$0xf]
      %v243 = vld [vmem:[%s212 + $0x28] sm:$0xf]
      %v244 = vld [vmem:[%s212 + $0x2c] sm:$0xf]
      %v245 = vld [vmem:[%s212 + $0x30] sm:$0xf]
      %v246 = vld [vmem:[%s212 + $0x34] sm:$0xf]
      %v247 = vld [vmem:[%s212 + $0x38] sm:$0xf]
      %v248 = vld [vmem:[%s212 + $0x3c] sm:$0xf]
      %v249 = vld [vmem:[%s215] sm:$0x1]
      %v251 = vperm.slane %v249, 0
      %v261 = vunpack.c.l.b16 %v225
      %v262 = vunpack.c.l.b16 %v226
      %v263 = vunpack.c.l.b16 %v227
      %v264 = vunpack.c.l.b16 %v228
      %v265 = vunpack.c.l.b16 %v229
      %v266 = vunpack.c.l.b16 %v230
      %v267 = vunpack.c.l.b16 %v231
      %v268 = vunpack.c.l.b16 %v232
      %v269 = vpack.c.b16 %v262, %v261
      %v270 = vpack.c.b16 %v264, %v263
      %v271 = vpack.c.b16 %v266, %v265
      %v272 = vpack.c.b16 %v268, %v267
      %v293 = vunpack.c.l.b16 %v233
      %v294 = vunpack.c.l.b16 %v234
      %v295 = vunpack.c.l.b16 %v235
      %v296 = vunpack.c.l.b16 %v236
      %v297 = vunpack.c.l.b16 %v237
      %v298 = vunpack.c.l.b16 %v238
      %v299 = vunpack.c.l.b16 %v239
      %v300 = vunpack.c.l.b16 %v240
      %v301 = vunpack.c.l.b16 %v241
      %v302 = vunpack.c.l.b16 %v242
      %v303 = vunpack.c.l.b16 %v243
      %v304 = vunpack.c.l.b16 %v244
      %v305 = vunpack.c.l.b16 %v245
      %v306 = vunpack.c.l.b16 %v246
      %v307 = vunpack.c.l.b16 %v247
      %v308 = vunpack.c.l.b16 %v248
      %v309 = vpack.c.b16 %v294, %v293
      %v310 = vpack.c.b16 %v296, %v295
      %v311 = vpack.c.b16 %v298, %v297
      %v312 = vpack.c.b16 %v300, %v299
      %v313 = vpack.c.b16 %v302, %v301
      %v314 = vpack.c.b16 %v304, %v303
      %v315 = vpack.c.b16 %v306, %v305
      %v316 = vpack.c.b16 %v308, %v307
      %325 = vmatpush.bf16.msra.mxu0 %v316
      %326 = vmatpush.bf16.msra.mxu0 %v315
      %327 = vmatpush.bf16.msra.mxu0 %v314
      %328 = vmatpush.bf16.msra.mxu0 %v313
      %329 = vmatpush.bf16.msra.mxu0 %v312
      %330 = vmatpush.bf16.msra.mxu0 %v311
      %331 = vmatpush.bf16.msra.mxu0 %v310
      %332 = vmatpush.bf16.msra.mxu0 %v309
      %333 = vmatmul.bf16.gmra.mxu0 %v269
      %v334 = vpop.f32.mrf.mxu0
      %v335 = vadd.f32 %v251, %v334
      %v336 = vpop.f32.mrf.mxu0
      %v337 = vadd.f32 %v251, %v336
      %338 = vmatmul.bf16.gmra.mxu0 %v270
      %v339 = vpop.f32.mrf.mxu0
      %v340 = vadd.f32 %v251, %v339
      %v341 = vpop.f32.mrf.mxu0
      %v342 = vadd.f32 %v251, %v341
      %343 = vmatmul.bf16.gmra.mxu0 %v271
      %v344 = vpop.f32.mrf.mxu0
      %v345 = vadd.f32 %v251, %v344
      %v346 = vpop.f32.mrf.mxu0
      %v347 = vadd.f32 %v251, %v346
      %348 = vmatmul.bf16.gmra.mxu0 %v272
      %v349 = vpop.f32.mrf.mxu0
      %v350 = vadd.f32 %v251, %v349
      %v351 = vpop.f32.mrf.mxu0
      %v352 = vadd.f32 %v251, %v351
      %353 = vdwg.mxu0
      %v354 = vmax.f32 %v335, 0.0
      %v355 = vmax.f32 %v337, 0.0
      %v356 = vmax.f32 %v340, 0.0
      %v357 = vmax.f32 %v342, 0.0
      %v358 = vmax.f32 %v345, 0.0
      %v359 = vmax.f32 %v347, 0.0
      %v360 = vmax.f32 %v350, 0.0
      %v361 = vmax.f32 %v352, 0.0
      %v362 = vpack.c.bf16 %v354, %v354
      %v363 = vpack.c.bf16 %v355, %v355
      %v364 = vpack.c.bf16 %v356, %v356
      %v365 = vpack.c.bf16 %v357, %v357
      %v366 = vpack.c.bf16 %v358, %v358
      %v367 = vpack.c.bf16 %v359, %v359
      %v368 = vpack.c.bf16 %v360, %v360
      %v369 = vpack.c.bf16 %v361, %v361
      %370 = vst [vmem:[%s223] sm:$0xf] %v362
      %371 = vst [vmem:[%s223 + $0x4] sm:$0xf] %v363
      %372 = vst [vmem:[%s223 + $0x8] sm:$0xf] %v364
      %373 = vst [vmem:[%s223 + $0xc] sm:$0xf] %v365
      %374 = vst [vmem:[%s223 + $0x10] sm:$0xf] %v366
      %375 = vst [vmem:[%s223 + $0x14] sm:$0xf] %v367
      %376 = vst [vmem:[%s223 + $0x18] sm:$0xf] %v368
      %377 = vst [vmem:[%s223 + $0x1c] sm:$0xf] %v369
      %s378 = smul.u32 8, %s18
      %p379 = scmp.lt.s32.totalorder %s378, 15
      %s380 = scalar_select %p379, %s378, 15
      %p381 = scmp.lt.s32.totalorder %s19, 0
      %s382 = scalar_select %p381, %s19, 0
      %s383 = sadd.s32 %s382, %s380
      %s384 = smul.addr %s383, 4
      %s385 = scalar_lea.vmem %s3, %s384
      // Predicated region
      $region33: #{encoder_forward.12} parent=31 // pred_check
        %p386 = pneg %p124
      $region34: #{encoder_forward.12} parent=31 // pred_check_branch
        %388 = sbr.rel (%p386) target = $region36
      $region35: #{encoder_forward.12} parent=31 // pred_region
        %s389 = smul.u32 8, %s18
      $region36: #{encoder_forward.12} parent=31 // pred_fallthru
        _
    $region32: #{encoder_forward.12} parent=5 // pred_fallthru
      _
    %p390 = scmp.le.s32.totalorder 2, %s9
    // Predicated region
    $region37: #{encoder_forward.12} parent=5 // pred_check
      %p391 = pneg %p390
    $region38: #{encoder_forward.12} parent=5 // pred_check_branch
      %393 = sbr.rel (%p391) target = $region40
    $region39: #{encoder_forward.12} parent=5 // pred_region
      %s394 = ssub.s32 %s9, 2
      // Predicated region
      $region41: #{encoder_forward.12} parent=39 // pred_check
        %p395 = pneg %p130
      $region42: #{encoder_forward.12} parent=39 // pred_check_branch
        %397 = sbr.rel (%p395) target = $region44
      $region43: #{encoder_forward.12} parent=39 // pred_region
        %s398 = smul.u32 8, %s20
        %p399 = scmp.lt.s32.totalorder %s398, 15
        %s400 = scalar_select %p399, %s398, 15
        %p401 = scmp.lt.s32.totalorder %s21, 0
        %s402 = scalar_select %p401, %s21, 0
        %s403 = sadd.s32 %s402, %s400
        %s404 = smul.addr %s403, 4
        %s405 = scalar_lea.vmem %s3, %s404
      $region44: #{encoder_forward.12} parent=39 // pred_fallthru
        _
    $region40: #{encoder_forward.12} parent=5 // pred_fallthru
      _
  $region6: #{encoder_forward.12} parent=0 // loop_footer
    %s13 = sadd.s32 1, %s9
  $region7: #{encoder_forward.12} parent=0 // loop_footer_branch
    %8 = sbr.rel target = $region3
  $region8: #{encoder_forward.12} parent=0 // loop_exit
    _

// kernel: encoder_forward.14
$region0: #{encoder_forward.14}
  #allocation0 [shape = 'u32[]', space=smem, size = 0x4, offset = 0x4, fixed_abs, tag = 'smem constant byte address 0x4 - core index']
  #allocation1 [shape = 'u32[72,128]{1,0:T(1,128)}', space=vmem, size = 0x9000, scoped, tag = 'internal scratch']
  %s0 = inlined_call_operand.vmem [shape: bf16[128,128], index: 0, kind: input, shape index: {}]
  %s1 = inlined_call_operand.vmem [shape: bf16[128,256], index: 1, kind: input, shape index: {}]
  %s2 = inlined_call_operand.vmem [shape: f32[1,256], index: 2, kind: input, shape index: {}]
  %s3 = inlined_call_operand.vmem [shape: bf16[128,256], index: 3, kind: output, shape index: {}]
  %s4 = sld [smem:[#allocation0]]
  $region45: #{encoder_forward.14} parent=0
    _
  %s6 = ssub.s32 1, %s4
  %s7 = scalar_select 0, %s6, %s4
  loop: start=0, step=1, limit=4
  $region2: #{encoder_forward.14} parent=0 // loop_pre_header
    _
  $region3: #{encoder_forward.14} parent=0 // loop_header
    %s9 = sphi 0, %s13
    %p10 = scmp.ge.s32.totalorder %s9, 4
    %s16 = sphi 0, %s28
    %s17 = sphi 0, %s24
    %s18 = sphi 0, %s16
    %s19 = sphi 0, %s17
    %s20 = sphi 0, %s18
    %s21 = sphi 0, %s19
    %s31 = sphi 0, %s33
    %s34 = sphi 0, %s31
    %s35 = sphi 0, %s34
    %s51 = sphi 0, %s35
    %s57 = sphi 0, %s59
    %s60 = sphi 0, %s57
    %s61 = sphi 0, %s60
    %s77 = sphi 0, %s61
    %s83 = sphi 0, %s85
    %s86 = sphi 0, %s83
    %s87 = sphi 0, %s86
    %s103 = sphi 0, %s87
    %s111 = sphi 0, %s113
    %s114 = sphi 0, %s111
    %s115 = sphi 0, %s114
    %s131 = sphi 0, %s115
  $region4: #{encoder_forward.14} parent=0 // loop_header_branch
    %12 = sbr.rel (%p10) target = $region8
  $region5: #{encoder_forward.14} parent=0 // loop_body
    %s14 = ssub.s32 %s9, 1
    %s15 = ssub.s32 %s9, 2
    %s22 = sadd.s32 1, %s17
    %p23 = scmp.ge.s32.totalorder %s22, 1
    %s24 = scalar_select %p23, 0, %s22
    %s25 = sadd.s32 1, %s16
    %s26 = scalar_select %p23, %s25, %s16
    %p27 = scmp.ge.s32.totalorder %s26, 2
    %s28 = scalar_select %p27, 0, %s26
    %s29 = ssub.s32 %s16, %s28
    %p30 = scmp.eq.s32.totalorder %s29, 0
    %s32 = sadd.s32 %s31, 1
    %s33 = scalar_select %p30, %s31, %s32
    %p36 = pneg %p30
    %p37 = scmp.eq.s32.totalorder %s9, 1
    %p38 = por %p36, %p37
    %p39 = scmp.ne.s32.totalorder %s31, %s34
    %p40 = scmp.eq.s32.totalorder %s9, 0
    %p41 = por %p39, %p40
    %p42 = scmp.ne.s32.totalorder %s31, %s34
    %p43 = scmp.eq.s32.totalorder %s14, 1
    %p44 = por %p42, %p43
    %p45 = scmp.ne.s32.totalorder %s34, %s35
    %p46 = scmp.eq.s32.totalorder %s14, 0
    %p47 = por %p45, %p46
    %p48 = scmp.ne.s32.totalorder %s34, %s35
    %p49 = scmp.eq.s32.totalorder %s15, 1
    %p50 = por %p48, %p49
    %p52 = scmp.ne.s32.totalorder %s35, %s51
    %p53 = scmp.eq.s32.totalorder %s15, 0
    %p54 = por %p52, %p53
    %s55 = ssub.s32 %s17, %s24
    %p56 = scmp.eq.s32.totalorder %s55, 0
    %s58 = sadd.s32 %s57, 1
    %s59 = scalar_select %p56, %s57, %s58
    %p62 = pneg %p56
    %p63 = scmp.eq.s32.totalorder %s9, 1
    %p64 = por %p62, %p63
    %p65 = scmp.ne.s32.totalorder %s57, %s60
    %p66 = scmp.eq.s32.totalorder %s9, 0
    %p67 = por %p65, %p66
    %p68 = scmp.ne.s32.totalorder %s57, %s60
    %p69 = scmp.eq.s32.totalorder %s14, 1
    %p70 = por %p68, %p69
    %p71 = scmp.ne.s32.totalorder %s60, %s61
    %p72 = scmp.eq.s32.totalorder %s14, 0
    %p73 = por %p71, %p72
    %p74 = scmp.ne.s32.totalorder %s60, %s61
    %p75 = scmp.eq.s32.totalorder %s15, 1
    %p76 = por %p74, %p75
    %p78 = scmp.ne.s32.totalorder %s61, %s77
    %p79 = scmp.eq.s32.totalorder %s15, 0
    %p80 = por %p78, %p79
    %s81 = ssub.s32 %s17, %s24
    %p82 = scmp.eq.s32.totalorder %s81, 0
    %s84 = sadd.s32 %s83, 1
    %s85 = scalar_select %p82, %s83, %s84
    %p88 = pneg %p82
    %p89 = scmp.eq.s32.totalorder %s9, 1
    %p90 = por %p88, %p89
    %p91 = scmp.ne.s32.totalorder %s83, %s86
    %p92 = scmp.eq.s32.totalorder %s9, 0
    %p93 = por %p91, %p92
    %p94 = scmp.ne.s32.totalorder %s83, %s86
    %p95 = scmp.eq.s32.totalorder %s14, 1
    %p96 = por %p94, %p95
    %p97 = scmp.ne.s32.totalorder %s86, %s87
    %p98 = scmp.eq.s32.totalorder %s14, 0
    %p99 = por %p97, %p98
    %p100 = scmp.ne.s32.totalorder %s86, %s87
    %p101 = scmp.eq.s32.totalorder %s15, 1
    %p102 = por %p100, %p101
    %p104 = scmp.ne.s32.totalorder %s87, %s103
    %p105 = scmp.eq.s32.totalorder %s15, 0
    %p106 = por %p104, %p105
    %s107 = ssub.s32 %s16, %s28
    %s108 = ssub.s32 %s17, %s24
    %s109 = sor.u32 %s107, %s108
    %p110 = scmp.eq.s32.totalorder %s109, 0
    %s112 = sadd.s32 %s111, 1
    %s113 = scalar_select %p110, %s111, %s112
    %p116 = pneg %p110
    %p117 = scmp.eq.s32.totalorder %s9, 1
    %p118 = por %p116, %p117
    %p119 = scmp.ne.s32.totalorder %s111, %s114
    %p120 = scmp.eq.s32.totalorder %s9, 0
    %p121 = por %p119, %p120
    %p122 = scmp.ne.s32.totalorder %s111, %s114
    %p123 = scmp.eq.s32.totalorder %s14, 1
    %p124 = por %p122, %p123
    %p125 = scmp.ne.s32.totalorder %s114, %s115
    %p126 = scmp.eq.s32.totalorder %s14, 0
    %p127 = por %p125, %p126
    %p128 = scmp.ne.s32.totalorder %s114, %s115
    %p129 = scmp.eq.s32.totalorder %s15, 1
    %p130 = por %p128, %p129
    %p132 = scmp.ne.s32.totalorder %s115, %s131
    %p133 = scmp.eq.s32.totalorder %s15, 0
    %p134 = por %p132, %p133
    %p135 = scmp.le.s32.totalorder 1, %s9
    %p136 = scmp.lt.s32.totalorder %s9, 3
    %p137 = pnand %p135, %p136
    %p138 = pneg %p137
    // Predicated region
    $region9: #{encoder_forward.14} parent=5 // pred_check
      _
    $region10: #{encoder_forward.14} parent=5 // pred_check_branch
      %140 = sbr.rel (%p137) target = $region12
    $region11: #{encoder_forward.14} parent=5 // pred_region
      %s141 = ssub.s32 %s9, 1
      // Predicated region
      $region13: #{encoder_forward.14} parent=11 // pred_check
        %p142 = pneg %p73
      $region14: #{encoder_forward.14} parent=11 // pred_check_branch
        %144 = sbr.rel (%p142) target = $region16
      $region15: #{encoder_forward.14} parent=11 // pred_region
        %s145 = smul.u32 2, %s19
        %p146 = scmp.lt.s32.totalorder %s145, 1
        %s147 = scalar_select %p146, %s145, 1
        %s148 = smul.addr %s147, 4
        %s149 = scalar_lea.vmem %s1, %s148
        %s150 = smul.u32 2, %s19
      $region16: #{encoder_forward.14} parent=11 // pred_fallthru
        _
      // Predicated region
      $region17: #{encoder_forward.14} parent=11 // pred_check
        %p151 = pneg %p99
      $region18: #{encoder_forward.14} parent=11 // pred_check_branch
        %153 = sbr.rel (%p151) target = $region20
      $region19: #{encoder_forward.14} parent=11 // pred_region
        %s154 = smul.u32 2, %s19
        %p155 = scmp.lt.s32.totalorder %s154, 1
        %s156 = scalar_select %p155, %s154, 1
        %s157 = scalar_lea.vmem %s2, %s156
        %s158 = smul.u32 2, %s19
      $region20: #{encoder_forward.14} parent=11 // pred_fallthru
        _
    $region12: #{encoder_forward.14} parent=5 // pred_fallthru
      _
    %p159 = scmp.lt.s32.totalorder %s9, 2
    // Predicated region
    $region21: #{encoder_forward.14} parent=5 // pred_check
      %p160 = pneg %p159
    $region22: #{encoder_forward.14} parent=5 // pred_check_branch
      %162 = sbr.rel (%p160) target = $region24
    $region23: #{encoder_forward.14} parent=5 // pred_region
      // Predicated region
      $region25: #{encoder_forward.14} parent=23 // pred_check
        %p163 = pneg %p41
      $region26: #{encoder_forward.14} parent=23 // pred_check_branch
        %165 = sbr.rel (%p163) target = $region28
      $region27: #{encoder_forward.14} parent=23 // pred_region
        %s166 = smul.u32 8, %s16
        %p167 = scmp.lt.s32.totalorder %s166, 15
        %s168 = scalar_select %p167, %s166, 15
        %s169 = smul.addr %s168, 4
        %s170 = scalar_lea.vmem %s0, %s169
        %s171 = smul.u32 8, %s16
      $region28: #{encoder_forward.14} parent=23 // pred_fallthru
        _
    $region24: #{encoder_forward.14} parent=5 // pred_fallthru
      _
    %p172 = scmp.le.s32.totalorder 1, %s9
    %p173 = scmp.lt.s32.totalorder %s9, 3
    %p174 = pnand %p172, %p173
    %p175 = pneg %p174
    // Predicated region
    $region29: #{encoder_forward.14} parent=5 // pred_check
      _
    $region30: #{encoder_forward.14} parent=5 // pred_check_branch
      %177 = sbr.rel (%p174) target = $region32
    $region31: #{encoder_forward.14} parent=5 // pred_region
      %s178 = ssub.s32 %s9, 1
      %s179 = smul.u32 8, %s18
      %p180 = scmp.lt.s32.totalorder %s179, 15
      %s181 = scalar_select %p180, %s179, 15
      %s182 = smul.addr %s181, 4
      %s183 = scalar_lea.vmem %s0, %s182
      %p184 = pneg %p47
      %p185 = pneg %p44
      %s186 = smul.u32 2, %s19
      %p187 = scmp.lt.s32.totalorder %s186, 1
      %s188 = scalar_select %p187, %s186, 1
      %s189 = smul.addr %s188, 4
      %s190 = scalar_lea.vmem %s1, %s189
      %p191 = pneg %p73
      %p192 = pneg %p70
      %s193 = smul.u32 2, %s19
      %p194 = scmp.lt.s32.totalorder %s193, 1
      %s195 = scalar_select %p194, %s193, 1
      %s196 = scalar_lea.vmem %s2, %s195
      %p197 = pneg %p99
      %p198 = pneg %p96
      %p199 = pneg %p127
      %p200 = pneg %p124
      %s201 = smul.u32 8, %s18
      %s202 = smul.u32 2, %s19
      %p203 = scmp.lt.s32.totalorder %s201, 15
      %s204 = scalar_select %p203, %s201, 15
      %p205 = scmp.lt.s32.totalorder %s202, 1
      %s206 = scalar_select %p205, %s202, 1
      %s207 = smul.addr %s204, 2
      %s208 = sadd.s32 %s206, %s207
      %s209 = smul.addr %s208, 4
      %s210 = scalar_lea.vmem %s3, %s209
      %s211 = smul.u32 8, %s18
      %p212 = scmp.lt.s32.totalorder %s211, 15
      %s213 = scalar_select %p212, %s211, 15
      %s214 = smul.addr %s213, 4
      %s215 = scalar_lea.vmem %s0, %s214
      %s216 = smul.u32 8, %s18
      %s217 = smul.u32 2, %s19
      %p218 = scmp.lt.s32.totalorder %s217, 1
      %s219 = scalar_select %p218, %s217, 1
      %s220 = smul.addr %s219, 4
      %s221 = scalar_lea.vmem %s1, %s220
      %s222 = smul.u32 2, %s19
      %s223 = smul.u32 2, %s19
      %p224 = scmp.lt.s32.totalorder %s223, 1
      %s225 = scalar_select %p224, %s223, 1
      %s226 = scalar_lea.vmem %s2, %s225
      %s227 = smul.u32 2, %s19
      %s228 = smul.u32 8, %s18
      %s229 = smul.u32 2, %s19
      %p230 = scmp.lt.s32.totalorder %s228, 15
      %s231 = scalar_select %p230, %s228, 15
      %p232 = scmp.lt.s32.totalorder %s229, 1
      %s233 = scalar_select %p232, %s229, 1
      %s234 = smul.addr %s231, 2
      %s235 = sadd.s32 %s233, %s234
      %s236 = smul.addr %s235, 4
      %s237 = scalar_lea.vmem %s3, %s236
      %s238 = smul.u32 8, %s18
      %s239 = smul.u32 2, %s19
      %v240 = vld [vmem:[%s215] sm:$0xf]
      %v241 = vld [vmem:[%s215 + $0x4] sm:$0xf]
      %v242 = vld [vmem:[%s215 + $0x8] sm:$0xf]
      %v243 = vld [vmem:[%s215 + $0xc] sm:$0xf]
      %v244 = vld [vmem:[%s215 + $0x10] sm:$0xf]
      %v245 = vld [vmem:[%s215 + $0x14] sm:$0xf]
      %v246 = vld [vmem:[%s215 + $0x18] sm:$0xf]
      %v247 = vld [vmem:[%s215 + $0x1c] sm:$0xf]
      %v248 = vld [vmem:[%s221] sm:$0xff]
      %v249 = vld [vmem:[%s221 + $0x8] sm:$0xff]
      %v250 = vld [vmem:[%s221 + $0x10] sm:$0xff]
      %v251 = vld [vmem:[%s221 + $0x18] sm:$0xff]
      %v252 = vld [vmem:[%s221 + $0x20] sm:$0xff]
      %v253 = vld [vmem:[%s221 + $0x28] sm:$0xff]
      %v254 = vld [vmem:[%s221 + $0x30] sm:$0xff]
      %v255 = vld [vmem:[%s221 + $0x38] sm:$0xff]
      %v256 = vld [vmem:[%s221 + $0x40] sm:$0xff]
      %v257 = vld [vmem:[%s221 + $0x48] sm:$0xff]
      %v258 = vld [vmem:[%s221 + $0x50] sm:$0xff]
      %v259 = vld [vmem:[%s221 + $0x58] sm:$0xff]
      %v260 = vld [vmem:[%s221 + $0x60] sm:$0xff]
      %v261 = vld [vmem:[%s221 + $0x68] sm:$0xff]
      %v262 = vld [vmem:[%s221 + $0x70] sm:$0xff]
      %v263 = vld [vmem:[%s221 + $0x78] sm:$0xff]
      %v264 = vld [vmem:[%s226] sm:$0x3]
      %v266 = vperm.slane %v264, 0
      %v267 = vperm.slane %v264, 1
      %v278 = vunpack.c.l.b16 %v240
      %v279 = vunpack.c.l.b16 %v241
      %v280 = vunpack.c.l.b16 %v242
      %v281 = vunpack.c.l.b16 %v243
      %v282 = vunpack.c.l.b16 %v244
      %v283 = vunpack.c.l.b16 %v245
      %v284 = vunpack.c.l.b16 %v246
      %v285 = vunpack.c.l.b16 %v247
      %v286 = vpack.c.b16 %v279, %v278
      %v287 = vpack.c.b16 %v281, %v280
      %v288 = vpack.c.b16 %v283, %v282
      %v289 = vpack.c.b16 %v285, %v284
      %v310 = vunpack.c.l.b16 %v248
      %v311 = vunpack.c.h.b16 %v248
      %v312 = vunpack.c.l.b16 %v249
      %v313 = vunpack.c.h.b16 %v249
      %v314 = vunpack.c.l.b16 %v250
      %v315 = vunpack.c.h.b16 %v250
      %v316 = vunpack.c.l.b16 %v251
      %v317 = vunpack.c.h.b16 %v251
      %v318 = vunpack.c.l.b16 %v252
      %v319 = vunpack.c.h.b16 %v252
      %v320 = vunpack.c.l.b16 %v253
      %v321 = vunpack.c.h.b16 %v253
      %v322 = vunpack.c.l.b16 %v254
      %v323 = vunpack.c.h.b16 %v254
      %v324 = vunpack.c.l.b16 %v255
      %v325 = vunpack.c.h.b16 %v255
      %v326 = vunpack.c.l.b16 %v256
      %v327 = vunpack.c.h.b16 %v256
      %v328 = vunpack.c.l.b16 %v257
      %v329 = vunpack.c.h.b16 %v257
      %v330 = vunpack.c.l.b16 %v258
      %v331 = vunpack.c.h.b16 %v258
      %v332 = vunpack.c.l.b16 %v259
      %v333 = vunpack.c.h.b16 %v259
      %v334 = vunpack.c.l.b16 %v260
      %v335 = vunpack.c.h.b16 %v260
      %v336 = vunpack.c.l.b16 %v261
      %v337 = vunpack.c.h.b16 %v261
      %v338 = vunpack.c.l.b16 %v262
      %v339 = vunpack.c.h.b16 %v262
      %v340 = vunpack.c.l.b16 %v263
      %v341 = vunpack.c.h.b16 %v263
      %v342 = vpack.c.b16 %v312, %v310
      %v343 = vpack.c.b16 %v313, %v311
      %v344 = vpack.c.b16 %v316, %v314
      %v345 = vpack.c.b16 %v317, %v315
      %v346 = vpack.c.b16 %v320, %v318
      %v347 = vpack.c.b16 %v321, %v319
      %v348 = vpack.c.b16 %v324, %v322
      %v349 = vpack.c.b16 %v325, %v323
      %v350 = vpack.c.b16 %v328, %v326
      %v351 = vpack.c.b16 %v329, %v327
      %v352 = vpack.c.b16 %v332, %v330
      %v353 = vpack.c.b16 %v333, %v331
      %v354 = vpack.c.b16 %v336, %v334
      %v355 = vpack.c.b16 %v337, %v335
      %v356 = vpack.c.b16 %v340, %v338
      %v357 = vpack.c.b16 %v341, %v339
      %374 = vmatpush.bf16.msra.mxu0 %v356
      %375 = vmatpush.bf16.msra.mxu0 %v354
      %376 = vmatpush.bf16.msra.mxu0 %v352
      %377 = vmatpush.bf16.msra.mxu0 %v350
      %378 = vmatpush.bf16.msra.mxu0 %v348
      %379 = vmatpush.bf16.msra.mxu0 %v346
      %380 = vmatpush.bf16.msra.mxu0 %v344
      %381 = vmatpush.bf16.msra.mxu0 %v342
      %382 = vmatmul.bf16.gmra.mxu0 %v286
      %v383 = vpop.f32.mrf.mxu0
      %v384 = vadd.f32 %v266, %v383
      %v385 = vpop.f32.mrf.mxu0
      %v386 = vadd.f32 %v266, %v385
      %387 = vmatmul.bf16.gmra.mxu0 %v287
      %v388 = vpop.f32.mrf.mxu0
      %v389 = vadd.f32 %v266, %v388
      %v390 = vpop.f32.mrf.mxu0
      %v391 = vadd.f32 %v266, %v390
      %392 = vmatmul.bf16.gmra.mxu0 %v288
      %v393 = vpop.f32.mrf.mxu0
      %v394 = vadd.f32 %v266, %v393
      %v395 = vpop.f32.mrf.mxu0
      %v396 = vadd.f32 %v266, %v395
      %397 = vmatmul.bf16.gmra.mxu0 %v289
      %v398 = vpop.f32.mrf.mxu0
      %v399 = vadd.f32 %v266, %v398
      %v400 = vpop.f32.mrf.mxu0
      %v401 = vadd.f32 %v266, %v400
      %402 = vdwg.mxu0
      %403 = vmatpush.bf16.msra.mxu0 %v357
      %404 = vmatpush.bf16.msra.mxu0 %v355
      %405 = vmatpush.bf16.msra.mxu0 %v353
      %406 = vmatpush.bf16.msra.mxu0 %v351
      %407 = vmatpush.bf16.msra.mxu0 %v349
      %408 = vmatpush.bf16.msra.mxu0 %v347
      %409 = vmatpush.bf16.msra.mxu0 %v345
      %410 = vmatpush.bf16.msra.mxu0 %v343
      %411 = vmatmul.bf16.gmra.mxu0 %v286
      %v412 = vpop.f32.mrf.mxu0
      %v413 = vadd.f32 %v267, %v412
      %v414 = vpop.f32.mrf.mxu0
      %v415 = vadd.f32 %v267, %v414
      %416 = vmatmul.bf16.gmra.mxu0 %v287
      %v417 = vpop.f32.mrf.mxu0
      %v418 = vadd.f32 %v267, %v417
      %v419 = vpop.f32.mrf.mxu0
      %v420 = vadd.f32 %v267, %v419
      %421 = vmatmul.bf16.gmra.mxu0 %v288
      %v422 = vpop.f32.mrf.mxu0
      %v423 = vadd.f32 %v267, %v422
      %v424 = vpop.f32.mrf.mxu0
      %v425 = vadd.f32 %v267, %v424
      %426 = vmatmul.bf16.gmra.mxu0 %v289
      %v427 = vpop.f32.mrf.mxu0
      %v428 = vadd.f32 %v267, %v427
      %v429 = vpop.f32.mrf.mxu0
      %v430 = vadd.f32 %v267, %v429
      %431 = vdwg.mxu0
      %v432 = vpack.c.bf16 %v413, %v384
      %v433 = vpack.c.bf16 %v415, %v386
      %v434 = vpack.c.bf16 %v418, %v389
      %v435 = vpack.c.bf16 %v420, %v391
      %v436 = vpack.c.bf16 %v423, %v394
      %v437 = vpack.c.bf16 %v425, %v396
      %v438 = vpack.c.bf16 %v428, %v399
      %v439 = vpack.c.bf16 %v430, %v401
      %440 = vst [vmem:[%s237] sm:$0xff] %v432
      %441 = vst [vmem:[%s237 + $0x8] sm:$0xff] %v433
      %442 = vst [vmem:[%s237 + $0x10] sm:$0xff] %v434
      %443 = vst [vmem:[%s237 + $0x18] sm:$0xff] %v435
      %444 = vst [vmem:[%s237 + $0x20] sm:$0xff] %v436
      %445 = vst [vmem:[%s237 + $0x28] sm:$0xff] %v437
      %446 = vst [vmem:[%s237 + $0x30] sm:$0xff] %v438
      %447 = vst [vmem:[%s237 + $0x38] sm:$0xff] %v439
      %s448 = smul.u32 8, %s18
      %s449 = smul.u32 2, %s19
      %p450 = scmp.lt.s32.totalorder %s448, 15
      %s451 = scalar_select %p450, %s448, 15
      %p452 = scmp.lt.s32.totalorder %s449, 1
      %s453 = scalar_select %p452, %s449, 1
      %s454 = smul.addr %s451, 2
      %s455 = sadd.s32 %s453, %s454
      %s456 = smul.addr %s455, 4
      %s457 = scalar_lea.vmem %s3, %s456
      // Predicated region
      $region33: #{encoder_forward.14} parent=31 // pred_check
        %p458 = pneg %p124
      $region34: #{encoder_forward.14} parent=31 // pred_check_branch
        %460 = sbr.rel (%p458) target = $region36
      $region35: #{encoder_forward.14} parent=31 // pred_region
        %s461 = smul.u32 8, %s18
        %s462 = smul.u32 2, %s19
      $region36: #{encoder_forward.14} parent=31 // pred_fallthru
        _
    $region32: #{encoder_forward.14} parent=5 // pred_fallthru
      _
    %p463 = scmp.le.s32.totalorder 2, %s9
    // Predicated region
    $region37: #{encoder_forward.14} parent=5 // pred_check
      %p464 = pneg %p463
    $region38: #{encoder_forward.14} parent=5 // pred_check_branch
      %466 = sbr.rel (%p464) target = $region40
    $region39: #{encoder_forward.14} parent=5 // pred_region
      %s467 = ssub.s32 %s9, 2
      // Predicated region
      $region41: #{encoder_forward.14} parent=39 // pred_check
        %p468 = pneg %p130
      $region42: #{encoder_forward.14} parent=39 // pred_check_branch
        %470 = sbr.rel (%p468) target = $region44
      $region43: #{encoder_forward.14} parent=39 // pred_region
        %s471 = smul.u32 8, %s20
        %s472 = smul.u32 2, %s21
        %p473 = scmp.lt.s32.totalorder %s471, 15
        %s474 = scalar_select %p473, %s471, 15
        %p475 = scmp.lt.s32.totalorder %s472, 1
        %s476 = scalar_select %p475, %s472, 1
        %s477 = smul.addr %s474, 2
        %s478 = sadd.s32 %s476, %s477
        %s479 = smul.addr %s478, 4
        %s480 = scalar_lea.vmem %s3, %s479
      $region44: #{encoder_forward.14} parent=39 // pred_fallthru
        _
    $region40: #{encoder_forward.14} parent=5 // pred_fallthru
      _
  $region6: #{encoder_forward.14} parent=0 // loop_footer
    %s13 = sadd.s32 1, %s9
  $region7: #{encoder_forward.14} parent=0 // loop_footer_branch
    %8 = sbr.rel target = $region3
  $region8: #{encoder_forward.14} parent=0 // loop_exit
    _

// kernel: encoder_forward.11
$region0: #{encoder_forward.11}
  #allocation0 [shape = 'u32[]', space=smem, size = 0x4, offset = 0x4, fixed_abs, tag = 'smem constant byte address 0x4 - core index']
  #allocation1 [shape = 'u32[72,128]{1,0:T(1,128)}', space=vmem, size = 0x9000, scoped, tag = 'internal scratch']
  %s0 = inlined_call_operand.vmem [shape: bf16[2,18,18,1,128], index: 0, kind: input, shape index: {}]
  %s1 = inlined_call_operand.vmem [shape: bf16[2,8,8,1,128], index: 1, kind: output, shape index: {}]
  %s2 = sld [smem:[#allocation0]]
  $region37: #{encoder_forward.11} parent=0
    _
  %s4 = ssub.s32 1, %s2
  %s5 = scalar_select 0, %s4, %s2
  loop: start=0, step=1, limit=4
  $region2: #{encoder_forward.11} parent=0 // loop_pre_header
    _
  $region3: #{encoder_forward.11} parent=0 // loop_header
    %s7 = sphi 0, %s11
    %p8 = scmp.ge.s32.totalorder %s7, 4
    %s17 = sphi 0, %s19
    %s20 = sphi 0, %s17
    %s21 = sphi 0, %s20
    %s37 = sphi 0, %s21
    %s43 = sphi 0, %s45
    %s46 = sphi 0, %s43
    %s47 = sphi 0, %s46
    %s63 = sphi 0, %s47
  $region4: #{encoder_forward.11} parent=0 // loop_header_branch
    %10 = sbr.rel (%p8) target = $region8
  $region5: #{encoder_forward.11} parent=0 // loop_body
    %s12 = ssub.s32 %s7, 1
    %s13 = ssub.s32 %s7, 2
    %s14 = sadd.s32 %s7, 1
    %s15 = ssub.s32 %s7, %s14
    %p16 = scmp.eq.s32.totalorder %s15, 0
    %s18 = sadd.s32 %s17, 1
    %s19 = scalar_select %p16, %s17, %s18
    %p22 = pneg %p16
    %p23 = scmp.eq.s32.totalorder %s7, 1
    %p24 = por %p22, %p23
    %p25 = scmp.ne.s32.totalorder %s17, %s20
    %p26 = scmp.eq.s32.totalorder %s7, 0
    %p27 = por %p25, %p26
    %p28 = scmp.ne.s32.totalorder %s17, %s20
    %p29 = scmp.eq.s32.totalorder %s12, 1
    %p30 = por %p28, %p29
    %p31 = scmp.ne.s32.totalorder %s20, %s21
    %p32 = scmp.eq.s32.totalorder %s12, 0
    %p33 = por %p31, %p32
    %p34 = scmp.ne.s32.totalorder %s20, %s21
    %p35 = scmp.eq.s32.totalorder %s13, 1
    %p36 = por %p34, %p35
    %p38 = scmp.ne.s32.totalorder %s21, %s37
    %p39 = scmp.eq.s32.totalorder %s13, 0
    %p40 = por %p38, %p39
    %s41 = ssub.s32 %s7, %s14
    %p42 = scmp.eq.s32.totalorder %s41, 0
    %s44 = sadd.s32 %s43, 1
    %s45 = scalar_select %p42, %s43, %s44
    %p48 = pneg %p42
    %p49 = scmp.eq.s32.totalorder %s7, 1
    %p50 = por %p48, %p49
    %p51 = scmp.ne.s32.totalorder %s43, %s46
    %p52 = scmp.eq.s32.totalorder %s7, 0
    %p53 = por %p51, %p52
    %p54 = scmp.ne.s32.totalorder %s43, %s46
    %p55 = scmp.eq.s32.totalorder %s12, 1
    %p56 = por %p54, %p55
    %p57 = scmp.ne.s32.totalorder %s46, %s47
    %p58 = scmp.eq.s32.totalorder %s12, 0
    %p59 = por %p57, %p58
    %p60 = scmp.ne.s32.totalorder %s46, %s47
    %p61 = scmp.eq.s32.totalorder %s13, 1
    %p62 = por %p60, %p61
    %p64 = scmp.ne.s32.totalorder %s47, %s63
    %p65 = scmp.eq.s32.totalorder %s13, 0
    %p66 = por %p64, %p65
    %p67 = scmp.le.s32.totalorder 1, %s7
    %p68 = scmp.lt.s32.totalorder %s7, 3
    %p69 = pnand %p67, %p68
    %p70 = pneg %p69
    // Predicated region
    $region9: #{encoder_forward.11} parent=5 // pred_check
      _
    $region10: #{encoder_forward.11} parent=5 // pred_check_branch
      %72 = sbr.rel (%p69) target = $region12
    $region11: #{encoder_forward.11} parent=5 // pred_region
      %s73 = ssub.s32 %s7, 1
    $region12: #{encoder_forward.11} parent=5 // pred_fallthru
      _
    %p74 = scmp.lt.s32.totalorder %s7, 2
    // Predicated region
    $region13: #{encoder_forward.11} parent=5 // pred_check
      %p75 = pneg %p74
    $region14: #{encoder_forward.11} parent=5 // pred_check_branch
      %77 = sbr.rel (%p75) target = $region16
    $region15: #{encoder_forward.11} parent=5 // pred_region
      // Predicated region
      $region17: #{encoder_forward.11} parent=15 // pred_check
        %p78 = pneg %p27
      $region18: #{encoder_forward.11} parent=15 // pred_check_branch
        %80 = sbr.rel (%p78) target = $region20
      $region19: #{encoder_forward.11} parent=15 // pred_region
        %p81 = scmp.lt.s32.totalorder %s7, 1
        %s82 = scalar_select %p81, %s7, 1
        %s83 = smul.addr %s82, 324
        %s84 = scalar_lea.vmem %s0, %s83
      $region20: #{encoder_forward.11} parent=15 // pred_fallthru
        _
    $region16: #{encoder_forward.11} parent=5 // pred_fallthru
      _
    %p85 = scmp.le.s32.totalorder 1, %s7
    %p86 = scmp.lt.s32.totalorder %s7, 3
    %p87 = pnand %p85, %p86
    %p88 = pneg %p87
    // Predicated region
    $region21: #{encoder_forward.11} parent=5 // pred_check
      _
    $region22: #{encoder_forward.11} parent=5 // pred_check_branch
      %90 = sbr.rel (%p87) target = $region24
    $region23: #{encoder_forward.11} parent=5 // pred_region
      %s91 = ssub.s32 %s7, 1
      %p92 = scmp.lt.s32.totalorder %s12, 1
      %s93 = scalar_select %p92, %s12, 1
      %s94 = smul.addr %s93, 324
      %s95 = scalar_lea.vmem %s0, %s94
      %p96 = pneg %p33
      %p97 = pneg %p30
      %p98 = pneg %p59
      %p99 = pneg %p56
      %p100 = scmp.lt.s32.totalorder %s12, 1
      %s101 = scalar_select %p100, %s12, 1
      %s102 = smul.addr %s101, 64
      %s103 = scalar_lea.vmem %s1, %s102
      %p104 = scmp.lt.s32.totalorder %s12, 1
      %s105 = scalar_select %p104, %s12, 1
      %s106 = smul.addr %s105, 324
      %s107 = scalar_lea.vmem %s0, %s106
      %p108 = scmp.lt.s32.totalorder %s12, 1
      %s109 = scalar_select %p108, %s12, 1
      %s110 = smul.addr %s109, 64
      %s111 = scalar_lea.vmem %s1, %s110
      %v112 = vld [vmem:[%s107] sm:$0x1]
      %v113 = vld [vmem:[%s107 + $0x1] sm:$0x1]
      %v114 = vld [vmem:[%s107 + $0x2] sm:$0x1]
      %v115 = vld [vmem:[%s107 + $0x3] sm:$0x1]
      %v116 = vld [vmem:[%s107 + $0x4] sm:$0x1]
      %v117 = vld [vmem:[%s107 + $0x5] sm:$0x1]
      %v118 = vld [vmem:[%s107 + $0x6] sm:$0x1]
      %v119 = vld [vmem:[%s107 + $0x7] sm:$0x1]
      %v120 = vld [vmem:[%s107 + $0x8] sm:$0x1]
      %v121 = vld [vmem:[%s107 + $0x9] sm:$0x1]
      %v122 = vld [vmem:[%s107 + $0xa] sm:$0x1]
      %v123 = vld [vmem:[%s107 + $0xb] sm:$0x1]
      %v124 = vld [vmem:[%s107 + $0xc] sm:$0x1]
      %v125 = vld [vmem:[%s107 + $0xd] sm:$0x1]
      %v126 = vld [vmem:[%s107 + $0xe] sm:$0x1]
      %v127 = vld [vmem:[%s107 + $0xf] sm:$0x1]
      %v128 = vld [vmem:[%s107 + $0x10] sm:$0x1]
      %v129 = vld [vmem:[%s107 + $0x12] sm:$0x1]
      %v130 = vld [vmem:[%s107 + $0x13] sm:$0x1]
      %v131 = vld [vmem:[%s107 + $0x14] sm:$0x1]
      %v132 = vld [vmem:[%s107 + $0x15] sm:$0x1]
      %v133 = vld [vmem:[%s107 + $0x16] sm:$0x1]
      %v134 = vld [vmem:[%s107 + $0x17] sm:$0x1]
      %v135 = vld [vmem:[%s107 + $0x18] sm:$0x1]
      %v136 = vld [vmem:[%s107 + $0x19] sm:$0x1]
      %v137 = vld [vmem:[%s107 + $0x1a] sm:$0x1]
      %v138 = vld [vmem:[%s107 + $0x1b] sm:$0x1]
      %v139 = vld [vmem:[%s107 + $0x1c] sm:$0x1]
      %v140 = vld [vmem:[%s107 + $0x1d] sm:$0x1]
      %v141 = vld [vmem:[%s107 + $0x1e] sm:$0x1]
      %v142 = vld [vmem:[%s107 + $0x1f] sm:$0x1]
      %v143 = vld [vmem:[%s107 + $0x20] sm:$0x1]
      %v144 = vld [vmem:[%s107 + $0x21] sm:$0x1]
      %v145 = vld [vmem:[%s107 + $0x22] sm:$0x1]
      %v146 = vld [vmem:[%s107 + $0x24] sm:$0x1]
      %v147 = vld [vmem:[%s107 + $0x25] sm:$0x1]
      %v148 = vld [vmem:[%s107 + $0x26] sm:$0x1]
      %v149 = vld [vmem:[%s107 + $0x27] sm:$0x1]
      %v150 = vld [vmem:[%s107 + $0x28] sm:$0x1]
      %v151 = vld [vmem:[%s107 + $0x29] sm:$0x1]
      %v152 = vld [vmem:[%s107 + $0x2a] sm:$0x1]
      %v153 = vld [vmem:[%s107 + $0x2b] sm:$0x1]
      %v154 = vld [vmem:[%s107 + $0x2c] sm:$0x1]
      %v155 = vld [vmem:[%s107 + $0x2d] sm:$0x1]
      %v156 = vld [vmem:[%s107 + $0x2e] sm:$0x1]
      %v157 = vld [vmem:[%s107 + $0x2f] sm:$0x1]
      %v158 = vld [vmem:[%s107 + $0x30] sm:$0x1]
      %v159 = vld [vmem:[%s107 + $0x31] sm:$0x1]
      %v160 = vld [vmem:[%s107 + $0x32] sm:$0x1]
      %v161 = vld [vmem:[%s107 + $0x33] sm:$0x1]
      %v162 = vld [vmem:[%s107 + $0x34] sm:$0x1]
      %v163 = vld [vmem:[%s107 + $0x36] sm:$0x1]
      %v164 = vld [vmem:[%s107 + $0x37] sm:$0x1]
      %v165 = vld [vmem:[%s107 + $0x38] sm:$0x1]
      %v166 = vld [vmem:[%s107 + $0x39] sm:$0x1]
      %v167 = vld [vmem:[%s107 + $0x3a] sm:$0x1]
      %v168 = vld [vmem:[%s107 + $0x3b] sm:$0x1]
      %v169 = vld [vmem:[%s107 + $0x3c] sm:$0x1]
      %v170 = vld [vmem:[%s107 + $0x3d] sm:$0x1]
      %v171 = vld [vmem:[%s107 + $0x3e] sm:$0x1]
      %v172 = vld [vmem:[%s107 + $0x3f] sm:$0x1]
      %v173 = vld [vmem:[%s107 + $0x40] sm:$0x1]
      %v174 = vld [vmem:[%s107 + $0x41] sm:$0x1]
      %v175 = vld [vmem:[%s107 + $0x42] sm:$0x1]
      %v176 = vld [vmem:[%s107 + $0x43] sm:$0x1]
      %v177 = vld [vmem:[%s107 + $0x44] sm:$0x1]
      %v178 = vld [vmem:[%s107 + $0x45] sm:$0x1]
      %v179 = vld [vmem:[%s107 + $0x46] sm:$0x1]
      %v180 = vld [vmem:[%s107 + $0x48] sm:$0x1]
      %v181 = vld [vmem:[%s107 + $0x49] sm:$0x1]
      %v182 = vld [vmem:[%s107 + $0x4a] sm:$0x1]
      %v183 = vld [vmem:[%s107 + $0x4b] sm:$0x1]
      %v184 = vld [vmem:[%s107 + $0x4c] sm:$0x1]
      %v185 = vld [vmem:[%s107 + $0x4d] sm:$0x1]
      %v186 = vld [vmem:[%s107 + $0x4e] sm:$0x1]
      %v187 = vld [vmem:[%s107 + $0x4f] sm:$0x1]
      %v188 = vld [vmem:[%s107 + $0x50] sm:$0x1]
      %v189 = vld [vmem:[%s107 + $0x51] sm:$0x1]
      %v190 = vld [vmem:[%s107 + $0x52] sm:$0x1]
      %v191 = vld [vmem:[%s107 + $0x53] sm:$0x1]
      %v192 = vld [vmem:[%s107 + $0x54] sm:$0x1]
      %v193 = vld [vmem:[%s107 + $0x55] sm:$0x1]
      %v194 = vld [vmem:[%s107 + $0x56] sm:$0x1]
      %v195 = vld [vmem:[%s107 + $0x57] sm:$0x1]
      %v196 = vld [vmem:[%s107 + $0x58] sm:$0x1]
      %v197 = vld [vmem:[%s107 + $0x5a] sm:$0x1]
      %v198 = vld [vmem:[%s107 + $0x5b] sm:$0x1]
      %v199 = vld [vmem:[%s107 + $0x5c] sm:$0x1]
      %v200 = vld [vmem:[%s107 + $0x5d] sm:$0x1]
      %v201 = vld [vmem:[%s107 + $0x5e] sm:$0x1]
      %v202 = vld [vmem:[%s107 + $0x5f] sm:$0x1]
      %v203 = vld [vmem:[%s107 + $0x60] sm:$0x1]
      %v204 = vld [vmem:[%s107 + $0x61] sm:$0x1]
      %v205 = vld [vmem:[%s107 + $0x62] sm:$0x1]
      %v206 = vld [vmem:[%s107 + $0x63] sm:$0x1]
      %v207 = vld [vmem:[%s107 + $0x64] sm:$0x1]
      %v208 = vld [vmem:[%s107 + $0x65] sm:$0x1]
      %v209 = vld [vmem:[%s107 + $0x66] sm:$0x1]
      %v210 = vld [vmem:[%s107 + $0x67] sm:$0x1]
      %v211 = vld [vmem:[%s107 + $0x68] sm:$0x1]
      %v212 = vld [vmem:[%s107 + $0x69] sm:$0x1]
      %v213 = vld [vmem:[%s107 + $0x6a] sm:$0x1]
      %v214 = vld [vmem:[%s107 + $0x6c] sm:$0x1]
      %v215 = vld [vmem:[%s107 + $0x6d] sm:$0x1]
      %v216 = vld [vmem:[%s107 + $0x6e] sm:$0x1]
      %v217 = vld [vmem:[%s107 + $0x6f] sm:$0x1]
      %v218 = vld [vmem:[%s107 + $0x70] sm:$0x1]
      %v219 = vld [vmem:[%s107 + $0x71] sm:$0x1]
      %v220 = vld [vmem:[%s107 + $0x72] sm:$0x1]
      %v221 = vld [vmem:[%s107 + $0x73] sm:$0x1]
      %v222 = vld [vmem:[%s107 + $0x74] sm:$0x1]
      %v223 = vld [vmem:[%s107 + $0x75] sm:$0x1]
      %v224 = vld [vmem:[%s107 + $0x76] sm:$0x1]
      %v225 = vld [vmem:[%s107 + $0x77] sm:$0x1]
      %v226 = vld [vmem:[%s107 + $0x78] sm:$0x1]
      %v227 = vld [vmem:[%s107 + $0x79] sm:$0x1]
      %v228 = vld [vmem:[%s107 + $0x7a] sm:$0x1]
      %v229 = vld [vmem:[%s107 + $0x7b] sm:$0x1]
      %v230 = vld [vmem:[%s107 + $0x7c] sm:$0x1]
      %v231 = vld [vmem:[%s107 + $0x7e] sm:$0x1]
      %v232 = vld [vmem:[%s107 + $0x7f] sm:$0x1]
      %v233 = vld [vmem:[%s107 + $0x80] sm:$0x1]
      %v234 = vld [vmem:[%s107 + $0x81] sm:$0x1]
      %v235 = vld [vmem:[%s107 + $0x82] sm:$0x1]
      %v236 = vld [vmem:[%s107 + $0x83] sm:$0x1]
      %v237 = vld [vmem:[%s107 + $0x84] sm:$0x1]
      %v238 = vld [vmem:[%s107 + $0x85] sm:$0x1]
      %v239 = vld [vmem:[%s107 + $0x86] sm:$0x1]
      %v240 = vld [vmem:[%s107 + $0x87] sm:$0x1]
      %v241 = vld [vmem:[%s107 + $0x88] sm:$0x1]
      %v242 = vld [vmem:[%s107 + $0x89] sm:$0x1]
      %v243 = vld [vmem:[%s107 + $0x8a] sm:$0x1]
      %v244 = vld [vmem:[%s107 + $0x8b] sm:$0x1]
      %v245 = vld [vmem:[%s107 + $0x8c] sm:$0x1]
      %v246 = vld [vmem:[%s107 + $0x8d] sm:$0x1]
      %v247 = vld [vmem:[%s107 + $0x8e] sm:$0x1]
      %v248 = vld [vmem:[%s107 + $0x90] sm:$0x1]
      %v249 = vld [vmem:[%s107 + $0x91] sm:$0x1]
      %v250 = vld [vmem:[%s107 + $0x92] sm:$0x1]
      %v251 = vld [vmem:[%s107 + $0x93] sm:$0x1]
      %v252 = vld [vmem:[%s107 + $0x94] sm:$0x1]
      %v253 = vld [vmem:[%s107 + $0x95] sm:$0x1]
      %v254 = vld [vmem:[%s107 + $0x96] sm:$0x1]
      %v255 = vld [vmem:[%s107 + $0x97] sm:$0x1]
      %v256 = vld [vmem:[%s107 + $0x98] sm:$0x1]
      %v257 = vld [vmem:[%s107 + $0x99] sm:$0x1]
      %v258 = vld [vmem:[%s107 + $0x9a] sm:$0x1]
      %v259 = vld [vmem:[%s107 + $0x9b] sm:$0x1]
      %v260 = vld [vmem:[%s107 + $0x9c] sm:$0x1]
      %v261 = vld [vmem:[%s107 + $0x9d] sm:$0x1]
      %v262 = vld [vmem:[%s107 + $0x9e] sm:$0x1]
      %v263 = vld [vmem:[%s107 + $0x9f] sm:$0x1]
      %v264 = vld [vmem:[%s107 + $0xa0] sm:$0x1]
      %v265 = vld [vmem:[%s107 + $0xa2] sm:$0x1]
      %v266 = vld [vmem:[%s107 + $0xa3] sm:$0x1]
      %v267 = vld [vmem:[%s107 + $0xa4] sm:$0x1]
      %v268 = vld [vmem:[%s107 + $0xa5] sm:$0x1]
      %v269 = vld [vmem:[%s107 + $0xa6] sm:$0x1]
      %v270 = vld [vmem:[%s107 + $0xa7] sm:$0x1]
      %v271 = vld [vmem:[%s107 + $0xa8] sm:$0x1]
      %v272 = vld [vmem:[%s107 + $0xa9] sm:$0x1]
      %v273 = vld [vmem:[%s107 + $0xaa] sm:$0x1]
      %v274 = vld [vmem:[%s107 + $0xab] sm:$0x1]
      %v275 = vld [vmem:[%s107 + $0xac] sm:$0x1]
      %v276 = vld [vmem:[%s107 + $0xad] sm:$0x1]
      %v277 = vld [vmem:[%s107 + $0xae] sm:$0x1]
      %v278 = vld [vmem:[%s107 + $0xaf] sm:$0x1]
      %v279 = vld [vmem:[%s107 + $0xb0] sm:$0x1]
      %v280 = vld [vmem:[%s107 + $0xb1] sm:$0x1]
      %v281 = vld [vmem:[%s107 + $0xb2] sm:$0x1]
      %v282 = vld [vmem:[%s107 + $0xb4] sm:$0x1]
      %v283 = vld [vmem:[%s107 + $0xb5] sm:$0x1]
      %v284 = vld [vmem:[%s107 + $0xb6] sm:$0x1]
      %v285 = vld [vmem:[%s107 + $0xb7] sm:$0x1]
      %v286 = vld [vmem:[%s107 + $0xb8] sm:$0x1]
      %v287 = vld [vmem:[%s107 + $0xb9] sm:$0x1]
      %v288 = vld [vmem:[%s107 + $0xba] sm:$0x1]
      %v289 = vld [vmem:[%s107 + $0xbb] sm:$0x1]
      %v290 = vld [vmem:[%s107 + $0xbc] sm:$0x1]
      %v291 = vld [vmem:[%s107 + $0xbd] sm:$0x1]
      %v292 = vld [vmem:[%s107 + $0xbe] sm:$0x1]
      %v293 = vld [vmem:[%s107 + $0xbf] sm:$0x1]
      %v294 = vld [vmem:[%s107 + $0xc0] sm:$0x1]
      %v295 = vld [vmem:[%s107 + $0xc1] sm:$0x1]
      %v296 = vld [vmem:[%s107 + $0xc2] sm:$0x1]
      %v297 = vld [vmem:[%s107 + $0xc3] sm:$0x1]
      %v298 = vld [vmem:[%s107 + $0xc4] sm:$0x1]
      %v299 = vld [vmem:[%s107 + $0xc6] sm:$0x1]
      %v300 = vld [vmem:[%s107 + $0xc7] sm:$0x1]
      %v301 = vld [vmem:[%s107 + $0xc8] sm:$0x1]
      %v302 = vld [vmem:[%s107 + $0xc9] sm:$0x1]
      %v303 = vld [vmem:[%s107 + $0xca] sm:$0x1]
      %v304 = vld [vmem:[%s107 + $0xcb] sm:$0x1]
      %v305 = vld [vmem:[%s107 + $0xcc] sm:$0x1]
      %v306 = vld [vmem:[%s107 + $0xcd] sm:$0x1]
      %v307 = vld [vmem:[%s107 + $0xce] sm:$0x1]
      %v308 = vld [vmem:[%s107 + $0xcf] sm:$0x1]
      %v309 = vld [vmem:[%s107 + $0xd0] sm:$0x1]
      %v310 = vld [vmem:[%s107 + $0xd1] sm:$0x1]
      %v311 = vld [vmem:[%s107 + $0xd2] sm:$0x1]
      %v312 = vld [vmem:[%s107 + $0xd3] sm:$0x1]
      %v313 = vld [vmem:[%s107 + $0xd4] sm:$0x1]
      %v314 = vld [vmem:[%s107 + $0xd5] sm:$0x1]
      %v315 = vld [vmem:[%s107 + $0xd6] sm:$0x1]
      %v316 = vld [vmem:[%s107 + $0xd8] sm:$0x1]
      %v317 = vld [vmem:[%s107 + $0xd9] sm:$0x1]
      %v318 = vld [vmem:[%s107 + $0xda] sm:$0x1]
      %v319 = vld [vmem:[%s107 + $0xdb] sm:$0x1]
      %v320 = vld [vmem:[%s107 + $0xdc] sm:$0x1]
      %v321 = vld [vmem:[%s107 + $0xdd] sm:$0x1]
      %v322 = vld [vmem:[%s107 + $0xde] sm:$0x1]
      %v323 = vld [vmem:[%s107 + $0xdf] sm:$0x1]
      %v324 = vld [vmem:[%s107 + $0xe0] sm:$0x1]
      %v325 = vld [vmem:[%s107 + $0xe1] sm:$0x1]
      %v326 = vld [vmem:[%s107 + $0xe2] sm:$0x1]
      %v327 = vld [vmem:[%s107 + $0xe3] sm:$0x1]
      %v328 = vld [vmem:[%s107 + $0xe4] sm:$0x1]
      %v329 = vld [vmem:[%s107 + $0xe5] sm:$0x1]
      %v330 = vld [vmem:[%s107 + $0xe6] sm:$0x1]
      %v331 = vld [vmem:[%s107 + $0xe7] sm:$0x1]
      %v332 = vld [vmem:[%s107 + $0xe8] sm:$0x1]
      %v333 = vld [vmem:[%s107 + $0xea] sm:$0x1]
      %v334 = vld [vmem:[%s107 + $0xeb] sm:$0x1]
      %v335 = vld [vmem:[%s107 + $0xec] sm:$0x1]
      %v336 = vld [vmem:[%s107 + $0xed] sm:$0x1]
      %v337 = vld [vmem:[%s107 + $0xee] sm:$0x1]
      %v338 = vld [vmem:[%s107 + $0xef] sm:$0x1]
      %v339 = vld [vmem:[%s107 + $0xf0] sm:$0x1]
      %v340 = vld [vmem:[%s107 + $0xf1] sm:$0x1]
      %v341 = vld [vmem:[%s107 + $0xf2] sm:$0x1]
      %v342 = vld [vmem:[%s107 + $0xf3] sm:$0x1]
      %v343 = vld [vmem:[%s107 + $0xf4] sm:$0x1]
      %v344 = vld [vmem:[%s107 + $0xf5] sm:$0x1]
      %v345 = vld [vmem:[%s107 + $0xf6] sm:$0x1]
      %v346 = vld [vmem:[%s107 + $0xf7] sm:$0x1]
      %v347 = vld [vmem:[%s107 + $0xf8] sm:$0x1]
      %v348 = vld [vmem:[%s107 + $0xf9] sm:$0x1]
      %v349 = vld [vmem:[%s107 + $0xfa] sm:$0x1]
      %v350 = vld [vmem:[%s107 + $0xfc] sm:$0x1]
      %v351 = vld [vmem:[%s107 + $0xfd] sm:$0x1]
      %v352 = vld [vmem:[%s107 + $0xfe] sm:$0x1]
      %v353 = vld [vmem:[%s107 + $0xff] sm:$0x1]
      %v354 = vld [vmem:[%s107 + $0x100] sm:$0x1]
      %v355 = vld [vmem:[%s107 + $0x101] sm:$0x1]
      %v356 = vld [vmem:[%s107 + $0x102] sm:$0x1]
      %v357 = vld [vmem:[%s107 + $0x103] sm:$0x1]
      %v358 = vld [vmem:[%s107 + $0x104] sm:$0x1]
      %v359 = vld [vmem:[%s107 + $0x105] sm:$0x1]
      %v360 = vld [vmem:[%s107 + $0x106] sm:$0x1]
      %v361 = vld [vmem:[%s107 + $0x107] sm:$0x1]
      %v362 = vld [vmem:[%s107 + $0x108] sm:$0x1]
      %v363 = vld [vmem:[%s107 + $0x109] sm:$0x1]
      %v364 = vld [vmem:[%s107 + $0x10a] sm:$0x1]
      %v365 = vld [vmem:[%s107 + $0x10b] sm:$0x1]
      %v366 = vld [vmem:[%s107 + $0x10c] sm:$0x1]
      %v367 = vld [vmem:[%s107 + $0x10e] sm:$0x1]
      %v368 = vld [vmem:[%s107 + $0x10f] sm:$0x1]
      %v369 = vld [vmem:[%s107 + $0x110] sm:$0x1]
      %v370 = vld [vmem:[%s107 + $0x111] sm:$0x1]
      %v371 = vld [vmem:[%s107 + $0x112] sm:$0x1]
      %v372 = vld [vmem:[%s107 + $0x113] sm:$0x1]
      %v373 = vld [vmem:[%s107 + $0x114] sm:$0x1]
      %v374 = vld [vmem:[%s107 + $0x115] sm:$0x1]
      %v375 = vld [vmem:[%s107 + $0x116] sm:$0x1]
      %v376 = vld [vmem:[%s107 + $0x117] sm:$0x1]
      %v377 = vld [vmem:[%s107 + $0x118] sm:$0x1]
      %v378 = vld [vmem:[%s107 + $0x119] sm:$0x1]
      %v379 = vld [vmem:[%s107 + $0x11a] sm:$0x1]
      %v380 = vld [vmem:[%s107 + $0x11b] sm:$0x1]
      %v381 = vld [vmem:[%s107 + $0x11c] sm:$0x1]
      %v382 = vld [vmem:[%s107 + $0x11d] sm:$0x1]
      %v383 = vld [vmem:[%s107 + $0x11e] sm:$0x1]
      %v384 = vld [vmem:[%s107 + $0x120] sm:$0x1]
      %v385 = vld [vmem:[%s107 + $0x121] sm:$0x1]
      %v386 = vld [vmem:[%s107 + $0x122] sm:$0x1]
      %v387 = vld [vmem:[%s107 + $0x123] sm:$0x1]
      %v388 = vld [vmem:[%s107 + $0x124] sm:$0x1]
      %v389 = vld [vmem:[%s107 + $0x125] sm:$0x1]
      %v390 = vld [vmem:[%s107 + $0x126] sm:$0x1]
      %v391 = vld [vmem:[%s107 + $0x127] sm:$0x1]
      %v392 = vld [vmem:[%s107 + $0x128] sm:$0x1]
      %v393 = vld [vmem:[%s107 + $0x129] sm:$0x1]
      %v394 = vld [vmem:[%s107 + $0x12a] sm:$0x1]
      %v395 = vld [vmem:[%s107 + $0x12b] sm:$0x1]
      %v396 = vld [vmem:[%s107 + $0x12c] sm:$0x1]
      %v397 = vld [vmem:[%s107 + $0x12d] sm:$0x1]
      %v398 = vld [vmem:[%s107 + $0x12e] sm:$0x1]
      %v399 = vld [vmem:[%s107 + $0x12f] sm:$0x1]
      %v400 = vld [vmem:[%s107 + $0x130] sm:$0x1]
      %v401 = vunpack.c.l.bf16 %v112
      %v402 = vunpack.c.l.bf16 %v113
      %v403 = vunpack.c.l.bf16 %v114
      %v404 = vunpack.c.l.bf16 %v115
      %v405 = vunpack.c.l.bf16 %v116
      %v406 = vunpack.c.l.bf16 %v117
      %v407 = vunpack.c.l.bf16 %v118
      %v408 = vunpack.c.l.bf16 %v119
      %v409 = vunpack.c.l.bf16 %v120
      %v410 = vunpack.c.l.bf16 %v121
      %v411 = vunpack.c.l.bf16 %v122
      %v412 = vunpack.c.l.bf16 %v123
      %v413 = vunpack.c.l.bf16 %v124
      %v414 = vunpack.c.l.bf16 %v125
      %v415 = vunpack.c.l.bf16 %v126
      %v416 = vunpack.c.l.bf16 %v127
      %v417 = vunpack.c.l.bf16 %v128
      %v418 = vunpack.c.l.bf16 %v146
      %v419 = vunpack.c.l.bf16 %v147
      %v420 = vunpack.c.l.bf16 %v148
      %v421 = vunpack.c.l.bf16 %v149
      %v422 = vunpack.c.l.bf16 %v150
      %v423 = vunpack.c.l.bf16 %v151
      %v424 = vunpack.c.l.bf16 %v152
      %v425 = vunpack.c.l.bf16 %v153
      %v426 = vunpack.c.l.bf16 %v154
      %v427 = vunpack.c.l.bf16 %v155
      %v428 = vunpack.c.l.bf16 %v156
      %v429 = vunpack.c.l.bf16 %v157
      %v430 = vunpack.c.l.bf16 %v158
      %v431 = vunpack.c.l.bf16 %v159
      %v432 = vunpack.c.l.bf16 %v160
      %v433 = vunpack.c.l.bf16 %v161
      %v434 = vunpack.c.l.bf16 %v162
      %v435 = vunpack.c.l.bf16 %v180
      %v436 = vunpack.c.l.bf16 %v181
      %v437 = vunpack.c.l.bf16 %v182
      %v438 = vunpack.c.l.bf16 %v183
      %v439 = vunpack.c.l.bf16 %v184
      %v440 = vunpack.c.l.bf16 %v185
      %v441 = vunpack.c.l.bf16 %v186
      %v442 = vunpack.c.l.bf16 %v187
      %v443 = vunpack.c.l.bf16 %v188
      %v444 = vunpack.c.l.bf16 %v189
      %v445 = vunpack.c.l.bf16 %v190
      %v446 = vunpack.c.l.bf16 %v191
      %v447 = vunpack.c.l.bf16 %v192
      %v448 = vunpack.c.l.bf16 %v193
      %v449 = vunpack.c.l.bf16 %v194
      %v450 = vunpack.c.l.bf16 %v195
      %v451 = vunpack.c.l.bf16 %v196
      %v452 = vunpack.c.l.bf16 %v214
      %v453 = vunpack.c.l.bf16 %v215
      %v454 = vunpack.c.l.bf16 %v216
      %v455 = vunpack.c.l.bf16 %v217
      %v456 = vunpack.c.l.bf16 %v218
      %v457 = vunpack.c.l.bf16 %v219
      %v458 = vunpack.c.l.bf16 %v220
      %v459 = vunpack.c.l.bf16 %v221
      %v460 = vunpack.c.l.bf16 %v222
      %v461 = vunpack.c.l.bf16 %v223
      %v462 = vunpack.c.l.bf16 %v224
      %v463 = vunpack.c.l.bf16 %v225
      %v464 = vunpack.c.l.bf16 %v226
      %v465 = vunpack.c.l.bf16 %v227
      %v466 = vunpack.c.l.bf16 %v228
      %v467 = vunpack.c.l.bf16 %v229
      %v468 = vunpack.c.l.bf16 %v230
      %v469 = vunpack.c.l.bf16 %v248
      %v470 = vunpack.c.l.bf16 %v249
      %v471 = vunpack.c.l.bf16 %v250
      %v472 = vunpack.c.l.bf16 %v251
      %v473 = vunpack.c.l.bf16 %v252
      %v474 = vunpack.c.l.bf16 %v253
      %v475 = vunpack.c.l.bf16 %v254
      %v476 = vunpack.c.l.bf16 %v255
      %v477 = vunpack.c.l.bf16 %v256
      %v478 = vunpack.c.l.bf16 %v257
      %v479 = vunpack.c.l.bf16 %v258
      %v480 = vunpack.c.l.bf16 %v259
      %v481 = vunpack.c.l.bf16 %v260
      %v482 = vunpack.c.l.bf16 %v261
      %v483 = vunpack.c.l.bf16 %v262
      %v484 = vunpack.c.l.bf16 %v263
      %v485 = vunpack.c.l.bf16 %v264
      %v486 = vunpack.c.l.bf16 %v282
      %v487 = vunpack.c.l.bf16 %v283
      %v488 = vunpack.c.l.bf16 %v284
      %v489 = vunpack.c.l.bf16 %v285
      %v490 = vunpack.c.l.bf16 %v286
      %v491 = vunpack.c.l.bf16 %v287
      %v492 = vunpack.c.l.bf16 %v288
      %v493 = vunpack.c.l.bf16 %v289
      %v494 = vunpack.c.l.bf16 %v290
      %v495 = vunpack.c.l.bf16 %v291
      %v496 = vunpack.c.l.bf16 %v292
      %v497 = vunpack.c.l.bf16 %v293
      %v498 = vunpack.c.l.bf16 %v294
      %v499 = vunpack.c.l.bf16 %v295
      %v500 = vunpack.c.l.bf16 %v296
      %v501 = vunpack.c.l.bf16 %v297
      %v502 = vunpack.c.l.bf16 %v298
      %v503 = vunpack.c.l.bf16 %v316
      %v504 = vunpack.c.l.bf16 %v317
      %v505 = vunpack.c.l.bf16 %v318
      %v506 = vunpack.c.l.bf16 %v319
      %v507 = vunpack.c.l.bf16 %v320
      %v508 = vunpack.c.l.bf16 %v321
      %v509 = vunpack.c.l.bf16 %v322
      %v510 = vunpack.c.l.bf16 %v323
      %v511 = vunpack.c.l.bf16 %v324
      %v512 = vunpack.c.l.bf16 %v325
      %v513 = vunpack.c.l.bf16 %v326
      %v514 = vunpack.c.l.bf16 %v327
      %v515 = vunpack.c.l.bf16 %v328
      %v516 = vunpack.c.l.bf16 %v329
      %v517 = vunpack.c.l.bf16 %v330
      %v518 = vunpack.c.l.bf16 %v331
      %v519 = vunpack.c.l.bf16 %v332
      %v520 = vunpack.c.l.bf16 %v350
      %v521 = vunpack.c.l.bf16 %v351
      %v522 = vunpack.c.l.bf16 %v352
      %v523 = vunpack.c.l.bf16 %v353
      %v524 = vunpack.c.l.bf16 %v354
      %v525 = vunpack.c.l.bf16 %v355
      %v526 = vunpack.c.l.bf16 %v356
      %v527 = vunpack.c.l.bf16 %v357
      %v528 = vunpack.c.l.bf16 %v358
      %v529 = vunpack.c.l.bf16 %v359
      %v530 = vunpack.c.l.bf16 %v360
      %v531 = vunpack.c.l.bf16 %v361
      %v532 = vunpack.c.l.bf16 %v362
      %v533 = vunpack.c.l.bf16 %v363
      %v534 = vunpack.c.l.bf16 %v364
      %v535 = vunpack.c.l.bf16 %v365
      %v536 = vunpack.c.l.bf16 %v366
      %v537 = vunpack.c.l.bf16 %v129
      %v538 = vunpack.c.l.bf16 %v130
      %v539 = vunpack.c.l.bf16 %v131
      %v540 = vunpack.c.l.bf16 %v132
      %v541 = vunpack.c.l.bf16 %v133
      %v542 = vunpack.c.l.bf16 %v134
      %v543 = vunpack.c.l.bf16 %v135
      %v544 = vunpack.c.l.bf16 %v136
      %v545 = vunpack.c.l.bf16 %v137
      %v546 = vunpack.c.l.bf16 %v138
      %v547 = vunpack.c.l.bf16 %v139
      %v548 = vunpack.c.l.bf16 %v140
      %v549 = vunpack.c.l.bf16 %v141
      %v550 = vunpack.c.l.bf16 %v142
      %v551 = vunpack.c.l.bf16 %v143
      %v552 = vunpack.c.l.bf16 %v144
      %v553 = vunpack.c.l.bf16 %v145
      %v554 = vunpack.c.l.bf16 %v163
      %v555 = vunpack.c.l.bf16 %v164
      %v556 = vunpack.c.l.bf16 %v165
      %v557 = vunpack.c.l.bf16 %v166
      %v558 = vunpack.c.l.bf16 %v167
      %v559 = vunpack.c.l.bf16 %v168
      %v560 = vunpack.c.l.bf16 %v169
      %v561 = vunpack.c.l.bf16 %v170
      %v562 = vunpack.c.l.bf16 %v171
      %v563 = vunpack.c.l.bf16 %v172
      %v564 = vunpack.c.l.bf16 %v173
      %v565 = vunpack.c.l.bf16 %v174
      %v566 = vunpack.c.l.bf16 %v175
      %v567 = vunpack.c.l.bf16 %v176
      %v568 = vunpack.c.l.bf16 %v177
      %v569 = vunpack.c.l.bf16 %v178
      %v570 = vunpack.c.l.bf16 %v179
      %v571 = vunpack.c.l.bf16 %v197
      %v572 = vunpack.c.l.bf16 %v198
      %v573 = vunpack.c.l.bf16 %v199
      %v574 = vunpack.c.l.bf16 %v200
      %v575 = vunpack.c.l.bf16 %v201
      %v576 = vunpack.c.l.bf16 %v202
      %v577 = vunpack.c.l.bf16 %v203
      %v578 = vunpack.c.l.bf16 %v204
      %v579 = vunpack.c.l.bf16 %v205
      %v580 = vunpack.c.l.bf16 %v206
      %v581 = vunpack.c.l.bf16 %v207
      %v582 = vunpack.c.l.bf16 %v208
      %v583 = vunpack.c.l.bf16 %v209
      %v584 = vunpack.c.l.bf16 %v210
      %v585 = vunpack.c.l.bf16 %v211
      %v586 = vunpack.c.l.bf16 %v212
      %v587 = vunpack.c.l.bf16 %v213
      %v588 = vunpack.c.l.bf16 %v231
      %v589 = vunpack.c.l.bf16 %v232
      %v590 = vunpack.c.l.bf16 %v233
      %v591 = vunpack.c.l.bf16 %v234
      %v592 = vunpack.c.l.bf16 %v235
      %v593 = vunpack.c.l.bf16 %v236
      %v594 = vunpack.c.l.bf16 %v237
      %v595 = vunpack.c.l.bf16 %v238
      %v596 = vunpack.c.l.bf16 %v239
      %v597 = vunpack.c.l.bf16 %v240
      %v598 = vunpack.c.l.bf16 %v241
      %v599 = vunpack.c.l.bf16 %v242
      %v600 = vunpack.c.l.bf16 %v243
      %v601 = vunpack.c.l.bf16 %v244
      %v602 = vunpack.c.l.bf16 %v245
      %v603 = vunpack.c.l.bf16 %v246
      %v604 = vunpack.c.l.bf16 %v247
      %v605 = vunpack.c.l.bf16 %v265
      %v606 = vunpack.c.l.bf16 %v266
      %v607 = vunpack.c.l.bf16 %v267
      %v608 = vunpack.c.l.bf16 %v268
      %v609 = vunpack.c.l.bf16 %v269
      %v610 = vunpack.c.l.bf16 %v270
      %v611 = vunpack.c.l.bf16 %v271
      %v612 = vunpack.c.l.bf16 %v272
      %v613 = vunpack.c.l.bf16 %v273
      %v614 = vunpack.c.l.bf16 %v274
      %v615 = vunpack.c.l.bf16 %v275
      %v616 = vunpack.c.l.bf16 %v276
      %v617 = vunpack.c.l.bf16 %v277
      %v618 = vunpack.c.l.bf16 %v278
      %v619 = vunpack.c.l.bf16 %v279
      %v620 = vunpack.c.l.bf16 %v280
      %v621 = vunpack.c.l.bf16 %v281
      %v622 = vunpack.c.l.bf16 %v299
      %v623 = vunpack.c.l.bf16 %v300
      %v624 = vunpack.c.l.bf16 %v301
      %v625 = vunpack.c.l.bf16 %v302
      %v626 = vunpack.c.l.bf16 %v303
      %v627 = vunpack.c.l.bf16 %v304
      %v628 = vunpack.c.l.bf16 %v305
      %v629 = vunpack.c.l.bf16 %v306
      %v630 = vunpack.c.l.bf16 %v307
      %v631 = vunpack.c.l.bf16 %v308
      %v632 = vunpack.c.l.bf16 %v309
      %v633 = vunpack.c.l.bf16 %v310
      %v634 = vunpack.c.l.bf16 %v311
      %v635 = vunpack.c.l.bf16 %v312
      %v636 = vunpack.c.l.bf16 %v313
      %v637 = vunpack.c.l.bf16 %v314
      %v638 = vunpack.c.l.bf16 %v315
      %v639 = vunpack.c.l.bf16 %v333
      %v640 = vunpack.c.l.bf16 %v334
      %v641 = vunpack.c.l.bf16 %v335
      %v642 = vunpack.c.l.bf16 %v336
      %v643 = vunpack.c.l.bf16 %v337
      %v644 = vunpack.c.l.bf16 %v338
      %v645 = vunpack.c.l.bf16 %v339
      %v646 = vunpack.c.l.bf16 %v340
      %v647 = vunpack.c.l.bf16 %v341
      %v648 = vunpack.c.l.bf16 %v342
      %v649 = vunpack.c.l.bf16 %v343
      %v650 = vunpack.c.l.bf16 %v344
      %v651 = vunpack.c.l.bf16 %v345
      %v652 = vunpack.c.l.bf16 %v346
      %v653 = vunpack.c.l.bf16 %v347
      %v654 = vunpack.c.l.bf16 %v348
      %v655 = vunpack.c.l.bf16 %v349
      %v656 = vunpack.c.l.bf16 %v367
      %v657 = vunpack.c.l.bf16 %v368
      %v658 = vunpack.c.l.bf16 %v369
      %v659 = vunpack.c.l.bf16 %v370
      %v660 = vunpack.c.l.bf16 %v371
      %v661 = vunpack.c.l.bf16 %v372
      %v662 = vunpack.c.l.bf16 %v373
      %v663 = vunpack.c.l.bf16 %v374
      %v664 = vunpack.c.l.bf16 %v375
      %v665 = vunpack.c.l.bf16 %v376
      %v666 = vunpack.c.l.bf16 %v377
      %v667 = vunpack.c.l.bf16 %v378
      %v668 = vunpack.c.l.bf16 %v379
      %v669 = vunpack.c.l.bf16 %v380
      %v670 = vunpack.c.l.bf16 %v381
      %v671 = vunpack.c.l.bf16 %v382
      %v672 = vunpack.c.l.bf16 %v383
      %v673 = vmax.f32 %v401, %v537
      %v674 = vmax.f32 %v402, %v538
      %v675 = vmax.f32 %v403, %v539
      %v676 = vmax.f32 %v404, %v540
      %v677 = vmax.f32 %v405, %v541
      %v678 = vmax.f32 %v406, %v542
      %v679 = vmax.f32 %v407, %v543
      %v680 = vmax.f32 %v408, %v544
      %v681 = vmax.f32 %v409, %v545
      %v682 = vmax.f32 %v410, %v546
      %v683 = vmax.f32 %v411, %v547
      %v684 = vmax.f32 %v412, %v548
      %v685 = vmax.f32 %v413, %v549
      %v686 = vmax.f32 %v414, %v550
      %v687 = vmax.f32 %v415, %v551
      %v688 = vmax.f32 %v416, %v552
      %v689 = vmax.f32 %v417, %v553
      %v690 = vmax.f32 %v418, %v554
      %v691 = vmax.f32 %v419, %v555
      %v692 = vmax.f32 %v420, %v556
      %v693 = vmax.f32 %v421, %v557
      %v694 = vmax.f32 %v422, %v558
      %v695 = vmax.f32 %v423, %v559
      %v696 = vmax.f32 %v424, %v560
      %v697 = vmax.f32 %v425, %v561
      %v698 = vmax.f32 %v426, %v562
      %v699 = vmax.f32 %v427, %v563
      %v700 = vmax.f32 %v428, %v564
      %v701 = vmax.f32 %v429, %v565
      %v702 = vmax.f32 %v430, %v566
      %v703 = vmax.f32 %v431, %v567
      %v704 = vmax.f32 %v432, %v568
      %v705 = vmax.f32 %v433, %v569
      %v706 = vmax.f32 %v434, %v570
      %v707 = vmax.f32 %v435, %v571
      %v708 = vmax.f32 %v436, %v572
      %v709 = vmax.f32 %v437, %v573
      %v710 = vmax.f32 %v438, %v574
      %v711 = vmax.f32 %v439, %v575
      %v712 = vmax.f32 %v440, %v576
      %v713 = vmax.f32 %v441, %v577
      %v714 = vmax.f32 %v442, %v578
      %v715 = vmax.f32 %v443, %v579
      %v716 = vmax.f32 %v444, %v580
      %v717 = vmax.f32 %v445, %v581
      %v718 = vmax.f32 %v446, %v582
      %v719 = vmax.f32 %v447, %v583
      %v720 = vmax.f32 %v448, %v584
      %v721 = vmax.f32 %v449, %v585
      %v722 = vmax.f32 %v450, %v586
      %v723 = vmax.f32 %v451, %v587
      %v724 = vmax.f32 %v452, %v588
      %v725 = vmax.f32 %v453, %v589
      %v726 = vmax.f32 %v454, %v590
      %v727 = vmax.f32 %v455, %v591
      %v728 = vmax.f32 %v456, %v592
      %v729 = vmax.f32 %v457, %v593
      %v730 = vmax.f32 %v458, %v594
      %v731 = vmax.f32 %v459, %v595
      %v732 = vmax.f32 %v460, %v596
      %v733 = vmax.f32 %v461, %v597
      %v734 = vmax.f32 %v462, %v598
      %v735 = vmax.f32 %v463, %v599
      %v736 = vmax.f32 %v464, %v600
      %v737 = vmax.f32 %v465, %v601
      %v738 = vmax.f32 %v466, %v602
      %v739 = vmax.f32 %v467, %v603
      %v740 = vmax.f32 %v468, %v604
      %v741 = vmax.f32 %v469, %v605
      %v742 = vmax.f32 %v470, %v606
      %v743 = vmax.f32 %v471, %v607
      %v744 = vmax.f32 %v472, %v608
      %v745 = vmax.f32 %v473, %v609
      %v746 = vmax.f32 %v474, %v610
      %v747 = vmax.f32 %v475, %v611
      %v748 = vmax.f32 %v476, %v612
      %v749 = vmax.f32 %v477, %v613
      %v750 = vmax.f32 %v478, %v614
      %v751 = vmax.f32 %v479, %v615
      %v752 = vmax.f32 %v480, %v616
      %v753 = vmax.f32 %v481, %v617
      %v754 = vmax.f32 %v482, %v618
      %v755 = vmax.f32 %v483, %v619
      %v756 = vmax.f32 %v484, %v620
      %v757 = vmax.f32 %v485, %v621
      %v758 = vmax.f32 %v486, %v622
      %v759 = vmax.f32 %v487, %v623
      %v760 = vmax.f32 %v488, %v624
      %v761 = vmax.f32 %v489, %v625
      %v762 = vmax.f32 %v490, %v626
      %v763 = vmax.f32 %v491, %v627
      %v764 = vmax.f32 %v492, %v628
      %v765 = vmax.f32 %v493, %v629
      %v766 = vmax.f32 %v494, %v630
      %v767 = vmax.f32 %v495, %v631
      %v768 = vmax.f32 %v496, %v632
      %v769 = vmax.f32 %v497, %v633
      %v770 = vmax.f32 %v498, %v634
      %v771 = vmax.f32 %v499, %v635
      %v772 = vmax.f32 %v500, %v636
      %v773 = vmax.f32 %v501, %v637
      %v774 = vmax.f32 %v502, %v638
      %v775 = vmax.f32 %v503, %v639
      %v776 = vmax.f32 %v504, %v640
      %v777 = vmax.f32 %v505, %v641
      %v778 = vmax.f32 %v506, %v642
      %v779 = vmax.f32 %v507, %v643
      %v780 = vmax.f32 %v508, %v644
      %v781 = vmax.f32 %v509, %v645
      %v782 = vmax.f32 %v510, %v646
      %v783 = vmax.f32 %v511, %v647
      %v784 = vmax.f32 %v512, %v648
      %v785 = vmax.f32 %v513, %v649
      %v786 = vmax.f32 %v514, %v650
      %v787 = vmax.f32 %v515, %v651
      %v788 = vmax.f32 %v516, %v652
      %v789 = vmax.f32 %v517, %v653
      %v790 = vmax.f32 %v518, %v654
      %v791 = vmax.f32 %v519, %v655
      %v792 = vmax.f32 %v520, %v656
      %v793 = vmax.f32 %v521, %v657
      %v794 = vmax.f32 %v522, %v658
      %v795 = vmax.f32 %v523, %v659
      %v796 = vmax.f32 %v524, %v660
      %v797 = vmax.f32 %v525, %v661
      %v798 = vmax.f32 %v526, %v662
      %v799 = vmax.f32 %v527, %v663
      %v800 = vmax.f32 %v528, %v664
      %v801 = vmax.f32 %v529, %v665
      %v802 = vmax.f32 %v530, %v666
      %v803 = vmax.f32 %v531, %v667
      %v804 = vmax.f32 %v532, %v668
      %v805 = vmax.f32 %v533, %v669
      %v806 = vmax.f32 %v534, %v670
      %v807 = vmax.f32 %v535, %v671
      %v808 = vmax.f32 %v536, %v672
      %v809 = vpack.c.bf16 %v673, %v673
      %v810 = vpack.c.bf16 %v674, %v674
      %v811 = vpack.c.bf16 %v675, %v675
      %v812 = vpack.c.bf16 %v676, %v676
      %v813 = vpack.c.bf16 %v677, %v677
      %v814 = vpack.c.bf16 %v678, %v678
      %v815 = vpack.c.bf16 %v679, %v679
      %v816 = vpack.c.bf16 %v680, %v680
      %v817 = vpack.c.bf16 %v681, %v681
      %v818 = vpack.c.bf16 %v682, %v682
      %v819 = vpack.c.bf16 %v683, %v683
      %v820 = vpack.c.bf16 %v684, %v684
      %v821 = vpack.c.bf16 %v685, %v685
      %v822 = vpack.c.bf16 %v686, %v686
      %v823 = vpack.c.bf16 %v687, %v687
      %v824 = vpack.c.bf16 %v688, %v688
      %v825 = vpack.c.bf16 %v689, %v689
      %v826 = vpack.c.bf16 %v690, %v690
      %v827 = vpack.c.bf16 %v691, %v691
      %v828 = vpack.c.bf16 %v692, %v692
      %v829 = vpack.c.bf16 %v693, %v693
      %v830 = vpack.c.bf16 %v694, %v694
      %v831 = vpack.c.bf16 %v695, %v695
      %v832 = vpack.c.bf16 %v696, %v696
      %v833 = vpack.c.bf16 %v697, %v697
      %v834 = vpack.c.bf16 %v698, %v698
      %v835 = vpack.c.bf16 %v699, %v699
      %v836 = vpack.c.bf16 %v700, %v700
      %v837 = vpack.c.bf16 %v701, %v701
      %v838 = vpack.c.bf16 %v702, %v702
      %v839 = vpack.c.bf16 %v703, %v703
      %v840 = vpack.c.bf16 %v704, %v704
      %v841 = vpack.c.bf16 %v705, %v705
      %v842 = vpack.c.bf16 %v706, %v706
      %v843 = vpack.c.bf16 %v707, %v707
      %v844 = vpack.c.bf16 %v708, %v708
      %v845 = vpack.c.bf16 %v709, %v709
      %v846 = vpack.c.bf16 %v710, %v710
      %v847 = vpack.c.bf16 %v711, %v711
      %v848 = vpack.c.bf16 %v712, %v712
      %v849 = vpack.c.bf16 %v713, %v713
      %v850 = vpack.c.bf16 %v714, %v714
      %v851 = vpack.c.bf16 %v715, %v715
      %v852 = vpack.c.bf16 %v716, %v716
      %v853 = vpack.c.bf16 %v717, %v717
      %v854 = vpack.c.bf16 %v718, %v718
      %v855 = vpack.c.bf16 %v719, %v719
      %v856 = vpack.c.bf16 %v720, %v720
      %v857 = vpack.c.bf16 %v721, %v721
      %v858 = vpack.c.bf16 %v722, %v722
      %v859 = vpack.c.bf16 %v723, %v723
      %v860 = vpack.c.bf16 %v724, %v724
      %v861 = vpack.c.bf16 %v725, %v725
      %v862 = vpack.c.bf16 %v726, %v726
      %v863 = vpack.c.bf16 %v727, %v727
      %v864 = vpack.c.bf16 %v728, %v728
      %v865 = vpack.c.bf16 %v729, %v729
      %v866 = vpack.c.bf16 %v730, %v730
      %v867 = vpack.c.bf16 %v731, %v731
      %v868 = vpack.c.bf16 %v732, %v732
      %v869 = vpack.c.bf16 %v733, %v733
      %v870 = vpack.c.bf16 %v734, %v734
      %v871 = vpack.c.bf16 %v735, %v735
      %v872 = vpack.c.bf16 %v736, %v736
      %v873 = vpack.c.bf16 %v737, %v737
      %v874 = vpack.c.bf16 %v738, %v738
      %v875 = vpack.c.bf16 %v739, %v739
      %v876 = vpack.c.bf16 %v740, %v740
      %v877 = vpack.c.bf16 %v741, %v741
      %v878 = vpack.c.bf16 %v742, %v742
      %v879 = vpack.c.bf16 %v743, %v743
      %v880 = vpack.c.bf16 %v744, %v744
      %v881 = vpack.c.bf16 %v745, %v745
      %v882 = vpack.c.bf16 %v746, %v746
      %v883 = vpack.c.bf16 %v747, %v747
      %v884 = vpack.c.bf16 %v748, %v748
      %v885 = vpack.c.bf16 %v749, %v749
      %v886 = vpack.c.bf16 %v750, %v750
      %v887 = vpack.c.bf16 %v751, %v751
      %v888 = vpack.c.bf16 %v752, %v752
      %v889 = vpack.c.bf16 %v753, %v753
      %v890 = vpack.c.bf16 %v754, %v754
      %v891 = vpack.c.bf16 %v755, %v755
      %v892 = vpack.c.bf16 %v756, %v756
      %v893 = vpack.c.bf16 %v757, %v757
      %v894 = vpack.c.bf16 %v758, %v758
      %v895 = vpack.c.bf16 %v759, %v759
      %v896 = vpack.c.bf16 %v760, %v760
      %v897 = vpack.c.bf16 %v761, %v761
      %v898 = vpack.c.bf16 %v762, %v762
      %v899 = vpack.c.bf16 %v763, %v763
      %v900 = vpack.c.bf16 %v764, %v764
      %v901 = vpack.c.bf16 %v765, %v765
      %v902 = vpack.c.bf16 %v766, %v766
      %v903 = vpack.c.bf16 %v767, %v767
      %v904 = vpack.c.bf16 %v768, %v768
      %v905 = vpack.c.bf16 %v769, %v769
      %v906 = vpack.c.bf16 %v770, %v770
      %v907 = vpack.c.bf16 %v771, %v771
      %v908 = vpack.c.bf16 %v772, %v772
      %v909 = vpack.c.bf16 %v773, %v773
      %v910 = vpack.c.bf16 %v774, %v774
      %v911 = vpack.c.bf16 %v775, %v775
      %v912 = vpack.c.bf16 %v776, %v776
      %v913 = vpack.c.bf16 %v777, %v777
      %v914 = vpack.c.bf16 %v778, %v778
      %v915 = vpack.c.bf16 %v779, %v779
      %v916 = vpack.c.bf16 %v780, %v780
      %v917 = vpack.c.bf16 %v781, %v781
      %v918 = vpack.c.bf16 %v782, %v782
      %v919 = vpack.c.bf16 %v783, %v783
      %v920 = vpack.c.bf16 %v784, %v784
      %v921 = vpack.c.bf16 %v785, %v785
      %v922 = vpack.c.bf16 %v786, %v786
      %v923 = vpack.c.bf16 %v787, %v787
      %v924 = vpack.c.bf16 %v788, %v788
      %v925 = vpack.c.bf16 %v789, %v789
      %v926 = vpack.c.bf16 %v790, %v790
      %v927 = vpack.c.bf16 %v791, %v791
      %v928 = vpack.c.bf16 %v792, %v792
      %v929 = vpack.c.bf16 %v793, %v793
      %v930 = vpack.c.bf16 %v794, %v794
      %v931 = vpack.c.bf16 %v795, %v795
      %v932 = vpack.c.bf16 %v796, %v796
      %v933 = vpack.c.bf16 %v797, %v797
      %v934 = vpack.c.bf16 %v798, %v798
      %v935 = vpack.c.bf16 %v799, %v799
      %v936 = vpack.c.bf16 %v800, %v800
      %v937 = vpack.c.bf16 %v801, %v801
      %v938 = vpack.c.bf16 %v802, %v802
      %v939 = vpack.c.bf16 %v803, %v803
      %v940 = vpack.c.bf16 %v804, %v804
      %v941 = vpack.c.bf16 %v805, %v805
      %v942 = vpack.c.bf16 %v806, %v806
      %v943 = vpack.c.bf16 %v807, %v807
      %v944 = vpack.c.bf16 %v808, %v808
      %v945 = vunpack.c.l.bf16 %v809
      %v946 = vunpack.c.l.bf16 %v810
      %v947 = vunpack.c.l.bf16 %v811
      %v948 = vunpack.c.l.bf16 %v812
      %v949 = vunpack.c.l.bf16 %v813
      %v950 = vunpack.c.l.bf16 %v814
      %v951 = vunpack.c.l.bf16 %v815
      %v952 = vunpack.c.l.bf16 %v816
      %v953 = vunpack.c.l.bf16 %v817
      %v954 = vunpack.c.l.bf16 %v818
      %v955 = vunpack.c.l.bf16 %v819
      %v956 = vunpack.c.l.bf16 %v820
      %v957 = vunpack.c.l.bf16 %v821
      %v958 = vunpack.c.l.bf16 %v822
      %v959 = vunpack.c.l.bf16 %v823
      %v960 = vunpack.c.l.bf16 %v824
      %v961 = vunpack.c.l.bf16 %v825
      %v962 = vunpack.c.l.bf16 %v826
      %v963 = vunpack.c.l.bf16 %v827
      %v964 = vunpack.c.l.bf16 %v828
      %v965 = vunpack.c.l.bf16 %v829
      %v966 = vunpack.c.l.bf16 %v830
      %v967 = vunpack.c.l.bf16 %v831
      %v968 = vunpack.c.l.bf16 %v832
      %v969 = vunpack.c.l.bf16 %v833
      %v970 = vunpack.c.l.bf16 %v834
      %v971 = vunpack.c.l.bf16 %v835
      %v972 = vunpack.c.l.bf16 %v836
      %v973 = vunpack.c.l.bf16 %v837
      %v974 = vunpack.c.l.bf16 %v838
      %v975 = vunpack.c.l.bf16 %v839
      %v976 = vunpack.c.l.bf16 %v840
      %v977 = vunpack.c.l.bf16 %v841
      %v978 = vunpack.c.l.bf16 %v842
      %v979 = vunpack.c.l.bf16 %v843
      %v980 = vunpack.c.l.bf16 %v844
      %v981 = vunpack.c.l.bf16 %v845
      %v982 = vunpack.c.l.bf16 %v846
      %v983 = vunpack.c.l.bf16 %v847
      %v984 = vunpack.c.l.bf16 %v848
      %v985 = vunpack.c.l.bf16 %v849
      %v986 = vunpack.c.l.bf16 %v850
      %v987 = vunpack.c.l.bf16 %v851
      %v988 = vunpack.c.l.bf16 %v852
      %v989 = vunpack.c.l.bf16 %v853
      %v990 = vunpack.c.l.bf16 %v854
      %v991 = vunpack.c.l.bf16 %v855
      %v992 = vunpack.c.l.bf16 %v856
      %v993 = vunpack.c.l.bf16 %v857
      %v994 = vunpack.c.l.bf16 %v858
      %v995 = vunpack.c.l.bf16 %v859
      %v996 = vunpack.c.l.bf16 %v860
      %v997 = vunpack.c.l.bf16 %v861
      %v998 = vunpack.c.l.bf16 %v862
      %v999 = vunpack.c.l.bf16 %v863
      %v1000 = vunpack.c.l.bf16 %v864
      %v1001 = vunpack.c.l.bf16 %v865
      %v1002 = vunpack.c.l.bf16 %v866
      %v1003 = vunpack.c.l.bf16 %v867
      %v1004 = vunpack.c.l.bf16 %v868
      %v1005 = vunpack.c.l.bf16 %v869
      %v1006 = vunpack.c.l.bf16 %v870
      %v1007 = vunpack.c.l.bf16 %v871
      %v1008 = vunpack.c.l.bf16 %v872
      %v1009 = vunpack.c.l.bf16 %v873
      %v1010 = vunpack.c.l.bf16 %v874
      %v1011 = vunpack.c.l.bf16 %v875
      %v1012 = vunpack.c.l.bf16 %v876
      %v1013 = vunpack.c.l.bf16 %v877
      %v1014 = vunpack.c.l.bf16 %v878
      %v1015 = vunpack.c.l.bf16 %v879
      %v1016 = vunpack.c.l.bf16 %v880
      %v1017 = vunpack.c.l.bf16 %v881
      %v1018 = vunpack.c.l.bf16 %v882
      %v1019 = vunpack.c.l.bf16 %v883
      %v1020 = vunpack.c.l.bf16 %v884
      %v1021 = vunpack.c.l.bf16 %v885
      %v1022 = vunpack.c.l.bf16 %v886
      %v1023 = vunpack.c.l.bf16 %v887
      %v1024 = vunpack.c.l.bf16 %v888
      %v1025 = vunpack.c.l.bf16 %v889
      %v1026 = vunpack.c.l.bf16 %v890
      %v1027 = vunpack.c.l.bf16 %v891
      %v1028 = vunpack.c.l.bf16 %v892
      %v1029 = vunpack.c.l.bf16 %v893
      %v1030 = vunpack.c.l.bf16 %v894
      %v1031 = vunpack.c.l.bf16 %v895
      %v1032 = vunpack.c.l.bf16 %v896
      %v1033 = vunpack.c.l.bf16 %v897
      %v1034 = vunpack.c.l.bf16 %v898
      %v1035 = vunpack.c.l.bf16 %v899
      %v1036 = vunpack.c.l.bf16 %v900
      %v1037 = vunpack.c.l.bf16 %v901
      %v1038 = vunpack.c.l.bf16 %v902
      %v1039 = vunpack.c.l.bf16 %v903
      %v1040 = vunpack.c.l.bf16 %v904
      %v1041 = vunpack.c.l.bf16 %v905
      %v1042 = vunpack.c.l.bf16 %v906
      %v1043 = vunpack.c.l.bf16 %v907
      %v1044 = vunpack.c.l.bf16 %v908
      %v1045 = vunpack.c.l.bf16 %v909
      %v1046 = vunpack.c.l.bf16 %v910
      %v1047 = vunpack.c.l.bf16 %v911
      %v1048 = vunpack.c.l.bf16 %v912
      %v1049 = vunpack.c.l.bf16 %v913
      %v1050 = vunpack.c.l.bf16 %v914
      %v1051 = vunpack.c.l.bf16 %v915
      %v1052 = vunpack.c.l.bf16 %v916
      %v1053 = vunpack.c.l.bf16 %v917
      %v1054 = vunpack.c.l.bf16 %v918
      %v1055 = vunpack.c.l.bf16 %v919
      %v1056 = vunpack.c.l.bf16 %v920
      %v1057 = vunpack.c.l.bf16 %v921
      %v1058 = vunpack.c.l.bf16 %v922
      %v1059 = vunpack.c.l.bf16 %v923
      %v1060 = vunpack.c.l.bf16 %v924
      %v1061 = vunpack.c.l.bf16 %v925
      %v1062 = vunpack.c.l.bf16 %v926
      %v1063 = vunpack.c.l.bf16 %v927
      %v1064 = vunpack.c.l.bf16 %v928
      %v1065 = vunpack.c.l.bf16 %v929
      %v1066 = vunpack.c.l.bf16 %v930
      %v1067 = vunpack.c.l.bf16 %v931
      %v1068 = vunpack.c.l.bf16 %v932
      %v1069 = vunpack.c.l.bf16 %v933
      %v1070 = vunpack.c.l.bf16 %v934
      %v1071 = vunpack.c.l.bf16 %v935
      %v1072 = vunpack.c.l.bf16 %v936
      %v1073 = vunpack.c.l.bf16 %v937
      %v1074 = vunpack.c.l.bf16 %v938
      %v1075 = vunpack.c.l.bf16 %v939
      %v1076 = vunpack.c.l.bf16 %v940
      %v1077 = vunpack.c.l.bf16 %v941
      %v1078 = vunpack.c.l.bf16 %v942
      %v1079 = vunpack.c.l.bf16 %v943
      %v1080 = vunpack.c.l.bf16 %v944
      %v1081 = vunpack.c.l.bf16 %v384
      %v1082 = vunpack.c.l.bf16 %v385
      %v1083 = vunpack.c.l.bf16 %v386
      %v1084 = vunpack.c.l.bf16 %v387
      %v1085 = vunpack.c.l.bf16 %v388
      %v1086 = vunpack.c.l.bf16 %v389
      %v1087 = vunpack.c.l.bf16 %v390
      %v1088 = vunpack.c.l.bf16 %v391
      %v1089 = vunpack.c.l.bf16 %v392
      %v1090 = vunpack.c.l.bf16 %v393
      %v1091 = vunpack.c.l.bf16 %v394
      %v1092 = vunpack.c.l.bf16 %v395
      %v1093 = vunpack.c.l.bf16 %v396
      %v1094 = vunpack.c.l.bf16 %v397
      %v1095 = vunpack.c.l.bf16 %v398
      %v1096 = vunpack.c.l.bf16 %v399
      %v1097 = vunpack.c.l.bf16 %v400
      %v1098 = vmax.f32 %v945, %v418
      %v1099 = vmax.f32 %v946, %v419
      %v1100 = vmax.f32 %v947, %v420
      %v1101 = vmax.f32 %v948, %v421
      %v1102 = vmax.f32 %v949, %v422
      %v1103 = vmax.f32 %v950, %v423
      %v1104 = vmax.f32 %v951, %v424
      %v1105 = vmax.f32 %v952, %v425
      %v1106 = vmax.f32 %v953, %v426
      %v1107 = vmax.f32 %v954, %v427
      %v1108 = vmax.f32 %v955, %v428
      %v1109 = vmax.f32 %v956, %v429
      %v1110 = vmax.f32 %v957, %v430
      %v1111 = vmax.f32 %v958, %v431
      %v1112 = vmax.f32 %v959, %v432
      %v1113 = vmax.f32 %v960, %v433
      %v1114 = vmax.f32 %v961, %v434
      %v1115 = vmax.f32 %v962, %v435
      %v1116 = vmax.f32 %v963, %v436
      %v1117 = vmax.f32 %v964, %v437
      %v1118 = vmax.f32 %v965, %v438
      %v1119 = vmax.f32 %v966, %v439
      %v1120 = vmax.f32 %v967, %v440
      %v1121 = vmax.f32 %v968, %v441
      %v1122 = vmax.f32 %v969, %v442
      %v1123 = vmax.f32 %v970, %v443
      %v1124 = vmax.f32 %v971, %v444
      %v1125 = vmax.f32 %v972, %v445
      %v1126 = vmax.f32 %v973, %v446
      %v1127 = vmax.f32 %v974, %v447
      %v1128 = vmax.f32 %v975, %v448
      %v1129 = vmax.f32 %v976, %v449
      %v1130 = vmax.f32 %v977, %v450
      %v1131 = vmax.f32 %v978, %v451
      %v1132 = vmax.f32 %v979, %v452
      %v1133 = vmax.f32 %v980, %v453
      %v1134 = vmax.f32 %v981, %v454
      %v1135 = vmax.f32 %v982, %v455
      %v1136 = vmax.f32 %v983, %v456
      %v1137 = vmax.f32 %v984, %v457
      %v1138 = vmax.f32 %v985, %v458
      %v1139 = vmax.f32 %v986, %v459
      %v1140 = vmax.f32 %v987, %v460
      %v1141 = vmax.f32 %v988, %v461
      %v1142 = vmax.f32 %v989, %v462
      %v1143 = vmax.f32 %v990, %v463
      %v1144 = vmax.f32 %v991, %v464
      %v1145 = vmax.f32 %v992, %v465
      %v1146 = vmax.f32 %v993, %v466
      %v1147 = vmax.f32 %v994, %v467
      %v1148 = vmax.f32 %v995, %v468
      %v1149 = vmax.f32 %v996, %v469
      %v1150 = vmax.f32 %v997, %v470
      %v1151 = vmax.f32 %v998, %v471
      %v1152 = vmax.f32 %v999, %v472
      %v1153 = vmax.f32 %v1000, %v473
      %v1154 = vmax.f32 %v1001, %v474
      %v1155 = vmax.f32 %v1002, %v475
      %v1156 = vmax.f32 %v1003, %v476
      %v1157 = vmax.f32 %v1004, %v477
      %v1158 = vmax.f32 %v1005, %v478
      %v1159 = vmax.f32 %v1006, %v479
      %v1160 = vmax.f32 %v1007, %v480
      %v1161 = vmax.f32 %v1008, %v481
      %v1162 = vmax.f32 %v1009, %v482
      %v1163 = vmax.f32 %v1010, %v483
      %v1164 = vmax.f32 %v1011, %v484
      %v1165 = vmax.f32 %v1012, %v485
      %v1166 = vmax.f32 %v1013, %v486
      %v1167 = vmax.f32 %v1014, %v487
      %v1168 = vmax.f32 %v1015, %v488
      %v1169 = vmax.f32 %v1016, %v489
      %v1170 = vmax.f32 %v1017, %v490
      %v1171 = vmax.f32 %v1018, %v491
      %v1172 = vmax.f32 %v1019, %v492
      %v1173 = vmax.f32 %v1020, %v493
      %v1174 = vmax.f32 %v1021, %v494
      %v1175 = vmax.f32 %v1022, %v495
      %v1176 = vmax.f32 %v1023, %v496
      %v1177 = vmax.f32 %v1024, %v497
      %v1178 = vmax.f32 %v1025, %v498
      %v1179 = vmax.f32 %v1026, %v499
      %v1180 = vmax.f32 %v1027, %v500
      %v1181 = vmax.f32 %v1028, %v501
      %v1182 = vmax.f32 %v1029, %v502
      %v1183 = vmax.f32 %v1030, %v503
      %v1184 = vmax.f32 %v1031, %v504
      %v1185 = vmax.f32 %v1032, %v505
      %v1186 = vmax.f32 %v1033, %v506
      %v1187 = vmax.f32 %v1034, %v507
      %v1188 = vmax.f32 %v1035, %v508
      %v1189 = vmax.f32 %v1036, %v509
      %v1190 = vmax.f32 %v1037, %v510
      %v1191 = vmax.f32 %v1038, %v511
      %v1192 = vmax.f32 %v1039, %v512
      %v1193 = vmax.f32 %v1040, %v513
      %v1194 = vmax.f32 %v1041, %v514
      %v1195 = vmax.f32 %v1042, %v515
      %v1196 = vmax.f32 %v1043, %v516
      %v1197 = vmax.f32 %v1044, %v517
      %v1198 = vmax.f32 %v1045, %v518
      %v1199 = vmax.f32 %v1046, %v519
      %v1200 = vmax.f32 %v1047, %v520
      %v1201 = vmax.f32 %v1048, %v521
      %v1202 = vmax.f32 %v1049, %v522
      %v1203 = vmax.f32 %v1050, %v523
      %v1204 = vmax.f32 %v1051, %v524
      %v1205 = vmax.f32 %v1052, %v525
      %v1206 = vmax.f32 %v1053, %v526
      %v1207 = vmax.f32 %v1054, %v527
      %v1208 = vmax.f32 %v1055, %v528
      %v1209 = vmax.f32 %v1056, %v529
      %v1210 = vmax.f32 %v1057, %v530
      %v1211 = vmax.f32 %v1058, %v531
      %v1212 = vmax.f32 %v1059, %v532
      %v1213 = vmax.f32 %v1060, %v533
      %v1214 = vmax.f32 %v1061, %v534
      %v1215 = vmax.f32 %v1062, %v535
      %v1216 = vmax.f32 %v1063, %v536
      %v1217 = vmax.f32 %v1064, %v1081
      %v1218 = vmax.f32 %v1065, %v1082
      %v1219 = vmax.f32 %v1066, %v1083
      %v1220 = vmax.f32 %v1067, %v1084
      %v1221 = vmax.f32 %v1068, %v1085
      %v1222 = vmax.f32 %v1069, %v1086
      %v1223 = vmax.f32 %v1070, %v1087
      %v1224 = vmax.f32 %v1071, %v1088
      %v1225 = vmax.f32 %v1072, %v1089
      %v1226 = vmax.f32 %v1073, %v1090
      %v1227 = vmax.f32 %v1074, %v1091
      %v1228 = vmax.f32 %v1075, %v1092
      %v1229 = vmax.f32 %v1076, %v1093
      %v1230 = vmax.f32 %v1077, %v1094
      %v1231 = vmax.f32 %v1078, %v1095
      %v1232 = vmax.f32 %v1079, %v1096
      %v1233 = vmax.f32 %v1080, %v1097
      %v1234 = vpack.c.bf16 %v1098, %v1098
      %v1235 = vpack.c.bf16 %v1099, %v1099
      %v1236 = vpack.c.bf16 %v1100, %v1100
      %v1237 = vpack.c.bf16 %v1101, %v1101
      %v1238 = vpack.c.bf16 %v1102, %v1102
      %v1239 = vpack.c.bf16 %v1103, %v1103
      %v1240 = vpack.c.bf16 %v1104, %v1104
      %v1241 = vpack.c.bf16 %v1105, %v1105
      %v1242 = vpack.c.bf16 %v1106, %v1106
      %v1243 = vpack.c.bf16 %v1107, %v1107
      %v1244 = vpack.c.bf16 %v1108, %v1108
      %v1245 = vpack.c.bf16 %v1109, %v1109
      %v1246 = vpack.c.bf16 %v1110, %v1110
      %v1247 = vpack.c.bf16 %v1111, %v1111
      %v1248 = vpack.c.bf16 %v1112, %v1112
      %v1249 = vpack.c.bf16 %v1113, %v1113
      %v1250 = vpack.c.bf16 %v1114, %v1114
      %v1251 = vpack.c.bf16 %v1115, %v1115
      %v1252 = vpack.c.bf16 %v1116, %v1116
      %v1253 = vpack.c.bf16 %v1117, %v1117
      %v1254 = vpack.c.bf16 %v1118, %v1118
      %v1255 = vpack.c.bf16 %v1119, %v1119
      %v1256 = vpack.c.bf16 %v1120, %v1120
      %v1257 = vpack.c.bf16 %v1121, %v1121
      %v1258 = vpack.c.bf16 %v1122, %v1122
      %v1259 = vpack.c.bf16 %v1123, %v1123
      %v1260 = vpack.c.bf16 %v1124, %v1124
      %v1261 = vpack.c.bf16 %v1125, %v1125
      %v1262 = vpack.c.bf16 %v1126, %v1126
      %v1263 = vpack.c.bf16 %v1127, %v1127
      %v1264 = vpack.c.bf16 %v1128, %v1128
      %v1265 = vpack.c.bf16 %v1129, %v1129
      %v1266 = vpack.c.bf16 %v1130, %v1130
      %v1267 = vpack.c.bf16 %v1131, %v1131
      %v1268 = vpack.c.bf16 %v1132, %v1132
      %v1269 = vpack.c.bf16 %v1133, %v1133
      %v1270 = vpack.c.bf16 %v1134, %v1134
      %v1271 = vpack.c.bf16 %v1135, %v1135
      %v1272 = vpack.c.bf16 %v1136, %v1136
      %v1273 = vpack.c.bf16 %v1137, %v1137
      %v1274 = vpack.c.bf16 %v1138, %v1138
      %v1275 = vpack.c.bf16 %v1139, %v1139
      %v1276 = vpack.c.bf16 %v1140, %v1140
      %v1277 = vpack.c.bf16 %v1141, %v1141
      %v1278 = vpack.c.bf16 %v1142, %v1142
      %v1279 = vpack.c.bf16 %v1143, %v1143
      %v1280 = vpack.c.bf16 %v1144, %v1144
      %v1281 = vpack.c.bf16 %v1145, %v1145
      %v1282 = vpack.c.bf16 %v1146, %v1146
      %v1283 = vpack.c.bf16 %v1147, %v1147
      %v1284 = vpack.c.bf16 %v1148, %v1148
      %v1285 = vpack.c.bf16 %v1149, %v1149
      %v1286 = vpack.c.bf16 %v1150, %v1150
      %v1287 = vpack.c.bf16 %v1151, %v1151
      %v1288 = vpack.c.bf16 %v1152, %v1152
      %v1289 = vpack.c.bf16 %v1153, %v1153
      %v1290 = vpack.c.bf16 %v1154, %v1154
      %v1291 = vpack.c.bf16 %v1155, %v1155
      %v1292 = vpack.c.bf16 %v1156, %v1156
      %v1293 = vpack.c.bf16 %v1157, %v1157
      %v1294 = vpack.c.bf16 %v1158, %v1158
      %v1295 = vpack.c.bf16 %v1159, %v1159
      %v1296 = vpack.c.bf16 %v1160, %v1160
      %v1297 = vpack.c.bf16 %v1161, %v1161
      %v1298 = vpack.c.bf16 %v1162, %v1162
      %v1299 = vpack.c.bf16 %v1163, %v1163
      %v1300 = vpack.c.bf16 %v1164, %v1164
      %v1301 = vpack.c.bf16 %v1165, %v1165
      %v1302 = vpack.c.bf16 %v1166, %v1166
      %v1303 = vpack.c.bf16 %v1167, %v1167
      %v1304 = vpack.c.bf16 %v1168, %v1168
      %v1305 = vpack.c.bf16 %v1169, %v1169
      %v1306 = vpack.c.bf16 %v1170, %v1170
      %v1307 = vpack.c.bf16 %v1171, %v1171
      %v1308 = vpack.c.bf16 %v1172, %v1172
      %v1309 = vpack.c.bf16 %v1173, %v1173
      %v1310 = vpack.c.bf16 %v1174, %v1174
      %v1311 = vpack.c.bf16 %v1175, %v1175
      %v1312 = vpack.c.bf16 %v1176, %v1176
      %v1313 = vpack.c.bf16 %v1177, %v1177
      %v1314 = vpack.c.bf16 %v1178, %v1178
      %v1315 = vpack.c.bf16 %v1179, %v1179
      %v1316 = vpack.c.bf16 %v1180, %v1180
      %v1317 = vpack.c.bf16 %v1181, %v1181
      %v1318 = vpack.c.bf16 %v1182, %v1182
      %v1319 = vpack.c.bf16 %v1183, %v1183
      %v1320 = vpack.c.bf16 %v1184, %v1184
      %v1321 = vpack.c.bf16 %v1185, %v1185
      %v1322 = vpack.c.bf16 %v1186, %v1186
      %v1323 = vpack.c.bf16 %v1187, %v1187
      %v1324 = vpack.c.bf16 %v1188, %v1188
      %v1325 = vpack.c.bf16 %v1189, %v1189
      %v1326 = vpack.c.bf16 %v1190, %v1190
      %v1327 = vpack.c.bf16 %v1191, %v1191
      %v1328 = vpack.c.bf16 %v1192, %v1192
      %v1329 = vpack.c.bf16 %v1193, %v1193
      %v1330 = vpack.c.bf16 %v1194, %v1194
      %v1331 = vpack.c.bf16 %v1195, %v1195
      %v1332 = vpack.c.bf16 %v1196, %v1196
      %v1333 = vpack.c.bf16 %v1197, %v1197
      %v1334 = vpack.c.bf16 %v1198, %v1198
      %v1335 = vpack.c.bf16 %v1199, %v1199
      %v1336 = vpack.c.bf16 %v1200, %v1200
      %v1337 = vpack.c.bf16 %v1201, %v1201
      %v1338 = vpack.c.bf16 %v1202, %v1202
      %v1339 = vpack.c.bf16 %v1203, %v1203
      %v1340 = vpack.c.bf16 %v1204, %v1204
      %v1341 = vpack.c.bf16 %v1205, %v1205
      %v1342 = vpack.c.bf16 %v1206, %v1206
      %v1343 = vpack.c.bf16 %v1207, %v1207
      %v1344 = vpack.c.bf16 %v1208, %v1208
      %v1345 = vpack.c.bf16 %v1209, %v1209
      %v1346 = vpack.c.bf16 %v1210, %v1210
      %v1347 = vpack.c.bf16 %v1211, %v1211
      %v1348 = vpack.c.bf16 %v1212, %v1212
      %v1349 = vpack.c.bf16 %v1213, %v1213
      %v1350 = vpack.c.bf16 %v1214, %v1214
      %v1351 = vpack.c.bf16 %v1215, %v1215
      %v1352 = vpack.c.bf16 %v1216, %v1216
      %v1353 = vpack.c.bf16 %v1217, %v1217
      %v1354 = vpack.c.bf16 %v1218, %v1218
      %v1355 = vpack.c.bf16 %v1219, %v1219
      %v1356 = vpack.c.bf16 %v1220, %v1220
      %v1357 = vpack.c.bf16 %v1221, %v1221
      %v1358 = vpack.c.bf16 %v1222, %v1222
      %v1359 = vpack.c.bf16 %v1223, %v1223
      %v1360 = vpack.c.bf16 %v1224, %v1224
      %v1361 = vpack.c.bf16 %v1225, %v1225
      %v1362 = vpack.c.bf16 %v1226, %v1226
      %v1363 = vpack.c.bf16 %v1227, %v1227
      %v1364 = vpack.c.bf16 %v1228, %v1228
      %v1365 = vpack.c.bf16 %v1229, %v1229
      %v1366 = vpack.c.bf16 %v1230, %v1230
      %v1367 = vpack.c.bf16 %v1231, %v1231
      %v1368 = vpack.c.bf16 %v1232, %v1232
      %v1369 = vpack.c.bf16 %v1233, %v1233
      %v1370 = vunpack.c.l.bf16 %v1234
      %v1371 = vunpack.c.l.bf16 %v1236
      %v1372 = vunpack.c.l.bf16 %v1238
      %v1373 = vunpack.c.l.bf16 %v1240
      %v1374 = vunpack.c.l.bf16 %v1242
      %v1375 = vunpack.c.l.bf16 %v1244
      %v1376 = vunpack.c.l.bf16 %v1246
      %v1377 = vunpack.c.l.bf16 %v1248
      %v1378 = vunpack.c.l.bf16 %v1251
      %v1379 = vunpack.c.l.bf16 %v1253
      %v1380 = vunpack.c.l.bf16 %v1255
      %v1381 = vunpack.c.l.bf16 %v1257
      %v1382 = vunpack.c.l.bf16 %v1259
      %v1383 = vunpack.c.l.bf16 %v1261
      %v1384 = vunpack.c.l.bf16 %v1263
      %v1385 = vunpack.c.l.bf16 %v1265
      %v1386 = vunpack.c.l.bf16 %v1268
      %v1387 = vunpack.c.l.bf16 %v1270
      %v1388 = vunpack.c.l.bf16 %v1272
      %v1389 = vunpack.c.l.bf16 %v1274
      %v1390 = vunpack.c.l.bf16 %v1276
      %v1391 = vunpack.c.l.bf16 %v1278
      %v1392 = vunpack.c.l.bf16 %v1280
      %v1393 = vunpack.c.l.bf16 %v1282
      %v1394 = vunpack.c.l.bf16 %v1285
      %v1395 = vunpack.c.l.bf16 %v1287
      %v1396 = vunpack.c.l.bf16 %v1289
      %v1397 = vunpack.c.l.bf16 %v1291
      %v1398 = vunpack.c.l.bf16 %v1293
      %v1399 = vunpack.c.l.bf16 %v1295
      %v1400 = vunpack.c.l.bf16 %v1297
      %v1401 = vunpack.c.l.bf16 %v1299
      %v1402 = vunpack.c.l.bf16 %v1302
      %v1403 = vunpack.c.l.bf16 %v1304
      %v1404 = vunpack.c.l.bf16 %v1306
      %v1405 = vunpack.c.l.bf16 %v1308
      %v1406 = vunpack.c.l.bf16 %v1310
      %v1407 = vunpack.c.l.bf16 %v1312
      %v1408 = vunpack.c.l.bf16 %v1314
      %v1409 = vunpack.c.l.bf16 %v1316
      %v1410 = vunpack.c.l.bf16 %v1319
      %v1411 = vunpack.c.l.bf16 %v1321
      %v1412 = vunpack.c.l.bf16 %v1323
      %v1413 = vunpack.c.l.bf16 %v1325
      %v1414 = vunpack.c.l.bf16 %v1327
      %v1415 = vunpack.c.l.bf16 %v1329
      %v1416 = vunpack.c.l.bf16 %v1331
      %v1417 = vunpack.c.l.bf16 %v1333
      %v1418 = vunpack.c.l.bf16 %v1336
      %v1419 = vunpack.c.l.bf16 %v1338
      %v1420 = vunpack.c.l.bf16 %v1340
      %v1421 = vunpack.c.l.bf16 %v1342
      %v1422 = vunpack.c.l.bf16 %v1344
      %v1423 = vunpack.c.l.bf16 %v1346
      %v1424 = vunpack.c.l.bf16 %v1348
      %v1425 = vunpack.c.l.bf16 %v1350
      %v1426 = vunpack.c.l.bf16 %v1353
      %v1427 = vunpack.c.l.bf16 %v1355
      %v1428 = vunpack.c.l.bf16 %v1357
      %v1429 = vunpack.c.l.bf16 %v1359
      %v1430 = vunpack.c.l.bf16 %v1361
      %v1431 = vunpack.c.l.bf16 %v1363
      %v1432 = vunpack.c.l.bf16 %v1365
      %v1433 = vunpack.c.l.bf16 %v1367
      %v1434 = vunpack.c.l.bf16 %v1235
      %v1435 = vunpack.c.l.bf16 %v1237
      %v1436 = vunpack.c.l.bf16 %v1239
      %v1437 = vunpack.c.l.bf16 %v1241
      %v1438 = vunpack.c.l.bf16 %v1243
      %v1439 = vunpack.c.l.bf16 %v1245
      %v1440 = vunpack.c.l.bf16 %v1247
      %v1441 = vunpack.c.l.bf16 %v1249
      %v1442 = vunpack.c.l.bf16 %v1252
      %v1443 = vunpack.c.l.bf16 %v1254
      %v1444 = vunpack.c.l.bf16 %v1256
      %v1445 = vunpack.c.l.bf16 %v1258
      %v1446 = vunpack.c.l.bf16 %v1260
      %v1447 = vunpack.c.l.bf16 %v1262
      %v1448 = vunpack.c.l.bf16 %v1264
      %v1449 = vunpack.c.l.bf16 %v1266
      %v1450 = vunpack.c.l.bf16 %v1269
      %v1451 = vunpack.c.l.bf16 %v1271
      %v1452 = vunpack.c.l.bf16 %v1273
      %v1453 = vunpack.c.l.bf16 %v1275
      %v1454 = vunpack.c.l.bf16 %v1277
      %v1455 = vunpack.c.l.bf16 %v1279
      %v1456 = vunpack.c.l.bf16 %v1281
      %v1457 = vunpack.c.l.bf16 %v1283
      %v1458 = vunpack.c.l.bf16 %v1286
      %v1459 = vunpack.c.l.bf16 %v1288
      %v1460 = vunpack.c.l.bf16 %v1290
      %v1461 = vunpack.c.l.bf16 %v1292
      %v1462 = vunpack.c.l.bf16 %v1294
      %v1463 = vunpack.c.l.bf16 %v1296
      %v1464 = vunpack.c.l.bf16 %v1298
      %v1465 = vunpack.c.l.bf16 %v1300
      %v1466 = vunpack.c.l.bf16 %v1303
      %v1467 = vunpack.c.l.bf16 %v1305
      %v1468 = vunpack.c.l.bf16 %v1307
      %v1469 = vunpack.c.l.bf16 %v1309
      %v1470 = vunpack.c.l.bf16 %v1311
      %v1471 = vunpack.c.l.bf16 %v1313
      %v1472 = vunpack.c.l.bf16 %v1315
      %v1473 = vunpack.c.l.bf16 %v1317
      %v1474 = vunpack.c.l.bf16 %v1320
      %v1475 = vunpack.c.l.bf16 %v1322
      %v1476 = vunpack.c.l.bf16 %v1324
      %v1477 = vunpack.c.l.bf16 %v1326
      %v1478 = vunpack.c.l.bf16 %v1328
      %v1479 = vunpack.c.l.bf16 %v1330
      %v1480 = vunpack.c.l.bf16 %v1332
      %v1481 = vunpack.c.l.bf16 %v1334
      %v1482 = vunpack.c.l.bf16 %v1337
      %v1483 = vunpack.c.l.bf16 %v1339
      %v1484 = vunpack.c.l.bf16 %v1341
      %v1485 = vunpack.c.l.bf16 %v1343
      %v1486 = vunpack.c.l.bf16 %v1345
      %v1487 = vunpack.c.l.bf16 %v1347
      %v1488 = vunpack.c.l.bf16 %v1349
      %v1489 = vunpack.c.l.bf16 %v1351
      %v1490 = vunpack.c.l.bf16 %v1354
      %v1491 = vunpack.c.l.bf16 %v1356
      %v1492 = vunpack.c.l.bf16 %v1358
      %v1493 = vunpack.c.l.bf16 %v1360
      %v1494 = vunpack.c.l.bf16 %v1362
      %v1495 = vunpack.c.l.bf16 %v1364
      %v1496 = vunpack.c.l.bf16 %v1366
      %v1497 = vunpack.c.l.bf16 %v1368
      %v1498 = vmax.f32 %v1370, %v1434
      %v1499 = vmax.f32 %v1371, %v1435
      %v1500 = vmax.f32 %v1372, %v1436
      %v1501 = vmax.f32 %v1373, %v1437
      %v1502 = vmax.f32 %v1374, %v1438
      %v1503 = vmax.f32 %v1375, %v1439
      %v1504 = vmax.f32 %v1376, %v1440
      %v1505 = vmax.f32 %v1377, %v1441
      %v1506 = vmax.f32 %v1378, %v1442
      %v1507 = vmax.f32 %v1379, %v1443
      %v1508 = vmax.f32 %v1380, %v1444
      %v1509 = vmax.f32 %v1381, %v1445
      %v1510 = vmax.f32 %v1382, %v1446
      %v1511 = vmax.f32 %v1383, %v1447
      %v1512 = vmax.f32 %v1384, %v1448
      %v1513 = vmax.f32 %v1385, %v1449
      %v1514 = vmax.f32 %v1386, %v1450
      %v1515 = vmax.f32 %v1387, %v1451
      %v1516 = vmax.f32 %v1388, %v1452
      %v1517 = vmax.f32 %v1389, %v1453
      %v1518 = vmax.f32 %v1390, %v1454
      %v1519 = vmax.f32 %v1391, %v1455
      %v1520 = vmax.f32 %v1392, %v1456
      %v1521 = vmax.f32 %v1393, %v1457
      %v1522 = vmax.f32 %v1394, %v1458
      %v1523 = vmax.f32 %v1395, %v1459
      %v1524 = vmax.f32 %v1396, %v1460
      %v1525 = vmax.f32 %v1397, %v1461
      %v1526 = vmax.f32 %v1398, %v1462
      %v1527 = vmax.f32 %v1399, %v1463
      %v1528 = vmax.f32 %v1400, %v1464
      %v1529 = vmax.f32 %v1401, %v1465
      %v1530 = vmax.f32 %v1402, %v1466
      %v1531 = vmax.f32 %v1403, %v1467
      %v1532 = vmax.f32 %v1404, %v1468
      %v1533 = vmax.f32 %v1405, %v1469
      %v1534 = vmax.f32 %v1406, %v1470
      %v1535 = vmax.f32 %v1407, %v1471
      %v1536 = vmax.f32 %v1408, %v1472
      %v1537 = vmax.f32 %v1409, %v1473
      %v1538 = vmax.f32 %v1410, %v1474
      %v1539 = vmax.f32 %v1411, %v1475
      %v1540 = vmax.f32 %v1412, %v1476
      %v1541 = vmax.f32 %v1413, %v1477
      %v1542 = vmax.f32 %v1414, %v1478
      %v1543 = vmax.f32 %v1415, %v1479
      %v1544 = vmax.f32 %v1416, %v1480
      %v1545 = vmax.f32 %v1417, %v1481
      %v1546 = vmax.f32 %v1418, %v1482
      %v1547 = vmax.f32 %v1419, %v1483
      %v1548 = vmax.f32 %v1420, %v1484
      %v1549 = vmax.f32 %v1421, %v1485
      %v1550 = vmax.f32 %v1422, %v1486
      %v1551 = vmax.f32 %v1423, %v1487
      %v1552 = vmax.f32 %v1424, %v1488
      %v1553 = vmax.f32 %v1425, %v1489
      %v1554 = vmax.f32 %v1426, %v1490
      %v1555 = vmax.f32 %v1427, %v1491
      %v1556 = vmax.f32 %v1428, %v1492
      %v1557 = vmax.f32 %v1429, %v1493
      %v1558 = vmax.f32 %v1430, %v1494
      %v1559 = vmax.f32 %v1431, %v1495
      %v1560 = vmax.f32 %v1432, %v1496
      %v1561 = vmax.f32 %v1433, %v1497
      %v1562 = vpack.c.bf16 %v1498, %v1498
      %v1563 = vpack.c.bf16 %v1499, %v1499
      %v1564 = vpack.c.bf16 %v1500, %v1500
      %v1565 = vpack.c.bf16 %v1501, %v1501
      %v1566 = vpack.c.bf16 %v1502, %v1502
      %v1567 = vpack.c.bf16 %v1503, %v1503
      %v1568 = vpack.c.bf16 %v1504, %v1504
      %v1569 = vpack.c.bf16 %v1505, %v1505
      %v1570 = vpack.c.bf16 %v1506, %v1506
      %v1571 = vpack.c.bf16 %v1507, %v1507
      %v1572 = vpack.c.bf16 %v1508, %v1508
      %v1573 = vpack.c.bf16 %v1509, %v1509
      %v1574 = vpack.c.bf16 %v1510, %v1510
      %v1575 = vpack.c.bf16 %v1511, %v1511
      %v1576 = vpack.c.bf16 %v1512, %v1512
      %v1577 = vpack.c.bf16 %v1513, %v1513
      %v1578 = vpack.c.bf16 %v1514, %v1514
      %v1579 = vpack.c.bf16 %v1515, %v1515
      %v1580 = vpack.c.bf16 %v1516, %v1516
      %v1581 = vpack.c.bf16 %v1517, %v1517
      %v1582 = vpack.c.bf16 %v1518, %v1518
      %v1583 = vpack.c.bf16 %v1519, %v1519
      %v1584 = vpack.c.bf16 %v1520, %v1520
      %v1585 = vpack.c.bf16 %v1521, %v1521
      %v1586 = vpack.c.bf16 %v1522, %v1522
      %v1587 = vpack.c.bf16 %v1523, %v1523
      %v1588 = vpack.c.bf16 %v1524, %v1524
      %v1589 = vpack.c.bf16 %v1525, %v1525
      %v1590 = vpack.c.bf16 %v1526, %v1526
      %v1591 = vpack.c.bf16 %v1527, %v1527
      %v1592 = vpack.c.bf16 %v1528, %v1528
      %v1593 = vpack.c.bf16 %v1529, %v1529
      %v1594 = vpack.c.bf16 %v1530, %v1530
      %v1595 = vpack.c.bf16 %v1531, %v1531
      %v1596 = vpack.c.bf16 %v1532, %v1532
      %v1597 = vpack.c.bf16 %v1533, %v1533
      %v1598 = vpack.c.bf16 %v1534, %v1534
      %v1599 = vpack.c.bf16 %v1535, %v1535
      %v1600 = vpack.c.bf16 %v1536, %v1536
      %v1601 = vpack.c.bf16 %v1537, %v1537
      %v1602 = vpack.c.bf16 %v1538, %v1538
      %v1603 = vpack.c.bf16 %v1539, %v1539
      %v1604 = vpack.c.bf16 %v1540, %v1540
      %v1605 = vpack.c.bf16 %v1541, %v1541
      %v1606 = vpack.c.bf16 %v1542, %v1542
      %v1607 = vpack.c.bf16 %v1543, %v1543
      %v1608 = vpack.c.bf16 %v1544, %v1544
      %v1609 = vpack.c.bf16 %v1545, %v1545
      %v1610 = vpack.c.bf16 %v1546, %v1546
      %v1611 = vpack.c.bf16 %v1547, %v1547
      %v1612 = vpack.c.bf16 %v1548, %v1548
      %v1613 = vpack.c.bf16 %v1549, %v1549
      %v1614 = vpack.c.bf16 %v1550, %v1550
      %v1615 = vpack.c.bf16 %v1551, %v1551
      %v1616 = vpack.c.bf16 %v1552, %v1552
      %v1617 = vpack.c.bf16 %v1553, %v1553
      %v1618 = vpack.c.bf16 %v1554, %v1554
      %v1619 = vpack.c.bf16 %v1555, %v1555
      %v1620 = vpack.c.bf16 %v1556, %v1556
      %v1621 = vpack.c.bf16 %v1557, %v1557
      %v1622 = vpack.c.bf16 %v1558, %v1558
      %v1623 = vpack.c.bf16 %v1559, %v1559
      %v1624 = vpack.c.bf16 %v1560, %v1560
      %v1625 = vpack.c.bf16 %v1561, %v1561
      %v1626 = vunpack.c.l.bf16 %v1562
      %v1627 = vunpack.c.l.bf16 %v1563
      %v1628 = vunpack.c.l.bf16 %v1564
      %v1629 = vunpack.c.l.bf16 %v1565
      %v1630 = vunpack.c.l.bf16 %v1566
      %v1631 = vunpack.c.l.bf16 %v1567
      %v1632 = vunpack.c.l.bf16 %v1568
      %v1633 = vunpack.c.l.bf16 %v1569
      %v1634 = vunpack.c.l.bf16 %v1570
      %v1635 = vunpack.c.l.bf16 %v1571
      %v1636 = vunpack.c.l.bf16 %v1572
      %v1637 = vunpack.c.l.bf16 %v1573
      %v1638 = vunpack.c.l.bf16 %v1574
      %v1639 = vunpack.c.l.bf16 %v1575
      %v1640 = vunpack.c.l.bf16 %v1576
      %v1641 = vunpack.c.l.bf16 %v1577
      %v1642 = vunpack.c.l.bf16 %v1578
      %v1643 = vunpack.c.l.bf16 %v1579
      %v1644 = vunpack.c.l.bf16 %v1580
      %v1645 = vunpack.c.l.bf16 %v1581
      %v1646 = vunpack.c.l.bf16 %v1582
      %v1647 = vunpack.c.l.bf16 %v1583
      %v1648 = vunpack.c.l.bf16 %v1584
      %v1649 = vunpack.c.l.bf16 %v1585
      %v1650 = vunpack.c.l.bf16 %v1586
      %v1651 = vunpack.c.l.bf16 %v1587
      %v1652 = vunpack.c.l.bf16 %v1588
      %v1653 = vunpack.c.l.bf16 %v1589
      %v1654 = vunpack.c.l.bf16 %v1590
      %v1655 = vunpack.c.l.bf16 %v1591
      %v1656 = vunpack.c.l.bf16 %v1592
      %v1657 = vunpack.c.l.bf16 %v1593
      %v1658 = vunpack.c.l.bf16 %v1594
      %v1659 = vunpack.c.l.bf16 %v1595
      %v1660 = vunpack.c.l.bf16 %v1596
      %v1661 = vunpack.c.l.bf16 %v1597
      %v1662 = vunpack.c.l.bf16 %v1598
      %v1663 = vunpack.c.l.bf16 %v1599
      %v1664 = vunpack.c.l.bf16 %v1600
      %v1665 = vunpack.c.l.bf16 %v1601
      %v1666 = vunpack.c.l.bf16 %v1602
      %v1667 = vunpack.c.l.bf16 %v1603
      %v1668 = vunpack.c.l.bf16 %v1604
      %v1669 = vunpack.c.l.bf16 %v1605
      %v1670 = vunpack.c.l.bf16 %v1606
      %v1671 = vunpack.c.l.bf16 %v1607
      %v1672 = vunpack.c.l.bf16 %v1608
      %v1673 = vunpack.c.l.bf16 %v1609
      %v1674 = vunpack.c.l.bf16 %v1610
      %v1675 = vunpack.c.l.bf16 %v1611
      %v1676 = vunpack.c.l.bf16 %v1612
      %v1677 = vunpack.c.l.bf16 %v1613
      %v1678 = vunpack.c.l.bf16 %v1614
      %v1679 = vunpack.c.l.bf16 %v1615
      %v1680 = vunpack.c.l.bf16 %v1616
      %v1681 = vunpack.c.l.bf16 %v1617
      %v1682 = vunpack.c.l.bf16 %v1618
      %v1683 = vunpack.c.l.bf16 %v1619
      %v1684 = vunpack.c.l.bf16 %v1620
      %v1685 = vunpack.c.l.bf16 %v1621
      %v1686 = vunpack.c.l.bf16 %v1622
      %v1687 = vunpack.c.l.bf16 %v1623
      %v1688 = vunpack.c.l.bf16 %v1624
      %v1689 = vunpack.c.l.bf16 %v1625
      %v1690 = vunpack.c.l.bf16 %v1250
      %v1691 = vunpack.c.l.bf16 %v1267
      %v1692 = vunpack.c.l.bf16 %v1284
      %v1693 = vunpack.c.l.bf16 %v1301
      %v1694 = vunpack.c.l.bf16 %v1318
      %v1695 = vunpack.c.l.bf16 %v1335
      %v1696 = vunpack.c.l.bf16 %v1352
      %v1697 = vunpack.c.l.bf16 %v1369
      %v1698 = vmax.f32 %v1626, %v1371
      %v1699 = vmax.f32 %v1627, %v1372
      %v1700 = vmax.f32 %v1628, %v1373
      %v1701 = vmax.f32 %v1629, %v1374
      %v1702 = vmax.f32 %v1630, %v1375
      %v1703 = vmax.f32 %v1631, %v1376
      %v1704 = vmax.f32 %v1632, %v1377
      %v1705 = vmax.f32 %v1633, %v1690
      %v1706 = vmax.f32 %v1634, %v1379
      %v1707 = vmax.f32 %v1635, %v1380
      %v1708 = vmax.f32 %v1636, %v1381
      %v1709 = vmax.f32 %v1637, %v1382
      %v1710 = vmax.f32 %v1638, %v1383
      %v1711 = vmax.f32 %v1639, %v1384
      %v1712 = vmax.f32 %v1640, %v1385
      %v1713 = vmax.f32 %v1641, %v1691
      %v1714 = vmax.f32 %v1642, %v1387
      %v1715 = vmax.f32 %v1643, %v1388
      %v1716 = vmax.f32 %v1644, %v1389
      %v1717 = vmax.f32 %v1645, %v1390
      %v1718 = vmax.f32 %v1646, %v1391
      %v1719 = vmax.f32 %v1647, %v1392
      %v1720 = vmax.f32 %v1648, %v1393
      %v1721 = vmax.f32 %v1649, %v1692
      %v1722 = vmax.f32 %v1650, %v1395
      %v1723 = vmax.f32 %v1651, %v1396
      %v1724 = vmax.f32 %v1652, %v1397
      %v1725 = vmax.f32 %v1653, %v1398
      %v1726 = vmax.f32 %v1654, %v1399
      %v1727 = vmax.f32 %v1655, %v1400
      %v1728 = vmax.f32 %v1656, %v1401
      %v1729 = vmax.f32 %v1657, %v1693
      %v1730 = vmax.f32 %v1658, %v1403
      %v1731 = vmax.f32 %v1659, %v1404
      %v1732 = vmax.f32 %v1660, %v1405
      %v1733 = vmax.f32 %v1661, %v1406
      %v1734 = vmax.f32 %v1662, %v1407
      %v1735 = vmax.f32 %v1663, %v1408
      %v1736 = vmax.f32 %v1664, %v1409
      %v1737 = vmax.f32 %v1665, %v1694
      %v1738 = vmax.f32 %v1666, %v1411
      %v1739 = vmax.f32 %v1667, %v1412
      %v1740 = vmax.f32 %v1668, %v1413
      %v1741 = vmax.f32 %v1669, %v1414
      %v1742 = vmax.f32 %v1670, %v1415
      %v1743 = vmax.f32 %v1671, %v1416
      %v1744 = vmax.f32 %v1672, %v1417
      %v1745 = vmax.f32 %v1673, %v1695
      %v1746 = vmax.f32 %v1674, %v1419
      %v1747 = vmax.f32 %v1675, %v1420
      %v1748 = vmax.f32 %v1676, %v1421
      %v1749 = vmax.f32 %v1677, %v1422
      %v1750 = vmax.f32 %v1678, %v1423
      %v1751 = vmax.f32 %v1679, %v1424
      %v1752 = vmax.f32 %v1680, %v1425
      %v1753 = vmax.f32 %v1681, %v1696
      %v1754 = vmax.f32 %v1682, %v1427
      %v1755 = vmax.f32 %v1683, %v1428
      %v1756 = vmax.f32 %v1684, %v1429
      %v1757 = vmax.f32 %v1685, %v1430
      %v1758 = vmax.f32 %v1686, %v1431
      %v1759 = vmax.f32 %v1687, %v1432
      %v1760 = vmax.f32 %v1688, %v1433
      %v1761 = vmax.f32 %v1689, %v1697
      %v1762 = vpack.c.bf16 %v1698, %v1698
      %v1763 = vpack.c.bf16 %v1699, %v1699
      %v1764 = vpack.c.bf16 %v1700, %v1700
      %v1765 = vpack.c.bf16 %v1701, %v1701
      %v1766 = vpack.c.bf16 %v1702, %v1702
      %v1767 = vpack.c.bf16 %v1703, %v1703
      %v1768 = vpack.c.bf16 %v1704, %v1704
      %v1769 = vpack.c.bf16 %v1705, %v1705
      %v1770 = vpack.c.bf16 %v1706, %v1706
      %v1771 = vpack.c.bf16 %v1707, %v1707
      %v1772 = vpack.c.bf16 %v1708, %v1708
      %v1773 = vpack.c.bf16 %v1709, %v1709
      %v1774 = vpack.c.bf16 %v1710, %v1710
      %v1775 = vpack.c.bf16 %v1711, %v1711
      %v1776 = vpack.c.bf16 %v1712, %v1712
      %v1777 = vpack.c.bf16 %v1713, %v1713
      %v1778 = vpack.c.bf16 %v1714, %v1714
      %v1779 = vpack.c.bf16 %v1715, %v1715
      %v1780 = vpack.c.bf16 %v1716, %v1716
      %v1781 = vpack.c.bf16 %v1717, %v1717
      %v1782 = vpack.c.bf16 %v1718, %v1718
      %v1783 = vpack.c.bf16 %v1719, %v1719
      %v1784 = vpack.c.bf16 %v1720, %v1720
      %v1785 = vpack.c.bf16 %v1721, %v1721
      %v1786 = vpack.c.bf16 %v1722, %v1722
      %v1787 = vpack.c.bf16 %v1723, %v1723
      %v1788 = vpack.c.bf16 %v1724, %v1724
      %v1789 = vpack.c.bf16 %v1725, %v1725
      %v1790 = vpack.c.bf16 %v1726, %v1726
      %v1791 = vpack.c.bf16 %v1727, %v1727
      %v1792 = vpack.c.bf16 %v1728, %v1728
      %v1793 = vpack.c.bf16 %v1729, %v1729
      %v1794 = vpack.c.bf16 %v1730, %v1730
      %v1795 = vpack.c.bf16 %v1731, %v1731
      %v1796 = vpack.c.bf16 %v1732, %v1732
      %v1797 = vpack.c.bf16 %v1733, %v1733
      %v1798 = vpack.c.bf16 %v1734, %v1734
      %v1799 = vpack.c.bf16 %v1735, %v1735
      %v1800 = vpack.c.bf16 %v1736, %v1736
      %v1801 = vpack.c.bf16 %v1737, %v1737
      %v1802 = vpack.c.bf16 %v1738, %v1738
      %v1803 = vpack.c.bf16 %v1739, %v1739
      %v1804 = vpack.c.bf16 %v1740, %v1740
      %v1805 = vpack.c.bf16 %v1741, %v1741
      %v1806 = vpack.c.bf16 %v1742, %v1742
      %v1807 = vpack.c.bf16 %v1743, %v1743
      %v1808 = vpack.c.bf16 %v1744, %v1744
      %v1809 = vpack.c.bf16 %v1745, %v1745
      %v1810 = vpack.c.bf16 %v1746, %v1746
      %v1811 = vpack.c.bf16 %v1747, %v1747
      %v1812 = vpack.c.bf16 %v1748, %v1748
      %v1813 = vpack.c.bf16 %v1749, %v1749
      %v1814 = vpack.c.bf16 %v1750, %v1750
      %v1815 = vpack.c.bf16 %v1751, %v1751
      %v1816 = vpack.c.bf16 %v1752, %v1752
      %v1817 = vpack.c.bf16 %v1753, %v1753
      %v1818 = vpack.c.bf16 %v1754, %v1754
      %v1819 = vpack.c.bf16 %v1755, %v1755
      %v1820 = vpack.c.bf16 %v1756, %v1756
      %v1821 = vpack.c.bf16 %v1757, %v1757
      %v1822 = vpack.c.bf16 %v1758, %v1758
      %v1823 = vpack.c.bf16 %v1759, %v1759
      %v1824 = vpack.c.bf16 %v1760, %v1760
      %v1825 = vpack.c.bf16 %v1761, %v1761
      %vm1826 = vcmask 1040384
      %vm1827 = vsmask.f32 256
      %vm1828 = vmand %vm1826, %vm1827
      %v1829 = vld [vmem:[%s111] sm:$0x1]
      %v1830 = vsel %vm1828, %v1762, %v1829
      %1831 = vst [vmem:[%s111] sm:$0x1] %v1830
      %v1832 = vld [vmem:[%s111 + $0x1] sm:$0x1]
      %v1833 = vsel %vm1828, %v1763, %v1832
      %1834 = vst [vmem:[%s111 + $0x1] sm:$0x1] %v1833
      %v1835 = vld [vmem:[%s111 + $0x2] sm:$0x1]
      %v1836 = vsel %vm1828, %v1764, %v1835
      %1837 = vst [vmem:[%s111 + $0x2] sm:$0x1] %v1836
      %v1838 = vld [vmem:[%s111 + $0x3] sm:$0x1]
      %v1839 = vsel %vm1828, %v1765, %v1838
      %1840 = vst [vmem:[%s111 + $0x3] sm:$0x1] %v1839
      %v1841 = vld [vmem:[%s111 + $0x4] sm:$0x1]
      %v1842 = vsel %vm1828, %v1766, %v1841
      %1843 = vst [vmem:[%s111 + $0x4] sm:$0x1] %v1842
      %v1844 = vld [vmem:[%s111 + $0x5] sm:$0x1]
      %v1845 = vsel %vm1828, %v1767, %v1844
      %1846 = vst [vmem:[%s111 + $0x5] sm:$0x1] %v1845
      %v1847 = vld [vmem:[%s111 + $0x6] sm:$0x1]
      %v1848 = vsel %vm1828, %v1768, %v1847
      %1849 = vst [vmem:[%s111 + $0x6] sm:$0x1] %v1848
      %v1850 = vld [vmem:[%s111 + $0x7] sm:$0x1]
      %v1851 = vsel %vm1828, %v1769, %v1850
      %1852 = vst [vmem:[%s111 + $0x7] sm:$0x1] %v1851
      %v1853 = vld [vmem:[%s111 + $0x8] sm:$0x1]
      %v1854 = vsel %vm1828, %v1770, %v1853
      %1855 = vst [vmem:[%s111 + $0x8] sm:$0x1] %v1854
      %v1856 = vld [vmem:[%s111 + $0x9] sm:$0x1]
      %v1857 = vsel %vm1828, %v1771, %v1856
      %1858 = vst [vmem:[%s111 + $0x9] sm:$0x1] %v1857
      %v1859 = vld [vmem:[%s111 + $0xa] sm:$0x1]
      %v1860 = vsel %vm1828, %v1772, %v1859
      %1861 = vst [vmem:[%s111 + $0xa] sm:$0x1] %v1860
      %v1862 = vld [vmem:[%s111 + $0xb] sm:$0x1]
      %v1863 = vsel %vm1828, %v1773, %v1862
      %1864 = vst [vmem:[%s111 + $0xb] sm:$0x1] %v1863
      %v1865 = vld [vmem:[%s111 + $0xc] sm:$0x1]
      %v1866 = vsel %vm1828, %v1774, %v1865
      %1867 = vst [vmem:[%s111 + $0xc] sm:$0x1] %v1866
      %v1868 = vld [vmem:[%s111 + $0xd] sm:$0x1]
      %v1869 = vsel %vm1828, %v1775, %v1868
      %1870 = vst [vmem:[%s111 + $0xd] sm:$0x1] %v1869
      %v1871 = vld [vmem:[%s111 + $0xe] sm:$0x1]
      %v1872 = vsel %vm1828, %v1776, %v1871
      %1873 = vst [vmem:[%s111 + $0xe] sm:$0x1] %v1872
      %v1874 = vld [vmem:[%s111 + $0xf] sm:$0x1]
      %v1875 = vsel %vm1828, %v1777, %v1874
      %1876 = vst [vmem:[%s111 + $0xf] sm:$0x1] %v1875
      %v1877 = vld [vmem:[%s111 + $0x10] sm:$0x1]
      %v1878 = vsel %vm1828, %v1778, %v1877
      %1879 = vst [vmem:[%s111 + $0x10] sm:$0x1] %v1878
      %v1880 = vld [vmem:[%s111 + $0x11] sm:$0x1]
      %v1881 = vsel %vm1828, %v1779, %v1880
      %1882 = vst [vmem:[%s111 + $0x11] sm:$0x1] %v1881
      %v1883 = vld [vmem:[%s111 + $0x12] sm:$0x1]
      %v1884 = vsel %vm1828, %v1780, %v1883
      %1885 = vst [vmem:[%s111 + $0x12] sm:$0x1] %v1884
      %v1886 = vld [vmem:[%s111 + $0x13] sm:$0x1]
      %v1887 = vsel %vm1828, %v1781, %v1886
      %1888 = vst [vmem:[%s111 + $0x13] sm:$0x1] %v1887
      %v1889 = vld [vmem:[%s111 + $0x14] sm:$0x1]
      %v1890 = vsel %vm1828, %v1782, %v1889
      %1891 = vst [vmem:[%s111 + $0x14] sm:$0x1] %v1890
      %v1892 = vld [vmem:[%s111 + $0x15] sm:$0x1]
      %v1893 = vsel %vm1828, %v1783, %v1892
      %1894 = vst [vmem:[%s111 + $0x15] sm:$0x1] %v1893
      %v1895 = vld [vmem:[%s111 + $0x16] sm:$0x1]
      %v1896 = vsel %vm1828, %v1784, %v1895
      %1897 = vst [vmem:[%s111 + $0x16] sm:$0x1] %v1896
      %v1898 = vld [vmem:[%s111 + $0x17] sm:$0x1]
      %v1899 = vsel %vm1828, %v1785, %v1898
      %1900 = vst [vmem:[%s111 + $0x17] sm:$0x1] %v1899
      %v1901 = vld [vmem:[%s111 + $0x18] sm:$0x1]
      %v1902 = vsel %vm1828, %v1786, %v1901
      %1903 = vst [vmem:[%s111 + $0x18] sm:$0x1] %v1902
      %v1904 = vld [vmem:[%s111 + $0x19] sm:$0x1]
      %v1905 = vsel %vm1828, %v1787, %v1904
      %1906 = vst [vmem:[%s111 + $0x19] sm:$0x1] %v1905
      %v1907 = vld [vmem:[%s111 + $0x1a] sm:$0x1]
      %v1908 = vsel %vm1828, %v1788, %v1907
      %1909 = vst [vmem:[%s111 + $0x1a] sm:$0x1] %v1908
      %v1910 = vld [vmem:[%s111 + $0x1b] sm:$0x1]
      %v1911 = vsel %vm1828, %v1789, %v1910
      %1912 = vst [vmem:[%s111 + $0x1b] sm:$0x1] %v1911
      %v1913 = vld [vmem:[%s111 + $0x1c] sm:$0x1]
      %v1914 = vsel %vm1828, %v1790, %v1913
      %1915 = vst [vmem:[%s111 + $0x1c] sm:$0x1] %v1914
      %v1916 = vld [vmem:[%s111 + $0x1d] sm:$0x1]
      %v1917 = vsel %vm1828, %v1791, %v1916
      %1918 = vst [vmem:[%s111 + $0x1d] sm:$0x1] %v1917
      %v1919 = vld [vmem:[%s111 + $0x1e] sm:$0x1]
      %v1920 = vsel %vm1828, %v1792, %v1919
      %1921 = vst [vmem:[%s111 + $0x1e] sm:$0x1] %v1920
      %v1922 = vld [vmem:[%s111 + $0x1f] sm:$0x1]
      %v1923 = vsel %vm1828, %v1793, %v1922
      %1924 = vst [vmem:[%s111 + $0x1f] sm:$0x1] %v1923
      %v1925 = vld [vmem:[%s111 + $0x20] sm:$0x1]
      %v1926 = vsel %vm1828, %v1794, %v1925
      %1927 = vst [vmem:[%s111 + $0x20] sm:$0x1] %v1926
      %v1928 = vld [vmem:[%s111 + $0x21] sm:$0x1]
      %v1929 = vsel %vm1828, %v1795, %v1928
      %1930 = vst [vmem:[%s111 + $0x21] sm:$0x1] %v1929
      %v1931 = vld [vmem:[%s111 + $0x22] sm:$0x1]
      %v1932 = vsel %vm1828, %v1796, %v1931
      %1933 = vst [vmem:[%s111 + $0x22] sm:$0x1] %v1932
      %v1934 = vld [vmem:[%s111 + $0x23] sm:$0x1]
      %v1935 = vsel %vm1828, %v1797, %v1934
      %1936 = vst [vmem:[%s111 + $0x23] sm:$0x1] %v1935
      %v1937 = vld [vmem:[%s111 + $0x24] sm:$0x1]
      %v1938 = vsel %vm1828, %v1798, %v1937
      %1939 = vst [vmem:[%s111 + $0x24] sm:$0x1] %v1938
      %v1940 = vld [vmem:[%s111 + $0x25] sm:$0x1]
      %v1941 = vsel %vm1828, %v1799, %v1940
      %1942 = vst [vmem:[%s111 + $0x25] sm:$0x1] %v1941
      %v1943 = vld [vmem:[%s111 + $0x26] sm:$0x1]
      %v1944 = vsel %vm1828, %v1800, %v1943
      %1945 = vst [vmem:[%s111 + $0x26] sm:$0x1] %v1944
      %v1946 = vld [vmem:[%s111 + $0x27] sm:$0x1]
      %v1947 = vsel %vm1828, %v1801, %v1946
      %1948 = vst [vmem:[%s111 + $0x27] sm:$0x1] %v1947
      %v1949 = vld [vmem:[%s111 + $0x28] sm:$0x1]
      %v1950 = vsel %vm1828, %v1802, %v1949
      %1951 = vst [vmem:[%s111 + $0x28] sm:$0x1] %v1950
      %v1952 = vld [vmem:[%s111 + $0x29] sm:$0x1]
      %v1953 = vsel %vm1828, %v1803, %v1952
      %1954 = vst [vmem:[%s111 + $0x29] sm:$0x1] %v1953
      %v1955 = vld [vmem:[%s111 + $0x2a] sm:$0x1]
      %v1956 = vsel %vm1828, %v1804, %v1955
      %1957 = vst [vmem:[%s111 + $0x2a] sm:$0x1] %v1956
      %v1958 = vld [vmem:[%s111 + $0x2b] sm:$0x1]
      %v1959 = vsel %vm1828, %v1805, %v1958
      %1960 = vst [vmem:[%s111 + $0x2b] sm:$0x1] %v1959
      %v1961 = vld [vmem:[%s111 + $0x2c] sm:$0x1]
      %v1962 = vsel %vm1828, %v1806, %v1961
      %1963 = vst [vmem:[%s111 + $0x2c] sm:$0x1] %v1962
      %v1964 = vld [vmem:[%s111 + $0x2d] sm:$0x1]
      %v1965 = vsel %vm1828, %v1807, %v1964
      %1966 = vst [vmem:[%s111 + $0x2d] sm:$0x1] %v1965
      %v1967 = vld [vmem:[%s111 + $0x2e] sm:$0x1]
      %v1968 = vsel %vm1828, %v1808, %v1967
      %1969 = vst [vmem:[%s111 + $0x2e] sm:$0x1] %v1968
      %v1970 = vld [vmem:[%s111 + $0x2f] sm:$0x1]
      %v1971 = vsel %vm1828, %v1809, %v1970
      %1972 = vst [vmem:[%s111 + $0x2f] sm:$0x1] %v1971
      %v1973 = vld [vmem:[%s111 + $0x30] sm:$0x1]
      %v1974 = vsel %vm1828, %v1810, %v1973
      %1975 = vst [vmem:[%s111 + $0x30] sm:$0x1] %v1974
      %v1976 = vld [vmem:[%s111 + $0x31] sm:$0x1]
      %v1977 = vsel %vm1828, %v1811, %v1976
      %1978 = vst [vmem:[%s111 + $0x31] sm:$0x1] %v1977
      %v1979 = vld [vmem:[%s111 + $0x32] sm:$0x1]
      %v1980 = vsel %vm1828, %v1812, %v1979
      %1981 = vst [vmem:[%s111 + $0x32] sm:$0x1] %v1980
      %v1982 = vld [vmem:[%s111 + $0x33] sm:$0x1]
      %v1983 = vsel %vm1828, %v1813, %v1982
      %1984 = vst [vmem:[%s111 + $0x33] sm:$0x1] %v1983
      %v1985 = vld [vmem:[%s111 + $0x34] sm:$0x1]
      %v1986 = vsel %vm1828, %v1814, %v1985
      %1987 = vst [vmem:[%s111 + $0x34] sm:$0x1] %v1986
      %v1988 = vld [vmem:[%s111 + $0x35] sm:$0x1]
      %v1989 = vsel %vm1828, %v1815, %v1988
      %1990 = vst [vmem:[%s111 + $0x35] sm:$0x1] %v1989
      %v1991 = vld [vmem:[%s111 + $0x36] sm:$0x1]
      %v1992 = vsel %vm1828, %v1816, %v1991
      %1993 = vst [vmem:[%s111 + $0x36] sm:$0x1] %v1992
      %v1994 = vld [vmem:[%s111 + $0x37] sm:$0x1]
      %v1995 = vsel %vm1828, %v1817, %v1994
      %1996 = vst [vmem:[%s111 + $0x37] sm:$0x1] %v1995
      %v1997 = vld [vmem:[%s111 + $0x38] sm:$0x1]
      %v1998 = vsel %vm1828, %v1818, %v1997
      %1999 = vst [vmem:[%s111 + $0x38] sm:$0x1] %v1998
      %v2000 = vld [vmem:[%s111 + $0x39] sm:$0x1]
      %v2001 = vsel %vm1828, %v1819, %v2000
      %2002 = vst [vmem:[%s111 + $0x39] sm:$0x1] %v2001
      %v2003 = vld [vmem:[%s111 + $0x3a] sm:$0x1]
      %v2004 = vsel %vm1828, %v1820, %v2003
      %2005 = vst [vmem:[%s111 + $0x3a] sm:$0x1] %v2004
      %v2006 = vld [vmem:[%s111 + $0x3b] sm:$0x1]
      %v2007 = vsel %vm1828, %v1821, %v2006
      %2008 = vst [vmem:[%s111 + $0x3b] sm:$0x1] %v2007
      %v2009 = vld [vmem:[%s111 + $0x3c] sm:$0x1]
      %v2010 = vsel %vm1828, %v1822, %v2009
      %2011 = vst [vmem:[%s111 + $0x3c] sm:$0x1] %v2010
      %v2012 = vld [vmem:[%s111 + $0x3d] sm:$0x1]
      %v2013 = vsel %vm1828, %v1823, %v2012
      %2014 = vst [vmem:[%s111 + $0x3d] sm:$0x1] %v2013
      %v2015 = vld [vmem:[%s111 + $0x3e] sm:$0x1]
      %v2016 = vsel %vm1828, %v1824, %v2015
      %2017 = vst [vmem:[%s111 + $0x3e] sm:$0x1] %v2016
      %v2018 = vld [vmem:[%s111 + $0x3f] sm:$0x1]
      %v2019 = vsel %vm1828, %v1825, %v2018
      %2020 = vst [vmem:[%s111 + $0x3f] sm:$0x1] %v2019
      %p2021 = scmp.lt.s32.totalorder %s12, 1
      %s2022 = scalar_select %p2021, %s12, 1
      %s2023 = smul.addr %s2022, 64
      %s2024 = scalar_lea.vmem %s1, %s2023
      // Predicated region
      $region25: #{encoder_forward.11} parent=23 // pred_check
        %p2025 = pneg %p56
      $region26: #{encoder_forward.11} parent=23 // pred_check_branch
        %2027 = sbr.rel (%p2025) target = $region28
      $region27: #{encoder_forward.11} parent=23 // pred_region
        _
      $region28: #{encoder_forward.11} parent=23 // pred_fallthru
        _
    $region24: #{encoder_forward.11} parent=5 // pred_fallthru
      _
    %p2028 = scmp.le.s32.totalorder 2, %s7
    // Predicated region
    $region29: #{encoder_forward.11} parent=5 // pred_check
      %p2029 = pneg %p2028
    $region30: #{encoder_forward.11} parent=5 // pred_check_branch
      %2031 = sbr.rel (%p2029) target = $region32
    $region31: #{encoder_forward.11} parent=5 // pred_region
      %s2032 = ssub.s32 %s7, 2
      // Predicated region
      $region33: #{encoder_forward.11} parent=31 // pred_check
        %p2033 = pneg %p62
      $region34: #{encoder_forward.11} parent=31 // pred_check_branch
        %2035 = sbr.rel (%p2033) target = $region36
      $region35: #{encoder_forward.11} parent=31 // pred_region
        %p2036 = scmp.lt.s32.totalorder %s13, 1
        %s2037 = scalar_select %p2036, %s13, 1
        %s2038 = smul.addr %s2037, 64
        %s2039 = scalar_lea.vmem %s1, %s2038
      $region36: #{encoder_forward.11} parent=31 // pred_fallthru
        _
    $region32: #{encoder_forward.11} parent=5 // pred_fallthru
      _
  $region6: #{encoder_forward.11} parent=0 // loop_footer
    %s11 = sadd.s32 1, %s7
  $region7: #{encoder_forward.11} parent=0 // loop_footer_branch
    %6 = sbr.rel target = $region3
  $region8: #{encoder_forward.11} parent=0 // loop_exit
    _

// kernel: encoder_forward.13
$region0: #{encoder_forward.13}
  #allocation0 [shape = 'u32[]', space=smem, size = 0x4, offset = 0x4, fixed_abs, tag = 'smem constant byte address 0x4 - core index']
  #allocation1 [shape = 'u32[72,128]{1,0:T(1,128)}', space=vmem, size = 0x9000, scoped, tag = 'internal scratch']
  %s0 = inlined_call_operand.vmem [shape: bf16[128,1152], index: 0, kind: input, shape index: {}]
  %s1 = inlined_call_operand.vmem [shape: bf16[1152,128], index: 1, kind: input, shape index: {}]
  %s2 = inlined_call_operand.vmem [shape: f32[1,128], index: 2, kind: input, shape index: {}]
  %s3 = inlined_call_operand.vmem [shape: bf16[128,128], index: 3, kind: output, shape index: {}]
  %s4 = sld [smem:[#allocation0]]
  $region45: #{encoder_forward.13} parent=0
    _
  %s6 = ssub.s32 1, %s4
  %s7 = scalar_select 0, %s6, %s4
  loop: start=0, step=1, limit=4
  $region2: #{encoder_forward.13} parent=0 // loop_pre_header
    _
  $region3: #{encoder_forward.13} parent=0 // loop_header
    %s9 = sphi 0, %s13
    %p10 = scmp.ge.s32.totalorder %s9, 4
    %s16 = sphi 0, %s28
    %s17 = sphi 0, %s24
    %s18 = sphi 0, %s16
    %s19 = sphi 0, %s17
    %s20 = sphi 0, %s18
    %s21 = sphi 0, %s19
    %s31 = sphi 0, %s33
    %s34 = sphi 0, %s31
    %s35 = sphi 0, %s34
    %s51 = sphi 0, %s35
    %s57 = sphi 0, %s59
    %s60 = sphi 0, %s57
    %s61 = sphi 0, %s60
    %s77 = sphi 0, %s61
    %s83 = sphi 0, %s85
    %s86 = sphi 0, %s83
    %s87 = sphi 0, %s86
    %s103 = sphi 0, %s87
    %s111 = sphi 0, %s113
    %s114 = sphi 0, %s111
    %s115 = sphi 0, %s114
    %s131 = sphi 0, %s115
  $region4: #{encoder_forward.13} parent=0 // loop_header_branch
    %12 = sbr.rel (%p10) target = $region8
  $region5: #{encoder_forward.13} parent=0 // loop_body
    %s14 = ssub.s32 %s9, 1
    %s15 = ssub.s32 %s9, 2
    %s22 = sadd.s32 1, %s17
    %p23 = scmp.ge.s32.totalorder %s22, 1
    %s24 = scalar_select %p23, 0, %s22
    %s25 = sadd.s32 1, %s16
    %s26 = scalar_select %p23, %s25, %s16
    %p27 = scmp.ge.s32.totalorder %s26, 2
    %s28 = scalar_select %p27, 0, %s26
    %s29 = ssub.s32 %s16, %s28
    %p30 = scmp.eq.s32.totalorder %s29, 0
    %s32 = sadd.s32 %s31, 1
    %s33 = scalar_select %p30, %s31, %s32
    %p36 = pneg %p30
    %p37 = scmp.eq.s32.totalorder %s9, 1
    %p38 = por %p36, %p37
    %p39 = scmp.ne.s32.totalorder %s31, %s34
    %p40 = scmp.eq.s32.totalorder %s9, 0
    %p41 = por %p39, %p40
    %p42 = scmp.ne.s32.totalorder %s31, %s34
    %p43 = scmp.eq.s32.totalorder %s14, 1
    %p44 = por %p42, %p43
    %p45 = scmp.ne.s32.totalorder %s34, %s35
    %p46 = scmp.eq.s32.totalorder %s14, 0
    %p47 = por %p45, %p46
    %p48 = scmp.ne.s32.totalorder %s34, %s35
    %p49 = scmp.eq.s32.totalorder %s15, 1
    %p50 = por %p48, %p49
    %p52 = scmp.ne.s32.totalorder %s35, %s51
    %p53 = scmp.eq.s32.totalorder %s15, 0
    %p54 = por %p52, %p53
    %s55 = ssub.s32 %s17, %s24
    %p56 = scmp.eq.s32.totalorder %s55, 0
    %s58 = sadd.s32 %s57, 1
    %s59 = scalar_select %p56, %s57, %s58
    %p62 = pneg %p56
    %p63 = scmp.eq.s32.totalorder %s9, 1
    %p64 = por %p62, %p63
    %p65 = scmp.ne.s32.totalorder %s57, %s60
    %p66 = scmp.eq.s32.totalorder %s9, 0
    %p67 = por %p65, %p66
    %p68 = scmp.ne.s32.totalorder %s57, %s60
    %p69 = scmp.eq.s32.totalorder %s14, 1
    %p70 = por %p68, %p69
    %p71 = scmp.ne.s32.totalorder %s60, %s61
    %p72 = scmp.eq.s32.totalorder %s14, 0
    %p73 = por %p71, %p72
    %p74 = scmp.ne.s32.totalorder %s60, %s61
    %p75 = scmp.eq.s32.totalorder %s15, 1
    %p76 = por %p74, %p75
    %p78 = scmp.ne.s32.totalorder %s61, %s77
    %p79 = scmp.eq.s32.totalorder %s15, 0
    %p80 = por %p78, %p79
    %s81 = ssub.s32 %s17, %s24
    %p82 = scmp.eq.s32.totalorder %s81, 0
    %s84 = sadd.s32 %s83, 1
    %s85 = scalar_select %p82, %s83, %s84
    %p88 = pneg %p82
    %p89 = scmp.eq.s32.totalorder %s9, 1
    %p90 = por %p88, %p89
    %p91 = scmp.ne.s32.totalorder %s83, %s86
    %p92 = scmp.eq.s32.totalorder %s9, 0
    %p93 = por %p91, %p92
    %p94 = scmp.ne.s32.totalorder %s83, %s86
    %p95 = scmp.eq.s32.totalorder %s14, 1
    %p96 = por %p94, %p95
    %p97 = scmp.ne.s32.totalorder %s86, %s87
    %p98 = scmp.eq.s32.totalorder %s14, 0
    %p99 = por %p97, %p98
    %p100 = scmp.ne.s32.totalorder %s86, %s87
    %p101 = scmp.eq.s32.totalorder %s15, 1
    %p102 = por %p100, %p101
    %p104 = scmp.ne.s32.totalorder %s87, %s103
    %p105 = scmp.eq.s32.totalorder %s15, 0
    %p106 = por %p104, %p105
    %s107 = ssub.s32 %s16, %s28
    %s108 = ssub.s32 %s17, %s24
    %s109 = sor.u32 %s107, %s108
    %p110 = scmp.eq.s32.totalorder %s109, 0
    %s112 = sadd.s32 %s111, 1
    %s113 = scalar_select %p110, %s111, %s112
    %p116 = pneg %p110
    %p117 = scmp.eq.s32.totalorder %s9, 1
    %p118 = por %p116, %p117
    %p119 = scmp.ne.s32.totalorder %s111, %s114
    %p120 = scmp.eq.s32.totalorder %s9, 0
    %p121 = por %p119, %p120
    %p122 = scmp.ne.s32.totalorder %s111, %s114
    %p123 = scmp.eq.s32.totalorder %s14, 1
    %p124 = por %p122, %p123
    %p125 = scmp.ne.s32.totalorder %s114, %s115
    %p126 = scmp.eq.s32.totalorder %s14, 0
    %p127 = por %p125, %p126
    %p128 = scmp.ne.s32.totalorder %s114, %s115
    %p129 = scmp.eq.s32.totalorder %s15, 1
    %p130 = por %p128, %p129
    %p132 = scmp.ne.s32.totalorder %s115, %s131
    %p133 = scmp.eq.s32.totalorder %s15, 0
    %p134 = por %p132, %p133
    %p135 = scmp.le.s32.totalorder 1, %s9
    %p136 = scmp.lt.s32.totalorder %s9, 3
    %p137 = pnand %p135, %p136
    %p138 = pneg %p137
    // Predicated region
    $region9: #{encoder_forward.13} parent=5 // pred_check
      _
    $region10: #{encoder_forward.13} parent=5 // pred_check_branch
      %140 = sbr.rel (%p137) target = $region12
    $region11: #{encoder_forward.13} parent=5 // pred_region
      %s141 = ssub.s32 %s9, 1
      // Predicated region
      $region13: #{encoder_forward.13} parent=11 // pred_check
        %p142 = pneg %p73
      $region14: #{encoder_forward.13} parent=11 // pred_check_branch
        %144 = sbr.rel (%p142) target = $region16
      $region15: #{encoder_forward.13} parent=11 // pred_region
        %p145 = scmp.lt.s32.totalorder %s19, 0
        %s146 = scalar_select %p145, %s19, 0
        %s147 = smul.addr %s146, 4
        %s148 = scalar_lea.vmem %s1, %s147
      $region16: #{encoder_forward.13} parent=11 // pred_fallthru
        _
      // Predicated region
      $region17: #{encoder_forward.13} parent=11 // pred_check
        %p149 = pneg %p99
      $region18: #{encoder_forward.13} parent=11 // pred_check_branch
        %151 = sbr.rel (%p149) target = $region20
      $region19: #{encoder_forward.13} parent=11 // pred_region
        %p152 = scmp.lt.s32.totalorder %s19, 0
        %s153 = scalar_select %p152, %s19, 0
        %s154 = scalar_lea.vmem %s2, %s153
      $region20: #{encoder_forward.13} parent=11 // pred_fallthru
        _
    $region12: #{encoder_forward.13} parent=5 // pred_fallthru
      _
    %p155 = scmp.lt.s32.totalorder %s9, 2
    // Predicated region
    $region21: #{encoder_forward.13} parent=5 // pred_check
      %p156 = pneg %p155
    $region22: #{encoder_forward.13} parent=5 // pred_check_branch
      %158 = sbr.rel (%p156) target = $region24
    $region23: #{encoder_forward.13} parent=5 // pred_region
      // Predicated region
      $region25: #{encoder_forward.13} parent=23 // pred_check
        %p159 = pneg %p41
      $region26: #{encoder_forward.13} parent=23 // pred_check_branch
        %161 = sbr.rel (%p159) target = $region28
      $region27: #{encoder_forward.13} parent=23 // pred_region
        %s162 = smul.u32 8, %s16
        %p163 = scmp.lt.s32.totalorder %s162, 15
        %s164 = scalar_select %p163, %s162, 15
        %s165 = smul.addr %s164, 9
        %s166 = smul.addr %s165, 4
        %s167 = scalar_lea.vmem %s0, %s166
        %s168 = smul.u32 8, %s16
      $region28: #{encoder_forward.13} parent=23 // pred_fallthru
        _
    $region24: #{encoder_forward.13} parent=5 // pred_fallthru
      _
    %p169 = scmp.le.s32.totalorder 1, %s9
    %p170 = scmp.lt.s32.totalorder %s9, 3
    %p171 = pnand %p169, %p170
    %p172 = pneg %p171
    // Predicated region
    $region29: #{encoder_forward.13} parent=5 // pred_check
      _
    $region30: #{encoder_forward.13} parent=5 // pred_check_branch
      %174 = sbr.rel (%p171) target = $region32
    $region31: #{encoder_forward.13} parent=5 // pred_region
      %s175 = ssub.s32 %s9, 1
      %s176 = smul.u32 8, %s18
      %p177 = scmp.lt.s32.totalorder %s176, 15
      %s178 = scalar_select %p177, %s176, 15
      %s179 = smul.addr %s178, 9
      %s180 = smul.addr %s179, 4
      %s181 = scalar_lea.vmem %s0, %s180
      %p182 = pneg %p47
      %p183 = pneg %p44
      %p184 = scmp.lt.s32.totalorder %s19, 0
      %s185 = scalar_select %p184, %s19, 0
      %s186 = smul.addr %s185, 4
      %s187 = scalar_lea.vmem %s1, %s186
      %p188 = pneg %p73
      %p189 = pneg %p70
      %p190 = scmp.lt.s32.totalorder %s19, 0
      %s191 = scalar_select %p190, %s19, 0
      %s192 = scalar_lea.vmem %s2, %s191
      %p193 = pneg %p99
      %p194 = pneg %p96
      %p195 = pneg %p127
      %p196 = pneg %p124
      %s197 = smul.u32 8, %s18
      %p198 = scmp.lt.s32.totalorder %s197, 15
      %s199 = scalar_select %p198, %s197, 15
      %p200 = scmp.lt.s32.totalorder %s19, 0
      %s201 = scalar_select %p200, %s19, 0
      %s202 = sadd.s32 %s201, %s199
      %s203 = smul.addr %s202, 4
      %s204 = scalar_lea.vmem %s3, %s203
      %s205 = smul.u32 8, %s18
      %p206 = scmp.lt.s32.totalorder %s205, 15
      %s207 = scalar_select %p206, %s205, 15
      %s208 = smul.addr %s207, 9
      %s209 = smul.addr %s208, 4
      %s210 = scalar_lea.vmem %s0, %s209
      %s211 = smul.u32 8, %s18
      %p212 = scmp.lt.s32.totalorder %s19, 0
      %s213 = scalar_select %p212, %s19, 0
      %s214 = smul.addr %s213, 4
      %s215 = scalar_lea.vmem %s1, %s214
      %p216 = scmp.lt.s32.totalorder %s19, 0
      %s217 = scalar_select %p216, %s19, 0
      %s218 = scalar_lea.vmem %s2, %s217
      %s219 = smul.u32 8, %s18
      %p220 = scmp.lt.s32.totalorder %s219, 15
      %s221 = scalar_select %p220, %s219, 15
      %p222 = scmp.lt.s32.totalorder %s19, 0
      %s223 = scalar_select %p222, %s19, 0
      %s224 = sadd.s32 %s223, %s221
      %s225 = smul.addr %s224, 4
      %s226 = scalar_lea.vmem %s3, %s225
      %s227 = smul.u32 8, %s18
      %v228 = vld [vmem:[%s210] sm:$0xff]
      %v229 = vld [vmem:[%s210 + $0x8] sm:$0xff]
      %v230 = vld [vmem:[%s210 + $0x10] sm:$0xff]
      %v231 = vld [vmem:[%s210 + $0x18] sm:$0xff]
      %v232 = vld [vmem:[%s210 + $0x20] sm:$0xf]
      %v233 = vld [vmem:[%s210 + $0x24] sm:$0xff]
      %v234 = vld [vmem:[%s210 + $0x2c] sm:$0xff]
      %v235 = vld [vmem:[%s210 + $0x34] sm:$0xff]
      %v236 = vld [vmem:[%s210 + $0x3c] sm:$0xff]
      %v237 = vld [vmem:[%s210 + $0x44] sm:$0xf]
      %v238 = vld [vmem:[%s210 + $0x48] sm:$0xff]
      %v239 = vld [vmem:[%s210 + $0x50] sm:$0xff]
      %v240 = vld [vmem:[%s210 + $0x58] sm:$0xff]
      %v241 = vld [vmem:[%s210 + $0x60] sm:$0xff]
      %v242 = vld [vmem:[%s210 + $0x68] sm:$0xf]
      %v243 = vld [vmem:[%s210 + $0x6c] sm:$0xff]
      %v244 = vld [vmem:[%s210 + $0x74] sm:$0xff]
      %v245 = vld [vmem:[%s210 + $0x7c] sm:$0xff]
      %v246 = vld [vmem:[%s210 + $0x84] sm:$0xff]
      %v247 = vld [vmem:[%s210 + $0x8c] sm:$0xf]
      %v248 = vld [vmem:[%s210 + $0x90] sm:$0xff]
      %v249 = vld [vmem:[%s210 + $0x98] sm:$0xff]
      %v250 = vld [vmem:[%s210 + $0xa0] sm:$0xff]
      %v251 = vld [vmem:[%s210 + $0xa8] sm:$0xff]
      %v252 = vld [vmem:[%s210 + $0xb0] sm:$0xf]
      %v253 = vld [vmem:[%s210 + $0xb4] sm:$0xff]
      %v254 = vld [vmem:[%s210 + $0xbc] sm:$0xff]
      %v255 = vld [vmem:[%s210 + $0xc4] sm:$0xff]
      %v256 = vld [vmem:[%s210 + $0xcc] sm:$0xff]
      %v257 = vld [vmem:[%s210 + $0xd4] sm:$0xf]
      %v258 = vld [vmem:[%s210 + $0xd8] sm:$0xff]
      %v259 = vld [vmem:[%s210 + $0xe0] sm:$0xff]
      %v260 = vld [vmem:[%s210 + $0xe8] sm:$0xff]
      %v261 = vld [vmem:[%s210 + $0xf0] sm:$0xff]
      %v262 = vld [vmem:[%s210 + $0xf8] sm:$0xf]
      %v263 = vld [vmem:[%s210 + $0xfc] sm:$0xff]
      %v264 = vld [vmem:[%s210 + $0x104] sm:$0xff]
      %v265 = vld [vmem:[%s210 + $0x10c] sm:$0xff]
      %v266 = vld [vmem:[%s210 + $0x114] sm:$0xff]
      %v267 = vld [vmem:[%s210 + $0x11c] sm:$0xf]
      %v268 = vld [vmem:[%s215] sm:$0xf]
      %v269 = vld [vmem:[%s215 + $0x4] sm:$0xf]
      %v270 = vld [vmem:[%s215 + $0x8] sm:$0xf]
      %v271 = vld [vmem:[%s215 + $0xc] sm:$0xf]
      %v272 = vld [vmem:[%s215 + $0x10] sm:$0xf]
      %v273 = vld [vmem:[%s215 + $0x14] sm:$0xf]
      %v274 = vld [vmem:[%s215 + $0x18] sm:$0xf]
      %v275 = vld [vmem:[%s215 + $0x1c] sm:$0xf]
      %v276 = vld [vmem:[%s215 + $0x20] sm:$0xf]
      %v277 = vld [vmem:[%s215 + $0x24] sm:$0xf]
      %v278 = vld [vmem:[%s215 + $0x28] sm:$0xf]
      %v279 = vld [vmem:[%s215 + $0x2c] sm:$0xf]
      %v280 = vld [vmem:[%s215 + $0x30] sm:$0xf]
      %v281 = vld [vmem:[%s215 + $0x34] sm:$0xf]
      %v282 = vld [vmem:[%s215 + $0x38] sm:$0xf]
      %v283 = vld [vmem:[%s215 + $0x3c] sm:$0xf]
      %v284 = vld [vmem:[%s215 + $0x40] sm:$0xf]
      %v285 = vld [vmem:[%s215 + $0x44] sm:$0xf]
      %v286 = vld [vmem:[%s215 + $0x48] sm:$0xf]
      %v287 = vld [vmem:[%s215 + $0x4c] sm:$0xf]
      %v288 = vld [vmem:[%s215 + $0x50] sm:$0xf]
      %v289 = vld [vmem:[%s215 + $0x54] sm:$0xf]
      %v290 = vld [vmem:[%s215 + $0x58] sm:$0xf]
      %v291 = vld [vmem:[%s215 + $0x5c] sm:$0xf]
      %v292 = vld [vmem:[%s215 + $0x60] sm:$0xf]
      %v293 = vld [vmem:[%s215 + $0x64] sm:$0xf]
      %v294 = vld [vmem:[%s215 + $0x68] sm:$0xf]
      %v295 = vld [vmem:[%s215 + $0x6c] sm:$0xf]
      %v296 = vld [vmem:[%s215 + $0x70] sm:$0xf]
      %v297 = vld [vmem:[%s215 + $0x74] sm:$0xf]
      %v298 = vld [vmem:[%s215 + $0x78] sm:$0xf]
      %v299 = vld [vmem:[%s215 + $0x7c] sm:$0xf]
      %v300 = vld [vmem:[%s215 + $0x80] sm:$0xf]
      %v301 = vld [vmem:[%s215 + $0x84] sm:$0xf]
      %v302 = vld [vmem:[%s215 + $0x88] sm:$0xf]
      %v303 = vld [vmem:[%s215 + $0x8c] sm:$0xf]
      %v304 = vld [vmem:[%s215 + $0x90] sm:$0xf]
      %v305 = vld [vmem:[%s215 + $0x94] sm:$0xf]
      %v306 = vld [vmem:[%s215 + $0x98] sm:$0xf]
      %v307 = vld [vmem:[%s215 + $0x9c] sm:$0xf]
      %v308 = vld [vmem:[%s215 + $0xa0] sm:$0xf]
      %v309 = vld [vmem:[%s215 + $0xa4] sm:$0xf]
      %v310 = vld [vmem:[%s215 + $0xa8] sm:$0xf]
      %v311 = vld [vmem:[%s215 + $0xac] sm:$0xf]
      %v312 = vld [vmem:[%s215 + $0xb0] sm:$0xf]
      %v313 = vld [vmem:[%s215 + $0xb4] sm:$0xf]
      %v314 = vld [vmem:[%s215 + $0xb8] sm:$0xf]
      %v315 = vld [vmem:[%s215 + $0xbc] sm:$0xf]
      %v316 = vld [vmem:[%s215 + $0xc0] sm:$0xf]
      %v317 = vld [vmem:[%s215 + $0xc4] sm:$0xf]
      %v318 = vld [vmem:[%s215 + $0xc8] sm:$0xf]
      %v319 = vld [vmem:[%s215 + $0xcc] sm:$0xf]
      %v320 = vld [vmem:[%s215 + $0xd0] sm:$0xf]
      %v321 = vld [vmem:[%s215 + $0xd4] sm:$0xf]
      %v322 = vld [vmem:[%s215 + $0xd8] sm:$0xf]
      %v323 = vld [vmem:[%s215 + $0xdc] sm:$0xf]
      %v324 = vld [vmem:[%s215 + $0xe0] sm:$0xf]
      %v325 = vld [vmem:[%s215 + $0xe4] sm:$0xf]
      %v326 = vld [vmem:[%s215 + $0xe8] sm:$0xf]
      %v327 = vld [vmem:[%s215 + $0xec] sm:$0xf]
      %v328 = vld [vmem:[%s215 + $0xf0] sm:$0xf]
      %v329 = vld [vmem:[%s215 + $0xf4] sm:$0xf]
      %v330 = vld [vmem:[%s215 + $0xf8] sm:$0xf]
      %v331 = vld [vmem:[%s215 + $0xfc] sm:$0xf]
      %v332 = vld [vmem:[%s215 + $0x100] sm:$0xf]
      %v333 = vld [vmem:[%s215 + $0x104] sm:$0xf]
      %v334 = vld [vmem:[%s215 + $0x108] sm:$0xf]
      %v335 = vld [vmem:[%s215 + $0x10c] sm:$0xf]
      %v336 = vld [vmem:[%s215 + $0x110] sm:$0xf]
      %v337 = vld [vmem:[%s215 + $0x114] sm:$0xf]
      %v338 = vld [vmem:[%s215 + $0x118] sm:$0xf]
      %v339 = vld [vmem:[%s215 + $0x11c] sm:$0xf]
      %v340 = vld [vmem:[%s215 + $0x120] sm:$0xf]
      %v341 = vld [vmem:[%s215 + $0x124] sm:$0xf]
      %v342 = vld [vmem:[%s215 + $0x128] sm:$0xf]
      %v343 = vld [vmem:[%s215 + $0x12c] sm:$0xf]
      %v344 = vld [vmem:[%s215 + $0x130] sm:$0xf]
      %v345 = vld [vmem:[%s215 + $0x134] sm:$0xf]
      %v346 = vld [vmem:[%s215 + $0x138] sm:$0xf]
      %v347 = vld [vmem:[%s215 + $0x13c] sm:$0xf]
      %v348 = vld [vmem:[%s215 + $0x140] sm:$0xf]
      %v349 = vld [vmem:[%s215 + $0x144] sm:$0xf]
      %v350 = vld [vmem:[%s215 + $0x148] sm:$0xf]
      %v351 = vld [vmem:[%s215 + $0x14c] sm:$0xf]
      %v352 = vld [vmem:[%s215 + $0x150] sm:$0xf]
      %v353 = vld [vmem:[%s215 + $0x154] sm:$0xf]
      %v354 = vld [vmem:[%s215 + $0x158] sm:$0xf]
      %v355 = vld [vmem:[%s215 + $0x15c] sm:$0xf]
      %v356 = vld [vmem:[%s215 + $0x160] sm:$0xf]
      %v357 = vld [vmem:[%s215 + $0x164] sm:$0xf]
      %v358 = vld [vmem:[%s215 + $0x168] sm:$0xf]
      %v359 = vld [vmem:[%s215 + $0x16c] sm:$0xf]
      %v360 = vld [vmem:[%s215 + $0x170] sm:$0xf]
      %v361 = vld [vmem:[%s215 + $0x174] sm:$0xf]
      %v362 = vld [vmem:[%s215 + $0x178] sm:$0xf]
      %v363 = vld [vmem:[%s215 + $0x17c] sm:$0xf]
      %v364 = vld [vmem:[%s215 + $0x180] sm:$0xf]
      %v365 = vld [vmem:[%s215 + $0x184] sm:$0xf]
      %v366 = vld [vmem:[%s215 + $0x188] sm:$0xf]
      %v367 = vld [vmem:[%s215 + $0x18c] sm:$0xf]
      %v368 = vld [vmem:[%s215 + $0x190] sm:$0xf]
      %v369 = vld [vmem:[%s215 + $0x194] sm:$0xf]
      %v370 = vld [vmem:[%s215 + $0x198] sm:$0xf]
      %v371 = vld [vmem:[%s215 + $0x19c] sm:$0xf]
      %v372 = vld [vmem:[%s215 + $0x1a0] sm:$0xf]
      %v373 = vld [vmem:[%s215 + $0x1a4] sm:$0xf]
      %v374 = vld [vmem:[%s215 + $0x1a8] sm:$0xf]
      %v375 = vld [vmem:[%s215 + $0x1ac] sm:$0xf]
      %v376 = vld [vmem:[%s215 + $0x1b0] sm:$0xf]
      %v377 = vld [vmem:[%s215 + $0x1b4] sm:$0xf]
      %v378 = vld [vmem:[%s215 + $0x1b8] sm:$0xf]
      %v379 = vld [vmem:[%s215 + $0x1bc] sm:$0xf]
      %v380 = vld [vmem:[%s215 + $0x1c0] sm:$0xf]
      %v381 = vld [vmem:[%s215 + $0x1c4] sm:$0xf]
      %v382 = vld [vmem:[%s215 + $0x1c8] sm:$0xf]
      %v383 = vld [vmem:[%s215 + $0x1cc] sm:$0xf]
      %v384 = vld [vmem:[%s215 + $0x1d0] sm:$0xf]
      %v385 = vld [vmem:[%s215 + $0x1d4] sm:$0xf]
      %v386 = vld [vmem:[%s215 + $0x1d8] sm:$0xf]
      %v387 = vld [vmem:[%s215 + $0x1dc] sm:$0xf]
      %v388 = vld [vmem:[%s215 + $0x1e0] sm:$0xf]
      %v389 = vld [vmem:[%s215 + $0x1e4] sm:$0xf]
      %v390 = vld [vmem:[%s215 + $0x1e8] sm:$0xf]
      %v391 = vld [vmem:[%s215 + $0x1ec] sm:$0xf]
      %v392 = vld [vmem:[%s215 + $0x1f0] sm:$0xf]
      %v393 = vld [vmem:[%s215 + $0x1f4] sm:$0xf]
      %v394 = vld [vmem:[%s215 + $0x1f8] sm:$0xf]
      %v395 = vld [vmem:[%s215 + $0x1fc] sm:$0xf]
      %v396 = vld [vmem:[%s215 + $0x200] sm:$0xf]
      %v397 = vld [vmem:[%s215 + $0x204] sm:$0xf]
      %v398 = vld [vmem:[%s215 + $0x208] sm:$0xf]
      %v399 = vld [vmem:[%s215 + $0x20c] sm:$0xf]
      %v400 = vld [vmem:[%s215 + $0x210] sm:$0xf]
      %v401 = vld [vmem:[%s215 + $0x214] sm:$0xf]
      %v402 = vld [vmem:[%s215 + $0x218] sm:$0xf]
      %v403 = vld [vmem:[%s215 + $0x21c] sm:$0xf]
      %v404 = vld [vmem:[%s215 + $0x220] sm:$0xf]
      %v405 = vld [vmem:[%s215 + $0x224] sm:$0xf]
      %v406 = vld [vmem:[%s215 + $0x228] sm:$0xf]
      %v407 = vld [vmem:[%s215 + $0x22c] sm:$0xf]
      %v408 = vld [vmem:[%s215 + $0x230] sm:$0xf]
      %v409 = vld [vmem:[%s215 + $0x234] sm:$0xf]
      %v410 = vld [vmem:[%s215 + $0x238] sm:$0xf]
      %v411 = vld [vmem:[%s215 + $0x23c] sm:$0xf]
      %v412 = vld [vmem:[%s218] sm:$0x1]
      %v414 = vperm.slane %v412, 0
      %v456 = vunpack.c.l.b16 %v228
      %v457 = vunpack.c.h.b16 %v228
      %v458 = vunpack.c.l.b16 %v229
      %v459 = vunpack.c.h.b16 %v229
      %v460 = vunpack.c.l.b16 %v230
      %v461 = vunpack.c.h.b16 %v230
      %v462 = vunpack.c.l.b16 %v231
      %v463 = vunpack.c.h.b16 %v231
      %v464 = vunpack.c.l.b16 %v232
      %v465 = vunpack.c.l.b16 %v233
      %v466 = vunpack.c.h.b16 %v233
      %v467 = vunpack.c.l.b16 %v234
      %v468 = vunpack.c.h.b16 %v234
      %v469 = vunpack.c.l.b16 %v235
      %v470 = vunpack.c.h.b16 %v235
      %v471 = vunpack.c.l.b16 %v236
      %v472 = vunpack.c.h.b16 %v236
      %v473 = vunpack.c.l.b16 %v237
      %v474 = vunpack.c.l.b16 %v238
      %v475 = vunpack.c.h.b16 %v238
      %v476 = vunpack.c.l.b16 %v239
      %v477 = vunpack.c.h.b16 %v239
      %v478 = vunpack.c.l.b16 %v240
      %v479 = vunpack.c.h.b16 %v240
      %v480 = vunpack.c.l.b16 %v241
      %v481 = vunpack.c.h.b16 %v241
      %v482 = vunpack.c.l.b16 %v242
      %v483 = vunpack.c.l.b16 %v243
      %v484 = vunpack.c.h.b16 %v243
      %v485 = vunpack.c.l.b16 %v244
      %v486 = vunpack.c.h.b16 %v244
      %v487 = vunpack.c.l.b16 %v245
      %v488 = vunpack.c.h.b16 %v245
      %v489 = vunpack.c.l.b16 %v246
      %v490 = vunpack.c.h.b16 %v246
      %v491 = vunpack.c.l.b16 %v247
      %v492 = vunpack.c.l.b16 %v248
      %v493 = vunpack.c.h.b16 %v248
      %v494 = vunpack.c.l.b16 %v249
      %v495 = vunpack.c.h.b16 %v249
      %v496 = vunpack.c.l.b16 %v250
      %v497 = vunpack.c.h.b16 %v250
      %v498 = vunpack.c.l.b16 %v251
      %v499 = vunpack.c.h.b16 %v251
      %v500 = vunpack.c.l.b16 %v252
      %v501 = vunpack.c.l.b16 %v253
      %v502 = vunpack.c.h.b16 %v253
      %v503 = vunpack.c.l.b16 %v254
      %v504 = vunpack.c.h.b16 %v254
      %v505 = vunpack.c.l.b16 %v255
      %v506 = vunpack.c.h.b16 %v255
      %v507 = vunpack.c.l.b16 %v256
      %v508 = vunpack.c.h.b16 %v256
      %v509 = vunpack.c.l.b16 %v257
      %v510 = vunpack.c.l.b16 %v258
      %v511 = vunpack.c.h.b16 %v258
      %v512 = vunpack.c.l.b16 %v259
      %v513 = vunpack.c.h.b16 %v259
      %v514 = vunpack.c.l.b16 %v260
      %v515 = vunpack.c.h.b16 %v260
      %v516 = vunpack.c.l.b16 %v261
      %v517 = vunpack.c.h.b16 %v261
      %v518 = vunpack.c.l.b16 %v262
      %v519 = vunpack.c.l.b16 %v263
      %v520 = vunpack.c.h.b16 %v263
      %v521 = vunpack.c.l.b16 %v264
      %v522 = vunpack.c.h.b16 %v264
      %v523 = vunpack.c.l.b16 %v265
      %v524 = vunpack.c.h.b16 %v265
      %v525 = vunpack.c.l.b16 %v266
      %v526 = vunpack.c.h.b16 %v266
      %v527 = vunpack.c.l.b16 %v267
      %v528 = vpack.c.b16 %v465, %v456
      %v529 = vpack.c.b16 %v466, %v457
      %v530 = vpack.c.b16 %v467, %v458
      %v531 = vpack.c.b16 %v468, %v459
      %v532 = vpack.c.b16 %v469, %v460
      %v533 = vpack.c.b16 %v470, %v461
      %v534 = vpack.c.b16 %v471, %v462
      %v535 = vpack.c.b16 %v472, %v463
      %v536 = vpack.c.b16 %v473, %v464
      %v537 = vpack.c.b16 %v483, %v474
      %v538 = vpack.c.b16 %v484, %v475
      %v539 = vpack.c.b16 %v485, %v476
      %v540 = vpack.c.b16 %v486, %v477
      %v541 = vpack.c.b16 %v487, %v478
      %v542 = vpack.c.b16 %v488, %v479
      %v543 = vpack.c.b16 %v489, %v480
      %v544 = vpack.c.b16 %v490, %v481
      %v545 = vpack.c.b16 %v491, %v482
      %v546 = vpack.c.b16 %v501, %v492
      %v547 = vpack.c.b16 %v502, %v493
      %v548 = vpack.c.b16 %v503, %v494
      %v549 = vpack.c.b16 %v504, %v495
      %v550 = vpack.c.b16 %v505, %v496
      %v551 = vpack.c.b16 %v506, %v497
      %v552 = vpack.c.b16 %v507, %v498
      %v553 = vpack.c.b16 %v508, %v499
      %v554 = vpack.c.b16 %v509, %v500
      %v555 = vpack.c.b16 %v519, %v510
      %v556 = vpack.c.b16 %v520, %v511
      %v557 = vpack.c.b16 %v521, %v512
      %v558 = vpack.c.b16 %v522, %v513
      %v559 = vpack.c.b16 %v523, %v514
      %v560 = vpack.c.b16 %v524, %v515
      %v561 = vpack.c.b16 %v525, %v516
      %v562 = vpack.c.b16 %v526, %v517
      %v563 = vpack.c.b16 %v527, %v518
      %v744 = vunpack.c.l.b16 %v268
      %v745 = vunpack.c.l.b16 %v269
      %v746 = vunpack.c.l.b16 %v270
      %v747 = vunpack.c.l.b16 %v271
      %v748 = vunpack.c.l.b16 %v272
      %v749 = vunpack.c.l.b16 %v273
      %v750 = vunpack.c.l.b16 %v274
      %v751 = vunpack.c.l.b16 %v275
      %v752 = vunpack.c.l.b16 %v276
      %v753 = vunpack.c.l.b16 %v277
      %v754 = vunpack.c.l.b16 %v278
      %v755 = vunpack.c.l.b16 %v279
      %v756 = vunpack.c.l.b16 %v280
      %v757 = vunpack.c.l.b16 %v281
      %v758 = vunpack.c.l.b16 %v282
      %v759 = vunpack.c.l.b16 %v283
      %v760 = vunpack.c.l.b16 %v284
      %v761 = vunpack.c.l.b16 %v285
      %v762 = vunpack.c.l.b16 %v286
      %v763 = vunpack.c.l.b16 %v287
      %v764 = vunpack.c.l.b16 %v288
      %v765 = vunpack.c.l.b16 %v289
      %v766 = vunpack.c.l.b16 %v290
      %v767 = vunpack.c.l.b16 %v291
      %v768 = vunpack.c.l.b16 %v292
      %v769 = vunpack.c.l.b16 %v293
      %v770 = vunpack.c.l.b16 %v294
      %v771 = vunpack.c.l.b16 %v295
      %v772 = vunpack.c.l.b16 %v296
      %v773 = vunpack.c.l.b16 %v297
      %v774 = vunpack.c.l.b16 %v298
      %v775 = vunpack.c.l.b16 %v299
      %v776 = vunpack.c.l.b16 %v300
      %v777 = vunpack.c.l.b16 %v301
      %v778 = vunpack.c.l.b16 %v302
      %v779 = vunpack.c.l.b16 %v303
      %v780 = vunpack.c.l.b16 %v304
      %v781 = vunpack.c.l.b16 %v305
      %v782 = vunpack.c.l.b16 %v306
      %v783 = vunpack.c.l.b16 %v307
      %v784 = vunpack.c.l.b16 %v308
      %v785 = vunpack.c.l.b16 %v309
      %v786 = vunpack.c.l.b16 %v310
      %v787 = vunpack.c.l.b16 %v311
      %v788 = vunpack.c.l.b16 %v312
      %v789 = vunpack.c.l.b16 %v313
      %v790 = vunpack.c.l.b16 %v314
      %v791 = vunpack.c.l.b16 %v315
      %v792 = vunpack.c.l.b16 %v316
      %v793 = vunpack.c.l.b16 %v317
      %v794 = vunpack.c.l.b16 %v318
      %v795 = vunpack.c.l.b16 %v319
      %v796 = vunpack.c.l.b16 %v320
      %v797 = vunpack.c.l.b16 %v321
      %v798 = vunpack.c.l.b16 %v322
      %v799 = vunpack.c.l.b16 %v323
      %v800 = vunpack.c.l.b16 %v324
      %v801 = vunpack.c.l.b16 %v325
      %v802 = vunpack.c.l.b16 %v326
      %v803 = vunpack.c.l.b16 %v327
      %v804 = vunpack.c.l.b16 %v328
      %v805 = vunpack.c.l.b16 %v329
      %v806 = vunpack.c.l.b16 %v330
      %v807 = vunpack.c.l.b16 %v331
      %v808 = vunpack.c.l.b16 %v332
      %v809 = vunpack.c.l.b16 %v333
      %v810 = vunpack.c.l.b16 %v334
      %v811 = vunpack.c.l.b16 %v335
      %v812 = vunpack.c.l.b16 %v336
      %v813 = vunpack.c.l.b16 %v337
      %v814 = vunpack.c.l.b16 %v338
      %v815 = vunpack.c.l.b16 %v339
      %v816 = vunpack.c.l.b16 %v340
      %v817 = vunpack.c.l.b16 %v341
      %v818 = vunpack.c.l.b16 %v342
      %v819 = vunpack.c.l.b16 %v343
      %v820 = vunpack.c.l.b16 %v344
      %v821 = vunpack.c.l.b16 %v345
      %v822 = vunpack.c.l.b16 %v346
      %v823 = vunpack.c.l.b16 %v347
      %v824 = vunpack.c.l.b16 %v348
      %v825 = vunpack.c.l.b16 %v349
      %v826 = vunpack.c.l.b16 %v350
      %v827 = vunpack.c.l.b16 %v351
      %v828 = vunpack.c.l.b16 %v352
      %v829 = vunpack.c.l.b16 %v353
      %v830 = vunpack.c.l.b16 %v354
      %v831 = vunpack.c.l.b16 %v355
      %v832 = vunpack.c.l.b16 %v356
      %v833 = vunpack.c.l.b16 %v357
      %v834 = vunpack.c.l.b16 %v358
      %v835 = vunpack.c.l.b16 %v359
      %v836 = vunpack.c.l.b16 %v360
      %v837 = vunpack.c.l.b16 %v361
      %v838 = vunpack.c.l.b16 %v362
      %v839 = vunpack.c.l.b16 %v363
      %v840 = vunpack.c.l.b16 %v364
      %v841 = vunpack.c.l.b16 %v365
      %v842 = vunpack.c.l.b16 %v366
      %v843 = vunpack.c.l.b16 %v367
      %v844 = vunpack.c.l.b16 %v368
      %v845 = vunpack.c.l.b16 %v369
      %v846 = vunpack.c.l.b16 %v370
      %v847 = vunpack.c.l.b16 %v371
      %v848 = vunpack.c.l.b16 %v372
      %v849 = vunpack.c.l.b16 %v373
      %v850 = vunpack.c.l.b16 %v374
      %v851 = vunpack.c.l.b16 %v375
      %v852 = vunpack.c.l.b16 %v376
      %v853 = vunpack.c.l.b16 %v377
      %v854 = vunpack.c.l.b16 %v378
      %v855 = vunpack.c.l.b16 %v379
      %v856 = vunpack.c.l.b16 %v380
      %v857 = vunpack.c.l.b16 %v381
      %v858 = vunpack.c.l.b16 %v382
      %v859 = vunpack.c.l.b16 %v383
      %v860 = vunpack.c.l.b16 %v384
      %v861 = vunpack.c.l.b16 %v385
      %v862 = vunpack.c.l.b16 %v386
      %v863 = vunpack.c.l.b16 %v387
      %v864 = vunpack.c.l.b16 %v388
      %v865 = vunpack.c.l.b16 %v389
      %v866 = vunpack.c.l.b16 %v390
      %v867 = vunpack.c.l.b16 %v391
      %v868 = vunpack.c.l.b16 %v392
      %v869 = vunpack.c.l.b16 %v393
      %v870 = vunpack.c.l.b16 %v394
      %v871 = vunpack.c.l.b16 %v395
      %v872 = vunpack.c.l.b16 %v396
      %v873 = vunpack.c.l.b16 %v397
      %v874 = vunpack.c.l.b16 %v398
      %v875 = vunpack.c.l.b16 %v399
      %v876 = vunpack.c.l.b16 %v400
      %v877 = vunpack.c.l.b16 %v401
      %v878 = vunpack.c.l.b16 %v402
      %v879 = vunpack.c.l.b16 %v403
      %v880 = vunpack.c.l.b16 %v404
      %v881 = vunpack.c.l.b16 %v405
      %v882 = vunpack.c.l.b16 %v406
      %v883 = vunpack.c.l.b16 %v407
      %v884 = vunpack.c.l.b16 %v408
      %v885 = vunpack.c.l.b16 %v409
      %v886 = vunpack.c.l.b16 %v410
      %v887 = vunpack.c.l.b16 %v411
      %v888 = vpack.c.b16 %v745, %v744
      %v889 = vpack.c.b16 %v747, %v746
      %v890 = vpack.c.b16 %v749, %v748
      %v891 = vpack.c.b16 %v751, %v750
      %v892 = vpack.c.b16 %v753, %v752
      %v893 = vpack.c.b16 %v755, %v754
      %v894 = vpack.c.b16 %v757, %v756
      %v895 = vpack.c.b16 %v759, %v758
      %v896 = vpack.c.b16 %v761, %v760
      %v897 = vpack.c.b16 %v763, %v762
      %v898 = vpack.c.b16 %v765, %v764
      %v899 = vpack.c.b16 %v767, %v766
      %v900 = vpack.c.b16 %v769, %v768
      %v901 = vpack.c.b16 %v771, %v770
      %v902 = vpack.c.b16 %v773, %v772
      %v903 = vpack.c.b16 %v775, %v774
      %v904 = vpack.c.b16 %v777, %v776
      %v905 = vpack.c.b16 %v779, %v778
      %v906 = vpack.c.b16 %v781, %v780
      %v907 = vpack.c.b16 %v783, %v782
      %v908 = vpack.c.b16 %v785, %v784
      %v909 = vpack.c.b16 %v787, %v786
      %v910 = vpack.c.b16 %v789, %v788
      %v911 = vpack.c.b16 %v791, %v790
      %v912 = vpack.c.b16 %v793, %v792
      %v913 = vpack.c.b16 %v795, %v794
      %v914 = vpack.c.b16 %v797, %v796
      %v915 = vpack.c.b16 %v799, %v798
      %v916 = vpack.c.b16 %v801, %v800
      %v917 = vpack.c.b16 %v803, %v802
      %v918 = vpack.c.b16 %v805, %v804
      %v919 = vpack.c.b16 %v807, %v806
      %v920 = vpack.c.b16 %v809, %v808
      %v921 = vpack.c.b16 %v811, %v810
      %v922 = vpack.c.b16 %v813, %v812
      %v923 = vpack.c.b16 %v815, %v814
      %v924 = vpack.c.b16 %v817, %v816
      %v925 = vpack.c.b16 %v819, %v818
      %v926 = vpack.c.b16 %v821, %v820
      %v927 = vpack.c.b16 %v823, %v822
      %v928 = vpack.c.b16 %v825, %v824
      %v929 = vpack.c.b16 %v827, %v826
      %v930 = vpack.c.b16 %v829, %v828
      %v931 = vpack.c.b16 %v831, %v830
      %v932 = vpack.c.b16 %v833, %v832
      %v933 = vpack.c.b16 %v835, %v834
      %v934 = vpack.c.b16 %v837, %v836
      %v935 = vpack.c.b16 %v839, %v838
      %v936 = vpack.c.b16 %v841, %v840
      %v937 = vpack.c.b16 %v843, %v842
      %v938 = vpack.c.b16 %v845, %v844
      %v939 = vpack.c.b16 %v847, %v846
      %v940 = vpack.c.b16 %v849, %v848
      %v941 = vpack.c.b16 %v851, %v850
      %v942 = vpack.c.b16 %v853, %v852
      %v943 = vpack.c.b16 %v855, %v854
      %v944 = vpack.c.b16 %v857, %v856
      %v945 = vpack.c.b16 %v859, %v858
      %v946 = vpack.c.b16 %v861, %v860
      %v947 = vpack.c.b16 %v863, %v862
      %v948 = vpack.c.b16 %v865, %v864
      %v949 = vpack.c.b16 %v867, %v866
      %v950 = vpack.c.b16 %v869, %v868
      %v951 = vpack.c.b16 %v871, %v870
      %v952 = vpack.c.b16 %v873, %v872
      %v953 = vpack.c.b16 %v875, %v874
      %v954 = vpack.c.b16 %v877, %v876
      %v955 = vpack.c.b16 %v879, %v878
      %v956 = vpack.c.b16 %v881, %v880
      %v957 = vpack.c.b16 %v883, %v882
      %v958 = vpack.c.b16 %v885, %v884
      %v959 = vpack.c.b16 %v887, %v886
      %1032 = vmatpush.bf16.msra.mxu0 %v895
      %1033 = vmatpush.bf16.msra.mxu0 %v894
      %1034 = vmatpush.bf16.msra.mxu0 %v893
      %1035 = vmatpush.bf16.msra.mxu0 %v892
      %1036 = vmatpush.bf16.msra.mxu0 %v891
      %1037 = vmatpush.bf16.msra.mxu0 %v890
      %1038 = vmatpush.bf16.msra.mxu0 %v889
      %1039 = vmatpush.bf16.msra.mxu0 %v888
      %1040 = vmatmul.bf16.gmra.mxu0 %v528
      %v1041 = vpop.f32.mrf.mxu0
      %v1042 = vadd.f32 %v414, %v1041
      %v1043 = vpop.f32.mrf.mxu0
      %v1044 = vadd.f32 %v414, %v1043
      %1045 = vmatmul.bf16.gmra.mxu0 %v537
      %v1046 = vpop.f32.mrf.mxu0
      %v1047 = vadd.f32 %v414, %v1046
      %v1048 = vpop.f32.mrf.mxu0
      %v1049 = vadd.f32 %v414, %v1048
      %1050 = vmatmul.bf16.gmra.mxu0 %v546
      %v1051 = vpop.f32.mrf.mxu0
      %v1052 = vadd.f32 %v414, %v1051
      %v1053 = vpop.f32.mrf.mxu0
      %v1054 = vadd.f32 %v414, %v1053
      %1055 = vmatmul.bf16.gmra.mxu0 %v555
      %v1056 = vpop.f32.mrf.mxu0
      %v1057 = vadd.f32 %v414, %v1056
      %v1058 = vpop.f32.mrf.mxu0
      %v1059 = vadd.f32 %v414, %v1058
      %1060 = vdwg.mxu0
      %1061 = vmatpush.bf16.msra.mxu0 %v903
      %1062 = vmatpush.bf16.msra.mxu0 %v902
      %1063 = vmatpush.bf16.msra.mxu0 %v901
      %1064 = vmatpush.bf16.msra.mxu0 %v900
      %1065 = vmatpush.bf16.msra.mxu0 %v899
      %1066 = vmatpush.bf16.msra.mxu0 %v898
      %1067 = vmatpush.bf16.msra.mxu0 %v897
      %1068 = vmatpush.bf16.msra.mxu0 %v896
      %1069 = vmatmul.bf16.gmra.mxu0 %v529
      %v1070 = vpop.f32.mrf.mxu0
      %v1071 = vadd.f32 %v1042, %v1070
      %v1072 = vpop.f32.mrf.mxu0
      %v1073 = vadd.f32 %v1044, %v1072
      %1074 = vmatmul.bf16.gmra.mxu0 %v538
      %v1075 = vpop.f32.mrf.mxu0
      %v1076 = vadd.f32 %v1047, %v1075
      %v1077 = vpop.f32.mrf.mxu0
      %v1078 = vadd.f32 %v1049, %v1077
      %1079 = vmatmul.bf16.gmra.mxu0 %v547
      %v1080 = vpop.f32.mrf.mxu0
      %v1081 = vadd.f32 %v1052, %v1080
      %v1082 = vpop.f32.mrf.mxu0
      %v1083 = vadd.f32 %v1054, %v1082
      %1084 = vmatmul.bf16.gmra.mxu0 %v556
      %v1085 = vpop.f32.mrf.mxu0
      %v1086 = vadd.f32 %v1057, %v1085
      %v1087 = vpop.f32.mrf.mxu0
      %v1088 = vadd.f32 %v1059, %v1087
      %1089 = vdwg.mxu0
      %1090 = vmatpush.bf16.msra.mxu0 %v911
      %1091 = vmatpush.bf16.msra.mxu0 %v910
      %1092 = vmatpush.bf16.msra.mxu0 %v909
      %1093 = vmatpush.bf16.msra.mxu0 %v908
      %1094 = vmatpush.bf16.msra.mxu0 %v907
      %1095 = vmatpush.bf16.msra.mxu0 %v906
      %1096 = vmatpush.bf16.msra.mxu0 %v905
      %1097 = vmatpush.bf16.msra.mxu0 %v904
      %1098 = vmatmul.bf16.gmra.mxu0 %v530
      %v1099 = vpop.f32.mrf.mxu0
      %v1100 = vadd.f32 %v1071, %v1099
      %v1101 = vpop.f32.mrf.mxu0
      %v1102 = vadd.f32 %v1073, %v1101
      %1103 = vmatmul.bf16.gmra.mxu0 %v539
      %v1104 = vpop.f32.mrf.mxu0
      %v1105 = vadd.f32 %v1076, %v1104
      %v1106 = vpop.f32.mrf.mxu0
      %v1107 = vadd.f32 %v1078, %v1106
      %1108 = vmatmul.bf16.gmra.mxu0 %v548
      %v1109 = vpop.f32.mrf.mxu0
      %v1110 = vadd.f32 %v1081, %v1109
      %v1111 = vpop.f32.mrf.mxu0
      %v1112 = vadd.f32 %v1083, %v1111
      %1113 = vmatmul.bf16.gmra.mxu0 %v557
      %v1114 = vpop.f32.mrf.mxu0
      %v1115 = vadd.f32 %v1086, %v1114
      %v1116 = vpop.f32.mrf.mxu0
      %v1117 = vadd.f32 %v1088, %v1116
      %1118 = vdwg.mxu0
      %1119 = vmatpush.bf16.msra.mxu0 %v919
      %1120 = vmatpush.bf16.msra.mxu0 %v918
      %1121 = vmatpush.bf16.msra.mxu0 %v917
      %1122 = vmatpush.bf16.msra.mxu0 %v916
      %1123 = vmatpush.bf16.msra.mxu0 %v915
      %1124 = vmatpush.bf16.msra.mxu0 %v914
      %1125 = vmatpush.bf16.msra.mxu0 %v913
      %1126 = vmatpush.bf16.msra.mxu0 %v912
      %1127 = vmatmul.bf16.gmra.mxu0 %v531
      %v1128 = vpop.f32.mrf.mxu0
      %v1129 = vadd.f32 %v1100, %v1128
      %v1130 = vpop.f32.mrf.mxu0
      %v1131 = vadd.f32 %v1102, %v1130
      %1132 = vmatmul.bf16.gmra.mxu0 %v540
      %v1133 = vpop.f32.mrf.mxu0
      %v1134 = vadd.f32 %v1105, %v1133
      %v1135 = vpop.f32.mrf.mxu0
      %v1136 = vadd.f32 %v1107, %v1135
      %1137 = vmatmul.bf16.gmra.mxu0 %v549
      %v1138 = vpop.f32.mrf.mxu0
      %v1139 = vadd.f32 %v1110, %v1138
      %v1140 = vpop.f32.mrf.mxu0
      %v1141 = vadd.f32 %v1112, %v1140
      %1142 = vmatmul.bf16.gmra.mxu0 %v558
      %v1143 = vpop.f32.mrf.mxu0
      %v1144 = vadd.f32 %v1115, %v1143
      %v1145 = vpop.f32.mrf.mxu0
      %v1146 = vadd.f32 %v1117, %v1145
      %1147 = vdwg.mxu0
      %1148 = vmatpush.bf16.msra.mxu0 %v927
      %1149 = vmatpush.bf16.msra.mxu0 %v926
      %1150 = vmatpush.bf16.msra.mxu0 %v925
      %1151 = vmatpush.bf16.msra.mxu0 %v924
      %1152 = vmatpush.bf16.msra.mxu0 %v923
      %1153 = vmatpush.bf16.msra.mxu0 %v922
      %1154 = vmatpush.bf16.msra.mxu0 %v921
      %1155 = vmatpush.bf16.msra.mxu0 %v920
      %1156 = vmatmul.bf16.gmra.mxu0 %v532
      %v1157 = vpop.f32.mrf.mxu0
      %v1158 = vadd.f32 %v1129, %v1157
      %v1159 = vpop.f32.mrf.mxu0
      %v1160 = vadd.f32 %v1131, %v1159
      %1161 = vmatmul.bf16.gmra.mxu0 %v541
      %v1162 = vpop.f32.mrf.mxu0
      %v1163 = vadd.f32 %v1134, %v1162
      %v1164 = vpop.f32.mrf.mxu0
      %v1165 = vadd.f32 %v1136, %v1164
      %1166 = vmatmul.bf16.gmra.mxu0 %v550
      %v1167 = vpop.f32.mrf.mxu0
      %v1168 = vadd.f32 %v1139, %v1167
      %v1169 = vpop.f32.mrf.mxu0
      %v1170 = vadd.f32 %v1141, %v1169
      %1171 = vmatmul.bf16.gmra.mxu0 %v559
      %v1172 = vpop.f32.mrf.mxu0
      %v1173 = vadd.f32 %v1144, %v1172
      %v1174 = vpop.f32.mrf.mxu0
      %v1175 = vadd.f32 %v1146, %v1174
      %1176 = vdwg.mxu0
      %1177 = vmatpush.bf16.msra.mxu0 %v935
      %1178 = vmatpush.bf16.msra.mxu0 %v934
      %1179 = vmatpush.bf16.msra.mxu0 %v933
      %1180 = vmatpush.bf16.msra.mxu0 %v932
      %1181 = vmatpush.bf16.msra.mxu0 %v931
      %1182 = vmatpush.bf16.msra.mxu0 %v930
      %1183 = vmatpush.bf16.msra.mxu0 %v929
      %1184 = vmatpush.bf16.msra.mxu0 %v928
      %1185 = vmatmul.bf16.gmra.mxu0 %v533
      %v1186 = vpop.f32.mrf.mxu0
      %v1187 = vadd.f32 %v1158, %v1186
      %v1188 = vpop.f32.mrf.mxu0
      %v1189 = vadd.f32 %v1160, %v1188
      %1190 = vmatmul.bf16.gmra.mxu0 %v542
      %v1191 = vpop.f32.mrf.mxu0
      %v1192 = vadd.f32 %v1163, %v1191
      %v1193 = vpop.f32.mrf.mxu0
      %v1194 = vadd.f32 %v1165, %v1193
      %1195 = vmatmul.bf16.gmra.mxu0 %v551
      %v1196 = vpop.f32.mrf.mxu0
      %v1197 = vadd.f32 %v1168, %v1196
      %v1198 = vpop.f32.mrf.mxu0
      %v1199 = vadd.f32 %v1170, %v1198
      %1200 = vmatmul.bf16.gmra.mxu0 %v560
      %v1201 = vpop.f32.mrf.mxu0
      %v1202 = vadd.f32 %v1173, %v1201
      %v1203 = vpop.f32.mrf.mxu0
      %v1204 = vadd.f32 %v1175, %v1203
      %1205 = vdwg.mxu0
      %1206 = vmatpush.bf16.msra.mxu0 %v943
      %1207 = vmatpush.bf16.msra.mxu0 %v942
      %1208 = vmatpush.bf16.msra.mxu0 %v941
      %1209 = vmatpush.bf16.msra.mxu0 %v940
      %1210 = vmatpush.bf16.msra.mxu0 %v939
      %1211 = vmatpush.bf16.msra.mxu0 %v938
      %1212 = vmatpush.bf16.msra.mxu0 %v937
      %1213 = vmatpush.bf16.msra.mxu0 %v936
      %1214 = vmatmul.bf16.gmra.mxu0 %v534
      %v1215 = vpop.f32.mrf.mxu0
      %v1216 = vadd.f32 %v1187, %v1215
      %v1217 = vpop.f32.mrf.mxu0
      %v1218 = vadd.f32 %v1189, %v1217
      %1219 = vmatmul.bf16.gmra.mxu0 %v543
      %v1220 = vpop.f32.mrf.mxu0
      %v1221 = vadd.f32 %v1192, %v1220
      %v1222 = vpop.f32.mrf.mxu0
      %v1223 = vadd.f32 %v1194, %v1222
      %1224 = vmatmul.bf16.gmra.mxu0 %v552
      %v1225 = vpop.f32.mrf.mxu0
      %v1226 = vadd.f32 %v1197, %v1225
      %v1227 = vpop.f32.mrf.mxu0
      %v1228 = vadd.f32 %v1199, %v1227
      %1229 = vmatmul.bf16.gmra.mxu0 %v561
      %v1230 = vpop.f32.mrf.mxu0
      %v1231 = vadd.f32 %v1202, %v1230
      %v1232 = vpop.f32.mrf.mxu0
      %v1233 = vadd.f32 %v1204, %v1232
      %1234 = vdwg.mxu0
      %1235 = vmatpush.bf16.msra.mxu0 %v951
      %1236 = vmatpush.bf16.msra.mxu0 %v950
      %1237 = vmatpush.bf16.msra.mxu0 %v949
      %1238 = vmatpush.bf16.msra.mxu0 %v948
      %1239 = vmatpush.bf16.msra.mxu0 %v947
      %1240 = vmatpush.bf16.msra.mxu0 %v946
      %1241 = vmatpush.bf16.msra.mxu0 %v945
      %1242 = vmatpush.bf16.msra.mxu0 %v944
      %1243 = vmatmul.bf16.gmra.mxu0 %v535
      %v1244 = vpop.f32.mrf.mxu0
      %v1245 = vadd.f32 %v1216, %v1244
      %v1246 = vpop.f32.mrf.mxu0
      %v1247 = vadd.f32 %v1218, %v1246
      %1248 = vmatmul.bf16.gmra.mxu0 %v544
      %v1249 = vpop.f32.mrf.mxu0
      %v1250 = vadd.f32 %v1221, %v1249
      %v1251 = vpop.f32.mrf.mxu0
      %v1252 = vadd.f32 %v1223, %v1251
      %1253 = vmatmul.bf16.gmra.mxu0 %v553
      %v1254 = vpop.f32.mrf.mxu0
      %v1255 = vadd.f32 %v1226, %v1254
      %v1256 = vpop.f32.mrf.mxu0
      %v1257 = vadd.f32 %v1228, %v1256
      %1258 = vmatmul.bf16.gmra.mxu0 %v562
      %v1259 = vpop.f32.mrf.mxu0
      %v1260 = vadd.f32 %v1231, %v1259
      %v1261 = vpop.f32.mrf.mxu0
      %v1262 = vadd.f32 %v1233, %v1261
      %1263 = vdwg.mxu0
      %1264 = vmatpush.bf16.msra.mxu0 %v959
      %1265 = vmatpush.bf16.msra.mxu0 %v958
      %1266 = vmatpush.bf16.msra.mxu0 %v957
      %1267 = vmatpush.bf16.msra.mxu0 %v956
      %1268 = vmatpush.bf16.msra.mxu0 %v955
      %1269 = vmatpush.bf16.msra.mxu0 %v954
      %1270 = vmatpush.bf16.msra.mxu0 %v953
      %1271 = vmatpush.bf16.msra.mxu0 %v952
      %1272 = vmatmul.bf16.gmra.mxu0 %v536
      %v1273 = vpop.f32.mrf.mxu0
      %v1274 = vadd.f32 %v1245, %v1273
      %v1275 = vpop.f32.mrf.mxu0
      %v1276 = vadd.f32 %v1247, %v1275
      %1277 = vmatmul.bf16.gmra.mxu0 %v545
      %v1278 = vpop.f32.mrf.mxu0
      %v1279 = vadd.f32 %v1250, %v1278
      %v1280 = vpop.f32.mrf.mxu0
      %v1281 = vadd.f32 %v1252, %v1280
      %1282 = vmatmul.bf16.gmra.mxu0 %v554
      %v1283 = vpop.f32.mrf.mxu0
      %v1284 = vadd.f32 %v1255, %v1283
      %v1285 = vpop.f32.mrf.mxu0
      %v1286 = vadd.f32 %v1257, %v1285
      %1287 = vmatmul.bf16.gmra.mxu0 %v563
      %v1288 = vpop.f32.mrf.mxu0
      %v1289 = vadd.f32 %v1260, %v1288
      %v1290 = vpop.f32.mrf.mxu0
      %v1291 = vadd.f32 %v1262, %v1290
      %1292 = vdwg.mxu0
      %v1293 = vmax.f32 %v1274, 0.0
      %v1294 = vmax.f32 %v1276, 0.0
      %v1295 = vmax.f32 %v1279, 0.0
      %v1296 = vmax.f32 %v1281, 0.0
      %v1297 = vmax.f32 %v1284, 0.0
      %v1298 = vmax.f32 %v1286, 0.0
      %v1299 = vmax.f32 %v1289, 0.0
      %v1300 = vmax.f32 %v1291, 0.0
      %v1301 = vpack.c.bf16 %v1293, %v1293
      %v1302 = vpack.c.bf16 %v1294, %v1294
      %v1303 = vpack.c.bf16 %v1295, %v1295
      %v1304 = vpack.c.bf16 %v1296, %v1296
      %v1305 = vpack.c.bf16 %v1297, %v1297
      %v1306 = vpack.c.bf16 %v1298, %v1298
      %v1307 = vpack.c.bf16 %v1299, %v1299
      %v1308 = vpack.c.bf16 %v1300, %v1300
      %1309 = vst [vmem:[%s226] sm:$0xf] %v1301
      %1310 = vst [vmem:[%s226 + $0x4] sm:$0xf] %v1302
      %1311 = vst [vmem:[%s226 + $0x8] sm:$0xf] %v1303
      %1312 = vst [vmem:[%s226 + $0xc] sm:$0xf] %v1304
      %1313 = vst [vmem:[%s226 + $0x10] sm:$0xf] %v1305
      %1314 = vst [vmem:[%s226 + $0x14] sm:$0xf] %v1306
      %1315 = vst [vmem:[%s226 + $0x18] sm:$0xf] %v1307
      %1316 = vst [vmem:[%s226 + $0x1c] sm:$0xf] %v1308
      %s1317 = smul.u32 8, %s18
      %p1318 = scmp.lt.s32.totalorder %s1317, 15
      %s1319 = scalar_select %p1318, %s1317, 15
      %p1320 = scmp.lt.s32.totalorder %s19, 0
      %s1321 = scalar_select %p1320, %s19, 0
      %s1322 = sadd.s32 %s1321, %s1319
      %s1323 = smul.addr %s1322, 4
      %s1324 = scalar_lea.vmem %s3, %s1323
      // Predicated region
      $region33: #{encoder_forward.13} parent=31 // pred_check
        %p1325 = pneg %p124
      $region34: #{encoder_forward.13} parent=31 // pred_check_branch
        %1327 = sbr.rel (%p1325) target = $region36
      $region35: #{encoder_forward.13} parent=31 // pred_region
        %s1328 = smul.u32 8, %s18
      $region36: #{encoder_forward.13} parent=31 // pred_fallthru
        _
    $region32: #{encoder_forward.13} parent=5 // pred_fallthru
      _
    %p1329 = scmp.le.s32.totalorder 2, %s9
    // Predicated region
    $region37: #{encoder_forward.13} parent=5 // pred_check
      %p1330 = pneg %p1329
    $region38: #{encoder_forward.13} parent=5 // pred_check_branch
      %1332 = sbr.rel (%p1330) target = $region40
    $region39: #{encoder_forward.13} parent=5 // pred_region
      %s1333 = ssub.s32 %s9, 2
      // Predicated region
      $region41: #{encoder_forward.13} parent=39 // pred_check
        %p1334 = pneg %p130
      $region42: #{encoder_forward.13} parent=39 // pred_check_branch
        %1336 = sbr.rel (%p1334) target = $region44
      $region43: #{encoder_forward.13} parent=39 // pred_region
        %s1337 = smul.u32 8, %s20
        %p1338 = scmp.lt.s32.totalorder %s1337, 15
        %s1339 = scalar_select %p1338, %s1337, 15
        %p1340 = scmp.lt.s32.totalorder %s21, 0
        %s1341 = scalar_select %p1340, %s21, 0
        %s1342 = sadd.s32 %s1341, %s1339
        %s1343 = smul.addr %s1342, 4
        %s1344 = scalar_lea.vmem %s3, %s1343
      $region44: #{encoder_forward.13} parent=39 // pred_fallthru
        _
    $region40: #{encoder_forward.13} parent=5 // pred_fallthru
      _
  $region6: #{encoder_forward.13} parent=0 // loop_footer
    %s13 = sadd.s32 1, %s9
  $region7: #{encoder_forward.13} parent=0 // loop_footer_branch
    %8 = sbr.rel target = $region3
  $region8: #{encoder_forward.13} parent=0 // loop_exit
    _

// kernel: encoder_forward.15
$region0: #{encoder_forward.15}
  #allocation0 [shape = 'u32[]', space=smem, size = 0x4, offset = 0x4, fixed_abs, tag = 'smem constant byte address 0x4 - core index']
  #allocation1 [shape = 'u32[72,128]{1,0:T(1,128)}', space=vmem, size = 0x9000, scoped, tag = 'internal scratch']
  %s0 = inlined_call_operand.vmem [shape: bf16[128,128], index: 0, kind: input, shape index: {}]
  %s1 = inlined_call_operand.vmem [shape: bf16[128,256], index: 1, kind: input, shape index: {}]
  %s2 = inlined_call_operand.vmem [shape: f32[1,256], index: 2, kind: input, shape index: {}]
  %s3 = inlined_call_operand.vmem [shape: bf16[128,256], index: 3, kind: input, shape index: {}]
  %s4 = inlined_call_operand.vmem [shape: bf16[128,256], index: 4, kind: output, shape index: {}]
  %s5 = sld [smem:[#allocation0]]
  $region49: #{encoder_forward.15} parent=0
    _
  %s7 = ssub.s32 1, %s5
  %s8 = scalar_select 0, %s7, %s5
  loop: start=0, step=1, limit=4
  $region2: #{encoder_forward.15} parent=0 // loop_pre_header
    _
  $region3: #{encoder_forward.15} parent=0 // loop_header
    %s10 = sphi 0, %s14
    %p11 = scmp.ge.s32.totalorder %s10, 4
    %s17 = sphi 0, %s29
    %s18 = sphi 0, %s25
    %s19 = sphi 0, %s17
    %s20 = sphi 0, %s18
    %s21 = sphi 0, %s19
    %s22 = sphi 0, %s20
    %s32 = sphi 0, %s34
    %s35 = sphi 0, %s32
    %s36 = sphi 0, %s35
    %s52 = sphi 0, %s36
    %s58 = sphi 0, %s60
    %s61 = sphi 0, %s58
    %s62 = sphi 0, %s61
    %s78 = sphi 0, %s62
    %s84 = sphi 0, %s86
    %s87 = sphi 0, %s84
    %s88 = sphi 0, %s87
    %s104 = sphi 0, %s88
    %s112 = sphi 0, %s114
    %s115 = sphi 0, %s112
    %s116 = sphi 0, %s115
    %s132 = sphi 0, %s116
    %s140 = sphi 0, %s142
    %s143 = sphi 0, %s140
    %s144 = sphi 0, %s143
    %s160 = sphi 0, %s144
  $region4: #{encoder_forward.15} parent=0 // loop_header_branch
    %13 = sbr.rel (%p11) target = $region8
  $region5: #{encoder_forward.15} parent=0 // loop_body
    %s15 = ssub.s32 %s10, 1
    %s16 = ssub.s32 %s10, 2
    %s23 = sadd.s32 1, %s18
    %p24 = scmp.ge.s32.totalorder %s23, 1
    %s25 = scalar_select %p24, 0, %s23
    %s26 = sadd.s32 1, %s17
    %s27 = scalar_select %p24, %s26, %s17
    %p28 = scmp.ge.s32.totalorder %s27, 2
    %s29 = scalar_select %p28, 0, %s27
    %s30 = ssub.s32 %s17, %s29
    %p31 = scmp.eq.s32.totalorder %s30, 0
    %s33 = sadd.s32 %s32, 1
    %s34 = scalar_select %p31, %s32, %s33
    %p37 = pneg %p31
    %p38 = scmp.eq.s32.totalorder %s10, 1
    %p39 = por %p37, %p38
    %p40 = scmp.ne.s32.totalorder %s32, %s35
    %p41 = scmp.eq.s32.totalorder %s10, 0
    %p42 = por %p40, %p41
    %p43 = scmp.ne.s32.totalorder %s32, %s35
    %p44 = scmp.eq.s32.totalorder %s15, 1
    %p45 = por %p43, %p44
    %p46 = scmp.ne.s32.totalorder %s35, %s36
    %p47 = scmp.eq.s32.totalorder %s15, 0
    %p48 = por %p46, %p47
    %p49 = scmp.ne.s32.totalorder %s35, %s36
    %p50 = scmp.eq.s32.totalorder %s16, 1
    %p51 = por %p49, %p50
    %p53 = scmp.ne.s32.totalorder %s36, %s52
    %p54 = scmp.eq.s32.totalorder %s16, 0
    %p55 = por %p53, %p54
    %s56 = ssub.s32 %s18, %s25
    %p57 = scmp.eq.s32.totalorder %s56, 0
    %s59 = sadd.s32 %s58, 1
    %s60 = scalar_select %p57, %s58, %s59
    %p63 = pneg %p57
    %p64 = scmp.eq.s32.totalorder %s10, 1
    %p65 = por %p63, %p64
    %p66 = scmp.ne.s32.totalorder %s58, %s61
    %p67 = scmp.eq.s32.totalorder %s10, 0
    %p68 = por %p66, %p67
    %p69 = scmp.ne.s32.totalorder %s58, %s61
    %p70 = scmp.eq.s32.totalorder %s15, 1
    %p71 = por %p69, %p70
    %p72 = scmp.ne.s32.totalorder %s61, %s62
    %p73 = scmp.eq.s32.totalorder %s15, 0
    %p74 = por %p72, %p73
    %p75 = scmp.ne.s32.totalorder %s61, %s62
    %p76 = scmp.eq.s32.totalorder %s16, 1
    %p77 = por %p75, %p76
    %p79 = scmp.ne.s32.totalorder %s62, %s78
    %p80 = scmp.eq.s32.totalorder %s16, 0
    %p81 = por %p79, %p80
    %s82 = ssub.s32 %s18, %s25
    %p83 = scmp.eq.s32.totalorder %s82, 0
    %s85 = sadd.s32 %s84, 1
    %s86 = scalar_select %p83, %s84, %s85
    %p89 = pneg %p83
    %p90 = scmp.eq.s32.totalorder %s10, 1
    %p91 = por %p89, %p90
    %p92 = scmp.ne.s32.totalorder %s84, %s87
    %p93 = scmp.eq.s32.totalorder %s10, 0
    %p94 = por %p92, %p93
    %p95 = scmp.ne.s32.totalorder %s84, %s87
    %p96 = scmp.eq.s32.totalorder %s15, 1
    %p97 = por %p95, %p96
    %p98 = scmp.ne.s32.totalorder %s87, %s88
    %p99 = scmp.eq.s32.totalorder %s15, 0
    %p100 = por %p98, %p99
    %p101 = scmp.ne.s32.totalorder %s87, %s88
    %p102 = scmp.eq.s32.totalorder %s16, 1
    %p103 = por %p101, %p102
    %p105 = scmp.ne.s32.totalorder %s88, %s104
    %p106 = scmp.eq.s32.totalorder %s16, 0
    %p107 = por %p105, %p106
    %s108 = ssub.s32 %s17, %s29
    %s109 = ssub.s32 %s18, %s25
    %s110 = sor.u32 %s108, %s109
    %p111 = scmp.eq.s32.totalorder %s110, 0
    %s113 = sadd.s32 %s112, 1
    %s114 = scalar_select %p111, %s112, %s113
    %p117 = pneg %p111
    %p118 = scmp.eq.s32.totalorder %s10, 1
    %p119 = por %p117, %p118
    %p120 = scmp.ne.s32.totalorder %s112, %s115
    %p121 = scmp.eq.s32.totalorder %s10, 0
    %p122 = por %p120, %p121
    %p123 = scmp.ne.s32.totalorder %s112, %s115
    %p124 = scmp.eq.s32.totalorder %s15, 1
    %p125 = por %p123, %p124
    %p126 = scmp.ne.s32.totalorder %s115, %s116
    %p127 = scmp.eq.s32.totalorder %s15, 0
    %p128 = por %p126, %p127
    %p129 = scmp.ne.s32.totalorder %s115, %s116
    %p130 = scmp.eq.s32.totalorder %s16, 1
    %p131 = por %p129, %p130
    %p133 = scmp.ne.s32.totalorder %s116, %s132
    %p134 = scmp.eq.s32.totalorder %s16, 0
    %p135 = por %p133, %p134
    %s136 = ssub.s32 %s17, %s29
    %s137 = ssub.s32 %s18, %s25
    %s138 = sor.u32 %s136, %s137
    %p139 = scmp.eq.s32.totalorder %s138, 0
    %s141 = sadd.s32 %s140, 1
    %s142 = scalar_select %p139, %s140, %s141
    %p145 = pneg %p139
    %p146 = scmp.eq.s32.totalorder %s10, 1
    %p147 = por %p145, %p146
    %p148 = scmp.ne.s32.totalorder %s140, %s143
    %p149 = scmp.eq.s32.totalorder %s10, 0
    %p150 = por %p148, %p149
    %p151 = scmp.ne.s32.totalorder %s140, %s143
    %p152 = scmp.eq.s32.totalorder %s15, 1
    %p153 = por %p151, %p152
    %p154 = scmp.ne.s32.totalorder %s143, %s144
    %p155 = scmp.eq.s32.totalorder %s15, 0
    %p156 = por %p154, %p155
    %p157 = scmp.ne.s32.totalorder %s143, %s144
    %p158 = scmp.eq.s32.totalorder %s16, 1
    %p159 = por %p157, %p158
    %p161 = scmp.ne.s32.totalorder %s144, %s160
    %p162 = scmp.eq.s32.totalorder %s16, 0
    %p163 = por %p161, %p162
    %p164 = scmp.le.s32.totalorder 1, %s10
    %p165 = scmp.lt.s32.totalorder %s10, 3
    %p166 = pnand %p164, %p165
    %p167 = pneg %p166
    // Predicated region
    $region9: #{encoder_forward.15} parent=5 // pred_check
      _
    $region10: #{encoder_forward.15} parent=5 // pred_check_branch
      %169 = sbr.rel (%p166) target = $region12
    $region11: #{encoder_forward.15} parent=5 // pred_region
      %s170 = ssub.s32 %s10, 1
      // Predicated region
      $region13: #{encoder_forward.15} parent=11 // pred_check
        %p171 = pneg %p74
      $region14: #{encoder_forward.15} parent=11 // pred_check_branch
        %173 = sbr.rel (%p171) target = $region16
      $region15: #{encoder_forward.15} parent=11 // pred_region
        %s174 = smul.u32 2, %s20
        %p175 = scmp.lt.s32.totalorder %s174, 1
        %s176 = scalar_select %p175, %s174, 1
        %s177 = smul.addr %s176, 4
        %s178 = scalar_lea.vmem %s1, %s177
        %s179 = smul.u32 2, %s20
      $region16: #{encoder_forward.15} parent=11 // pred_fallthru
        _
      // Predicated region
      $region17: #{encoder_forward.15} parent=11 // pred_check
        %p180 = pneg %p100
      $region18: #{encoder_forward.15} parent=11 // pred_check_branch
        %182 = sbr.rel (%p180) target = $region20
      $region19: #{encoder_forward.15} parent=11 // pred_region
        %s183 = smul.u32 2, %s20
        %p184 = scmp.lt.s32.totalorder %s183, 1
        %s185 = scalar_select %p184, %s183, 1
        %s186 = scalar_lea.vmem %s2, %s185
        %s187 = smul.u32 2, %s20
      $region20: #{encoder_forward.15} parent=11 // pred_fallthru
        _
    $region12: #{encoder_forward.15} parent=5 // pred_fallthru
      _
    %p188 = scmp.lt.s32.totalorder %s10, 2
    // Predicated region
    $region21: #{encoder_forward.15} parent=5 // pred_check
      %p189 = pneg %p188
    $region22: #{encoder_forward.15} parent=5 // pred_check_branch
      %191 = sbr.rel (%p189) target = $region24
    $region23: #{encoder_forward.15} parent=5 // pred_region
      // Predicated region
      $region25: #{encoder_forward.15} parent=23 // pred_check
        %p192 = pneg %p42
      $region26: #{encoder_forward.15} parent=23 // pred_check_branch
        %194 = sbr.rel (%p192) target = $region28
      $region27: #{encoder_forward.15} parent=23 // pred_region
        %s195 = smul.u32 8, %s17
        %p196 = scmp.lt.s32.totalorder %s195, 15
        %s197 = scalar_select %p196, %s195, 15
        %s198 = smul.addr %s197, 4
        %s199 = scalar_lea.vmem %s0, %s198
        %s200 = smul.u32 8, %s17
      $region28: #{encoder_forward.15} parent=23 // pred_fallthru
        _
      // Predicated region
      $region29: #{encoder_forward.15} parent=23 // pred_check
        %p201 = pneg %p122
      $region30: #{encoder_forward.15} parent=23 // pred_check_branch
        %203 = sbr.rel (%p201) target = $region32
      $region31: #{encoder_forward.15} parent=23 // pred_region
        %s204 = smul.u32 8, %s17
        %s205 = smul.u32 2, %s18
        %p206 = scmp.lt.s32.totalorder %s204, 15
        %s207 = scalar_select %p206, %s204, 15
        %p208 = scmp.lt.s32.totalorder %s205, 1
        %s209 = scalar_select %p208, %s205, 1
        %s210 = smul.addr %s207, 2
        %s211 = sadd.s32 %s209, %s210
        %s212 = smul.addr %s211, 4
        %s213 = scalar_lea.vmem %s3, %s212
        %s214 = smul.u32 8, %s17
        %s215 = smul.u32 2, %s18
      $region32: #{encoder_forward.15} parent=23 // pred_fallthru
        _
    $region24: #{encoder_forward.15} parent=5 // pred_fallthru
      _
    %p216 = scmp.le.s32.totalorder 1, %s10
    %p217 = scmp.lt.s32.totalorder %s10, 3
    %p218 = pnand %p216, %p217
    %p219 = pneg %p218
    // Predicated region
    $region33: #{encoder_forward.15} parent=5 // pred_check
      _
    $region34: #{encoder_forward.15} parent=5 // pred_check_branch
      %221 = sbr.rel (%p218) target = $region36
    $region35: #{encoder_forward.15} parent=5 // pred_region
      %s222 = ssub.s32 %s10, 1
      %s223 = smul.u32 8, %s19
      %p224 = scmp.lt.s32.totalorder %s223, 15
      %s225 = scalar_select %p224, %s223, 15
      %s226 = smul.addr %s225, 4
      %s227 = scalar_lea.vmem %s0, %s226
      %p228 = pneg %p48
      %p229 = pneg %p45
      %s230 = smul.u32 2, %s20
      %p231 = scmp.lt.s32.totalorder %s230, 1
      %s232 = scalar_select %p231, %s230, 1
      %s233 = smul.addr %s232, 4
      %s234 = scalar_lea.vmem %s1, %s233
      %p235 = pneg %p74
      %p236 = pneg %p71
      %s237 = smul.u32 2, %s20
      %p238 = scmp.lt.s32.totalorder %s237, 1
      %s239 = scalar_select %p238, %s237, 1
      %s240 = scalar_lea.vmem %s2, %s239
      %p241 = pneg %p100
      %p242 = pneg %p97
      %s243 = smul.u32 8, %s19
      %s244 = smul.u32 2, %s20
      %p245 = scmp.lt.s32.totalorder %s243, 15
      %s246 = scalar_select %p245, %s243, 15
      %p247 = scmp.lt.s32.totalorder %s244, 1
      %s248 = scalar_select %p247, %s244, 1
      %s249 = smul.addr %s246, 2
      %s250 = sadd.s32 %s248, %s249
      %s251 = smul.addr %s250, 4
      %s252 = scalar_lea.vmem %s3, %s251
      %p253 = pneg %p128
      %p254 = pneg %p125
      %p255 = pneg %p156
      %p256 = pneg %p153
      %s257 = smul.u32 8, %s19
      %s258 = smul.u32 2, %s20
      %p259 = scmp.lt.s32.totalorder %s257, 15
      %s260 = scalar_select %p259, %s257, 15
      %p261 = scmp.lt.s32.totalorder %s258, 1
      %s262 = scalar_select %p261, %s258, 1
      %s263 = smul.addr %s260, 2
      %s264 = sadd.s32 %s262, %s263
      %s265 = smul.addr %s264, 4
      %s266 = scalar_lea.vmem %s4, %s265
      %s267 = smul.u32 8, %s19
      %p268 = scmp.lt.s32.totalorder %s267, 15
      %s269 = scalar_select %p268, %s267, 15
      %s270 = smul.addr %s269, 4
      %s271 = scalar_lea.vmem %s0, %s270
      %s272 = smul.u32 8, %s19
      %s273 = smul.u32 2, %s20
      %p274 = scmp.lt.s32.totalorder %s273, 1
      %s275 = scalar_select %p274, %s273, 1
      %s276 = smul.addr %s275, 4
      %s277 = scalar_lea.vmem %s1, %s276
      %s278 = smul.u32 2, %s20
      %s279 = smul.u32 2, %s20
      %p280 = scmp.lt.s32.totalorder %s279, 1
      %s281 = scalar_select %p280, %s279, 1
      %s282 = scalar_lea.vmem %s2, %s281
      %s283 = smul.u32 2, %s20
      %s284 = smul.u32 8, %s19
      %s285 = smul.u32 2, %s20
      %p286 = scmp.lt.s32.totalorder %s284, 15
      %s287 = scalar_select %p286, %s284, 15
      %p288 = scmp.lt.s32.totalorder %s285, 1
      %s289 = scalar_select %p288, %s285, 1
      %s290 = smul.addr %s287, 2
      %s291 = sadd.s32 %s289, %s290
      %s292 = smul.addr %s291, 4
      %s293 = scalar_lea.vmem %s3, %s292
      %s294 = smul.u32 8, %s19
      %s295 = smul.u32 2, %s20
      %s296 = smul.u32 8, %s19
      %s297 = smul.u32 2, %s20
      %p298 = scmp.lt.s32.totalorder %s296, 15
      %s299 = scalar_select %p298, %s296, 15
      %p300 = scmp.lt.s32.totalorder %s297, 1
      %s301 = scalar_select %p300, %s297, 1
      %s302 = smul.addr %s299, 2
      %s303 = sadd.s32 %s301, %s302
      %s304 = smul.addr %s303, 4
      %s305 = scalar_lea.vmem %s4, %s304
      %s306 = smul.u32 8, %s19
      %s307 = smul.u32 2, %s20
      %v308 = vld [vmem:[%s271] sm:$0xf]
      %v309 = vld [vmem:[%s271 + $0x4] sm:$0xf]
      %v310 = vld [vmem:[%s271 + $0x8] sm:$0xf]
      %v311 = vld [vmem:[%s271 + $0xc] sm:$0xf]
      %v312 = vld [vmem:[%s271 + $0x10] sm:$0xf]
      %v313 = vld [vmem:[%s271 + $0x14] sm:$0xf]
      %v314 = vld [vmem:[%s271 + $0x18] sm:$0xf]
      %v315 = vld [vmem:[%s271 + $0x1c] sm:$0xf]
      %v316 = vld [vmem:[%s277] sm:$0xff]
      %v317 = vld [vmem:[%s277 + $0x8] sm:$0xff]
      %v318 = vld [vmem:[%s277 + $0x10] sm:$0xff]
      %v319 = vld [vmem:[%s277 + $0x18] sm:$0xff]
      %v320 = vld [vmem:[%s277 + $0x20] sm:$0xff]
      %v321 = vld [vmem:[%s277 + $0x28] sm:$0xff]
      %v322 = vld [vmem:[%s277 + $0x30] sm:$0xff]
      %v323 = vld [vmem:[%s277 + $0x38] sm:$0xff]
      %v324 = vld [vmem:[%s277 + $0x40] sm:$0xff]
      %v325 = vld [vmem:[%s277 + $0x48] sm:$0xff]
      %v326 = vld [vmem:[%s277 + $0x50] sm:$0xff]
      %v327 = vld [vmem:[%s277 + $0x58] sm:$0xff]
      %v328 = vld [vmem:[%s277 + $0x60] sm:$0xff]
      %v329 = vld [vmem:[%s277 + $0x68] sm:$0xff]
      %v330 = vld [vmem:[%s277 + $0x70] sm:$0xff]
      %v331 = vld [vmem:[%s277 + $0x78] sm:$0xff]
      %v332 = vld [vmem:[%s282] sm:$0x3]
      %v334 = vperm.slane %v332, 0
      %v335 = vperm.slane %v332, 1
      %v346 = vunpack.c.l.b16 %v308
      %v347 = vunpack.c.l.b16 %v309
      %v348 = vunpack.c.l.b16 %v310
      %v349 = vunpack.c.l.b16 %v311
      %v350 = vunpack.c.l.b16 %v312
      %v351 = vunpack.c.l.b16 %v313
      %v352 = vunpack.c.l.b16 %v314
      %v353 = vunpack.c.l.b16 %v315
      %v354 = vpack.c.b16 %v347, %v346
      %v355 = vpack.c.b16 %v349, %v348
      %v356 = vpack.c.b16 %v351, %v350
      %v357 = vpack.c.b16 %v353, %v352
      %v378 = vunpack.c.l.b16 %v316
      %v379 = vunpack.c.h.b16 %v316
      %v380 = vunpack.c.l.b16 %v317
      %v381 = vunpack.c.h.b16 %v317
      %v382 = vunpack.c.l.b16 %v318
      %v383 = vunpack.c.h.b16 %v318
      %v384 = vunpack.c.l.b16 %v319
      %v385 = vunpack.c.h.b16 %v319
      %v386 = vunpack.c.l.b16 %v320
      %v387 = vunpack.c.h.b16 %v320
      %v388 = vunpack.c.l.b16 %v321
      %v389 = vunpack.c.h.b16 %v321
      %v390 = vunpack.c.l.b16 %v322
      %v391 = vunpack.c.h.b16 %v322
      %v392 = vunpack.c.l.b16 %v323
      %v393 = vunpack.c.h.b16 %v323
      %v394 = vunpack.c.l.b16 %v324
      %v395 = vunpack.c.h.b16 %v324
      %v396 = vunpack.c.l.b16 %v325
      %v397 = vunpack.c.h.b16 %v325
      %v398 = vunpack.c.l.b16 %v326
      %v399 = vunpack.c.h.b16 %v326
      %v400 = vunpack.c.l.b16 %v327
      %v401 = vunpack.c.h.b16 %v327
      %v402 = vunpack.c.l.b16 %v328
      %v403 = vunpack.c.h.b16 %v328
      %v404 = vunpack.c.l.b16 %v329
      %v405 = vunpack.c.h.b16 %v329
      %v406 = vunpack.c.l.b16 %v330
      %v407 = vunpack.c.h.b16 %v330
      %v408 = vunpack.c.l.b16 %v331
      %v409 = vunpack.c.h.b16 %v331
      %v410 = vpack.c.b16 %v380, %v378
      %v411 = vpack.c.b16 %v381, %v379
      %v412 = vpack.c.b16 %v384, %v382
      %v413 = vpack.c.b16 %v385, %v383
      %v414 = vpack.c.b16 %v388, %v386
      %v415 = vpack.c.b16 %v389, %v387
      %v416 = vpack.c.b16 %v392, %v390
      %v417 = vpack.c.b16 %v393, %v391
      %v418 = vpack.c.b16 %v396, %v394
      %v419 = vpack.c.b16 %v397, %v395
      %v420 = vpack.c.b16 %v400, %v398
      %v421 = vpack.c.b16 %v401, %v399
      %v422 = vpack.c.b16 %v404, %v402
      %v423 = vpack.c.b16 %v405, %v403
      %v424 = vpack.c.b16 %v408, %v406
      %v425 = vpack.c.b16 %v409, %v407
      %442 = vmatpush.bf16.msra.mxu0 %v424
      %443 = vmatpush.bf16.msra.mxu0 %v422
      %444 = vmatpush.bf16.msra.mxu0 %v420
      %445 = vmatpush.bf16.msra.mxu0 %v418
      %446 = vmatpush.bf16.msra.mxu0 %v416
      %447 = vmatpush.bf16.msra.mxu0 %v414
      %448 = vmatpush.bf16.msra.mxu0 %v412
      %449 = vmatpush.bf16.msra.mxu0 %v410
      %450 = vmatmul.bf16.gmra.mxu0 %v354
      %v451 = vpop.f32.mrf.mxu0
      %v452 = vadd.f32 %v334, %v451
      %v453 = vpop.f32.mrf.mxu0
      %v454 = vadd.f32 %v334, %v453
      %455 = vmatmul.bf16.gmra.mxu0 %v355
      %v456 = vpop.f32.mrf.mxu0
      %v457 = vadd.f32 %v334, %v456
      %v458 = vpop.f32.mrf.mxu0
      %v459 = vadd.f32 %v334, %v458
      %460 = vmatmul.bf16.gmra.mxu0 %v356
      %v461 = vpop.f32.mrf.mxu0
      %v462 = vadd.f32 %v334, %v461
      %v463 = vpop.f32.mrf.mxu0
      %v464 = vadd.f32 %v334, %v463
      %465 = vmatmul.bf16.gmra.mxu0 %v357
      %v466 = vpop.f32.mrf.mxu0
      %v467 = vadd.f32 %v334, %v466
      %v468 = vpop.f32.mrf.mxu0
      %v469 = vadd.f32 %v334, %v468
      %470 = vdwg.mxu0
      %471 = vmatpush.bf16.msra.mxu0 %v425
      %472 = vmatpush.bf16.msra.mxu0 %v423
      %473 = vmatpush.bf16.msra.mxu0 %v421
      %474 = vmatpush.bf16.msra.mxu0 %v419
      %475 = vmatpush.bf16.msra.mxu0 %v417
      %476 = vmatpush.bf16.msra.mxu0 %v415
      %477 = vmatpush.bf16.msra.mxu0 %v413
      %478 = vmatpush.bf16.msra.mxu0 %v411
      %479 = vmatmul.bf16.gmra.mxu0 %v354
      %v480 = vpop.f32.mrf.mxu0
      %v481 = vadd.f32 %v335, %v480
      %v482 = vpop.f32.mrf.mxu0
      %v483 = vadd.f32 %v335, %v482
      %484 = vmatmul.bf16.gmra.mxu0 %v355
      %v485 = vpop.f32.mrf.mxu0
      %v486 = vadd.f32 %v335, %v485
      %v487 = vpop.f32.mrf.mxu0
      %v488 = vadd.f32 %v335, %v487
      %489 = vmatmul.bf16.gmra.mxu0 %v356
      %v490 = vpop.f32.mrf.mxu0
      %v491 = vadd.f32 %v335, %v490
      %v492 = vpop.f32.mrf.mxu0
      %v493 = vadd.f32 %v335, %v492
      %494 = vmatmul.bf16.gmra.mxu0 %v357
      %v495 = vpop.f32.mrf.mxu0
      %v496 = vadd.f32 %v335, %v495
      %v497 = vpop.f32.mrf.mxu0
      %v498 = vadd.f32 %v335, %v497
      %499 = vdwg.mxu0
      %v500 = vld [vmem:[%s293] sm:$0xff]
      %v501 = vld [vmem:[%s293 + $0x8] sm:$0xff]
      %v502 = vld [vmem:[%s293 + $0x10] sm:$0xff]
      %v503 = vld [vmem:[%s293 + $0x18] sm:$0xff]
      %v504 = vld [vmem:[%s293 + $0x20] sm:$0xff]
      %v505 = vld [vmem:[%s293 + $0x28] sm:$0xff]
      %v506 = vld [vmem:[%s293 + $0x30] sm:$0xff]
      %v507 = vld [vmem:[%s293 + $0x38] sm:$0xff]
      %v508 = vunpack.c.l.bf16 %v500
      %v509 = vunpack.c.h.bf16 %v500
      %v510 = vunpack.c.l.bf16 %v501
      %v511 = vunpack.c.h.bf16 %v501
      %v512 = vunpack.c.l.bf16 %v502
      %v513 = vunpack.c.h.bf16 %v502
      %v514 = vunpack.c.l.bf16 %v503
      %v515 = vunpack.c.h.bf16 %v503
      %v516 = vunpack.c.l.bf16 %v504
      %v517 = vunpack.c.h.bf16 %v504
      %v518 = vunpack.c.l.bf16 %v505
      %v519 = vunpack.c.h.bf16 %v505
      %v520 = vunpack.c.l.bf16 %v506
      %v521 = vunpack.c.h.bf16 %v506
      %v522 = vunpack.c.l.bf16 %v507
      %v523 = vunpack.c.h.bf16 %v507
      %v524 = vadd.f32 %v452, %v508
      %v525 = vadd.f32 %v481, %v509
      %v526 = vadd.f32 %v454, %v510
      %v527 = vadd.f32 %v483, %v511
      %v528 = vadd.f32 %v457, %v512
      %v529 = vadd.f32 %v486, %v513
      %v530 = vadd.f32 %v459, %v514
      %v531 = vadd.f32 %v488, %v515
      %v532 = vadd.f32 %v462, %v516
      %v533 = vadd.f32 %v491, %v517
      %v534 = vadd.f32 %v464, %v518
      %v535 = vadd.f32 %v493, %v519
      %v536 = vadd.f32 %v467, %v520
      %v537 = vadd.f32 %v496, %v521
      %v538 = vadd.f32 %v469, %v522
      %v539 = vadd.f32 %v498, %v523
      %v540 = vmax.f32 %v524, 0.0
      %v541 = vmax.f32 %v525, 0.0
      %v542 = vmax.f32 %v526, 0.0
      %v543 = vmax.f32 %v527, 0.0
      %v544 = vmax.f32 %v528, 0.0
      %v545 = vmax.f32 %v529, 0.0
      %v546 = vmax.f32 %v530, 0.0
      %v547 = vmax.f32 %v531, 0.0
      %v548 = vmax.f32 %v532, 0.0
      %v549 = vmax.f32 %v533, 0.0
      %v550 = vmax.f32 %v534, 0.0
      %v551 = vmax.f32 %v535, 0.0
      %v552 = vmax.f32 %v536, 0.0
      %v553 = vmax.f32 %v537, 0.0
      %v554 = vmax.f32 %v538, 0.0
      %v555 = vmax.f32 %v539, 0.0
      %v556 = vpack.c.bf16 %v541, %v540
      %v557 = vpack.c.bf16 %v543, %v542
      %v558 = vpack.c.bf16 %v545, %v544
      %v559 = vpack.c.bf16 %v547, %v546
      %v560 = vpack.c.bf16 %v549, %v548
      %v561 = vpack.c.bf16 %v551, %v550
      %v562 = vpack.c.bf16 %v553, %v552
      %v563 = vpack.c.bf16 %v555, %v554
      %564 = vst [vmem:[%s305] sm:$0xff] %v556
      %565 = vst [vmem:[%s305 + $0x8] sm:$0xff] %v557
      %566 = vst [vmem:[%s305 + $0x10] sm:$0xff] %v558
      %567 = vst [vmem:[%s305 + $0x18] sm:$0xff] %v559
      %568 = vst [vmem:[%s305 + $0x20] sm:$0xff] %v560
      %569 = vst [vmem:[%s305 + $0x28] sm:$0xff] %v561
      %570 = vst [vmem:[%s305 + $0x30] sm:$0xff] %v562
      %571 = vst [vmem:[%s305 + $0x38] sm:$0xff] %v563
      %s572 = smul.u32 8, %s19
      %s573 = smul.u32 2, %s20
      %p574 = scmp.lt.s32.totalorder %s572, 15
      %s575 = scalar_select %p574, %s572, 15
      %p576 = scmp.lt.s32.totalorder %s573, 1
      %s577 = scalar_select %p576, %s573, 1
      %s578 = smul.addr %s575, 2
      %s579 = sadd.s32 %s577, %s578
      %s580 = smul.addr %s579, 4
      %s581 = scalar_lea.vmem %s4, %s580
      // Predicated region
      $region37: #{encoder_forward.15} parent=35 // pred_check
        %p582 = pneg %p153
      $region38: #{encoder_forward.15} parent=35 // pred_check_branch
        %584 = sbr.rel (%p582) target = $region40
      $region39: #{encoder_forward.15} parent=35 // pred_region
        %s585 = smul.u32 8, %s19
        %s586 = smul.u32 2, %s20
      $region40: #{encoder_forward.15} parent=35 // pred_fallthru
        _
    $region36: #{encoder_forward.15} parent=5 // pred_fallthru
      _
    %p587 = scmp.le.s32.totalorder 2, %s10
    // Predicated region
    $region41: #{encoder_forward.15} parent=5 // pred_check
      %p588 = pneg %p587
    $region42: #{encoder_forward.15} parent=5 // pred_check_branch
      %590 = sbr.rel (%p588) target = $region44
    $region43: #{encoder_forward.15} parent=5 // pred_region
      %s591 = ssub.s32 %s10, 2
      // Predicated region
      $region45: #{encoder_forward.15} parent=43 // pred_check
        %p592 = pneg %p159
      $region46: #{encoder_forward.15} parent=43 // pred_check_branch
        %594 = sbr.rel (%p592) target = $region48
      $region47: #{encoder_forward.15} parent=43 // pred_region
        %s595 = smul.u32 8, %s21
        %s596 = smul.u32 2, %s22
        %p597 = scmp.lt.s32.totalorder %s595, 15
        %s598 = scalar_select %p597, %s595, 15
        %p599 = scmp.lt.s32.totalorder %s596, 1
        %s600 = scalar_select %p599, %s596, 1
        %s601 = smul.addr %s598, 2
        %s602 = sadd.s32 %s600, %s601
        %s603 = smul.addr %s602, 4
        %s604 = scalar_lea.vmem %s4, %s603
      $region48: #{encoder_forward.15} parent=43 // pred_fallthru
        _
    $region44: #{encoder_forward.15} parent=5 // pred_fallthru
      _
  $region6: #{encoder_forward.15} parent=0 // loop_footer
    %s14 = sadd.s32 1, %s10
  $region7: #{encoder_forward.15} parent=0 // loop_footer_branch
    %9 = sbr.rel target = $region3
  $region8: #{encoder_forward.15} parent=0 // loop_exit
    _

// kernel: encoder_forward.16
$region0: #{encoder_forward.16}
  #allocation0 [shape = 'u32[]', space=smem, size = 0x4, offset = 0x4, fixed_abs, tag = 'smem constant byte address 0x4 - core index']
  #allocation1 [shape = 'u32[72,128]{1,0:T(1,128)}', space=vmem, size = 0x9000, scoped, tag = 'internal scratch']
  %s0 = inlined_call_operand.vmem [shape: bf16[128,256], index: 0, kind: input, shape index: {}]
  %s1 = inlined_call_operand.vmem [shape: bf16[256,128], index: 1, kind: input, shape index: {}]
  %s2 = inlined_call_operand.vmem [shape: f32[1,128], index: 2, kind: input, shape index: {}]
  %s3 = inlined_call_operand.vmem [shape: bf16[128,128], index: 3, kind: output, shape index: {}]
  %s4 = sld [smem:[#allocation0]]
  $region45: #{encoder_forward.16} parent=0
    _
  %s6 = ssub.s32 1, %s4
  %s7 = scalar_select 0, %s6, %s4
  loop: start=0, step=1, limit=4
  $region2: #{encoder_forward.16} parent=0 // loop_pre_header
    _
  $region3: #{encoder_forward.16} parent=0 // loop_header
    %s9 = sphi 0, %s13
    %p10 = scmp.ge.s32.totalorder %s9, 4
    %s16 = sphi 0, %s28
    %s17 = sphi 0, %s24
    %s18 = sphi 0, %s16
    %s19 = sphi 0, %s17
    %s20 = sphi 0, %s18
    %s21 = sphi 0, %s19
    %s31 = sphi 0, %s33
    %s34 = sphi 0, %s31
    %s35 = sphi 0, %s34
    %s51 = sphi 0, %s35
    %s57 = sphi 0, %s59
    %s60 = sphi 0, %s57
    %s61 = sphi 0, %s60
    %s77 = sphi 0, %s61
    %s83 = sphi 0, %s85
    %s86 = sphi 0, %s83
    %s87 = sphi 0, %s86
    %s103 = sphi 0, %s87
    %s111 = sphi 0, %s113
    %s114 = sphi 0, %s111
    %s115 = sphi 0, %s114
    %s131 = sphi 0, %s115
  $region4: #{encoder_forward.16} parent=0 // loop_header_branch
    %12 = sbr.rel (%p10) target = $region8
  $region5: #{encoder_forward.16} parent=0 // loop_body
    %s14 = ssub.s32 %s9, 1
    %s15 = ssub.s32 %s9, 2
    %s22 = sadd.s32 1, %s17
    %p23 = scmp.ge.s32.totalorder %s22, 1
    %s24 = scalar_select %p23, 0, %s22
    %s25 = sadd.s32 1, %s16
    %s26 = scalar_select %p23, %s25, %s16
    %p27 = scmp.ge.s32.totalorder %s26, 2
    %s28 = scalar_select %p27, 0, %s26
    %s29 = ssub.s32 %s16, %s28
    %p30 = scmp.eq.s32.totalorder %s29, 0
    %s32 = sadd.s32 %s31, 1
    %s33 = scalar_select %p30, %s31, %s32
    %p36 = pneg %p30
    %p37 = scmp.eq.s32.totalorder %s9, 1
    %p38 = por %p36, %p37
    %p39 = scmp.ne.s32.totalorder %s31, %s34
    %p40 = scmp.eq.s32.totalorder %s9, 0
    %p41 = por %p39, %p40
    %p42 = scmp.ne.s32.totalorder %s31, %s34
    %p43 = scmp.eq.s32.totalorder %s14, 1
    %p44 = por %p42, %p43
    %p45 = scmp.ne.s32.totalorder %s34, %s35
    %p46 = scmp.eq.s32.totalorder %s14, 0
    %p47 = por %p45, %p46
    %p48 = scmp.ne.s32.totalorder %s34, %s35
    %p49 = scmp.eq.s32.totalorder %s15, 1
    %p50 = por %p48, %p49
    %p52 = scmp.ne.s32.totalorder %s35, %s51
    %p53 = scmp.eq.s32.totalorder %s15, 0
    %p54 = por %p52, %p53
    %s55 = ssub.s32 %s17, %s24
    %p56 = scmp.eq.s32.totalorder %s55, 0
    %s58 = sadd.s32 %s57, 1
    %s59 = scalar_select %p56, %s57, %s58
    %p62 = pneg %p56
    %p63 = scmp.eq.s32.totalorder %s9, 1
    %p64 = por %p62, %p63
    %p65 = scmp.ne.s32.totalorder %s57, %s60
    %p66 = scmp.eq.s32.totalorder %s9, 0
    %p67 = por %p65, %p66
    %p68 = scmp.ne.s32.totalorder %s57, %s60
    %p69 = scmp.eq.s32.totalorder %s14, 1
    %p70 = por %p68, %p69
    %p71 = scmp.ne.s32.totalorder %s60, %s61
    %p72 = scmp.eq.s32.totalorder %s14, 0
    %p73 = por %p71, %p72
    %p74 = scmp.ne.s32.totalorder %s60, %s61
    %p75 = scmp.eq.s32.totalorder %s15, 1
    %p76 = por %p74, %p75
    %p78 = scmp.ne.s32.totalorder %s61, %s77
    %p79 = scmp.eq.s32.totalorder %s15, 0
    %p80 = por %p78, %p79
    %s81 = ssub.s32 %s17, %s24
    %p82 = scmp.eq.s32.totalorder %s81, 0
    %s84 = sadd.s32 %s83, 1
    %s85 = scalar_select %p82, %s83, %s84
    %p88 = pneg %p82
    %p89 = scmp.eq.s32.totalorder %s9, 1
    %p90 = por %p88, %p89
    %p91 = scmp.ne.s32.totalorder %s83, %s86
    %p92 = scmp.eq.s32.totalorder %s9, 0
    %p93 = por %p91, %p92
    %p94 = scmp.ne.s32.totalorder %s83, %s86
    %p95 = scmp.eq.s32.totalorder %s14, 1
    %p96 = por %p94, %p95
    %p97 = scmp.ne.s32.totalorder %s86, %s87
    %p98 = scmp.eq.s32.totalorder %s14, 0
    %p99 = por %p97, %p98
    %p100 = scmp.ne.s32.totalorder %s86, %s87
    %p101 = scmp.eq.s32.totalorder %s15, 1
    %p102 = por %p100, %p101
    %p104 = scmp.ne.s32.totalorder %s87, %s103
    %p105 = scmp.eq.s32.totalorder %s15, 0
    %p106 = por %p104, %p105
    %s107 = ssub.s32 %s16, %s28
    %s108 = ssub.s32 %s17, %s24
    %s109 = sor.u32 %s107, %s108
    %p110 = scmp.eq.s32.totalorder %s109, 0
    %s112 = sadd.s32 %s111, 1
    %s113 = scalar_select %p110, %s111, %s112
    %p116 = pneg %p110
    %p117 = scmp.eq.s32.totalorder %s9, 1
    %p118 = por %p116, %p117
    %p119 = scmp.ne.s32.totalorder %s111, %s114
    %p120 = scmp.eq.s32.totalorder %s9, 0
    %p121 = por %p119, %p120
    %p122 = scmp.ne.s32.totalorder %s111, %s114
    %p123 = scmp.eq.s32.totalorder %s14, 1
    %p124 = por %p122, %p123
    %p125 = scmp.ne.s32.totalorder %s114, %s115
    %p126 = scmp.eq.s32.totalorder %s14, 0
    %p127 = por %p125, %p126
    %p128 = scmp.ne.s32.totalorder %s114, %s115
    %p129 = scmp.eq.s32.totalorder %s15, 1
    %p130 = por %p128, %p129
    %p132 = scmp.ne.s32.totalorder %s115, %s131
    %p133 = scmp.eq.s32.totalorder %s15, 0
    %p134 = por %p132, %p133
    %p135 = scmp.le.s32.totalorder 1, %s9
    %p136 = scmp.lt.s32.totalorder %s9, 3
    %p137 = pnand %p135, %p136
    %p138 = pneg %p137
    // Predicated region
    $region9: #{encoder_forward.16} parent=5 // pred_check
      _
    $region10: #{encoder_forward.16} parent=5 // pred_check_branch
      %140 = sbr.rel (%p137) target = $region12
    $region11: #{encoder_forward.16} parent=5 // pred_region
      %s141 = ssub.s32 %s9, 1
      // Predicated region
      $region13: #{encoder_forward.16} parent=11 // pred_check
        %p142 = pneg %p73
      $region14: #{encoder_forward.16} parent=11 // pred_check_branch
        %144 = sbr.rel (%p142) target = $region16
      $region15: #{encoder_forward.16} parent=11 // pred_region
        %p145 = scmp.lt.s32.totalorder %s19, 0
        %s146 = scalar_select %p145, %s19, 0
        %s147 = smul.addr %s146, 4
        %s148 = scalar_lea.vmem %s1, %s147
      $region16: #{encoder_forward.16} parent=11 // pred_fallthru
        _
      // Predicated region
      $region17: #{encoder_forward.16} parent=11 // pred_check
        %p149 = pneg %p99
      $region18: #{encoder_forward.16} parent=11 // pred_check_branch
        %151 = sbr.rel (%p149) target = $region20
      $region19: #{encoder_forward.16} parent=11 // pred_region
        %p152 = scmp.lt.s32.totalorder %s19, 0
        %s153 = scalar_select %p152, %s19, 0
        %s154 = scalar_lea.vmem %s2, %s153
      $region20: #{encoder_forward.16} parent=11 // pred_fallthru
        _
    $region12: #{encoder_forward.16} parent=5 // pred_fallthru
      _
    %p155 = scmp.lt.s32.totalorder %s9, 2
    // Predicated region
    $region21: #{encoder_forward.16} parent=5 // pred_check
      %p156 = pneg %p155
    $region22: #{encoder_forward.16} parent=5 // pred_check_branch
      %158 = sbr.rel (%p156) target = $region24
    $region23: #{encoder_forward.16} parent=5 // pred_region
      // Predicated region
      $region25: #{encoder_forward.16} parent=23 // pred_check
        %p159 = pneg %p41
      $region26: #{encoder_forward.16} parent=23 // pred_check_branch
        %161 = sbr.rel (%p159) target = $region28
      $region27: #{encoder_forward.16} parent=23 // pred_region
        %s162 = smul.u32 8, %s16
        %p163 = scmp.lt.s32.totalorder %s162, 15
        %s164 = scalar_select %p163, %s162, 15
        %s165 = smul.addr %s164, 2
        %s166 = smul.addr %s165, 4
        %s167 = scalar_lea.vmem %s0, %s166
        %s168 = smul.u32 8, %s16
      $region28: #{encoder_forward.16} parent=23 // pred_fallthru
        _
    $region24: #{encoder_forward.16} parent=5 // pred_fallthru
      _
    %p169 = scmp.le.s32.totalorder 1, %s9
    %p170 = scmp.lt.s32.totalorder %s9, 3
    %p171 = pnand %p169, %p170
    %p172 = pneg %p171
    // Predicated region
    $region29: #{encoder_forward.16} parent=5 // pred_check
      _
    $region30: #{encoder_forward.16} parent=5 // pred_check_branch
      %174 = sbr.rel (%p171) target = $region32
    $region31: #{encoder_forward.16} parent=5 // pred_region
      %s175 = ssub.s32 %s9, 1
      %s176 = smul.u32 8, %s18
      %p177 = scmp.lt.s32.totalorder %s176, 15
      %s178 = scalar_select %p177, %s176, 15
      %s179 = smul.addr %s178, 2
      %s180 = smul.addr %s179, 4
      %s181 = scalar_lea.vmem %s0, %s180
      %p182 = pneg %p47
      %p183 = pneg %p44
      %p184 = scmp.lt.s32.totalorder %s19, 0
      %s185 = scalar_select %p184, %s19, 0
      %s186 = smul.addr %s185, 4
      %s187 = scalar_lea.vmem %s1, %s186
      %p188 = pneg %p73
      %p189 = pneg %p70
      %p190 = scmp.lt.s32.totalorder %s19, 0
      %s191 = scalar_select %p190, %s19, 0
      %s192 = scalar_lea.vmem %s2, %s191
      %p193 = pneg %p99
      %p194 = pneg %p96
      %p195 = pneg %p127
      %p196 = pneg %p124
      %s197 = smul.u32 8, %s18
      %p198 = scmp.lt.s32.totalorder %s197, 15
      %s199 = scalar_select %p198, %s197, 15
      %p200 = scmp.lt.s32.totalorder %s19, 0
      %s201 = scalar_select %p200, %s19, 0
      %s202 = sadd.s32 %s201, %s199
      %s203 = smul.addr %s202, 4
      %s204 = scalar_lea.vmem %s3, %s203
      %s205 = smul.u32 8, %s18
      %p206 = scmp.lt.s32.totalorder %s205, 15
      %s207 = scalar_select %p206, %s205, 15
      %s208 = smul.addr %s207, 2
      %s209 = smul.addr %s208, 4
      %s210 = scalar_lea.vmem %s0, %s209
      %s211 = smul.u32 8, %s18
      %p212 = scmp.lt.s32.totalorder %s19, 0
      %s213 = scalar_select %p212, %s19, 0
      %s214 = smul.addr %s213, 4
      %s215 = scalar_lea.vmem %s1, %s214
      %p216 = scmp.lt.s32.totalorder %s19, 0
      %s217 = scalar_select %p216, %s19, 0
      %s218 = scalar_lea.vmem %s2, %s217
      %s219 = smul.u32 8, %s18
      %p220 = scmp.lt.s32.totalorder %s219, 15
      %s221 = scalar_select %p220, %s219, 15
      %p222 = scmp.lt.s32.totalorder %s19, 0
      %s223 = scalar_select %p222, %s19, 0
      %s224 = sadd.s32 %s223, %s221
      %s225 = smul.addr %s224, 4
      %s226 = scalar_lea.vmem %s3, %s225
      %s227 = smul.u32 8, %s18
      %v228 = vld [vmem:[%s210] sm:$0xff]
      %v229 = vld [vmem:[%s210 + $0x8] sm:$0xff]
      %v230 = vld [vmem:[%s210 + $0x10] sm:$0xff]
      %v231 = vld [vmem:[%s210 + $0x18] sm:$0xff]
      %v232 = vld [vmem:[%s210 + $0x20] sm:$0xff]
      %v233 = vld [vmem:[%s210 + $0x28] sm:$0xff]
      %v234 = vld [vmem:[%s210 + $0x30] sm:$0xff]
      %v235 = vld [vmem:[%s210 + $0x38] sm:$0xff]
      %v236 = vld [vmem:[%s215] sm:$0xf]
      %v237 = vld [vmem:[%s215 + $0x4] sm:$0xf]
      %v238 = vld [vmem:[%s215 + $0x8] sm:$0xf]
      %v239 = vld [vmem:[%s215 + $0xc] sm:$0xf]
      %v240 = vld [vmem:[%s215 + $0x10] sm:$0xf]
      %v241 = vld [vmem:[%s215 + $0x14] sm:$0xf]
      %v242 = vld [vmem:[%s215 + $0x18] sm:$0xf]
      %v243 = vld [vmem:[%s215 + $0x1c] sm:$0xf]
      %v244 = vld [vmem:[%s215 + $0x20] sm:$0xf]
      %v245 = vld [vmem:[%s215 + $0x24] sm:$0xf]
      %v246 = vld [vmem:[%s215 + $0x28] sm:$0xf]
      %v247 = vld [vmem:[%s215 + $0x2c] sm:$0xf]
      %v248 = vld [vmem:[%s215 + $0x30] sm:$0xf]
      %v249 = vld [vmem:[%s215 + $0x34] sm:$0xf]
      %v250 = vld [vmem:[%s215 + $0x38] sm:$0xf]
      %v251 = vld [vmem:[%s215 + $0x3c] sm:$0xf]
      %v252 = vld [vmem:[%s215 + $0x40] sm:$0xf]
      %v253 = vld [vmem:[%s215 + $0x44] sm:$0xf]
      %v254 = vld [vmem:[%s215 + $0x48] sm:$0xf]
      %v255 = vld [vmem:[%s215 + $0x4c] sm:$0xf]
      %v256 = vld [vmem:[%s215 + $0x50] sm:$0xf]
      %v257 = vld [vmem:[%s215 + $0x54] sm:$0xf]
      %v258 = vld [vmem:[%s215 + $0x58] sm:$0xf]
      %v259 = vld [vmem:[%s215 + $0x5c] sm:$0xf]
      %v260 = vld [vmem:[%s215 + $0x60] sm:$0xf]
      %v261 = vld [vmem:[%s215 + $0x64] sm:$0xf]
      %v262 = vld [vmem:[%s215 + $0x68] sm:$0xf]
      %v263 = vld [vmem:[%s215 + $0x6c] sm:$0xf]
      %v264 = vld [vmem:[%s215 + $0x70] sm:$0xf]
      %v265 = vld [vmem:[%s215 + $0x74] sm:$0xf]
      %v266 = vld [vmem:[%s215 + $0x78] sm:$0xf]
      %v267 = vld [vmem:[%s215 + $0x7c] sm:$0xf]
      %v268 = vld [vmem:[%s218] sm:$0x1]
      %v270 = vperm.slane %v268, 0
      %v280 = vunpack.c.l.b16 %v228
      %v281 = vunpack.c.h.b16 %v228
      %v282 = vunpack.c.l.b16 %v229
      %v283 = vunpack.c.h.b16 %v229
      %v284 = vunpack.c.l.b16 %v230
      %v285 = vunpack.c.h.b16 %v230
      %v286 = vunpack.c.l.b16 %v231
      %v287 = vunpack.c.h.b16 %v231
      %v288 = vunpack.c.l.b16 %v232
      %v289 = vunpack.c.h.b16 %v232
      %v290 = vunpack.c.l.b16 %v233
      %v291 = vunpack.c.h.b16 %v233
      %v292 = vunpack.c.l.b16 %v234
      %v293 = vunpack.c.h.b16 %v234
      %v294 = vunpack.c.l.b16 %v235
      %v295 = vunpack.c.h.b16 %v235
      %v296 = vpack.c.b16 %v282, %v280
      %v297 = vpack.c.b16 %v283, %v281
      %v298 = vpack.c.b16 %v286, %v284
      %v299 = vpack.c.b16 %v287, %v285
      %v300 = vpack.c.b16 %v290, %v288
      %v301 = vpack.c.b16 %v291, %v289
      %v302 = vpack.c.b16 %v294, %v292
      %v303 = vpack.c.b16 %v295, %v293
      %v344 = vunpack.c.l.b16 %v236
      %v345 = vunpack.c.l.b16 %v237
      %v346 = vunpack.c.l.b16 %v238
      %v347 = vunpack.c.l.b16 %v239
      %v348 = vunpack.c.l.b16 %v240
      %v349 = vunpack.c.l.b16 %v241
      %v350 = vunpack.c.l.b16 %v242
      %v351 = vunpack.c.l.b16 %v243
      %v352 = vunpack.c.l.b16 %v244
      %v353 = vunpack.c.l.b16 %v245
      %v354 = vunpack.c.l.b16 %v246
      %v355 = vunpack.c.l.b16 %v247
      %v356 = vunpack.c.l.b16 %v248
      %v357 = vunpack.c.l.b16 %v249
      %v358 = vunpack.c.l.b16 %v250
      %v359 = vunpack.c.l.b16 %v251
      %v360 = vunpack.c.l.b16 %v252
      %v361 = vunpack.c.l.b16 %v253
      %v362 = vunpack.c.l.b16 %v254
      %v363 = vunpack.c.l.b16 %v255
      %v364 = vunpack.c.l.b16 %v256
      %v365 = vunpack.c.l.b16 %v257
      %v366 = vunpack.c.l.b16 %v258
      %v367 = vunpack.c.l.b16 %v259
      %v368 = vunpack.c.l.b16 %v260
      %v369 = vunpack.c.l.b16 %v261
      %v370 = vunpack.c.l.b16 %v262
      %v371 = vunpack.c.l.b16 %v263
      %v372 = vunpack.c.l.b16 %v264
      %v373 = vunpack.c.l.b16 %v265
      %v374 = vunpack.c.l.b16 %v266
      %v375 = vunpack.c.l.b16 %v267
      %v376 = vpack.c.b16 %v345, %v344
      %v377 = vpack.c.b16 %v347, %v346
      %v378 = vpack.c.b16 %v349, %v348
      %v379 = vpack.c.b16 %v351, %v350
      %v380 = vpack.c.b16 %v353, %v352
      %v381 = vpack.c.b16 %v355, %v354
      %v382 = vpack.c.b16 %v357, %v356
      %v383 = vpack.c.b16 %v359, %v358
      %v384 = vpack.c.b16 %v361, %v360
      %v385 = vpack.c.b16 %v363, %v362
      %v386 = vpack.c.b16 %v365, %v364
      %v387 = vpack.c.b16 %v367, %v366
      %v388 = vpack.c.b16 %v369, %v368
      %v389 = vpack.c.b16 %v371, %v370
      %v390 = vpack.c.b16 %v373, %v372
      %v391 = vpack.c.b16 %v375, %v374
      %408 = vmatpush.bf16.msra.mxu0 %v383
      %409 = vmatpush.bf16.msra.mxu0 %v382
      %410 = vmatpush.bf16.msra.mxu0 %v381
      %411 = vmatpush.bf16.msra.mxu0 %v380
      %412 = vmatpush.bf16.msra.mxu0 %v379
      %413 = vmatpush.bf16.msra.mxu0 %v378
      %414 = vmatpush.bf16.msra.mxu0 %v377
      %415 = vmatpush.bf16.msra.mxu0 %v376
      %416 = vmatmul.bf16.gmra.mxu0 %v296
      %v417 = vpop.f32.mrf.mxu0
      %v418 = vadd.f32 %v270, %v417
      %v419 = vpop.f32.mrf.mxu0
      %v420 = vadd.f32 %v270, %v419
      %421 = vmatmul.bf16.gmra.mxu0 %v298
      %v422 = vpop.f32.mrf.mxu0
      %v423 = vadd.f32 %v270, %v422
      %v424 = vpop.f32.mrf.mxu0
      %v425 = vadd.f32 %v270, %v424
      %426 = vmatmul.bf16.gmra.mxu0 %v300
      %v427 = vpop.f32.mrf.mxu0
      %v428 = vadd.f32 %v270, %v427
      %v429 = vpop.f32.mrf.mxu0
      %v430 = vadd.f32 %v270, %v429
      %431 = vmatmul.bf16.gmra.mxu0 %v302
      %v432 = vpop.f32.mrf.mxu0
      %v433 = vadd.f32 %v270, %v432
      %v434 = vpop.f32.mrf.mxu0
      %v435 = vadd.f32 %v270, %v434
      %436 = vdwg.mxu0
      %437 = vmatpush.bf16.msra.mxu0 %v391
      %438 = vmatpush.bf16.msra.mxu0 %v390
      %439 = vmatpush.bf16.msra.mxu0 %v389
      %440 = vmatpush.bf16.msra.mxu0 %v388
      %441 = vmatpush.bf16.msra.mxu0 %v387
      %442 = vmatpush.bf16.msra.mxu0 %v386
      %443 = vmatpush.bf16.msra.mxu0 %v385
      %444 = vmatpush.bf16.msra.mxu0 %v384
      %445 = vmatmul.bf16.gmra.mxu0 %v297
      %v446 = vpop.f32.mrf.mxu0
      %v447 = vadd.f32 %v418, %v446
      %v448 = vpop.f32.mrf.mxu0
      %v449 = vadd.f32 %v420, %v448
      %450 = vmatmul.bf16.gmra.mxu0 %v299
      %v451 = vpop.f32.mrf.mxu0
      %v452 = vadd.f32 %v423, %v451
      %v453 = vpop.f32.mrf.mxu0
      %v454 = vadd.f32 %v425, %v453
      %455 = vmatmul.bf16.gmra.mxu0 %v301
      %v456 = vpop.f32.mrf.mxu0
      %v457 = vadd.f32 %v428, %v456
      %v458 = vpop.f32.mrf.mxu0
      %v459 = vadd.f32 %v430, %v458
      %460 = vmatmul.bf16.gmra.mxu0 %v303
      %v461 = vpop.f32.mrf.mxu0
      %v462 = vadd.f32 %v433, %v461
      %v463 = vpop.f32.mrf.mxu0
      %v464 = vadd.f32 %v435, %v463
      %465 = vdwg.mxu0
      %v466 = vmax.f32 %v447, 0.0
      %v467 = vmax.f32 %v449, 0.0
      %v468 = vmax.f32 %v452, 0.0
      %v469 = vmax.f32 %v454, 0.0
      %v470 = vmax.f32 %v457, 0.0
      %v471 = vmax.f32 %v459, 0.0
      %v472 = vmax.f32 %v462, 0.0
      %v473 = vmax.f32 %v464, 0.0
      %v474 = vpack.c.bf16 %v466, %v466
      %v475 = vpack.c.bf16 %v467, %v467
      %v476 = vpack.c.bf16 %v468, %v468
      %v477 = vpack.c.bf16 %v469, %v469
      %v478 = vpack.c.bf16 %v470, %v470
      %v479 = vpack.c.bf16 %v471, %v471
      %v480 = vpack.c.bf16 %v472, %v472
      %v481 = vpack.c.bf16 %v473, %v473
      %482 = vst [vmem:[%s226] sm:$0xf] %v474
      %483 = vst [vmem:[%s226 + $0x4] sm:$0xf] %v475
      %484 = vst [vmem:[%s226 + $0x8] sm:$0xf] %v476
      %485 = vst [vmem:[%s226 + $0xc] sm:$0xf] %v477
      %486 = vst [vmem:[%s226 + $0x10] sm:$0xf] %v478
      %487 = vst [vmem:[%s226 + $0x14] sm:$0xf] %v479
      %488 = vst [vmem:[%s226 + $0x18] sm:$0xf] %v480
      %489 = vst [vmem:[%s226 + $0x1c] sm:$0xf] %v481
      %s490 = smul.u32 8, %s18
      %p491 = scmp.lt.s32.totalorder %s490, 15
      %s492 = scalar_select %p491, %s490, 15
      %p493 = scmp.lt.s32.totalorder %s19, 0
      %s494 = scalar_select %p493, %s19, 0
      %s495 = sadd.s32 %s494, %s492
      %s496 = smul.addr %s495, 4
      %s497 = scalar_lea.vmem %s3, %s496
      // Predicated region
      $region33: #{encoder_forward.16} parent=31 // pred_check
        %p498 = pneg %p124
      $region34: #{encoder_forward.16} parent=31 // pred_check_branch
        %500 = sbr.rel (%p498) target = $region36
      $region35: #{encoder_forward.16} parent=31 // pred_region
        %s501 = smul.u32 8, %s18
      $region36: #{encoder_forward.16} parent=31 // pred_fallthru
        _
    $region32: #{encoder_forward.16} parent=5 // pred_fallthru
      _
    %p502 = scmp.le.s32.totalorder 2, %s9
    // Predicated region
    $region37: #{encoder_forward.16} parent=5 // pred_check
      %p503 = pneg %p502
    $region38: #{encoder_forward.16} parent=5 // pred_check_branch
      %505 = sbr.rel (%p503) target = $region40
    $region39: #{encoder_forward.16} parent=5 // pred_region
      %s506 = ssub.s32 %s9, 2
      // Predicated region
      $region41: #{encoder_forward.16} parent=39 // pred_check
        %p507 = pneg %p130
      $region42: #{encoder_forward.16} parent=39 // pred_check_branch
        %509 = sbr.rel (%p507) target = $region44
      $region43: #{encoder_forward.16} parent=39 // pred_region
        %s510 = smul.u32 8, %s20
        %p511 = scmp.lt.s32.totalorder %s510, 15
        %s512 = scalar_select %p511, %s510, 15
        %p513 = scmp.lt.s32.totalorder %s21, 0
        %s514 = scalar_select %p513, %s21, 0
        %s515 = sadd.s32 %s514, %s512
        %s516 = smul.addr %s515, 4
        %s517 = scalar_lea.vmem %s3, %s516
      $region44: #{encoder_forward.16} parent=39 // pred_fallthru
        _
    $region40: #{encoder_forward.16} parent=5 // pred_fallthru
      _
  $region6: #{encoder_forward.16} parent=0 // loop_footer
    %s13 = sadd.s32 1, %s9
  $region7: #{encoder_forward.16} parent=0 // loop_footer_branch
    %8 = sbr.rel target = $region3
  $region8: #{encoder_forward.16} parent=0 // loop_exit
    _

// kernel: encoder_forward.17
$region0: #{encoder_forward.17}
  #allocation0 [shape = 'u32[]', space=smem, size = 0x4, offset = 0x4, fixed_abs, tag = 'smem constant byte address 0x4 - core index']
  #allocation1 [shape = 'u32[72,128]{1,0:T(1,128)}', space=vmem, size = 0x9000, scoped, tag = 'internal scratch']
  %s0 = inlined_call_operand.vmem [shape: bf16[32,1152], index: 0, kind: input, shape index: {}]
  %s1 = inlined_call_operand.vmem [shape: bf16[1152,128], index: 1, kind: input, shape index: {}]
  %s2 = inlined_call_operand.vmem [shape: f32[1,128], index: 2, kind: input, shape index: {}]
  %s3 = inlined_call_operand.vmem [shape: bf16[32,128], index: 3, kind: output, shape index: {}]
  %s4 = sld [smem:[#allocation0]]
  $region45: #{encoder_forward.17} parent=0
    _
  %s6 = ssub.s32 1, %s4
  %s7 = scalar_select 0, %s6, %s4
  loop: start=0, step=1, limit=4
  $region2: #{encoder_forward.17} parent=0 // loop_pre_header
    _
  $region3: #{encoder_forward.17} parent=0 // loop_header
    %s9 = sphi 0, %s13
    %p10 = scmp.ge.s32.totalorder %s9, 4
    %s16 = sphi 0, %s28
    %s17 = sphi 0, %s24
    %s18 = sphi 0, %s16
    %s19 = sphi 0, %s17
    %s20 = sphi 0, %s18
    %s21 = sphi 0, %s19
    %s31 = sphi 0, %s33
    %s34 = sphi 0, %s31
    %s35 = sphi 0, %s34
    %s51 = sphi 0, %s35
    %s57 = sphi 0, %s59
    %s60 = sphi 0, %s57
    %s61 = sphi 0, %s60
    %s77 = sphi 0, %s61
    %s83 = sphi 0, %s85
    %s86 = sphi 0, %s83
    %s87 = sphi 0, %s86
    %s103 = sphi 0, %s87
    %s111 = sphi 0, %s113
    %s114 = sphi 0, %s111
    %s115 = sphi 0, %s114
    %s131 = sphi 0, %s115
  $region4: #{encoder_forward.17} parent=0 // loop_header_branch
    %12 = sbr.rel (%p10) target = $region8
  $region5: #{encoder_forward.17} parent=0 // loop_body
    %s14 = ssub.s32 %s9, 1
    %s15 = ssub.s32 %s9, 2
    %s22 = sadd.s32 1, %s17
    %p23 = scmp.ge.s32.totalorder %s22, 1
    %s24 = scalar_select %p23, 0, %s22
    %s25 = sadd.s32 1, %s16
    %s26 = scalar_select %p23, %s25, %s16
    %p27 = scmp.ge.s32.totalorder %s26, 2
    %s28 = scalar_select %p27, 0, %s26
    %s29 = ssub.s32 %s16, %s28
    %p30 = scmp.eq.s32.totalorder %s29, 0
    %s32 = sadd.s32 %s31, 1
    %s33 = scalar_select %p30, %s31, %s32
    %p36 = pneg %p30
    %p37 = scmp.eq.s32.totalorder %s9, 1
    %p38 = por %p36, %p37
    %p39 = scmp.ne.s32.totalorder %s31, %s34
    %p40 = scmp.eq.s32.totalorder %s9, 0
    %p41 = por %p39, %p40
    %p42 = scmp.ne.s32.totalorder %s31, %s34
    %p43 = scmp.eq.s32.totalorder %s14, 1
    %p44 = por %p42, %p43
    %p45 = scmp.ne.s32.totalorder %s34, %s35
    %p46 = scmp.eq.s32.totalorder %s14, 0
    %p47 = por %p45, %p46
    %p48 = scmp.ne.s32.totalorder %s34, %s35
    %p49 = scmp.eq.s32.totalorder %s15, 1
    %p50 = por %p48, %p49
    %p52 = scmp.ne.s32.totalorder %s35, %s51
    %p53 = scmp.eq.s32.totalorder %s15, 0
    %p54 = por %p52, %p53
    %s55 = ssub.s32 %s17, %s24
    %p56 = scmp.eq.s32.totalorder %s55, 0
    %s58 = sadd.s32 %s57, 1
    %s59 = scalar_select %p56, %s57, %s58
    %p62 = pneg %p56
    %p63 = scmp.eq.s32.totalorder %s9, 1
    %p64 = por %p62, %p63
    %p65 = scmp.ne.s32.totalorder %s57, %s60
    %p66 = scmp.eq.s32.totalorder %s9, 0
    %p67 = por %p65, %p66
    %p68 = scmp.ne.s32.totalorder %s57, %s60
    %p69 = scmp.eq.s32.totalorder %s14, 1
    %p70 = por %p68, %p69
    %p71 = scmp.ne.s32.totalorder %s60, %s61
    %p72 = scmp.eq.s32.totalorder %s14, 0
    %p73 = por %p71, %p72
    %p74 = scmp.ne.s32.totalorder %s60, %s61
    %p75 = scmp.eq.s32.totalorder %s15, 1
    %p76 = por %p74, %p75
    %p78 = scmp.ne.s32.totalorder %s61, %s77
    %p79 = scmp.eq.s32.totalorder %s15, 0
    %p80 = por %p78, %p79
    %s81 = ssub.s32 %s17, %s24
    %p82 = scmp.eq.s32.totalorder %s81, 0
    %s84 = sadd.s32 %s83, 1
    %s85 = scalar_select %p82, %s83, %s84
    %p88 = pneg %p82
    %p89 = scmp.eq.s32.totalorder %s9, 1
    %p90 = por %p88, %p89
    %p91 = scmp.ne.s32.totalorder %s83, %s86
    %p92 = scmp.eq.s32.totalorder %s9, 0
    %p93 = por %p91, %p92
    %p94 = scmp.ne.s32.totalorder %s83, %s86
    %p95 = scmp.eq.s32.totalorder %s14, 1
    %p96 = por %p94, %p95
    %p97 = scmp.ne.s32.totalorder %s86, %s87
    %p98 = scmp.eq.s32.totalorder %s14, 0
    %p99 = por %p97, %p98
    %p100 = scmp.ne.s32.totalorder %s86, %s87
    %p101 = scmp.eq.s32.totalorder %s15, 1
    %p102 = por %p100, %p101
    %p104 = scmp.ne.s32.totalorder %s87, %s103
    %p105 = scmp.eq.s32.totalorder %s15, 0
    %p106 = por %p104, %p105
    %s107 = ssub.s32 %s16, %s28
    %s108 = ssub.s32 %s17, %s24
    %s109 = sor.u32 %s107, %s108
    %p110 = scmp.eq.s32.totalorder %s109, 0
    %s112 = sadd.s32 %s111, 1
    %s113 = scalar_select %p110, %s111, %s112
    %p116 = pneg %p110
    %p117 = scmp.eq.s32.totalorder %s9, 1
    %p118 = por %p116, %p117
    %p119 = scmp.ne.s32.totalorder %s111, %s114
    %p120 = scmp.eq.s32.totalorder %s9, 0
    %p121 = por %p119, %p120
    %p122 = scmp.ne.s32.totalorder %s111, %s114
    %p123 = scmp.eq.s32.totalorder %s14, 1
    %p124 = por %p122, %p123
    %p125 = scmp.ne.s32.totalorder %s114, %s115
    %p126 = scmp.eq.s32.totalorder %s14, 0
    %p127 = por %p125, %p126
    %p128 = scmp.ne.s32.totalorder %s114, %s115
    %p129 = scmp.eq.s32.totalorder %s15, 1
    %p130 = por %p128, %p129
    %p132 = scmp.ne.s32.totalorder %s115, %s131
    %p133 = scmp.eq.s32.totalorder %s15, 0
    %p134 = por %p132, %p133
    %p135 = scmp.le.s32.totalorder 1, %s9
    %p136 = scmp.lt.s32.totalorder %s9, 3
    %p137 = pnand %p135, %p136
    %p138 = pneg %p137
    // Predicated region
    $region9: #{encoder_forward.17} parent=5 // pred_check
      _
    $region10: #{encoder_forward.17} parent=5 // pred_check_branch
      %140 = sbr.rel (%p137) target = $region12
    $region11: #{encoder_forward.17} parent=5 // pred_region
      %s141 = ssub.s32 %s9, 1
      // Predicated region
      $region13: #{encoder_forward.17} parent=11 // pred_check
        %p142 = pneg %p73
      $region14: #{encoder_forward.17} parent=11 // pred_check_branch
        %144 = sbr.rel (%p142) target = $region16
      $region15: #{encoder_forward.17} parent=11 // pred_region
        %p145 = scmp.lt.s32.totalorder %s19, 0
        %s146 = scalar_select %p145, %s19, 0
        %s147 = smul.addr %s146, 4
        %s148 = scalar_lea.vmem %s1, %s147
      $region16: #{encoder_forward.17} parent=11 // pred_fallthru
        _
      // Predicated region
      $region17: #{encoder_forward.17} parent=11 // pred_check
        %p149 = pneg %p99
      $region18: #{encoder_forward.17} parent=11 // pred_check_branch
        %151 = sbr.rel (%p149) target = $region20
      $region19: #{encoder_forward.17} parent=11 // pred_region
        %p152 = scmp.lt.s32.totalorder %s19, 0
        %s153 = scalar_select %p152, %s19, 0
        %s154 = scalar_lea.vmem %s2, %s153
      $region20: #{encoder_forward.17} parent=11 // pred_fallthru
        _
    $region12: #{encoder_forward.17} parent=5 // pred_fallthru
      _
    %p155 = scmp.lt.s32.totalorder %s9, 2
    // Predicated region
    $region21: #{encoder_forward.17} parent=5 // pred_check
      %p156 = pneg %p155
    $region22: #{encoder_forward.17} parent=5 // pred_check_branch
      %158 = sbr.rel (%p156) target = $region24
    $region23: #{encoder_forward.17} parent=5 // pred_region
      // Predicated region
      $region25: #{encoder_forward.17} parent=23 // pred_check
        %p159 = pneg %p41
      $region26: #{encoder_forward.17} parent=23 // pred_check_branch
        %161 = sbr.rel (%p159) target = $region28
      $region27: #{encoder_forward.17} parent=23 // pred_region
        %s162 = smul.u32 2, %s16
        %p163 = scmp.lt.s32.totalorder %s162, 3
        %s164 = scalar_select %p163, %s162, 3
        %s165 = smul.addr %s164, 9
        %s166 = smul.addr %s165, 4
        %s167 = scalar_lea.vmem %s0, %s166
        %s168 = smul.u32 2, %s16
      $region28: #{encoder_forward.17} parent=23 // pred_fallthru
        _
    $region24: #{encoder_forward.17} parent=5 // pred_fallthru
      _
    %p169 = scmp.le.s32.totalorder 1, %s9
    %p170 = scmp.lt.s32.totalorder %s9, 3
    %p171 = pnand %p169, %p170
    %p172 = pneg %p171
    // Predicated region
    $region29: #{encoder_forward.17} parent=5 // pred_check
      _
    $region30: #{encoder_forward.17} parent=5 // pred_check_branch
      %174 = sbr.rel (%p171) target = $region32
    $region31: #{encoder_forward.17} parent=5 // pred_region
      %s175 = ssub.s32 %s9, 1
      %s176 = smul.u32 2, %s18
      %p177 = scmp.lt.s32.totalorder %s176, 3
      %s178 = scalar_select %p177, %s176, 3
      %s179 = smul.addr %s178, 9
      %s180 = smul.addr %s179, 4
      %s181 = scalar_lea.vmem %s0, %s180
      %p182 = pneg %p47
      %p183 = pneg %p44
      %p184 = scmp.lt.s32.totalorder %s19, 0
      %s185 = scalar_select %p184, %s19, 0
      %s186 = smul.addr %s185, 4
      %s187 = scalar_lea.vmem %s1, %s186
      %p188 = pneg %p73
      %p189 = pneg %p70
      %p190 = scmp.lt.s32.totalorder %s19, 0
      %s191 = scalar_select %p190, %s19, 0
      %s192 = scalar_lea.vmem %s2, %s191
      %p193 = pneg %p99
      %p194 = pneg %p96
      %p195 = pneg %p127
      %p196 = pneg %p124
      %s197 = smul.u32 2, %s18
      %p198 = scmp.lt.s32.totalorder %s197, 3
      %s199 = scalar_select %p198, %s197, 3
      %p200 = scmp.lt.s32.totalorder %s19, 0
      %s201 = scalar_select %p200, %s19, 0
      %s202 = sadd.s32 %s201, %s199
      %s203 = smul.addr %s202, 4
      %s204 = scalar_lea.vmem %s3, %s203
      %s205 = smul.u32 2, %s18
      %p206 = scmp.lt.s32.totalorder %s205, 3
      %s207 = scalar_select %p206, %s205, 3
      %s208 = smul.addr %s207, 9
      %s209 = smul.addr %s208, 4
      %s210 = scalar_lea.vmem %s0, %s209
      %s211 = smul.u32 2, %s18
      %p212 = scmp.lt.s32.totalorder %s19, 0
      %s213 = scalar_select %p212, %s19, 0
      %s214 = smul.addr %s213, 4
      %s215 = scalar_lea.vmem %s1, %s214
      %p216 = scmp.lt.s32.totalorder %s19, 0
      %s217 = scalar_select %p216, %s19, 0
      %s218 = scalar_lea.vmem %s2, %s217
      %s219 = smul.u32 2, %s18
      %p220 = scmp.lt.s32.totalorder %s219, 3
      %s221 = scalar_select %p220, %s219, 3
      %p222 = scmp.lt.s32.totalorder %s19, 0
      %s223 = scalar_select %p222, %s19, 0
      %s224 = sadd.s32 %s223, %s221
      %s225 = smul.addr %s224, 4
      %s226 = scalar_lea.vmem %s3, %s225
      %s227 = smul.u32 2, %s18
      %v228 = vld [vmem:[%s210] sm:$0xff]
      %v229 = vld [vmem:[%s210 + $0x8] sm:$0xff]
      %v230 = vld [vmem:[%s210 + $0x10] sm:$0xff]
      %v231 = vld [vmem:[%s210 + $0x18] sm:$0xff]
      %v232 = vld [vmem:[%s210 + $0x20] sm:$0xf]
      %v233 = vld [vmem:[%s210 + $0x24] sm:$0xff]
      %v234 = vld [vmem:[%s210 + $0x2c] sm:$0xff]
      %v235 = vld [vmem:[%s210 + $0x34] sm:$0xff]
      %v236 = vld [vmem:[%s210 + $0x3c] sm:$0xff]
      %v237 = vld [vmem:[%s210 + $0x44] sm:$0xf]
      %v238 = vld [vmem:[%s215] sm:$0xf]
      %v239 = vld [vmem:[%s215 + $0x4] sm:$0xf]
      %v240 = vld [vmem:[%s215 + $0x8] sm:$0xf]
      %v241 = vld [vmem:[%s215 + $0xc] sm:$0xf]
      %v242 = vld [vmem:[%s215 + $0x10] sm:$0xf]
      %v243 = vld [vmem:[%s215 + $0x14] sm:$0xf]
      %v244 = vld [vmem:[%s215 + $0x18] sm:$0xf]
      %v245 = vld [vmem:[%s215 + $0x1c] sm:$0xf]
      %v246 = vld [vmem:[%s215 + $0x20] sm:$0xf]
      %v247 = vld [vmem:[%s215 + $0x24] sm:$0xf]
      %v248 = vld [vmem:[%s215 + $0x28] sm:$0xf]
      %v249 = vld [vmem:[%s215 + $0x2c] sm:$0xf]
      %v250 = vld [vmem:[%s215 + $0x30] sm:$0xf]
      %v251 = vld [vmem:[%s215 + $0x34] sm:$0xf]
      %v252 = vld [vmem:[%s215 + $0x38] sm:$0xf]
      %v253 = vld [vmem:[%s215 + $0x3c] sm:$0xf]
      %v254 = vld [vmem:[%s215 + $0x40] sm:$0xf]
      %v255 = vld [vmem:[%s215 + $0x44] sm:$0xf]
      %v256 = vld [vmem:[%s215 + $0x48] sm:$0xf]
      %v257 = vld [vmem:[%s215 + $0x4c] sm:$0xf]
      %v258 = vld [vmem:[%s215 + $0x50] sm:$0xf]
      %v259 = vld [vmem:[%s215 + $0x54] sm:$0xf]
      %v260 = vld [vmem:[%s215 + $0x58] sm:$0xf]
      %v261 = vld [vmem:[%s215 + $0x5c] sm:$0xf]
      %v262 = vld [vmem:[%s215 + $0x60] sm:$0xf]
      %v263 = vld [vmem:[%s215 + $0x64] sm:$0xf]
      %v264 = vld [vmem:[%s215 + $0x68] sm:$0xf]
      %v265 = vld [vmem:[%s215 + $0x6c] sm:$0xf]
      %v266 = vld [vmem:[%s215 + $0x70] sm:$0xf]
      %v267 = vld [vmem:[%s215 + $0x74] sm:$0xf]
      %v268 = vld [vmem:[%s215 + $0x78] sm:$0xf]
      %v269 = vld [vmem:[%s215 + $0x7c] sm:$0xf]
      %v270 = vld [vmem:[%s215 + $0x80] sm:$0xf]
      %v271 = vld [vmem:[%s215 + $0x84] sm:$0xf]
      %v272 = vld [vmem:[%s215 + $0x88] sm:$0xf]
      %v273 = vld [vmem:[%s215 + $0x8c] sm:$0xf]
      %v274 = vld [vmem:[%s215 + $0x90] sm:$0xf]
      %v275 = vld [vmem:[%s215 + $0x94] sm:$0xf]
      %v276 = vld [vmem:[%s215 + $0x98] sm:$0xf]
      %v277 = vld [vmem:[%s215 + $0x9c] sm:$0xf]
      %v278 = vld [vmem:[%s215 + $0xa0] sm:$0xf]
      %v279 = vld [vmem:[%s215 + $0xa4] sm:$0xf]
      %v280 = vld [vmem:[%s215 + $0xa8] sm:$0xf]
      %v281 = vld [vmem:[%s215 + $0xac] sm:$0xf]
      %v282 = vld [vmem:[%s215 + $0xb0] sm:$0xf]
      %v283 = vld [vmem:[%s215 + $0xb4] sm:$0xf]
      %v284 = vld [vmem:[%s215 + $0xb8] sm:$0xf]
      %v285 = vld [vmem:[%s215 + $0xbc] sm:$0xf]
      %v286 = vld [vmem:[%s215 + $0xc0] sm:$0xf]
      %v287 = vld [vmem:[%s215 + $0xc4] sm:$0xf]
      %v288 = vld [vmem:[%s215 + $0xc8] sm:$0xf]
      %v289 = vld [vmem:[%s215 + $0xcc] sm:$0xf]
      %v290 = vld [vmem:[%s215 + $0xd0] sm:$0xf]
      %v291 = vld [vmem:[%s215 + $0xd4] sm:$0xf]
      %v292 = vld [vmem:[%s215 + $0xd8] sm:$0xf]
      %v293 = vld [vmem:[%s215 + $0xdc] sm:$0xf]
      %v294 = vld [vmem:[%s215 + $0xe0] sm:$0xf]
      %v295 = vld [vmem:[%s215 + $0xe4] sm:$0xf]
      %v296 = vld [vmem:[%s215 + $0xe8] sm:$0xf]
      %v297 = vld [vmem:[%s215 + $0xec] sm:$0xf]
      %v298 = vld [vmem:[%s215 + $0xf0] sm:$0xf]
      %v299 = vld [vmem:[%s215 + $0xf4] sm:$0xf]
      %v300 = vld [vmem:[%s215 + $0xf8] sm:$0xf]
      %v301 = vld [vmem:[%s215 + $0xfc] sm:$0xf]
      %v302 = vld [vmem:[%s215 + $0x100] sm:$0xf]
      %v303 = vld [vmem:[%s215 + $0x104] sm:$0xf]
      %v304 = vld [vmem:[%s215 + $0x108] sm:$0xf]
      %v305 = vld [vmem:[%s215 + $0x10c] sm:$0xf]
      %v306 = vld [vmem:[%s215 + $0x110] sm:$0xf]
      %v307 = vld [vmem:[%s215 + $0x114] sm:$0xf]
      %v308 = vld [vmem:[%s215 + $0x118] sm:$0xf]
      %v309 = vld [vmem:[%s215 + $0x11c] sm:$0xf]
      %v310 = vld [vmem:[%s215 + $0x120] sm:$0xf]
      %v311 = vld [vmem:[%s215 + $0x124] sm:$0xf]
      %v312 = vld [vmem:[%s215 + $0x128] sm:$0xf]
      %v313 = vld [vmem:[%s215 + $0x12c] sm:$0xf]
      %v314 = vld [vmem:[%s215 + $0x130] sm:$0xf]
      %v315 = vld [vmem:[%s215 + $0x134] sm:$0xf]
      %v316 = vld [vmem:[%s215 + $0x138] sm:$0xf]
      %v317 = vld [vmem:[%s215 + $0x13c] sm:$0xf]
      %v318 = vld [vmem:[%s215 + $0x140] sm:$0xf]
      %v319 = vld [vmem:[%s215 + $0x144] sm:$0xf]
      %v320 = vld [vmem:[%s215 + $0x148] sm:$0xf]
      %v321 = vld [vmem:[%s215 + $0x14c] sm:$0xf]
      %v322 = vld [vmem:[%s215 + $0x150] sm:$0xf]
      %v323 = vld [vmem:[%s215 + $0x154] sm:$0xf]
      %v324 = vld [vmem:[%s215 + $0x158] sm:$0xf]
      %v325 = vld [vmem:[%s215 + $0x15c] sm:$0xf]
      %v326 = vld [vmem:[%s215 + $0x160] sm:$0xf]
      %v327 = vld [vmem:[%s215 + $0x164] sm:$0xf]
      %v328 = vld [vmem:[%s215 + $0x168] sm:$0xf]
      %v329 = vld [vmem:[%s215 + $0x16c] sm:$0xf]
      %v330 = vld [vmem:[%s215 + $0x170] sm:$0xf]
      %v331 = vld [vmem:[%s215 + $0x174] sm:$0xf]
      %v332 = vld [vmem:[%s215 + $0x178] sm:$0xf]
      %v333 = vld [vmem:[%s215 + $0x17c] sm:$0xf]
      %v334 = vld [vmem:[%s215 + $0x180] sm:$0xf]
      %v335 = vld [vmem:[%s215 + $0x184] sm:$0xf]
      %v336 = vld [vmem:[%s215 + $0x188] sm:$0xf]
      %v337 = vld [vmem:[%s215 + $0x18c] sm:$0xf]
      %v338 = vld [vmem:[%s215 + $0x190] sm:$0xf]
      %v339 = vld [vmem:[%s215 + $0x194] sm:$0xf]
      %v340 = vld [vmem:[%s215 + $0x198] sm:$0xf]
      %v341 = vld [vmem:[%s215 + $0x19c] sm:$0xf]
      %v342 = vld [vmem:[%s215 + $0x1a0] sm:$0xf]
      %v343 = vld [vmem:[%s215 + $0x1a4] sm:$0xf]
      %v344 = vld [vmem:[%s215 + $0x1a8] sm:$0xf]
      %v345 = vld [vmem:[%s215 + $0x1ac] sm:$0xf]
      %v346 = vld [vmem:[%s215 + $0x1b0] sm:$0xf]
      %v347 = vld [vmem:[%s215 + $0x1b4] sm:$0xf]
      %v348 = vld [vmem:[%s215 + $0x1b8] sm:$0xf]
      %v349 = vld [vmem:[%s215 + $0x1bc] sm:$0xf]
      %v350 = vld [vmem:[%s215 + $0x1c0] sm:$0xf]
      %v351 = vld [vmem:[%s215 + $0x1c4] sm:$0xf]
      %v352 = vld [vmem:[%s215 + $0x1c8] sm:$0xf]
      %v353 = vld [vmem:[%s215 + $0x1cc] sm:$0xf]
      %v354 = vld [vmem:[%s215 + $0x1d0] sm:$0xf]
      %v355 = vld [vmem:[%s215 + $0x1d4] sm:$0xf]
      %v356 = vld [vmem:[%s215 + $0x1d8] sm:$0xf]
      %v357 = vld [vmem:[%s215 + $0x1dc] sm:$0xf]
      %v358 = vld [vmem:[%s215 + $0x1e0] sm:$0xf]
      %v359 = vld [vmem:[%s215 + $0x1e4] sm:$0xf]
      %v360 = vld [vmem:[%s215 + $0x1e8] sm:$0xf]
      %v361 = vld [vmem:[%s215 + $0x1ec] sm:$0xf]
      %v362 = vld [vmem:[%s215 + $0x1f0] sm:$0xf]
      %v363 = vld [vmem:[%s215 + $0x1f4] sm:$0xf]
      %v364 = vld [vmem:[%s215 + $0x1f8] sm:$0xf]
      %v365 = vld [vmem:[%s215 + $0x1fc] sm:$0xf]
      %v366 = vld [vmem:[%s215 + $0x200] sm:$0xf]
      %v367 = vld [vmem:[%s215 + $0x204] sm:$0xf]
      %v368 = vld [vmem:[%s215 + $0x208] sm:$0xf]
      %v369 = vld [vmem:[%s215 + $0x20c] sm:$0xf]
      %v370 = vld [vmem:[%s215 + $0x210] sm:$0xf]
      %v371 = vld [vmem:[%s215 + $0x214] sm:$0xf]
      %v372 = vld [vmem:[%s215 + $0x218] sm:$0xf]
      %v373 = vld [vmem:[%s215 + $0x21c] sm:$0xf]
      %v374 = vld [vmem:[%s215 + $0x220] sm:$0xf]
      %v375 = vld [vmem:[%s215 + $0x224] sm:$0xf]
      %v376 = vld [vmem:[%s215 + $0x228] sm:$0xf]
      %v377 = vld [vmem:[%s215 + $0x22c] sm:$0xf]
      %v378 = vld [vmem:[%s215 + $0x230] sm:$0xf]
      %v379 = vld [vmem:[%s215 + $0x234] sm:$0xf]
      %v380 = vld [vmem:[%s215 + $0x238] sm:$0xf]
      %v381 = vld [vmem:[%s215 + $0x23c] sm:$0xf]
      %v382 = vld [vmem:[%s218] sm:$0x1]
      %v384 = vperm.slane %v382, 0
      %v396 = vunpack.c.l.b16 %v228
      %v397 = vunpack.c.h.b16 %v228
      %v398 = vunpack.c.l.b16 %v229
      %v399 = vunpack.c.h.b16 %v229
      %v400 = vunpack.c.l.b16 %v230
      %v401 = vunpack.c.h.b16 %v230
      %v402 = vunpack.c.l.b16 %v231
      %v403 = vunpack.c.h.b16 %v231
      %v404 = vunpack.c.l.b16 %v232
      %v405 = vunpack.c.l.b16 %v233
      %v406 = vunpack.c.h.b16 %v233
      %v407 = vunpack.c.l.b16 %v234
      %v408 = vunpack.c.h.b16 %v234
      %v409 = vunpack.c.l.b16 %v235
      %v410 = vunpack.c.h.b16 %v235
      %v411 = vunpack.c.l.b16 %v236
      %v412 = vunpack.c.h.b16 %v236
      %v413 = vunpack.c.l.b16 %v237
      %v414 = vpack.c.b16 %v405, %v396
      %v415 = vpack.c.b16 %v406, %v397
      %v416 = vpack.c.b16 %v407, %v398
      %v417 = vpack.c.b16 %v408, %v399
      %v418 = vpack.c.b16 %v409, %v400
      %v419 = vpack.c.b16 %v410, %v401
      %v420 = vpack.c.b16 %v411, %v402
      %v421 = vpack.c.b16 %v412, %v403
      %v422 = vpack.c.b16 %v413, %v404
      %v576 = vunpack.c.l.b16 %v238
      %v577 = vunpack.c.l.b16 %v239
      %v578 = vunpack.c.l.b16 %v240
      %v579 = vunpack.c.l.b16 %v241
      %v580 = vunpack.c.l.b16 %v242
      %v581 = vunpack.c.l.b16 %v243
      %v582 = vunpack.c.l.b16 %v244
      %v583 = vunpack.c.l.b16 %v245
      %v584 = vunpack.c.l.b16 %v246
      %v585 = vunpack.c.l.b16 %v247
      %v586 = vunpack.c.l.b16 %v248
      %v587 = vunpack.c.l.b16 %v249
      %v588 = vunpack.c.l.b16 %v250
      %v589 = vunpack.c.l.b16 %v251
      %v590 = vunpack.c.l.b16 %v252
      %v591 = vunpack.c.l.b16 %v253
      %v592 = vunpack.c.l.b16 %v254
      %v593 = vunpack.c.l.b16 %v255
      %v594 = vunpack.c.l.b16 %v256
      %v595 = vunpack.c.l.b16 %v257
      %v596 = vunpack.c.l.b16 %v258
      %v597 = vunpack.c.l.b16 %v259
      %v598 = vunpack.c.l.b16 %v260
      %v599 = vunpack.c.l.b16 %v261
      %v600 = vunpack.c.l.b16 %v262
      %v601 = vunpack.c.l.b16 %v263
      %v602 = vunpack.c.l.b16 %v264
      %v603 = vunpack.c.l.b16 %v265
      %v604 = vunpack.c.l.b16 %v266
      %v605 = vunpack.c.l.b16 %v267
      %v606 = vunpack.c.l.b16 %v268
      %v607 = vunpack.c.l.b16 %v269
      %v608 = vunpack.c.l.b16 %v270
      %v609 = vunpack.c.l.b16 %v271
      %v610 = vunpack.c.l.b16 %v272
      %v611 = vunpack.c.l.b16 %v273
      %v612 = vunpack.c.l.b16 %v274
      %v613 = vunpack.c.l.b16 %v275
      %v614 = vunpack.c.l.b16 %v276
      %v615 = vunpack.c.l.b16 %v277
      %v616 = vunpack.c.l.b16 %v278
      %v617 = vunpack.c.l.b16 %v279
      %v618 = vunpack.c.l.b16 %v280
      %v619 = vunpack.c.l.b16 %v281
      %v620 = vunpack.c.l.b16 %v282
      %v621 = vunpack.c.l.b16 %v283
      %v622 = vunpack.c.l.b16 %v284
      %v623 = vunpack.c.l.b16 %v285
      %v624 = vunpack.c.l.b16 %v286
      %v625 = vunpack.c.l.b16 %v287
      %v626 = vunpack.c.l.b16 %v288
      %v627 = vunpack.c.l.b16 %v289
      %v628 = vunpack.c.l.b16 %v290
      %v629 = vunpack.c.l.b16 %v291
      %v630 = vunpack.c.l.b16 %v292
      %v631 = vunpack.c.l.b16 %v293
      %v632 = vunpack.c.l.b16 %v294
      %v633 = vunpack.c.l.b16 %v295
      %v634 = vunpack.c.l.b16 %v296
      %v635 = vunpack.c.l.b16 %v297
      %v636 = vunpack.c.l.b16 %v298
      %v637 = vunpack.c.l.b16 %v299
      %v638 = vunpack.c.l.b16 %v300
      %v639 = vunpack.c.l.b16 %v301
      %v640 = vunpack.c.l.b16 %v302
      %v641 = vunpack.c.l.b16 %v303
      %v642 = vunpack.c.l.b16 %v304
      %v643 = vunpack.c.l.b16 %v305
      %v644 = vunpack.c.l.b16 %v306
      %v645 = vunpack.c.l.b16 %v307
      %v646 = vunpack.c.l.b16 %v308
      %v647 = vunpack.c.l.b16 %v309
      %v648 = vunpack.c.l.b16 %v310
      %v649 = vunpack.c.l.b16 %v311
      %v650 = vunpack.c.l.b16 %v312
      %v651 = vunpack.c.l.b16 %v313
      %v652 = vunpack.c.l.b16 %v314
      %v653 = vunpack.c.l.b16 %v315
      %v654 = vunpack.c.l.b16 %v316
      %v655 = vunpack.c.l.b16 %v317
      %v656 = vunpack.c.l.b16 %v318
      %v657 = vunpack.c.l.b16 %v319
      %v658 = vunpack.c.l.b16 %v320
      %v659 = vunpack.c.l.b16 %v321
      %v660 = vunpack.c.l.b16 %v322
      %v661 = vunpack.c.l.b16 %v323
      %v662 = vunpack.c.l.b16 %v324
      %v663 = vunpack.c.l.b16 %v325
      %v664 = vunpack.c.l.b16 %v326
      %v665 = vunpack.c.l.b16 %v327
      %v666 = vunpack.c.l.b16 %v328
      %v667 = vunpack.c.l.b16 %v329
      %v668 = vunpack.c.l.b16 %v330
      %v669 = vunpack.c.l.b16 %v331
      %v670 = vunpack.c.l.b16 %v332
      %v671 = vunpack.c.l.b16 %v333
      %v672 = vunpack.c.l.b16 %v334
      %v673 = vunpack.c.l.b16 %v335
      %v674 = vunpack.c.l.b16 %v336
      %v675 = vunpack.c.l.b16 %v337
      %v676 = vunpack.c.l.b16 %v338
      %v677 = vunpack.c.l.b16 %v339
      %v678 = vunpack.c.l.b16 %v340
      %v679 = vunpack.c.l.b16 %v341
      %v680 = vunpack.c.l.b16 %v342
      %v681 = vunpack.c.l.b16 %v343
      %v682 = vunpack.c.l.b16 %v344
      %v683 = vunpack.c.l.b16 %v345
      %v684 = vunpack.c.l.b16 %v346
      %v685 = vunpack.c.l.b16 %v347
      %v686 = vunpack.c.l.b16 %v348
      %v687 = vunpack.c.l.b16 %v349
      %v688 = vunpack.c.l.b16 %v350
      %v689 = vunpack.c.l.b16 %v351
      %v690 = vunpack.c.l.b16 %v352
      %v691 = vunpack.c.l.b16 %v353
      %v692 = vunpack.c.l.b16 %v354
      %v693 = vunpack.c.l.b16 %v355
      %v694 = vunpack.c.l.b16 %v356
      %v695 = vunpack.c.l.b16 %v357
      %v696 = vunpack.c.l.b16 %v358
      %v697 = vunpack.c.l.b16 %v359
      %v698 = vunpack.c.l.b16 %v360
      %v699 = vunpack.c.l.b16 %v361
      %v700 = vunpack.c.l.b16 %v362
      %v701 = vunpack.c.l.b16 %v363
      %v702 = vunpack.c.l.b16 %v364
      %v703 = vunpack.c.l.b16 %v365
      %v704 = vunpack.c.l.b16 %v366
      %v705 = vunpack.c.l.b16 %v367
      %v706 = vunpack.c.l.b16 %v368
      %v707 = vunpack.c.l.b16 %v369
      %v708 = vunpack.c.l.b16 %v370
      %v709 = vunpack.c.l.b16 %v371
      %v710 = vunpack.c.l.b16 %v372
      %v711 = vunpack.c.l.b16 %v373
      %v712 = vunpack.c.l.b16 %v374
      %v713 = vunpack.c.l.b16 %v375
      %v714 = vunpack.c.l.b16 %v376
      %v715 = vunpack.c.l.b16 %v377
      %v716 = vunpack.c.l.b16 %v378
      %v717 = vunpack.c.l.b16 %v379
      %v718 = vunpack.c.l.b16 %v380
      %v719 = vunpack.c.l.b16 %v381
      %v720 = vpack.c.b16 %v577, %v576
      %v721 = vpack.c.b16 %v579, %v578
      %v722 = vpack.c.b16 %v581, %v580
      %v723 = vpack.c.b16 %v583, %v582
      %v724 = vpack.c.b16 %v585, %v584
      %v725 = vpack.c.b16 %v587, %v586
      %v726 = vpack.c.b16 %v589, %v588
      %v727 = vpack.c.b16 %v591, %v590
      %v728 = vpack.c.b16 %v593, %v592
      %v729 = vpack.c.b16 %v595, %v594
      %v730 = vpack.c.b16 %v597, %v596
      %v731 = vpack.c.b16 %v599, %v598
      %v732 = vpack.c.b16 %v601, %v600
      %v733 = vpack.c.b16 %v603, %v602
      %v734 = vpack.c.b16 %v605, %v604
      %v735 = vpack.c.b16 %v607, %v606
      %v736 = vpack.c.b16 %v609, %v608
      %v737 = vpack.c.b16 %v611, %v610
      %v738 = vpack.c.b16 %v613, %v612
      %v739 = vpack.c.b16 %v615, %v614
      %v740 = vpack.c.b16 %v617, %v616
      %v741 = vpack.c.b16 %v619, %v618
      %v742 = vpack.c.b16 %v621, %v620
      %v743 = vpack.c.b16 %v623, %v622
      %v744 = vpack.c.b16 %v625, %v624
      %v745 = vpack.c.b16 %v627, %v626
      %v746 = vpack.c.b16 %v629, %v628
      %v747 = vpack.c.b16 %v631, %v630
      %v748 = vpack.c.b16 %v633, %v632
      %v749 = vpack.c.b16 %v635, %v634
      %v750 = vpack.c.b16 %v637, %v636
      %v751 = vpack.c.b16 %v639, %v638
      %v752 = vpack.c.b16 %v641, %v640
      %v753 = vpack.c.b16 %v643, %v642
      %v754 = vpack.c.b16 %v645, %v644
      %v755 = vpack.c.b16 %v647, %v646
      %v756 = vpack.c.b16 %v649, %v648
      %v757 = vpack.c.b16 %v651, %v650
      %v758 = vpack.c.b16 %v653, %v652
      %v759 = vpack.c.b16 %v655, %v654
      %v760 = vpack.c.b16 %v657, %v656
      %v761 = vpack.c.b16 %v659, %v658
      %v762 = vpack.c.b16 %v661, %v660
      %v763 = vpack.c.b16 %v663, %v662
      %v764 = vpack.c.b16 %v665, %v664
      %v765 = vpack.c.b16 %v667, %v666
      %v766 = vpack.c.b16 %v669, %v668
      %v767 = vpack.c.b16 %v671, %v670
      %v768 = vpack.c.b16 %v673, %v672
      %v769 = vpack.c.b16 %v675, %v674
      %v770 = vpack.c.b16 %v677, %v676
      %v771 = vpack.c.b16 %v679, %v678
      %v772 = vpack.c.b16 %v681, %v680
      %v773 = vpack.c.b16 %v683, %v682
      %v774 = vpack.c.b16 %v685, %v684
      %v775 = vpack.c.b16 %v687, %v686
      %v776 = vpack.c.b16 %v689, %v688
      %v777 = vpack.c.b16 %v691, %v690
      %v778 = vpack.c.b16 %v693, %v692
      %v779 = vpack.c.b16 %v695, %v694
      %v780 = vpack.c.b16 %v697, %v696
      %v781 = vpack.c.b16 %v699, %v698
      %v782 = vpack.c.b16 %v701, %v700
      %v783 = vpack.c.b16 %v703, %v702
      %v784 = vpack.c.b16 %v705, %v704
      %v785 = vpack.c.b16 %v707, %v706
      %v786 = vpack.c.b16 %v709, %v708
      %v787 = vpack.c.b16 %v711, %v710
      %v788 = vpack.c.b16 %v713, %v712
      %v789 = vpack.c.b16 %v715, %v714
      %v790 = vpack.c.b16 %v717, %v716
      %v791 = vpack.c.b16 %v719, %v718
      %864 = vmatpush.bf16.msra.mxu0 %v727
      %865 = vmatpush.bf16.msra.mxu0 %v726
      %866 = vmatpush.bf16.msra.mxu0 %v725
      %867 = vmatpush.bf16.msra.mxu0 %v724
      %868 = vmatpush.bf16.msra.mxu0 %v723
      %869 = vmatpush.bf16.msra.mxu0 %v722
      %870 = vmatpush.bf16.msra.mxu0 %v721
      %871 = vmatpush.bf16.msra.mxu0 %v720
      %872 = vmatmul.bf16.gmra.mxu0 %v414
      %v873 = vpop.f32.mrf.mxu0
      %v874 = vadd.f32 %v384, %v873
      %v875 = vpop.f32.mrf.mxu0
      %v876 = vadd.f32 %v384, %v875
      %877 = vdwg.mxu0
      %878 = vmatpush.bf16.msra.mxu0 %v735
      %879 = vmatpush.bf16.msra.mxu0 %v734
      %880 = vmatpush.bf16.msra.mxu0 %v733
      %881 = vmatpush.bf16.msra.mxu0 %v732
      %882 = vmatpush.bf16.msra.mxu0 %v731
      %883 = vmatpush.bf16.msra.mxu0 %v730
      %884 = vmatpush.bf16.msra.mxu0 %v729
      %885 = vmatpush.bf16.msra.mxu0 %v728
      %886 = vmatmul.bf16.gmra.mxu0 %v415
      %v887 = vpop.f32.mrf.mxu0
      %v888 = vadd.f32 %v874, %v887
      %v889 = vpop.f32.mrf.mxu0
      %v890 = vadd.f32 %v876, %v889
      %891 = vdwg.mxu0
      %892 = vmatpush.bf16.msra.mxu0 %v743
      %893 = vmatpush.bf16.msra.mxu0 %v742
      %894 = vmatpush.bf16.msra.mxu0 %v741
      %895 = vmatpush.bf16.msra.mxu0 %v740
      %896 = vmatpush.bf16.msra.mxu0 %v739
      %897 = vmatpush.bf16.msra.mxu0 %v738
      %898 = vmatpush.bf16.msra.mxu0 %v737
      %899 = vmatpush.bf16.msra.mxu0 %v736
      %900 = vmatmul.bf16.gmra.mxu0 %v416
      %v901 = vpop.f32.mrf.mxu0
      %v902 = vadd.f32 %v888, %v901
      %v903 = vpop.f32.mrf.mxu0
      %v904 = vadd.f32 %v890, %v903
      %905 = vdwg.mxu0
      %906 = vmatpush.bf16.msra.mxu0 %v751
      %907 = vmatpush.bf16.msra.mxu0 %v750
      %908 = vmatpush.bf16.msra.mxu0 %v749
      %909 = vmatpush.bf16.msra.mxu0 %v748
      %910 = vmatpush.bf16.msra.mxu0 %v747
      %911 = vmatpush.bf16.msra.mxu0 %v746
      %912 = vmatpush.bf16.msra.mxu0 %v745
      %913 = vmatpush.bf16.msra.mxu0 %v744
      %914 = vmatmul.bf16.gmra.mxu0 %v417
      %v915 = vpop.f32.mrf.mxu0
      %v916 = vadd.f32 %v902, %v915
      %v917 = vpop.f32.mrf.mxu0
      %v918 = vadd.f32 %v904, %v917
      %919 = vdwg.mxu0
      %920 = vmatpush.bf16.msra.mxu0 %v759
      %921 = vmatpush.bf16.msra.mxu0 %v758
      %922 = vmatpush.bf16.msra.mxu0 %v757
      %923 = vmatpush.bf16.msra.mxu0 %v756
      %924 = vmatpush.bf16.msra.mxu0 %v755
      %925 = vmatpush.bf16.msra.mxu0 %v754
      %926 = vmatpush.bf16.msra.mxu0 %v753
      %927 = vmatpush.bf16.msra.mxu0 %v752
      %928 = vmatmul.bf16.gmra.mxu0 %v418
      %v929 = vpop.f32.mrf.mxu0
      %v930 = vadd.f32 %v916, %v929
      %v931 = vpop.f32.mrf.mxu0
      %v932 = vadd.f32 %v918, %v931
      %933 = vdwg.mxu0
      %934 = vmatpush.bf16.msra.mxu0 %v767
      %935 = vmatpush.bf16.msra.mxu0 %v766
      %936 = vmatpush.bf16.msra.mxu0 %v765
      %937 = vmatpush.bf16.msra.mxu0 %v764
      %938 = vmatpush.bf16.msra.mxu0 %v763
      %939 = vmatpush.bf16.msra.mxu0 %v762
      %940 = vmatpush.bf16.msra.mxu0 %v761
      %941 = vmatpush.bf16.msra.mxu0 %v760
      %942 = vmatmul.bf16.gmra.mxu0 %v419
      %v943 = vpop.f32.mrf.mxu0
      %v944 = vadd.f32 %v930, %v943
      %v945 = vpop.f32.mrf.mxu0
      %v946 = vadd.f32 %v932, %v945
      %947 = vdwg.mxu0
      %948 = vmatpush.bf16.msra.mxu0 %v775
      %949 = vmatpush.bf16.msra.mxu0 %v774
      %950 = vmatpush.bf16.msra.mxu0 %v773
      %951 = vmatpush.bf16.msra.mxu0 %v772
      %952 = vmatpush.bf16.msra.mxu0 %v771
      %953 = vmatpush.bf16.msra.mxu0 %v770
      %954 = vmatpush.bf16.msra.mxu0 %v769
      %955 = vmatpush.bf16.msra.mxu0 %v768
      %956 = vmatmul.bf16.gmra.mxu0 %v420
      %v957 = vpop.f32.mrf.mxu0
      %v958 = vadd.f32 %v944, %v957
      %v959 = vpop.f32.mrf.mxu0
      %v960 = vadd.f32 %v946, %v959
      %961 = vdwg.mxu0
      %962 = vmatpush.bf16.msra.mxu0 %v783
      %963 = vmatpush.bf16.msra.mxu0 %v782
      %964 = vmatpush.bf16.msra.mxu0 %v781
      %965 = vmatpush.bf16.msra.mxu0 %v780
      %966 = vmatpush.bf16.msra.mxu0 %v779
      %967 = vmatpush.bf16.msra.mxu0 %v778
      %968 = vmatpush.bf16.msra.mxu0 %v777
      %969 = vmatpush.bf16.msra.mxu0 %v776
      %970 = vmatmul.bf16.gmra.mxu0 %v421
      %v971 = vpop.f32.mrf.mxu0
      %v972 = vadd.f32 %v958, %v971
      %v973 = vpop.f32.mrf.mxu0
      %v974 = vadd.f32 %v960, %v973
      %975 = vdwg.mxu0
      %976 = vmatpush.bf16.msra.mxu0 %v791
      %977 = vmatpush.bf16.msra.mxu0 %v790
      %978 = vmatpush.bf16.msra.mxu0 %v789
      %979 = vmatpush.bf16.msra.mxu0 %v788
      %980 = vmatpush.bf16.msra.mxu0 %v787
      %981 = vmatpush.bf16.msra.mxu0 %v786
      %982 = vmatpush.bf16.msra.mxu0 %v785
      %983 = vmatpush.bf16.msra.mxu0 %v784
      %984 = vmatmul.bf16.gmra.mxu0 %v422
      %v985 = vpop.f32.mrf.mxu0
      %v986 = vadd.f32 %v972, %v985
      %v987 = vpop.f32.mrf.mxu0
      %v988 = vadd.f32 %v974, %v987
      %989 = vdwg.mxu0
      %v990 = vmax.f32 %v986, 0.0
      %v991 = vmax.f32 %v988, 0.0
      %v992 = vpack.c.bf16 %v990, %v990
      %v993 = vpack.c.bf16 %v991, %v991
      %994 = vst [vmem:[%s226] sm:$0xf] %v992
      %995 = vst [vmem:[%s226 + $0x4] sm:$0xf] %v993
      %s996 = smul.u32 2, %s18
      %p997 = scmp.lt.s32.totalorder %s996, 3
      %s998 = scalar_select %p997, %s996, 3
      %p999 = scmp.lt.s32.totalorder %s19, 0
      %s1000 = scalar_select %p999, %s19, 0
      %s1001 = sadd.s32 %s1000, %s998
      %s1002 = smul.addr %s1001, 4
      %s1003 = scalar_lea.vmem %s3, %s1002
      // Predicated region
      $region33: #{encoder_forward.17} parent=31 // pred_check
        %p1004 = pneg %p124
      $region34: #{encoder_forward.17} parent=31 // pred_check_branch
        %1006 = sbr.rel (%p1004) target = $region36
      $region35: #{encoder_forward.17} parent=31 // pred_region
        %s1007 = smul.u32 2, %s18
      $region36: #{encoder_forward.17} parent=31 // pred_fallthru
        _
    $region32: #{encoder_forward.17} parent=5 // pred_fallthru
      _
    %p1008 = scmp.le.s32.totalorder 2, %s9
    // Predicated region
    $region37: #{encoder_forward.17} parent=5 // pred_check
      %p1009 = pneg %p1008
    $region38: #{encoder_forward.17} parent=5 // pred_check_branch
      %1011 = sbr.rel (%p1009) target = $region40
    $region39: #{encoder_forward.17} parent=5 // pred_region
      %s1012 = ssub.s32 %s9, 2
      // Predicated region
      $region41: #{encoder_forward.17} parent=39 // pred_check
        %p1013 = pneg %p130
      $region42: #{encoder_forward.17} parent=39 // pred_check_branch
        %1015 = sbr.rel (%p1013) target = $region44
      $region43: #{encoder_forward.17} parent=39 // pred_region
        %s1016 = smul.u32 2, %s20
        %p1017 = scmp.lt.s32.totalorder %s1016, 3
        %s1018 = scalar_select %p1017, %s1016, 3
        %p1019 = scmp.lt.s32.totalorder %s21, 0
        %s1020 = scalar_select %p1019, %s21, 0
        %s1021 = sadd.s32 %s1020, %s1018
        %s1022 = smul.addr %s1021, 4
        %s1023 = scalar_lea.vmem %s3, %s1022
      $region44: #{encoder_forward.17} parent=39 // pred_fallthru
        _
    $region40: #{encoder_forward.17} parent=5 // pred_fallthru
      _
  $region6: #{encoder_forward.17} parent=0 // loop_footer
    %s13 = sadd.s32 1, %s9
  $region7: #{encoder_forward.17} parent=0 // loop_footer_branch
    %8 = sbr.rel target = $region3
  $region8: #{encoder_forward.17} parent=0 // loop_exit
    _

// kernel: encoder_forward.19
$region0: #{encoder_forward.19}
  #allocation0 [shape = 'u32[]', space=smem, size = 0x4, offset = 0x4, fixed_abs, tag = 'smem constant byte address 0x4 - core index']
  #allocation1 [shape = 'u32[72,128]{1,0:T(1,128)}', space=vmem, size = 0x9000, scoped, tag = 'internal scratch']
  %s0 = inlined_call_operand.vmem [shape: bf16[32,128], index: 0, kind: input, shape index: {}]
  %s1 = inlined_call_operand.vmem [shape: bf16[128,2048], index: 1, kind: input, shape index: {}]
  %s2 = inlined_call_operand.vmem [shape: f32[1,2048], index: 2, kind: input, shape index: {}]
  %s3 = inlined_call_operand.vmem [shape: bf16[32,2048], index: 3, kind: input, shape index: {}]
  %s4 = inlined_call_operand.hbm [shape: f32[32,2048], index: 4, kind: output, shape index: {}]
  %s5 = sld [smem:[#allocation0]]
  $region95: #{encoder_forward.19} parent=0
    _
  %s7 = ssub.s32 1, %s5
  %s8 = scalar_select 0, %s7, %s5
  $region1: #{encoder_forward.19} parent=0
    #allocation2 [shape = 'u8[524288]{0}', space=vmem, size = 0x80000, scoped, tag = 'input window, operand 1']
    #allocation3 [shape = 'u8[65536]{0}', space=vmem, size = 0x10000, scoped, tag = 'input window, operand 3']
    #allocation4 [shape = 'u8[131072]{0}', space=vmem, size = 0x20000, scoped, tag = 'output window, operand 0']
    #allocation5 [shape = 's32[2]{0}', space=sflag, size = 0x8, scoped, tag = 'scoped memory for encoder_forward.19']
    %9 = vsyncpa [#allocation5], 0
    %s10 = scalar_lea.sflag [#allocation5], 1
    %11 = vsyncpa %s10, 0
    loop: start=0, step=1, limit=6
    $region2: #{encoder_forward.19} parent=1 // loop_pre_header
      _
    $region3: #{encoder_forward.19} parent=1 // loop_header
      %s13 = sphi 0, %s17
      %p14 = scmp.ge.s32.totalorder %s13, 6
      %s20 = sphi 0, %s32
      %s21 = sphi 0, %s28
      %s22 = sphi 0, %s20
      %s23 = sphi 0, %s21
      %s24 = sphi 0, %s22
      %s25 = sphi 0, %s23
      %s35 = sphi 0, %s37
      %s38 = sphi 0, %s35
      %s39 = sphi 0, %s38
      %s55 = sphi 0, %s39
      %s61 = sphi 0, %s63
      %s64 = sphi 0, %s61
      %s65 = sphi 0, %s64
      %s81 = sphi 0, %s65
      %s87 = sphi 0, %s89
      %s90 = sphi 0, %s87
      %s91 = sphi 0, %s90
      %s107 = sphi 0, %s91
      %s115 = sphi 0, %s117
      %s118 = sphi 0, %s115
      %s119 = sphi 0, %s118
      %s135 = sphi 0, %s119
      %s143 = sphi 0, %s145
      %s146 = sphi 0, %s143
      %s147 = sphi 0, %s146
      %s163 = sphi 0, %s147
    $region4: #{encoder_forward.19} parent=1 // loop_header_branch
      %16 = sbr.rel (%p14) target = $region8
    $region5: #{encoder_forward.19} parent=1 // loop_body
      %s18 = ssub.s32 %s13, 1
      %s19 = ssub.s32 %s13, 2
      %s26 = sadd.s32 1, %s21
      %p27 = scmp.ge.s32.totalorder %s26, 2
      %s28 = scalar_select %p27, 0, %s26
      %s29 = sadd.s32 1, %s20
      %s30 = scalar_select %p27, %s29, %s20
      %p31 = scmp.ge.s32.totalorder %s30, 2
      %s32 = scalar_select %p31, 0, %s30
      %s33 = ssub.s32 %s20, %s32
      %p34 = scmp.eq.s32.totalorder %s33, 0
      %s36 = sadd.s32 %s35, 1
      %s37 = scalar_select %p34, %s35, %s36
      %p40 = pneg %p34
      %p41 = scmp.eq.s32.totalorder %s13, 3
      %p42 = por %p40, %p41
      %p43 = scmp.ne.s32.totalorder %s35, %s38
      %p44 = scmp.eq.s32.totalorder %s13, 0
      %p45 = por %p43, %p44
      %p46 = scmp.ne.s32.totalorder %s35, %s38
      %p47 = scmp.eq.s32.totalorder %s18, 3
      %p48 = por %p46, %p47
      %p49 = scmp.ne.s32.totalorder %s38, %s39
      %p50 = scmp.eq.s32.totalorder %s18, 0
      %p51 = por %p49, %p50
      %p52 = scmp.ne.s32.totalorder %s38, %s39
      %p53 = scmp.eq.s32.totalorder %s19, 3
      %p54 = por %p52, %p53
      %p56 = scmp.ne.s32.totalorder %s39, %s55
      %p57 = scmp.eq.s32.totalorder %s19, 0
      %p58 = por %p56, %p57
      %s59 = ssub.s32 %s21, %s28
      %p60 = scmp.eq.s32.totalorder %s59, 0
      %s62 = sadd.s32 %s61, 1
      %s63 = scalar_select %p60, %s61, %s62
      %p66 = pneg %p60
      %p67 = scmp.eq.s32.totalorder %s13, 3
      %p68 = por %p66, %p67
      %p69 = scmp.ne.s32.totalorder %s61, %s64
      %p70 = scmp.eq.s32.totalorder %s13, 0
      %p71 = por %p69, %p70
      %p72 = scmp.ne.s32.totalorder %s61, %s64
      %p73 = scmp.eq.s32.totalorder %s18, 3
      %p74 = por %p72, %p73
      %p75 = scmp.ne.s32.totalorder %s64, %s65
      %p76 = scmp.eq.s32.totalorder %s18, 0
      %p77 = por %p75, %p76
      %p78 = scmp.ne.s32.totalorder %s64, %s65
      %p79 = scmp.eq.s32.totalorder %s19, 3
      %p80 = por %p78, %p79
      %p82 = scmp.ne.s32.totalorder %s65, %s81
      %p83 = scmp.eq.s32.totalorder %s19, 0
      %p84 = por %p82, %p83
      %s85 = ssub.s32 %s21, %s28
      %p86 = scmp.eq.s32.totalorder %s85, 0
      %s88 = sadd.s32 %s87, 1
      %s89 = scalar_select %p86, %s87, %s88
      %p92 = pneg %p86
      %p93 = scmp.eq.s32.totalorder %s13, 3
      %p94 = por %p92, %p93
      %p95 = scmp.ne.s32.totalorder %s87, %s90
      %p96 = scmp.eq.s32.totalorder %s13, 0
      %p97 = por %p95, %p96
      %p98 = scmp.ne.s32.totalorder %s87, %s90
      %p99 = scmp.eq.s32.totalorder %s18, 3
      %p100 = por %p98, %p99
      %p101 = scmp.ne.s32.totalorder %s90, %s91
      %p102 = scmp.eq.s32.totalorder %s18, 0
      %p103 = por %p101, %p102
      %p104 = scmp.ne.s32.totalorder %s90, %s91
      %p105 = scmp.eq.s32.totalorder %s19, 3
      %p106 = por %p104, %p105
      %p108 = scmp.ne.s32.totalorder %s91, %s107
      %p109 = scmp.eq.s32.totalorder %s19, 0
      %p110 = por %p108, %p109
      %s111 = ssub.s32 %s20, %s32
      %s112 = ssub.s32 %s21, %s28
      %s113 = sor.u32 %s111, %s112
      %p114 = scmp.eq.s32.totalorder %s113, 0
      %s116 = sadd.s32 %s115, 1
      %s117 = scalar_select %p114, %s115, %s116
      %p120 = pneg %p114
      %p121 = scmp.eq.s32.totalorder %s13, 3
      %p122 = por %p120, %p121
      %p123 = scmp.ne.s32.totalorder %s115, %s118
      %p124 = scmp.eq.s32.totalorder %s13, 0
      %p125 = por %p123, %p124
      %p126 = scmp.ne.s32.totalorder %s115, %s118
      %p127 = scmp.eq.s32.totalorder %s18, 3
      %p128 = por %p126, %p127
      %p129 = scmp.ne.s32.totalorder %s118, %s119
      %p130 = scmp.eq.s32.totalorder %s18, 0
      %p131 = por %p129, %p130
      %p132 = scmp.ne.s32.totalorder %s118, %s119
      %p133 = scmp.eq.s32.totalorder %s19, 3
      %p134 = por %p132, %p133
      %p136 = scmp.ne.s32.totalorder %s119, %s135
      %p137 = scmp.eq.s32.totalorder %s19, 0
      %p138 = por %p136, %p137
      %s139 = ssub.s32 %s20, %s32
      %s140 = ssub.s32 %s21, %s28
      %s141 = sor.u32 %s139, %s140
      %p142 = scmp.eq.s32.totalorder %s141, 0
      %s144 = sadd.s32 %s143, 1
      %s145 = scalar_select %p142, %s143, %s144
      %p148 = pneg %p142
      %p149 = scmp.eq.s32.totalorder %s13, 3
      %p150 = por %p148, %p149
      %p151 = scmp.ne.s32.totalorder %s143, %s146
      %p152 = scmp.eq.s32.totalorder %s13, 0
      %p153 = por %p151, %p152
      %p154 = scmp.ne.s32.totalorder %s143, %s146
      %p155 = scmp.eq.s32.totalorder %s18, 3
      %p156 = por %p154, %p155
      %p157 = scmp.ne.s32.totalorder %s146, %s147
      %p158 = scmp.eq.s32.totalorder %s18, 0
      %p159 = por %p157, %p158
      %p160 = scmp.ne.s32.totalorder %s146, %s147
      %p161 = scmp.eq.s32.totalorder %s19, 3
      %p162 = por %p160, %p161
      %p164 = scmp.ne.s32.totalorder %s147, %s163
      %p165 = scmp.eq.s32.totalorder %s19, 0
      %p166 = por %p164, %p165
      %p167 = scmp.le.s32.totalorder 1, %s13
      %p168 = scmp.lt.s32.totalorder %s13, 5
      %p169 = pnand %p167, %p168
      %p170 = pneg %p169
      // Predicated region
      $region9: #{encoder_forward.19} parent=5 // pred_check
        _
      $region10: #{encoder_forward.19} parent=5 // pred_check_branch
        %172 = sbr.rel (%p169) target = $region12
      $region11: #{encoder_forward.19} parent=5 // pred_region
        %s173 = ssub.s32 %s13, 1
      $region12: #{encoder_forward.19} parent=5 // pred_fallthru
        _
      %p174 = scmp.lt.s32.totalorder %s13, 4
      // Predicated region
      $region13: #{encoder_forward.19} parent=5 // pred_check
        %p175 = pneg %p174
      $region14: #{encoder_forward.19} parent=5 // pred_check_branch
        %177 = sbr.rel (%p175) target = $region16
      $region15: #{encoder_forward.19} parent=5 // pred_region
        // Predicated region
        $region17: #{encoder_forward.19} parent=15 // pred_check
          %p178 = pneg %p45
        $region18: #{encoder_forward.19} parent=15 // pred_check_branch
          %180 = sbr.rel (%p178) target = $region20
        $region19: #{encoder_forward.19} parent=15 // pred_region
          %s181 = smul.u32 2, %s20
          %p182 = scmp.lt.s32.totalorder %s181, 3
          %s183 = scalar_select %p182, %s181, 3
          %s184 = smul.addr %s183, 4
          %s185 = scalar_lea.vmem %s0, %s184
          %s186 = smul.u32 2, %s20
        $region20: #{encoder_forward.19} parent=15 // pred_fallthru
          _
        // Predicated region
        $region21: #{encoder_forward.19} parent=15 // pred_check
          %p187 = pneg %p71
        $region22: #{encoder_forward.19} parent=15 // pred_check_branch
          %189 = sbr.rel (%p187) target = $region24
        $region23: #{encoder_forward.19} parent=15 // pred_region
          %s190 = sand.u32 %s61, 1
          %s191 = sand.u32 %s61, 1
          %s192 = smul.addr %s191, 512
          %s193 = scalar_lea.vmem [#allocation2], %s192
          %s194 = smul.u32 8, %s21
          %s195 = smul.addr %s194, 4
          %s196 = scalar_lea.vmem %s1, %s195
          // Predicated region
          $region25: #{encoder_forward.19} parent=23 // pred_check
            _
          $region26: #{encoder_forward.19} parent=23 // pred_check_branch
            %198 = sbr.rel (0) target = $region28
          $region27: #{encoder_forward.19} parent=23 // pred_region
            // Predicated region
            $region29: #{encoder_forward.19} parent=27 // pred_check
              _
            $region30: #{encoder_forward.19} parent=27 // pred_check_branch
              %200 = sbr.rel (0) target = $region32
            $region31: #{encoder_forward.19} parent=27 // pred_region
              loop: start=0, step=1, limit=1
              $region33: #{encoder_forward.19} parent=31 // loop_pre_header
                _
              $region34: #{encoder_forward.19} parent=31 // loop_header
                %s202 = sphi 0, %s206
                %p203 = scmp.ge.s32.totalorder %s202, 1
                %s207 = sphi %s196, %s196
                %s208 = sphi %s193, %s193
              $region35: #{encoder_forward.19} parent=31 // loop_header_branch
                %205 = sbr.rel (%p203) target = $region39
              $region36: #{encoder_forward.19} parent=31 // loop_body
                %v209 = vld [vmem:[%s207] sm:$0xff]
                %210 = vst [vmem:[%s208] sm:$0xff] %v209
                %v211 = vld [vmem:[%s207 + $0x8] sm:$0xff]
                %212 = vst [vmem:[%s208 + $0x8] sm:$0xff] %v211
                %v213 = vld [vmem:[%s207 + $0x10] sm:$0xff]
                %214 = vst [vmem:[%s208 + $0x10] sm:$0xff] %v213
                %v215 = vld [vmem:[%s207 + $0x18] sm:$0xff]
                %216 = vst [vmem:[%s208 + $0x18] sm:$0xff] %v215
                %v217 = vld [vmem:[%s207 + $0x40] sm:$0xff]
                %218 = vst [vmem:[%s208 + $0x20] sm:$0xff] %v217
                %v219 = vld [vmem:[%s207 + $0x48] sm:$0xff]
                %220 = vst [vmem:[%s208 + $0x28] sm:$0xff] %v219
                %v221 = vld [vmem:[%s207 + $0x50] sm:$0xff]
                %222 = vst [vmem:[%s208 + $0x30] sm:$0xff] %v221
                %v223 = vld [vmem:[%s207 + $0x58] sm:$0xff]
                %224 = vst [vmem:[%s208 + $0x38] sm:$0xff] %v223
                %v225 = vld [vmem:[%s207 + $0x80] sm:$0xff]
                %226 = vst [vmem:[%s208 + $0x40] sm:$0xff] %v225
                %v227 = vld [vmem:[%s207 + $0x88] sm:$0xff]
                %228 = vst [vmem:[%s208 + $0x48] sm:$0xff] %v227
                %v229 = vld [vmem:[%s207 + $0x90] sm:$0xff]
                %230 = vst [vmem:[%s208 + $0x50] sm:$0xff] %v229
                %v231 = vld [vmem:[%s207 + $0x98] sm:$0xff]
                %232 = vst [vmem:[%s208 + $0x58] sm:$0xff] %v231
                %v233 = vld [vmem:[%s207 + $0xc0] sm:$0xff]
                %234 = vst [vmem:[%s208 + $0x60] sm:$0xff] %v233
                %v235 = vld [vmem:[%s207 + $0xc8] sm:$0xff]
                %236 = vst [vmem:[%s208 + $0x68] sm:$0xff] %v235
                %v237 = vld [vmem:[%s207 + $0xd0] sm:$0xff]
                %238 = vst [vmem:[%s208 + $0x70] sm:$0xff] %v237
                %v239 = vld [vmem:[%s207 + $0xd8] sm:$0xff]
                %240 = vst [vmem:[%s208 + $0x78] sm:$0xff] %v239
                %v241 = vld [vmem:[%s207 + $0x100] sm:$0xff]
                %242 = vst [vmem:[%s208 + $0x80] sm:$0xff] %v241
                %v243 = vld [vmem:[%s207 + $0x108] sm:$0xff]
                %244 = vst [vmem:[%s208 + $0x88] sm:$0xff] %v243
                %v245 = vld [vmem:[%s207 + $0x110] sm:$0xff]
                %246 = vst [vmem:[%s208 + $0x90] sm:$0xff] %v245
                %v247 = vld [vmem:[%s207 + $0x118] sm:$0xff]
                %248 = vst [vmem:[%s208 + $0x98] sm:$0xff] %v247
                %v249 = vld [vmem:[%s207 + $0x140] sm:$0xff]
                %250 = vst [vmem:[%s208 + $0xa0] sm:$0xff] %v249
                %v251 = vld [vmem:[%s207 + $0x148] sm:$0xff]
                %252 = vst [vmem:[%s208 + $0xa8] sm:$0xff] %v251
                %v253 = vld [vmem:[%s207 + $0x150] sm:$0xff]
                %254 = vst [vmem:[%s208 + $0xb0] sm:$0xff] %v253
                %v255 = vld [vmem:[%s207 + $0x158] sm:$0xff]
                %256 = vst [vmem:[%s208 + $0xb8] sm:$0xff] %v255
                %v257 = vld [vmem:[%s207 + $0x180] sm:$0xff]
                %258 = vst [vmem:[%s208 + $0xc0] sm:$0xff] %v257
                %v259 = vld [vmem:[%s207 + $0x188] sm:$0xff]
                %260 = vst [vmem:[%s208 + $0xc8] sm:$0xff] %v259
                %v261 = vld [vmem:[%s207 + $0x190] sm:$0xff]
                %262 = vst [vmem:[%s208 + $0xd0] sm:$0xff] %v261
                %v263 = vld [vmem:[%s207 + $0x198] sm:$0xff]
                %264 = vst [vmem:[%s208 + $0xd8] sm:$0xff] %v263
                %v265 = vld [vmem:[%s207 + $0x1c0] sm:$0xff]
                %266 = vst [vmem:[%s208 + $0xe0] sm:$0xff] %v265
                %v267 = vld [vmem:[%s207 + $0x1c8] sm:$0xff]
                %268 = vst [vmem:[%s208 + $0xe8] sm:$0xff] %v267
                %v269 = vld [vmem:[%s207 + $0x1d0] sm:$0xff]
                %270 = vst [vmem:[%s208 + $0xf0] sm:$0xff] %v269
                %v271 = vld [vmem:[%s207 + $0x1d8] sm:$0xff]
                %272 = vst [vmem:[%s208 + $0xf8] sm:$0xff] %v271
                %v273 = vld [vmem:[%s207 + $0x200] sm:$0xff]
                %274 = vst [vmem:[%s208 + $0x100] sm:$0xff] %v273
                %v275 = vld [vmem:[%s207 + $0x208] sm:$0xff]
                %276 = vst [vmem:[%s208 + $0x108] sm:$0xff] %v275
                %v277 = vld [vmem:[%s207 + $0x210] sm:$0xff]
                %278 = vst [vmem:[%s208 + $0x110] sm:$0xff] %v277
                %v279 = vld [vmem:[%s207 + $0x218] sm:$0xff]
                %280 = vst [vmem:[%s208 + $0x118] sm:$0xff] %v279
                %v281 = vld [vmem:[%s207 + $0x240] sm:$0xff]
                %282 = vst [vmem:[%s208 + $0x120] sm:$0xff] %v281
                %v283 = vld [vmem:[%s207 + $0x248] sm:$0xff]
                %284 = vst [vmem:[%s208 + $0x128] sm:$0xff] %v283
                %v285 = vld [vmem:[%s207 + $0x250] sm:$0xff]
                %286 = vst [vmem:[%s208 + $0x130] sm:$0xff] %v285
                %v287 = vld [vmem:[%s207 + $0x258] sm:$0xff]
                %288 = vst [vmem:[%s208 + $0x138] sm:$0xff] %v287
                %v289 = vld [vmem:[%s207 + $0x280] sm:$0xff]
                %290 = vst [vmem:[%s208 + $0x140] sm:$0xff] %v289
                %v291 = vld [vmem:[%s207 + $0x288] sm:$0xff]
                %292 = vst [vmem:[%s208 + $0x148] sm:$0xff] %v291
                %v293 = vld [vmem:[%s207 + $0x290] sm:$0xff]
                %294 = vst [vmem:[%s208 + $0x150] sm:$0xff] %v293
                %v295 = vld [vmem:[%s207 + $0x298] sm:$0xff]
                %296 = vst [vmem:[%s208 + $0x158] sm:$0xff] %v295
                %v297 = vld [vmem:[%s207 + $0x2c0] sm:$0xff]
                %298 = vst [vmem:[%s208 + $0x160] sm:$0xff] %v297
                %v299 = vld [vmem:[%s207 + $0x2c8] sm:$0xff]
                %300 = vst [vmem:[%s208 + $0x168] sm:$0xff] %v299
                %v301 = vld [vmem:[%s207 + $0x2d0] sm:$0xff]
                %302 = vst [vmem:[%s208 + $0x170] sm:$0xff] %v301
                %v303 = vld [vmem:[%s207 + $0x2d8] sm:$0xff]
                %304 = vst [vmem:[%s208 + $0x178] sm:$0xff] %v303
                %v305 = vld [vmem:[%s207 + $0x300] sm:$0xff]
                %306 = vst [vmem:[%s208 + $0x180] sm:$0xff] %v305
                %v307 = vld [vmem:[%s207 + $0x308] sm:$0xff]
                %308 = vst [vmem:[%s208 + $0x188] sm:$0xff] %v307
                %v309 = vld [vmem:[%s207 + $0x310] sm:$0xff]
                %310 = vst [vmem:[%s208 + $0x190] sm:$0xff] %v309
                %v311 = vld [vmem:[%s207 + $0x318] sm:$0xff]
                %312 = vst [vmem:[%s208 + $0x198] sm:$0xff] %v311
                %v313 = vld [vmem:[%s207 + $0x340] sm:$0xff]
                %314 = vst [vmem:[%s208 + $0x1a0] sm:$0xff] %v313
                %v315 = vld [vmem:[%s207 + $0x348] sm:$0xff]
                %316 = vst [vmem:[%s208 + $0x1a8] sm:$0xff] %v315
                %v317 = vld [vmem:[%s207 + $0x350] sm:$0xff]
                %318 = vst [vmem:[%s208 + $0x1b0] sm:$0xff] %v317
                %v319 = vld [vmem:[%s207 + $0x358] sm:$0xff]
                %320 = vst [vmem:[%s208 + $0x1b8] sm:$0xff] %v319
                %v321 = vld [vmem:[%s207 + $0x380] sm:$0xff]
                %322 = vst [vmem:[%s208 + $0x1c0] sm:$0xff] %v321
                %v323 = vld [vmem:[%s207 + $0x388] sm:$0xff]
                %324 = vst [vmem:[%s208 + $0x1c8] sm:$0xff] %v323
                %v325 = vld [vmem:[%s207 + $0x390] sm:$0xff]
                %326 = vst [vmem:[%s208 + $0x1d0] sm:$0xff] %v325
                %v327 = vld [vmem:[%s207 + $0x398] sm:$0xff]
                %328 = vst [vmem:[%s208 + $0x1d8] sm:$0xff] %v327
                %v329 = vld [vmem:[%s207 + $0x3c0] sm:$0xff]
                %330 = vst [vmem:[%s208 + $0x1e0] sm:$0xff] %v329
                %v331 = vld [vmem:[%s207 + $0x3c8] sm:$0xff]
                %332 = vst [vmem:[%s208 + $0x1e8] sm:$0xff] %v331
                %v333 = vld [vmem:[%s207 + $0x3d0] sm:$0xff]
                %334 = vst [vmem:[%s208 + $0x1f0] sm:$0xff] %v333
                %v335 = vld [vmem:[%s207 + $0x3d8] sm:$0xff]
                %336 = vst [vmem:[%s208 + $0x1f8] sm:$0xff] %v335
              $region37: #{encoder_forward.19} parent=31 // loop_footer
                %s206 = sadd.s32 1, %s202
              $region38: #{encoder_forward.19} parent=31 // loop_footer_branch
                %201 = sbr.rel target = $region34
              $region39: #{encoder_forward.19} parent=31 // loop_exit
                _
            $region32: #{encoder_forward.19} parent=27 // pred_fallthru
              _
            // Predicated region
            $region40: #{encoder_forward.19} parent=27 // pred_check
              _
            $region41: #{encoder_forward.19} parent=27 // pred_check_branch
              %338 = sbr.rel target = $region43
            $region42: #{encoder_forward.19} parent=27 // pred_region
              _
            $region43: #{encoder_forward.19} parent=27 // pred_fallthru
              _
          $region28: #{encoder_forward.19} parent=23 // pred_fallthru
            _
          %339 = vnop
        $region24: #{encoder_forward.19} parent=15 // pred_fallthru
          _
        // Predicated region
        $region44: #{encoder_forward.19} parent=15 // pred_check
          %p340 = pneg %p97
        $region45: #{encoder_forward.19} parent=15 // pred_check_branch
          %342 = sbr.rel (%p340) target = $region47
        $region46: #{encoder_forward.19} parent=15 // pred_region
          %s343 = smul.u32 8, %s21
          %p344 = scmp.lt.s32.totalorder %s343, 15
          %s345 = scalar_select %p344, %s343, 15
          %s346 = scalar_lea.vmem %s2, %s345
          %s347 = smul.u32 8, %s21
        $region47: #{encoder_forward.19} parent=15 // pred_fallthru
          _
        // Predicated region
        $region48: #{encoder_forward.19} parent=15 // pred_check
          %p348 = pneg %p125
        $region49: #{encoder_forward.19} parent=15 // pred_check_branch
          %350 = sbr.rel (%p348) target = $region51
        $region50: #{encoder_forward.19} parent=15 // pred_region
          %s351 = sand.u32 %s115, 1
          %s352 = sand.u32 %s115, 1
          %s353 = smul.addr %s352, 64
          %s354 = scalar_lea.vmem [#allocation3], %s353
          %s355 = smul.u32 2, %s20
          %s356 = smul.u32 8, %s21
          %s357 = smul.addr %s355, 16
          %s358 = sadd.s32 %s356, %s357
          %s359 = smul.addr %s358, 4
          %s360 = scalar_lea.vmem %s3, %s359
          // Predicated region
          $region52: #{encoder_forward.19} parent=50 // pred_check
            _
          $region53: #{encoder_forward.19} parent=50 // pred_check_branch
            %362 = sbr.rel (0) target = $region55
          $region54: #{encoder_forward.19} parent=50 // pred_region
            // Predicated region
            $region56: #{encoder_forward.19} parent=54 // pred_check
              _
            $region57: #{encoder_forward.19} parent=54 // pred_check_branch
              %364 = sbr.rel (0) target = $region59
            $region58: #{encoder_forward.19} parent=54 // pred_region
              loop: start=0, step=1, limit=1
              $region60: #{encoder_forward.19} parent=58 // loop_pre_header
                _
              $region61: #{encoder_forward.19} parent=58 // loop_header
                %s366 = sphi 0, %s370
                %p367 = scmp.ge.s32.totalorder %s366, 1
                %s371 = sphi %s360, %s360
                %s372 = sphi %s354, %s354
              $region62: #{encoder_forward.19} parent=58 // loop_header_branch
                %369 = sbr.rel (%p367) target = $region66
              $region63: #{encoder_forward.19} parent=58 // loop_body
                %v373 = vld [vmem:[%s371] sm:$0xff]
                %374 = vst [vmem:[%s372] sm:$0xff] %v373
                %v375 = vld [vmem:[%s371 + $0x8] sm:$0xff]
                %376 = vst [vmem:[%s372 + $0x8] sm:$0xff] %v375
                %v377 = vld [vmem:[%s371 + $0x10] sm:$0xff]
                %378 = vst [vmem:[%s372 + $0x10] sm:$0xff] %v377
                %v379 = vld [vmem:[%s371 + $0x18] sm:$0xff]
                %380 = vst [vmem:[%s372 + $0x18] sm:$0xff] %v379
                %v381 = vld [vmem:[%s371 + $0x40] sm:$0xff]
                %382 = vst [vmem:[%s372 + $0x20] sm:$0xff] %v381
                %v383 = vld [vmem:[%s371 + $0x48] sm:$0xff]
                %384 = vst [vmem:[%s372 + $0x28] sm:$0xff] %v383
                %v385 = vld [vmem:[%s371 + $0x50] sm:$0xff]
                %386 = vst [vmem:[%s372 + $0x30] sm:$0xff] %v385
                %v387 = vld [vmem:[%s371 + $0x58] sm:$0xff]
                %388 = vst [vmem:[%s372 + $0x38] sm:$0xff] %v387
              $region64: #{encoder_forward.19} parent=58 // loop_footer
                %s370 = sadd.s32 1, %s366
              $region65: #{encoder_forward.19} parent=58 // loop_footer_branch
                %365 = sbr.rel target = $region61
              $region66: #{encoder_forward.19} parent=58 // loop_exit
                _
            $region59: #{encoder_forward.19} parent=54 // pred_fallthru
              _
            // Predicated region
            $region67: #{encoder_forward.19} parent=54 // pred_check
              _
            $region68: #{encoder_forward.19} parent=54 // pred_check_branch
              %390 = sbr.rel target = $region70
            $region69: #{encoder_forward.19} parent=54 // pred_region
              _
            $region70: #{encoder_forward.19} parent=54 // pred_fallthru
              _
          $region55: #{encoder_forward.19} parent=50 // pred_fallthru
            _
          %391 = vnop
        $region51: #{encoder_forward.19} parent=15 // pred_fallthru
          _
      $region16: #{encoder_forward.19} parent=5 // pred_fallthru
        _
      %p392 = scmp.le.s32.totalorder 1, %s13
      %p393 = scmp.lt.s32.totalorder %s13, 5
      %p394 = pnand %p392, %p393
      %p395 = pneg %p394
      // Predicated region
      $region71: #{encoder_forward.19} parent=5 // pred_check
        _
      $region72: #{encoder_forward.19} parent=5 // pred_check_branch
        %397 = sbr.rel (%p394) target = $region74
      $region73: #{encoder_forward.19} parent=5 // pred_region
        %s398 = ssub.s32 %s13, 1
        %s399 = sand.u32 %s64, 1
        %s400 = sand.u32 %s64, 1
        %s401 = smul.addr %s400, 512
        %s402 = scalar_lea.vmem [#allocation2], %s401
        // Predicated region
        $region75: #{encoder_forward.19} parent=73 // pred_check
          %p403 = pneg %p77
        $region76: #{encoder_forward.19} parent=73 // pred_check_branch
          %405 = sbr.rel (%p403) target = $region78
        $region77: #{encoder_forward.19} parent=73 // pred_region
          _
        $region78: #{encoder_forward.19} parent=73 // pred_fallthru
          _
        %s406 = sand.u32 %s118, 1
        %s407 = sand.u32 %s118, 1
        %s408 = smul.addr %s407, 64
        %s409 = scalar_lea.vmem [#allocation3], %s408
        // Predicated region
        $region79: #{encoder_forward.19} parent=73 // pred_check
          %p410 = pneg %p131
        $region80: #{encoder_forward.19} parent=73 // pred_check_branch
          %412 = sbr.rel (%p410) target = $region82
        $region81: #{encoder_forward.19} parent=73 // pred_region
          _
        $region82: #{encoder_forward.19} parent=73 // pred_fallthru
          _
        %s413 = smul.u32 2, %s22
        %p414 = scmp.lt.s32.totalorder %s413, 3
        %s415 = scalar_select %p414, %s413, 3
        %s416 = smul.addr %s415, 4
        %s417 = scalar_lea.vmem %s0, %s416
        %p418 = pneg %p51
        %p419 = pneg %p48
        %s420 = sand.u32 %s64, 1
        %s421 = sand.u32 %s64, 1
        %s422 = smul.addr %s421, 512
        %s423 = scalar_lea.vmem [#allocation2], %s422
        %p424 = pneg %p77
        %p425 = pneg %p74
        %s426 = smul.u32 8, %s23
        %p427 = scmp.lt.s32.totalorder %s426, 15
        %s428 = scalar_select %p427, %s426, 15
        %s429 = scalar_lea.vmem %s2, %s428
        %p430 = pneg %p103
        %p431 = pneg %p100
        %s432 = sand.u32 %s118, 1
        %s433 = sand.u32 %s118, 1
        %s434 = smul.addr %s433, 64
        %s435 = scalar_lea.vmem [#allocation3], %s434
        %p436 = pneg %p131
        %p437 = pneg %p128
        %p438 = pneg %p159
        %p439 = pneg %p156
        %s440 = sand.u32 %s146, 1
        %s441 = scalar_lea.sflag [#allocation5], %s440
        %s442 = sand.u32 %s146, 1
        %s443 = smul.addr %s442, 128
        %s444 = scalar_lea.vmem [#allocation4], %s443
        %s445 = smul.u32 2, %s22
        %p446 = scmp.lt.s32.totalorder %s445, 3
        %s447 = scalar_select %p446, %s445, 3
        %s448 = smul.addr %s447, 4
        %s449 = scalar_lea.vmem %s0, %s448
        %s450 = smul.u32 2, %s22
        %s451 = smul.u32 8, %s23
        %s452 = smul.u32 8, %s23
        %p453 = scmp.lt.s32.totalorder %s452, 15
        %s454 = scalar_select %p453, %s452, 15
        %s455 = scalar_lea.vmem %s2, %s454
        %s456 = smul.u32 8, %s23
        %s457 = smul.u32 2, %s22
        %s458 = smul.u32 8, %s23
        %s459 = smul.u32 2, %s22
        %s460 = smul.u32 8, %s23
        %v461 = vld [vmem:[%s449] sm:$0xf]
        %v462 = vld [vmem:[%s449 + $0x4] sm:$0xf]
        %v463 = vld [vmem:[%s402] sm:$0xff]
        %v464 = vld [vmem:[%s402 + $0x8] sm:$0xff]
        %v465 = vld [vmem:[%s402 + $0x10] sm:$0xff]
        %v466 = vld [vmem:[%s402 + $0x18] sm:$0xff]
        %v467 = vld [vmem:[%s402 + $0x20] sm:$0xff]
        %v468 = vld [vmem:[%s402 + $0x28] sm:$0xff]
        %v469 = vld [vmem:[%s402 + $0x30] sm:$0xff]
        %v470 = vld [vmem:[%s402 + $0x38] sm:$0xff]
        %v471 = vld [vmem:[%s402 + $0x40] sm:$0xff]
        %v472 = vld [vmem:[%s402 + $0x48] sm:$0xff]
        %v473 = vld [vmem:[%s402 + $0x50] sm:$0xff]
        %v474 = vld [vmem:[%s402 + $0x58] sm:$0xff]
        %v475 = vld [vmem:[%s402 + $0x60] sm:$0xff]
        %v476 = vld [vmem:[%s402 + $0x68] sm:$0xff]
        %v477 = vld [vmem:[%s402 + $0x70] sm:$0xff]
        %v478 = vld [vmem:[%s402 + $0x78] sm:$0xff]
        %v479 = vld [vmem:[%s402 + $0x80] sm:$0xff]
        %v480 = vld [vmem:[%s402 + $0x88] sm:$0xff]
        %v481 = vld [vmem:[%s402 + $0x90] sm:$0xff]
        %v482 = vld [vmem:[%s402 + $0x98] sm:$0xff]
        %v483 = vld [vmem:[%s402 + $0xa0] sm:$0xff]
        %v484 = vld [vmem:[%s402 + $0xa8] sm:$0xff]
        %v485 = vld [vmem:[%s402 + $0xb0] sm:$0xff]
        %v486 = vld [vmem:[%s402 + $0xb8] sm:$0xff]
        %v487 = vld [vmem:[%s402 + $0xc0] sm:$0xff]
        %v488 = vld [vmem:[%s402 + $0xc8] sm:$0xff]
        %v489 = vld [vmem:[%s402 + $0xd0] sm:$0xff]
        %v490 = vld [vmem:[%s402 + $0xd8] sm:$0xff]
        %v491 = vld [vmem:[%s402 + $0xe0] sm:$0xff]
        %v492 = vld [vmem:[%s402 + $0xe8] sm:$0xff]
        %v493 = vld [vmem:[%s402 + $0xf0] sm:$0xff]
        %v494 = vld [vmem:[%s402 + $0xf8] sm:$0xff]
        %v495 = vld [vmem:[%s402 + $0x100] sm:$0xff]
        %v496 = vld [vmem:[%s402 + $0x108] sm:$0xff]
        %v497 = vld [vmem:[%s402 + $0x110] sm:$0xff]
        %v498 = vld [vmem:[%s402 + $0x118] sm:$0xff]
        %v499 = vld [vmem:[%s402 + $0x120] sm:$0xff]
        %v500 = vld [vmem:[%s402 + $0x128] sm:$0xff]
        %v501 = vld [vmem:[%s402 + $0x130] sm:$0xff]
        %v502 = vld [vmem:[%s402 + $0x138] sm:$0xff]
        %v503 = vld [vmem:[%s402 + $0x140] sm:$0xff]
        %v504 = vld [vmem:[%s402 + $0x148] sm:$0xff]
        %v505 = vld [vmem:[%s402 + $0x150] sm:$0xff]
        %v506 = vld [vmem:[%s402 + $0x158] sm:$0xff]
        %v507 = vld [vmem:[%s402 + $0x160] sm:$0xff]
        %v508 = vld [vmem:[%s402 + $0x168] sm:$0xff]
        %v509 = vld [vmem:[%s402 + $0x170] sm:$0xff]
        %v510 = vld [vmem:[%s402 + $0x178] sm:$0xff]
        %v511 = vld [vmem:[%s402 + $0x180] sm:$0xff]
        %v512 = vld [vmem:[%s402 + $0x188] sm:$0xff]
        %v513 = vld [vmem:[%s402 + $0x190] sm:$0xff]
        %v514 = vld [vmem:[%s402 + $0x198] sm:$0xff]
        %v515 = vld [vmem:[%s402 + $0x1a0] sm:$0xff]
        %v516 = vld [vmem:[%s402 + $0x1a8] sm:$0xff]
        %v517 = vld [vmem:[%s402 + $0x1b0] sm:$0xff]
        %v518 = vld [vmem:[%s402 + $0x1b8] sm:$0xff]
        %v519 = vld [vmem:[%s402 + $0x1c0] sm:$0xff]
        %v520 = vld [vmem:[%s402 + $0x1c8] sm:$0xff]
        %v521 = vld [vmem:[%s402 + $0x1d0] sm:$0xff]
        %v522 = vld [vmem:[%s402 + $0x1d8] sm:$0xff]
        %v523 = vld [vmem:[%s402 + $0x1e0] sm:$0xff]
        %v524 = vld [vmem:[%s402 + $0x1e8] sm:$0xff]
        %v525 = vld [vmem:[%s402 + $0x1f0] sm:$0xff]
        %v526 = vld [vmem:[%s402 + $0x1f8] sm:$0xff]
        %v527 = vld [vmem:[%s455] sm:$0xff]
        %v529 = vperm.slane %v527, 0
        %v530 = vperm.slane %v527, 1
        %v531 = vperm.slane %v527, 2
        %v532 = vperm.slane %v527, 3
        %v533 = vperm.slane %v527, 4
        %v534 = vperm.slane %v527, 5
        %v535 = vperm.slane %v527, 6
        %v536 = vperm.slane %v527, 7
        %v547 = vunpack.c.l.b16 %v461
        %v548 = vunpack.c.l.b16 %v462
        %v549 = vpack.c.b16 %v548, %v547
        %v615 = vunpack.c.l.b16 %v463
        %v616 = vunpack.c.h.b16 %v463
        %v617 = vunpack.c.l.b16 %v464
        %v618 = vunpack.c.h.b16 %v464
        %v619 = vunpack.c.l.b16 %v465
        %v620 = vunpack.c.h.b16 %v465
        %v621 = vunpack.c.l.b16 %v466
        %v622 = vunpack.c.h.b16 %v466
        %v623 = vunpack.c.l.b16 %v467
        %v624 = vunpack.c.h.b16 %v467
        %v625 = vunpack.c.l.b16 %v468
        %v626 = vunpack.c.h.b16 %v468
        %v627 = vunpack.c.l.b16 %v469
        %v628 = vunpack.c.h.b16 %v469
        %v629 = vunpack.c.l.b16 %v470
        %v630 = vunpack.c.h.b16 %v470
        %v631 = vunpack.c.l.b16 %v471
        %v632 = vunpack.c.h.b16 %v471
        %v633 = vunpack.c.l.b16 %v472
        %v634 = vunpack.c.h.b16 %v472
        %v635 = vunpack.c.l.b16 %v473
        %v636 = vunpack.c.h.b16 %v473
        %v637 = vunpack.c.l.b16 %v474
        %v638 = vunpack.c.h.b16 %v474
        %v639 = vunpack.c.l.b16 %v475
        %v640 = vunpack.c.h.b16 %v475
        %v641 = vunpack.c.l.b16 %v476
        %v642 = vunpack.c.h.b16 %v476
        %v643 = vunpack.c.l.b16 %v477
        %v644 = vunpack.c.h.b16 %v477
        %v645 = vunpack.c.l.b16 %v478
        %v646 = vunpack.c.h.b16 %v478
        %v647 = vunpack.c.l.b16 %v479
        %v648 = vunpack.c.h.b16 %v479
        %v649 = vunpack.c.l.b16 %v480
        %v650 = vunpack.c.h.b16 %v480
        %v651 = vunpack.c.l.b16 %v481
        %v652 = vunpack.c.h.b16 %v481
        %v653 = vunpack.c.l.b16 %v482
        %v654 = vunpack.c.h.b16 %v482
        %v655 = vunpack.c.l.b16 %v483
        %v656 = vunpack.c.h.b16 %v483
        %v657 = vunpack.c.l.b16 %v484
        %v658 = vunpack.c.h.b16 %v484
        %v659 = vunpack.c.l.b16 %v485
        %v660 = vunpack.c.h.b16 %v485
        %v661 = vunpack.c.l.b16 %v486
        %v662 = vunpack.c.h.b16 %v486
        %v663 = vunpack.c.l.b16 %v487
        %v664 = vunpack.c.h.b16 %v487
        %v665 = vunpack.c.l.b16 %v488
        %v666 = vunpack.c.h.b16 %v488
        %v667 = vunpack.c.l.b16 %v489
        %v668 = vunpack.c.h.b16 %v489
        %v669 = vunpack.c.l.b16 %v490
        %v670 = vunpack.c.h.b16 %v490
        %v671 = vunpack.c.l.b16 %v491
        %v672 = vunpack.c.h.b16 %v491
        %v673 = vunpack.c.l.b16 %v492
        %v674 = vunpack.c.h.b16 %v492
        %v675 = vunpack.c.l.b16 %v493
        %v676 = vunpack.c.h.b16 %v493
        %v677 = vunpack.c.l.b16 %v494
        %v678 = vunpack.c.h.b16 %v494
        %v679 = vunpack.c.l.b16 %v495
        %v680 = vunpack.c.h.b16 %v495
        %v681 = vunpack.c.l.b16 %v496
        %v682 = vunpack.c.h.b16 %v496
        %v683 = vunpack.c.l.b16 %v497
        %v684 = vunpack.c.h.b16 %v497
        %v685 = vunpack.c.l.b16 %v498
        %v686 = vunpack.c.h.b16 %v498
        %v687 = vunpack.c.l.b16 %v499
        %v688 = vunpack.c.h.b16 %v499
        %v689 = vunpack.c.l.b16 %v500
        %v690 = vunpack.c.h.b16 %v500
        %v691 = vunpack.c.l.b16 %v501
        %v692 = vunpack.c.h.b16 %v501
        %v693 = vunpack.c.l.b16 %v502
        %v694 = vunpack.c.h.b16 %v502
        %v695 = vunpack.c.l.b16 %v503
        %v696 = vunpack.c.h.b16 %v503
        %v697 = vunpack.c.l.b16 %v504
        %v698 = vunpack.c.h.b16 %v504
        %v699 = vunpack.c.l.b16 %v505
        %v700 = vunpack.c.h.b16 %v505
        %v701 = vunpack.c.l.b16 %v506
        %v702 = vunpack.c.h.b16 %v506
        %v703 = vunpack.c.l.b16 %v507
        %v704 = vunpack.c.h.b16 %v507
        %v705 = vunpack.c.l.b16 %v508
        %v706 = vunpack.c.h.b16 %v508
        %v707 = vunpack.c.l.b16 %v509
        %v708 = vunpack.c.h.b16 %v509
        %v709 = vunpack.c.l.b16 %v510
        %v710 = vunpack.c.h.b16 %v510
        %v711 = vunpack.c.l.b16 %v511
        %v712 = vunpack.c.h.b16 %v511
        %v713 = vunpack.c.l.b16 %v512
        %v714 = vunpack.c.h.b16 %v512
        %v715 = vunpack.c.l.b16 %v513
        %v716 = vunpack.c.h.b16 %v513
        %v717 = vunpack.c.l.b16 %v514
        %v718 = vunpack.c.h.b16 %v514
        %v719 = vunpack.c.l.b16 %v515
        %v720 = vunpack.c.h.b16 %v515
        %v721 = vunpack.c.l.b16 %v516
        %v722 = vunpack.c.h.b16 %v516
        %v723 = vunpack.c.l.b16 %v517
        %v724 = vunpack.c.h.b16 %v517
        %v725 = vunpack.c.l.b16 %v518
        %v726 = vunpack.c.h.b16 %v518
        %v727 = vunpack.c.l.b16 %v519
        %v728 = vunpack.c.h.b16 %v519
        %v729 = vunpack.c.l.b16 %v520
        %v730 = vunpack.c.h.b16 %v520
        %v731 = vunpack.c.l.b16 %v521
        %v732 = vunpack.c.h.b16 %v521
        %v733 = vunpack.c.l.b16 %v522
        %v734 = vunpack.c.h.b16 %v522
        %v735 = vunpack.c.l.b16 %v523
        %v736 = vunpack.c.h.b16 %v523
        %v737 = vunpack.c.l.b16 %v524
        %v738 = vunpack.c.h.b16 %v524
        %v739 = vunpack.c.l.b16 %v525
        %v740 = vunpack.c.h.b16 %v525
        %v741 = vunpack.c.l.b16 %v526
        %v742 = vunpack.c.h.b16 %v526
        %v743 = vpack.c.b16 %v623, %v615
        %v744 = vpack.c.b16 %v624, %v616
        %v745 = vpack.c.b16 %v625, %v617
        %v746 = vpack.c.b16 %v626, %v618
        %v747 = vpack.c.b16 %v627, %v619
        %v748 = vpack.c.b16 %v628, %v620
        %v749 = vpack.c.b16 %v629, %v621
        %v750 = vpack.c.b16 %v630, %v622
        %v751 = vpack.c.b16 %v639, %v631
        %v752 = vpack.c.b16 %v640, %v632
        %v753 = vpack.c.b16 %v641, %v633
        %v754 = vpack.c.b16 %v642, %v634
        %v755 = vpack.c.b16 %v643, %v635
        %v756 = vpack.c.b16 %v644, %v636
        %v757 = vpack.c.b16 %v645, %v637
        %v758 = vpack.c.b16 %v646, %v638
        %v759 = vpack.c.b16 %v655, %v647
        %v760 = vpack.c.b16 %v656, %v648
        %v761 = vpack.c.b16 %v657, %v649
        %v762 = vpack.c.b16 %v658, %v650
        %v763 = vpack.c.b16 %v659, %v651
        %v764 = vpack.c.b16 %v660, %v652
        %v765 = vpack.c.b16 %v661, %v653
        %v766 = vpack.c.b16 %v662, %v654
        %v767 = vpack.c.b16 %v671, %v663
        %v768 = vpack.c.b16 %v672, %v664
        %v769 = vpack.c.b16 %v673, %v665
        %v770 = vpack.c.b16 %v674, %v666
        %v771 = vpack.c.b16 %v675, %v667
        %v772 = vpack.c.b16 %v676, %v668
        %v773 = vpack.c.b16 %v677, %v669
        %v774 = vpack.c.b16 %v678, %v670
        %v775 = vpack.c.b16 %v687, %v679
        %v776 = vpack.c.b16 %v688, %v680
        %v777 = vpack.c.b16 %v689, %v681
        %v778 = vpack.c.b16 %v690, %v682
        %v779 = vpack.c.b16 %v691, %v683
        %v780 = vpack.c.b16 %v692, %v684
        %v781 = vpack.c.b16 %v693, %v685
        %v782 = vpack.c.b16 %v694, %v686
        %v783 = vpack.c.b16 %v703, %v695
        %v784 = vpack.c.b16 %v704, %v696
        %v785 = vpack.c.b16 %v705, %v697
        %v786 = vpack.c.b16 %v706, %v698
        %v787 = vpack.c.b16 %v707, %v699
        %v788 = vpack.c.b16 %v708, %v700
        %v789 = vpack.c.b16 %v709, %v701
        %v790 = vpack.c.b16 %v710, %v702
        %v791 = vpack.c.b16 %v719, %v711
        %v792 = vpack.c.b16 %v720, %v712
        %v793 = vpack.c.b16 %v721, %v713
        %v794 = vpack.c.b16 %v722, %v714
        %v795 = vpack.c.b16 %v723, %v715
        %v796 = vpack.c.b16 %v724, %v716
        %v797 = vpack.c.b16 %v725, %v717
        %v798 = vpack.c.b16 %v726, %v718
        %v799 = vpack.c.b16 %v735, %v727
        %v800 = vpack.c.b16 %v736, %v728
        %v801 = vpack.c.b16 %v737, %v729
        %v802 = vpack.c.b16 %v738, %v730
        %v803 = vpack.c.b16 %v739, %v731
        %v804 = vpack.c.b16 %v740, %v732
        %v805 = vpack.c.b16 %v741, %v733
        %v806 = vpack.c.b16 %v742, %v734
        %871 = vmatpush.bf16.msra.mxu0 %v799
        %872 = vmatpush.bf16.msra.mxu0 %v791
        %873 = vmatpush.bf16.msra.mxu0 %v783
        %874 = vmatpush.bf16.msra.mxu0 %v775
        %875 = vmatpush.bf16.msra.mxu0 %v767
        %876 = vmatpush.bf16.msra.mxu0 %v759
        %877 = vmatpush.bf16.msra.mxu0 %v751
        %878 = vmatpush.bf16.msra.mxu0 %v743
        %879 = vmatmul.bf16.gmra.mxu0 %v549
        %v880 = vpop.f32.mrf.mxu0
        %v881 = vadd.f32 %v529, %v880
        %v882 = vpop.f32.mrf.mxu0
        %v883 = vadd.f32 %v529, %v882
        %884 = vdwg.mxu0
        %885 = vmatpush.bf16.msra.mxu0 %v800
        %886 = vmatpush.bf16.msra.mxu0 %v792
        %887 = vmatpush.bf16.msra.mxu0 %v784
        %888 = vmatpush.bf16.msra.mxu0 %v776
        %889 = vmatpush.bf16.msra.mxu0 %v768
        %890 = vmatpush.bf16.msra.mxu0 %v760
        %891 = vmatpush.bf16.msra.mxu0 %v752
        %892 = vmatpush.bf16.msra.mxu0 %v744
        %893 = vmatmul.bf16.gmra.mxu0 %v549
        %v894 = vpop.f32.mrf.mxu0
        %v895 = vadd.f32 %v530, %v894
        %v896 = vpop.f32.mrf.mxu0
        %v897 = vadd.f32 %v530, %v896
        %898 = vdwg.mxu0
        %899 = vmatpush.bf16.msra.mxu0 %v801
        %900 = vmatpush.bf16.msra.mxu0 %v793
        %901 = vmatpush.bf16.msra.mxu0 %v785
        %902 = vmatpush.bf16.msra.mxu0 %v777
        %903 = vmatpush.bf16.msra.mxu0 %v769
        %904 = vmatpush.bf16.msra.mxu0 %v761
        %905 = vmatpush.bf16.msra.mxu0 %v753
        %906 = vmatpush.bf16.msra.mxu0 %v745
        %907 = vmatmul.bf16.gmra.mxu0 %v549
        %v908 = vpop.f32.mrf.mxu0
        %v909 = vadd.f32 %v531, %v908
        %v910 = vpop.f32.mrf.mxu0
        %v911 = vadd.f32 %v531, %v910
        %912 = vdwg.mxu0
        %913 = vmatpush.bf16.msra.mxu0 %v802
        %914 = vmatpush.bf16.msra.mxu0 %v794
        %915 = vmatpush.bf16.msra.mxu0 %v786
        %916 = vmatpush.bf16.msra.mxu0 %v778
        %917 = vmatpush.bf16.msra.mxu0 %v770
        %918 = vmatpush.bf16.msra.mxu0 %v762
        %919 = vmatpush.bf16.msra.mxu0 %v754
        %920 = vmatpush.bf16.msra.mxu0 %v746
        %921 = vmatmul.bf16.gmra.mxu0 %v549
        %v922 = vpop.f32.mrf.mxu0
        %v923 = vadd.f32 %v532, %v922
        %v924 = vpop.f32.mrf.mxu0
        %v925 = vadd.f32 %v532, %v924
        %926 = vdwg.mxu0
        %927 = vmatpush.bf16.msra.mxu0 %v803
        %928 = vmatpush.bf16.msra.mxu0 %v795
        %929 = vmatpush.bf16.msra.mxu0 %v787
        %930 = vmatpush.bf16.msra.mxu0 %v779
        %931 = vmatpush.bf16.msra.mxu0 %v771
        %932 = vmatpush.bf16.msra.mxu0 %v763
        %933 = vmatpush.bf16.msra.mxu0 %v755
        %934 = vmatpush.bf16.msra.mxu0 %v747
        %935 = vmatmul.bf16.gmra.mxu0 %v549
        %v936 = vpop.f32.mrf.mxu0
        %v937 = vadd.f32 %v533, %v936
        %v938 = vpop.f32.mrf.mxu0
        %v939 = vadd.f32 %v533, %v938
        %940 = vdwg.mxu0
        %941 = vmatpush.bf16.msra.mxu0 %v804
        %942 = vmatpush.bf16.msra.mxu0 %v796
        %943 = vmatpush.bf16.msra.mxu0 %v788
        %944 = vmatpush.bf16.msra.mxu0 %v780
        %945 = vmatpush.bf16.msra.mxu0 %v772
        %946 = vmatpush.bf16.msra.mxu0 %v764
        %947 = vmatpush.bf16.msra.mxu0 %v756
        %948 = vmatpush.bf16.msra.mxu0 %v748
        %949 = vmatmul.bf16.gmra.mxu0 %v549
        %v950 = vpop.f32.mrf.mxu0
        %v951 = vadd.f32 %v534, %v950
        %v952 = vpop.f32.mrf.mxu0
        %v953 = vadd.f32 %v534, %v952
        %954 = vdwg.mxu0
        %955 = vmatpush.bf16.msra.mxu0 %v805
        %956 = vmatpush.bf16.msra.mxu0 %v797
        %957 = vmatpush.bf16.msra.mxu0 %v789
        %958 = vmatpush.bf16.msra.mxu0 %v781
        %959 = vmatpush.bf16.msra.mxu0 %v773
        %960 = vmatpush.bf16.msra.mxu0 %v765
        %961 = vmatpush.bf16.msra.mxu0 %v757
        %962 = vmatpush.bf16.msra.mxu0 %v749
        %963 = vmatmul.bf16.gmra.mxu0 %v549
        %v964 = vpop.f32.mrf.mxu0
        %v965 = vadd.f32 %v535, %v964
        %v966 = vpop.f32.mrf.mxu0
        %v967 = vadd.f32 %v535, %v966
        %968 = vdwg.mxu0
        %969 = vmatpush.bf16.msra.mxu0 %v806
        %970 = vmatpush.bf16.msra.mxu0 %v798
        %971 = vmatpush.bf16.msra.mxu0 %v790
        %972 = vmatpush.bf16.msra.mxu0 %v782
        %973 = vmatpush.bf16.msra.mxu0 %v774
        %974 = vmatpush.bf16.msra.mxu0 %v766
        %975 = vmatpush.bf16.msra.mxu0 %v758
        %976 = vmatpush.bf16.msra.mxu0 %v750
        %977 = vmatmul.bf16.gmra.mxu0 %v549
        %v978 = vpop.f32.mrf.mxu0
        %v979 = vadd.f32 %v536, %v978
        %v980 = vpop.f32.mrf.mxu0
        %v981 = vadd.f32 %v536, %v980
        %982 = vdwg.mxu0
        %v983 = vld [vmem:[%s409] sm:$0xff]
        %v984 = vld [vmem:[%s409 + $0x8] sm:$0xff]
        %v985 = vld [vmem:[%s409 + $0x10] sm:$0xff]
        %v986 = vld [vmem:[%s409 + $0x18] sm:$0xff]
        %v987 = vld [vmem:[%s409 + $0x20] sm:$0xff]
        %v988 = vld [vmem:[%s409 + $0x28] sm:$0xff]
        %v989 = vld [vmem:[%s409 + $0x30] sm:$0xff]
        %v990 = vld [vmem:[%s409 + $0x38] sm:$0xff]
        %v991 = vunpack.c.l.bf16 %v983
        %v992 = vunpack.c.h.bf16 %v983
        %v993 = vunpack.c.l.bf16 %v984
        %v994 = vunpack.c.h.bf16 %v984
        %v995 = vunpack.c.l.bf16 %v985
        %v996 = vunpack.c.h.bf16 %v985
        %v997 = vunpack.c.l.bf16 %v986
        %v998 = vunpack.c.h.bf16 %v986
        %v999 = vunpack.c.l.bf16 %v987
        %v1000 = vunpack.c.h.bf16 %v987
        %v1001 = vunpack.c.l.bf16 %v988
        %v1002 = vunpack.c.h.bf16 %v988
        %v1003 = vunpack.c.l.bf16 %v989
        %v1004 = vunpack.c.h.bf16 %v989
        %v1005 = vunpack.c.l.bf16 %v990
        %v1006 = vunpack.c.h.bf16 %v990
        %v1007 = vadd.f32 %v881, %v991
        %v1008 = vadd.f32 %v895, %v992
        %v1009 = vadd.f32 %v909, %v993
        %v1010 = vadd.f32 %v923, %v994
        %v1011 = vadd.f32 %v937, %v995
        %v1012 = vadd.f32 %v951, %v996
        %v1013 = vadd.f32 %v965, %v997
        %v1014 = vadd.f32 %v979, %v998
        %v1015 = vadd.f32 %v883, %v999
        %v1016 = vadd.f32 %v897, %v1000
        %v1017 = vadd.f32 %v911, %v1001
        %v1018 = vadd.f32 %v925, %v1002
        %v1019 = vadd.f32 %v939, %v1003
        %v1020 = vadd.f32 %v953, %v1004
        %v1021 = vadd.f32 %v967, %v1005
        %v1022 = vadd.f32 %v981, %v1006
        %v1023 = vmax.f32 %v1007, 0.0
        %v1024 = vmax.f32 %v1008, 0.0
        %v1025 = vmax.f32 %v1009, 0.0
        %v1026 = vmax.f32 %v1010, 0.0
        %v1027 = vmax.f32 %v1011, 0.0
        %v1028 = vmax.f32 %v1012, 0.0
        %v1029 = vmax.f32 %v1013, 0.0
        %v1030 = vmax.f32 %v1014, 0.0
        %v1031 = vmax.f32 %v1015, 0.0
        %v1032 = vmax.f32 %v1016, 0.0
        %v1033 = vmax.f32 %v1017, 0.0
        %v1034 = vmax.f32 %v1018, 0.0
        %v1035 = vmax.f32 %v1019, 0.0
        %v1036 = vmax.f32 %v1020, 0.0
        %v1037 = vmax.f32 %v1021, 0.0
        %v1038 = vmax.f32 %v1022, 0.0
        %1039 = vst [vmem:[%s444] sm:$0xff] %v1023
        %1040 = vst [vmem:[%s444 + $0x8] sm:$0xff] %v1024
        %1041 = vst [vmem:[%s444 + $0x10] sm:$0xff] %v1025
        %1042 = vst [vmem:[%s444 + $0x18] sm:$0xff] %v1026
        %1043 = vst [vmem:[%s444 + $0x20] sm:$0xff] %v1027
        %1044 = vst [vmem:[%s444 + $0x28] sm:$0xff] %v1028
        %1045 = vst [vmem:[%s444 + $0x30] sm:$0xff] %v1029
        %1046 = vst [vmem:[%s444 + $0x38] sm:$0xff] %v1030
        %1047 = vst [vmem:[%s444 + $0x40] sm:$0xff] %v1031
        %1048 = vst [vmem:[%s444 + $0x48] sm:$0xff] %v1032
        %1049 = vst [vmem:[%s444 + $0x50] sm:$0xff] %v1033
        %1050 = vst [vmem:[%s444 + $0x58] sm:$0xff] %v1034
        %1051 = vst [vmem:[%s444 + $0x60] sm:$0xff] %v1035
        %1052 = vst [vmem:[%s444 + $0x68] sm:$0xff] %v1036
        %1053 = vst [vmem:[%s444 + $0x70] sm:$0xff] %v1037
        %1054 = vst [vmem:[%s444 + $0x78] sm:$0xff] %v1038
        %s1055 = sand.u32 %s146, 1
        %s1056 = scalar_lea.sflag [#allocation5], %s1055
        %s1057 = sand.u32 %s146, 1
        %s1058 = smul.addr %s1057, 128
        %s1059 = scalar_lea.vmem [#allocation4], %s1058
        // Predicated region
        $region83: #{encoder_forward.19} parent=73 // pred_check
          %p1060 = pneg %p156
        $region84: #{encoder_forward.19} parent=73 // pred_check_branch
          %1062 = sbr.rel (%p1060) target = $region86
        $region85: #{encoder_forward.19} parent=73 // pred_region
          %s1063 = smul.u32 2, %s22
          %s1064 = smul.u32 8, %s23
          %1066 = vsyncadd %s1056, 0
          %s1067 = smul.addr %s1063, 16
          %s1068 = sadd.s32 %s1064, %s1067
          %s1069 = smul.addr %s1068, 8
          %s1070 = scalar_lea.hbm %s4, %s1069
          %s1071 = sshll.u32 %s1059, 4
          %s1072 = int_to_ptr.vmem [resolvable:$true] %s1071
          %s1073 = sshll.u32 %s1070, 4
          %s1074 = int_to_ptr.hbm [resolvable:$true] %s1073
          %1079 = dma.vmem_to_hbm [thread:$0]  %s1072, 2048, %s1074, %s1056, 1024, 2048, 64
        $region86: #{encoder_forward.19} parent=73 // pred_fallthru
          _
      $region74: #{encoder_forward.19} parent=5 // pred_fallthru
        _
      %p1080 = scmp.le.s32.totalorder 2, %s13
      // Predicated region
      $region87: #{encoder_forward.19} parent=5 // pred_check
        %p1081 = pneg %p1080
      $region88: #{encoder_forward.19} parent=5 // pred_check_branch
        %1083 = sbr.rel (%p1081) target = $region90
      $region89: #{encoder_forward.19} parent=5 // pred_region
        %s1084 = ssub.s32 %s13, 2
        // Predicated region
        $region91: #{encoder_forward.19} parent=89 // pred_check
          %p1085 = pneg %p162
        $region92: #{encoder_forward.19} parent=89 // pred_check_branch
          %1087 = sbr.rel (%p1085) target = $region94
        $region93: #{encoder_forward.19} parent=89 // pred_region
          %s1088 = sand.u32 %s147, 1
          %s1089 = scalar_lea.sflag [#allocation5], %s1088
          %s1090 = sand.u32 %s147, 1
          %s1091 = smul.addr %s1090, 128
          %s1092 = scalar_lea.vmem [#allocation4], %s1091
          %1094 = dma.done %s1089, 2048
        $region94: #{encoder_forward.19} parent=89 // pred_fallthru
          _
      $region90: #{encoder_forward.19} parent=5 // pred_fallthru
        _
    $region6: #{encoder_forward.19} parent=1 // loop_footer
      %s17 = sadd.s32 1, %s13
    $region7: #{encoder_forward.19} parent=1 // loop_footer_branch
      %12 = sbr.rel target = $region3
    $region8: #{encoder_forward.19} parent=1 // loop_exit
      _
    %1095 = vsyncpa [#allocation5], 1
    %s1096 = scalar_lea.sflag [#allocation5], 1
    %1097 = vsyncpa %s1096, 1

// kernel: encoder_forward.18
$region0: #{encoder_forward.18}
  #allocation0 [shape = 'u32[]', space=smem, size = 0x4, offset = 0x4, fixed_abs, tag = 'smem constant byte address 0x4 - core index']
  #allocation1 [shape = 'u32[72,128]{1,0:T(1,128)}', space=vmem, size = 0x9000, scoped, tag = 'internal scratch']
  %s0 = inlined_call_operand.vmem [shape: bf16[32,256], index: 0, kind: input, shape index: {}]
  %s1 = inlined_call_operand.vmem [shape: bf16[256,2048], index: 1, kind: input, shape index: {}]
  %s2 = inlined_call_operand.vmem [shape: f32[1,2048], index: 2, kind: input, shape index: {}]
  %s3 = inlined_call_operand.vmem [shape: bf16[32,2048], index: 3, kind: output, shape index: {}]
  %s4 = sld [smem:[#allocation0]]
  $region87: #{encoder_forward.18} parent=0
    _
  %s6 = ssub.s32 1, %s4
  %s7 = scalar_select 0, %s6, %s4
  $region1: #{encoder_forward.18} parent=0
    #allocation2 [shape = 'u8[1048576]{0}', space=vmem, size = 0x100000, scoped, tag = 'input window, operand 1']
    #allocation3 [shape = 'u8[65536]{0}', space=vmem, size = 0x10000, scoped, tag = 'output window, operand 0']
    loop: start=0, step=1, limit=6
    $region2: #{encoder_forward.18} parent=1 // loop_pre_header
      _
    $region3: #{encoder_forward.18} parent=1 // loop_header
      %s9 = sphi 0, %s13
      %p10 = scmp.ge.s32.totalorder %s9, 6
      %s16 = sphi 0, %s28
      %s17 = sphi 0, %s24
      %s18 = sphi 0, %s16
      %s19 = sphi 0, %s17
      %s20 = sphi 0, %s18
      %s21 = sphi 0, %s19
      %s31 = sphi 0, %s33
      %s34 = sphi 0, %s31
      %s35 = sphi 0, %s34
      %s51 = sphi 0, %s35
      %s57 = sphi 0, %s59
      %s60 = sphi 0, %s57
      %s61 = sphi 0, %s60
      %s77 = sphi 0, %s61
      %s83 = sphi 0, %s85
      %s86 = sphi 0, %s83
      %s87 = sphi 0, %s86
      %s103 = sphi 0, %s87
      %s111 = sphi 0, %s113
      %s114 = sphi 0, %s111
      %s115 = sphi 0, %s114
      %s131 = sphi 0, %s115
    $region4: #{encoder_forward.18} parent=1 // loop_header_branch
      %12 = sbr.rel (%p10) target = $region8
    $region5: #{encoder_forward.18} parent=1 // loop_body
      %s14 = ssub.s32 %s9, 1
      %s15 = ssub.s32 %s9, 2
      %s22 = sadd.s32 1, %s17
      %p23 = scmp.ge.s32.totalorder %s22, 2
      %s24 = scalar_select %p23, 0, %s22
      %s25 = sadd.s32 1, %s16
      %s26 = scalar_select %p23, %s25, %s16
      %p27 = scmp.ge.s32.totalorder %s26, 2
      %s28 = scalar_select %p27, 0, %s26
      %s29 = ssub.s32 %s16, %s28
      %p30 = scmp.eq.s32.totalorder %s29, 0
      %s32 = sadd.s32 %s31, 1
      %s33 = scalar_select %p30, %s31, %s32
      %p36 = pneg %p30
      %p37 = scmp.eq.s32.totalorder %s9, 3
      %p38 = por %p36, %p37
      %p39 = scmp.ne.s32.totalorder %s31, %s34
      %p40 = scmp.eq.s32.totalorder %s9, 0
      %p41 = por %p39, %p40
      %p42 = scmp.ne.s32.totalorder %s31, %s34
      %p43 = scmp.eq.s32.totalorder %s14, 3
      %p44 = por %p42, %p43
      %p45 = scmp.ne.s32.totalorder %s34, %s35
      %p46 = scmp.eq.s32.totalorder %s14, 0
      %p47 = por %p45, %p46
      %p48 = scmp.ne.s32.totalorder %s34, %s35
      %p49 = scmp.eq.s32.totalorder %s15, 3
      %p50 = por %p48, %p49
      %p52 = scmp.ne.s32.totalorder %s35, %s51
      %p53 = scmp.eq.s32.totalorder %s15, 0
      %p54 = por %p52, %p53
      %s55 = ssub.s32 %s17, %s24
      %p56 = scmp.eq.s32.totalorder %s55, 0
      %s58 = sadd.s32 %s57, 1
      %s59 = scalar_select %p56, %s57, %s58
      %p62 = pneg %p56
      %p63 = scmp.eq.s32.totalorder %s9, 3
      %p64 = por %p62, %p63
      %p65 = scmp.ne.s32.totalorder %s57, %s60
      %p66 = scmp.eq.s32.totalorder %s9, 0
      %p67 = por %p65, %p66
      %p68 = scmp.ne.s32.totalorder %s57, %s60
      %p69 = scmp.eq.s32.totalorder %s14, 3
      %p70 = por %p68, %p69
      %p71 = scmp.ne.s32.totalorder %s60, %s61
      %p72 = scmp.eq.s32.totalorder %s14, 0
      %p73 = por %p71, %p72
      %p74 = scmp.ne.s32.totalorder %s60, %s61
      %p75 = scmp.eq.s32.totalorder %s15, 3
      %p76 = por %p74, %p75
      %p78 = scmp.ne.s32.totalorder %s61, %s77
      %p79 = scmp.eq.s32.totalorder %s15, 0
      %p80 = por %p78, %p79
      %s81 = ssub.s32 %s17, %s24
      %p82 = scmp.eq.s32.totalorder %s81, 0
      %s84 = sadd.s32 %s83, 1
      %s85 = scalar_select %p82, %s83, %s84
      %p88 = pneg %p82
      %p89 = scmp.eq.s32.totalorder %s9, 3
      %p90 = por %p88, %p89
      %p91 = scmp.ne.s32.totalorder %s83, %s86
      %p92 = scmp.eq.s32.totalorder %s9, 0
      %p93 = por %p91, %p92
      %p94 = scmp.ne.s32.totalorder %s83, %s86
      %p95 = scmp.eq.s32.totalorder %s14, 3
      %p96 = por %p94, %p95
      %p97 = scmp.ne.s32.totalorder %s86, %s87
      %p98 = scmp.eq.s32.totalorder %s14, 0
      %p99 = por %p97, %p98
      %p100 = scmp.ne.s32.totalorder %s86, %s87
      %p101 = scmp.eq.s32.totalorder %s15, 3
      %p102 = por %p100, %p101
      %p104 = scmp.ne.s32.totalorder %s87, %s103
      %p105 = scmp.eq.s32.totalorder %s15, 0
      %p106 = por %p104, %p105
      %s107 = ssub.s32 %s16, %s28
      %s108 = ssub.s32 %s17, %s24
      %s109 = sor.u32 %s107, %s108
      %p110 = scmp.eq.s32.totalorder %s109, 0
      %s112 = sadd.s32 %s111, 1
      %s113 = scalar_select %p110, %s111, %s112
      %p116 = pneg %p110
      %p117 = scmp.eq.s32.totalorder %s9, 3
      %p118 = por %p116, %p117
      %p119 = scmp.ne.s32.totalorder %s111, %s114
      %p120 = scmp.eq.s32.totalorder %s9, 0
      %p121 = por %p119, %p120
      %p122 = scmp.ne.s32.totalorder %s111, %s114
      %p123 = scmp.eq.s32.totalorder %s14, 3
      %p124 = por %p122, %p123
      %p125 = scmp.ne.s32.totalorder %s114, %s115
      %p126 = scmp.eq.s32.totalorder %s14, 0
      %p127 = por %p125, %p126
      %p128 = scmp.ne.s32.totalorder %s114, %s115
      %p129 = scmp.eq.s32.totalorder %s15, 3
      %p130 = por %p128, %p129
      %p132 = scmp.ne.s32.totalorder %s115, %s131
      %p133 = scmp.eq.s32.totalorder %s15, 0
      %p134 = por %p132, %p133
      %p135 = scmp.le.s32.totalorder 1, %s9
      %p136 = scmp.lt.s32.totalorder %s9, 5
      %p137 = pnand %p135, %p136
      %p138 = pneg %p137
      // Predicated region
      $region9: #{encoder_forward.18} parent=5 // pred_check
        _
      $region10: #{encoder_forward.18} parent=5 // pred_check_branch
        %140 = sbr.rel (%p137) target = $region12
      $region11: #{encoder_forward.18} parent=5 // pred_region
        %s141 = ssub.s32 %s9, 1
      $region12: #{encoder_forward.18} parent=5 // pred_fallthru
        _
      %p142 = scmp.lt.s32.totalorder %s9, 4
      // Predicated region
      $region13: #{encoder_forward.18} parent=5 // pred_check
        %p143 = pneg %p142
      $region14: #{encoder_forward.18} parent=5 // pred_check_branch
        %145 = sbr.rel (%p143) target = $region16
      $region15: #{encoder_forward.18} parent=5 // pred_region
        // Predicated region
        $region17: #{encoder_forward.18} parent=15 // pred_check
          %p146 = pneg %p41
        $region18: #{encoder_forward.18} parent=15 // pred_check_branch
          %148 = sbr.rel (%p146) target = $region20
        $region19: #{encoder_forward.18} parent=15 // pred_region
          %s149 = smul.u32 2, %s16
          %p150 = scmp.lt.s32.totalorder %s149, 3
          %s151 = scalar_select %p150, %s149, 3
          %s152 = smul.addr %s151, 2
          %s153 = smul.addr %s152, 4
          %s154 = scalar_lea.vmem %s0, %s153
          %s155 = smul.u32 2, %s16
        $region20: #{encoder_forward.18} parent=15 // pred_fallthru
          _
        // Predicated region
        $region21: #{encoder_forward.18} parent=15 // pred_check
          %p156 = pneg %p67
        $region22: #{encoder_forward.18} parent=15 // pred_check_branch
          %158 = sbr.rel (%p156) target = $region24
        $region23: #{encoder_forward.18} parent=15 // pred_region
          %s159 = sand.u32 %s57, 1
          %s160 = sand.u32 %s57, 1
          %s161 = smul.addr %s160, 1024
          %s162 = scalar_lea.vmem [#allocation2], %s161
          %s163 = smul.u32 8, %s17
          %s164 = smul.addr %s163, 4
          %s165 = scalar_lea.vmem %s1, %s164
          // Predicated region
          $region25: #{encoder_forward.18} parent=23 // pred_check
            _
          $region26: #{encoder_forward.18} parent=23 // pred_check_branch
            %167 = sbr.rel (0) target = $region28
          $region27: #{encoder_forward.18} parent=23 // pred_region
            // Predicated region
            $region29: #{encoder_forward.18} parent=27 // pred_check
              _
            $region30: #{encoder_forward.18} parent=27 // pred_check_branch
              %169 = sbr.rel (0) target = $region32
            $region31: #{encoder_forward.18} parent=27 // pred_region
              loop: start=0, step=1, limit=1
              $region33: #{encoder_forward.18} parent=31 // loop_pre_header
                _
              $region34: #{encoder_forward.18} parent=31 // loop_header
                %s171 = sphi 0, %s175
                %p172 = scmp.ge.s32.totalorder %s171, 1
                %s176 = sphi %s165, %s165
                %s177 = sphi %s162, %s162
              $region35: #{encoder_forward.18} parent=31 // loop_header_branch
                %174 = sbr.rel (%p172) target = $region39
              $region36: #{encoder_forward.18} parent=31 // loop_body
                %v178 = vld [vmem:[%s176] sm:$0xff]
                %179 = vst [vmem:[%s177] sm:$0xff] %v178
                %v180 = vld [vmem:[%s176 + $0x8] sm:$0xff]
                %181 = vst [vmem:[%s177 + $0x8] sm:$0xff] %v180
                %v182 = vld [vmem:[%s176 + $0x10] sm:$0xff]
                %183 = vst [vmem:[%s177 + $0x10] sm:$0xff] %v182
                %v184 = vld [vmem:[%s176 + $0x18] sm:$0xff]
                %185 = vst [vmem:[%s177 + $0x18] sm:$0xff] %v184
                %v186 = vld [vmem:[%s176 + $0x40] sm:$0xff]
                %187 = vst [vmem:[%s177 + $0x20] sm:$0xff] %v186
                %v188 = vld [vmem:[%s176 + $0x48] sm:$0xff]
                %189 = vst [vmem:[%s177 + $0x28] sm:$0xff] %v188
                %v190 = vld [vmem:[%s176 + $0x50] sm:$0xff]
                %191 = vst [vmem:[%s177 + $0x30] sm:$0xff] %v190
                %v192 = vld [vmem:[%s176 + $0x58] sm:$0xff]
                %193 = vst [vmem:[%s177 + $0x38] sm:$0xff] %v192
                %v194 = vld [vmem:[%s176 + $0x80] sm:$0xff]
                %195 = vst [vmem:[%s177 + $0x40] sm:$0xff] %v194
                %v196 = vld [vmem:[%s176 + $0x88] sm:$0xff]
                %197 = vst [vmem:[%s177 + $0x48] sm:$0xff] %v196
                %v198 = vld [vmem:[%s176 + $0x90] sm:$0xff]
                %199 = vst [vmem:[%s177 + $0x50] sm:$0xff] %v198
                %v200 = vld [vmem:[%s176 + $0x98] sm:$0xff]
                %201 = vst [vmem:[%s177 + $0x58] sm:$0xff] %v200
                %v202 = vld [vmem:[%s176 + $0xc0] sm:$0xff]
                %203 = vst [vmem:[%s177 + $0x60] sm:$0xff] %v202
                %v204 = vld [vmem:[%s176 + $0xc8] sm:$0xff]
                %205 = vst [vmem:[%s177 + $0x68] sm:$0xff] %v204
                %v206 = vld [vmem:[%s176 + $0xd0] sm:$0xff]
                %207 = vst [vmem:[%s177 + $0x70] sm:$0xff] %v206
                %v208 = vld [vmem:[%s176 + $0xd8] sm:$0xff]
                %209 = vst [vmem:[%s177 + $0x78] sm:$0xff] %v208
                %v210 = vld [vmem:[%s176 + $0x100] sm:$0xff]
                %211 = vst [vmem:[%s177 + $0x80] sm:$0xff] %v210
                %v212 = vld [vmem:[%s176 + $0x108] sm:$0xff]
                %213 = vst [vmem:[%s177 + $0x88] sm:$0xff] %v212
                %v214 = vld [vmem:[%s176 + $0x110] sm:$0xff]
                %215 = vst [vmem:[%s177 + $0x90] sm:$0xff] %v214
                %v216 = vld [vmem:[%s176 + $0x118] sm:$0xff]
                %217 = vst [vmem:[%s177 + $0x98] sm:$0xff] %v216
                %v218 = vld [vmem:[%s176 + $0x140] sm:$0xff]
                %219 = vst [vmem:[%s177 + $0xa0] sm:$0xff] %v218
                %v220 = vld [vmem:[%s176 + $0x148] sm:$0xff]
                %221 = vst [vmem:[%s177 + $0xa8] sm:$0xff] %v220
                %v222 = vld [vmem:[%s176 + $0x150] sm:$0xff]
                %223 = vst [vmem:[%s177 + $0xb0] sm:$0xff] %v222
                %v224 = vld [vmem:[%s176 + $0x158] sm:$0xff]
                %225 = vst [vmem:[%s177 + $0xb8] sm:$0xff] %v224
                %v226 = vld [vmem:[%s176 + $0x180] sm:$0xff]
                %227 = vst [vmem:[%s177 + $0xc0] sm:$0xff] %v226
                %v228 = vld [vmem:[%s176 + $0x188] sm:$0xff]
                %229 = vst [vmem:[%s177 + $0xc8] sm:$0xff] %v228
                %v230 = vld [vmem:[%s176 + $0x190] sm:$0xff]
                %231 = vst [vmem:[%s177 + $0xd0] sm:$0xff] %v230
                %v232 = vld [vmem:[%s176 + $0x198] sm:$0xff]
                %233 = vst [vmem:[%s177 + $0xd8] sm:$0xff] %v232
                %v234 = vld [vmem:[%s176 + $0x1c0] sm:$0xff]
                %235 = vst [vmem:[%s177 + $0xe0] sm:$0xff] %v234
                %v236 = vld [vmem:[%s176 + $0x1c8] sm:$0xff]
                %237 = vst [vmem:[%s177 + $0xe8] sm:$0xff] %v236
                %v238 = vld [vmem:[%s176 + $0x1d0] sm:$0xff]
                %239 = vst [vmem:[%s177 + $0xf0] sm:$0xff] %v238
                %v240 = vld [vmem:[%s176 + $0x1d8] sm:$0xff]
                %241 = vst [vmem:[%s177 + $0xf8] sm:$0xff] %v240
                %v242 = vld [vmem:[%s176 + $0x200] sm:$0xff]
                %243 = vst [vmem:[%s177 + $0x100] sm:$0xff] %v242
                %v244 = vld [vmem:[%s176 + $0x208] sm:$0xff]
                %245 = vst [vmem:[%s177 + $0x108] sm:$0xff] %v244
                %v246 = vld [vmem:[%s176 + $0x210] sm:$0xff]
                %247 = vst [vmem:[%s177 + $0x110] sm:$0xff] %v246
                %v248 = vld [vmem:[%s176 + $0x218] sm:$0xff]
                %249 = vst [vmem:[%s177 + $0x118] sm:$0xff] %v248
                %v250 = vld [vmem:[%s176 + $0x240] sm:$0xff]
                %251 = vst [vmem:[%s177 + $0x120] sm:$0xff] %v250
                %v252 = vld [vmem:[%s176 + $0x248] sm:$0xff]
                %253 = vst [vmem:[%s177 + $0x128] sm:$0xff] %v252
                %v254 = vld [vmem:[%s176 + $0x250] sm:$0xff]
                %255 = vst [vmem:[%s177 + $0x130] sm:$0xff] %v254
                %v256 = vld [vmem:[%s176 + $0x258] sm:$0xff]
                %257 = vst [vmem:[%s177 + $0x138] sm:$0xff] %v256
                %v258 = vld [vmem:[%s176 + $0x280] sm:$0xff]
                %259 = vst [vmem:[%s177 + $0x140] sm:$0xff] %v258
                %v260 = vld [vmem:[%s176 + $0x288] sm:$0xff]
                %261 = vst [vmem:[%s177 + $0x148] sm:$0xff] %v260
                %v262 = vld [vmem:[%s176 + $0x290] sm:$0xff]
                %263 = vst [vmem:[%s177 + $0x150] sm:$0xff] %v262
                %v264 = vld [vmem:[%s176 + $0x298] sm:$0xff]
                %265 = vst [vmem:[%s177 + $0x158] sm:$0xff] %v264
                %v266 = vld [vmem:[%s176 + $0x2c0] sm:$0xff]
                %267 = vst [vmem:[%s177 + $0x160] sm:$0xff] %v266
                %v268 = vld [vmem:[%s176 + $0x2c8] sm:$0xff]
                %269 = vst [vmem:[%s177 + $0x168] sm:$0xff] %v268
                %v270 = vld [vmem:[%s176 + $0x2d0] sm:$0xff]
                %271 = vst [vmem:[%s177 + $0x170] sm:$0xff] %v270
                %v272 = vld [vmem:[%s176 + $0x2d8] sm:$0xff]
                %273 = vst [vmem:[%s177 + $0x178] sm:$0xff] %v272
                %v274 = vld [vmem:[%s176 + $0x300] sm:$0xff]
                %275 = vst [vmem:[%s177 + $0x180] sm:$0xff] %v274
                %v276 = vld [vmem:[%s176 + $0x308] sm:$0xff]
                %277 = vst [vmem:[%s177 + $0x188] sm:$0xff] %v276
                %v278 = vld [vmem:[%s176 + $0x310] sm:$0xff]
                %279 = vst [vmem:[%s177 + $0x190] sm:$0xff] %v278
                %v280 = vld [vmem:[%s176 + $0x318] sm:$0xff]
                %281 = vst [vmem:[%s177 + $0x198] sm:$0xff] %v280
                %v282 = vld [vmem:[%s176 + $0x340] sm:$0xff]
                %283 = vst [vmem:[%s177 + $0x1a0] sm:$0xff] %v282
                %v284 = vld [vmem:[%s176 + $0x348] sm:$0xff]
                %285 = vst [vmem:[%s177 + $0x1a8] sm:$0xff] %v284
                %v286 = vld [vmem:[%s176 + $0x350] sm:$0xff]
                %287 = vst [vmem:[%s177 + $0x1b0] sm:$0xff] %v286
                %v288 = vld [vmem:[%s176 + $0x358] sm:$0xff]
                %289 = vst [vmem:[%s177 + $0x1b8] sm:$0xff] %v288
                %v290 = vld [vmem:[%s176 + $0x380] sm:$0xff]
                %291 = vst [vmem:[%s177 + $0x1c0] sm:$0xff] %v290
                %v292 = vld [vmem:[%s176 + $0x388] sm:$0xff]
                %293 = vst [vmem:[%s177 + $0x1c8] sm:$0xff] %v292
                %v294 = vld [vmem:[%s176 + $0x390] sm:$0xff]
                %295 = vst [vmem:[%s177 + $0x1d0] sm:$0xff] %v294
                %v296 = vld [vmem:[%s176 + $0x398] sm:$0xff]
                %297 = vst [vmem:[%s177 + $0x1d8] sm:$0xff] %v296
                %v298 = vld [vmem:[%s176 + $0x3c0] sm:$0xff]
                %299 = vst [vmem:[%s177 + $0x1e0] sm:$0xff] %v298
                %v300 = vld [vmem:[%s176 + $0x3c8] sm:$0xff]
                %301 = vst [vmem:[%s177 + $0x1e8] sm:$0xff] %v300
                %v302 = vld [vmem:[%s176 + $0x3d0] sm:$0xff]
                %303 = vst [vmem:[%s177 + $0x1f0] sm:$0xff] %v302
                %v304 = vld [vmem:[%s176 + $0x3d8] sm:$0xff]
                %305 = vst [vmem:[%s177 + $0x1f8] sm:$0xff] %v304
                %v306 = vld [vmem:[%s176 + $0x400] sm:$0xff]
                %307 = vst [vmem:[%s177 + $0x200] sm:$0xff] %v306
                %v308 = vld [vmem:[%s176 + $0x408] sm:$0xff]
                %309 = vst [vmem:[%s177 + $0x208] sm:$0xff] %v308
                %v310 = vld [vmem:[%s176 + $0x410] sm:$0xff]
                %311 = vst [vmem:[%s177 + $0x210] sm:$0xff] %v310
                %v312 = vld [vmem:[%s176 + $0x418] sm:$0xff]
                %313 = vst [vmem:[%s177 + $0x218] sm:$0xff] %v312
                %v314 = vld [vmem:[%s176 + $0x440] sm:$0xff]
                %315 = vst [vmem:[%s177 + $0x220] sm:$0xff] %v314
                %v316 = vld [vmem:[%s176 + $0x448] sm:$0xff]
                %317 = vst [vmem:[%s177 + $0x228] sm:$0xff] %v316
                %v318 = vld [vmem:[%s176 + $0x450] sm:$0xff]
                %319 = vst [vmem:[%s177 + $0x230] sm:$0xff] %v318
                %v320 = vld [vmem:[%s176 + $0x458] sm:$0xff]
                %321 = vst [vmem:[%s177 + $0x238] sm:$0xff] %v320
                %v322 = vld [vmem:[%s176 + $0x480] sm:$0xff]
                %323 = vst [vmem:[%s177 + $0x240] sm:$0xff] %v322
                %v324 = vld [vmem:[%s176 + $0x488] sm:$0xff]
                %325 = vst [vmem:[%s177 + $0x248] sm:$0xff] %v324
                %v326 = vld [vmem:[%s176 + $0x490] sm:$0xff]
                %327 = vst [vmem:[%s177 + $0x250] sm:$0xff] %v326
                %v328 = vld [vmem:[%s176 + $0x498] sm:$0xff]
                %329 = vst [vmem:[%s177 + $0x258] sm:$0xff] %v328
                %v330 = vld [vmem:[%s176 + $0x4c0] sm:$0xff]
                %331 = vst [vmem:[%s177 + $0x260] sm:$0xff] %v330
                %v332 = vld [vmem:[%s176 + $0x4c8] sm:$0xff]
                %333 = vst [vmem:[%s177 + $0x268] sm:$0xff] %v332
                %v334 = vld [vmem:[%s176 + $0x4d0] sm:$0xff]
                %335 = vst [vmem:[%s177 + $0x270] sm:$0xff] %v334
                %v336 = vld [vmem:[%s176 + $0x4d8] sm:$0xff]
                %337 = vst [vmem:[%s177 + $0x278] sm:$0xff] %v336
                %v338 = vld [vmem:[%s176 + $0x500] sm:$0xff]
                %339 = vst [vmem:[%s177 + $0x280] sm:$0xff] %v338
                %v340 = vld [vmem:[%s176 + $0x508] sm:$0xff]
                %341 = vst [vmem:[%s177 + $0x288] sm:$0xff] %v340
                %v342 = vld [vmem:[%s176 + $0x510] sm:$0xff]
                %343 = vst [vmem:[%s177 + $0x290] sm:$0xff] %v342
                %v344 = vld [vmem:[%s176 + $0x518] sm:$0xff]
                %345 = vst [vmem:[%s177 + $0x298] sm:$0xff] %v344
                %v346 = vld [vmem:[%s176 + $0x540] sm:$0xff]
                %347 = vst [vmem:[%s177 + $0x2a0] sm:$0xff] %v346
                %v348 = vld [vmem:[%s176 + $0x548] sm:$0xff]
                %349 = vst [vmem:[%s177 + $0x2a8] sm:$0xff] %v348
                %v350 = vld [vmem:[%s176 + $0x550] sm:$0xff]
                %351 = vst [vmem:[%s177 + $0x2b0] sm:$0xff] %v350
                %v352 = vld [vmem:[%s176 + $0x558] sm:$0xff]
                %353 = vst [vmem:[%s177 + $0x2b8] sm:$0xff] %v352
                %v354 = vld [vmem:[%s176 + $0x580] sm:$0xff]
                %355 = vst [vmem:[%s177 + $0x2c0] sm:$0xff] %v354
                %v356 = vld [vmem:[%s176 + $0x588] sm:$0xff]
                %357 = vst [vmem:[%s177 + $0x2c8] sm:$0xff] %v356
                %v358 = vld [vmem:[%s176 + $0x590] sm:$0xff]
                %359 = vst [vmem:[%s177 + $0x2d0] sm:$0xff] %v358
                %v360 = vld [vmem:[%s176 + $0x598] sm:$0xff]
                %361 = vst [vmem:[%s177 + $0x2d8] sm:$0xff] %v360
                %v362 = vld [vmem:[%s176 + $0x5c0] sm:$0xff]
                %363 = vst [vmem:[%s177 + $0x2e0] sm:$0xff] %v362
                %v364 = vld [vmem:[%s176 + $0x5c8] sm:$0xff]
                %365 = vst [vmem:[%s177 + $0x2e8] sm:$0xff] %v364
                %v366 = vld [vmem:[%s176 + $0x5d0] sm:$0xff]
                %367 = vst [vmem:[%s177 + $0x2f0] sm:$0xff] %v366
                %v368 = vld [vmem:[%s176 + $0x5d8] sm:$0xff]
                %369 = vst [vmem:[%s177 + $0x2f8] sm:$0xff] %v368
                %v370 = vld [vmem:[%s176 + $0x600] sm:$0xff]
                %371 = vst [vmem:[%s177 + $0x300] sm:$0xff] %v370
                %v372 = vld [vmem:[%s176 + $0x608] sm:$0xff]
                %373 = vst [vmem:[%s177 + $0x308] sm:$0xff] %v372
                %v374 = vld [vmem:[%s176 + $0x610] sm:$0xff]
                %375 = vst [vmem:[%s177 + $0x310] sm:$0xff] %v374
                %v376 = vld [vmem:[%s176 + $0x618] sm:$0xff]
                %377 = vst [vmem:[%s177 + $0x318] sm:$0xff] %v376
                %v378 = vld [vmem:[%s176 + $0x640] sm:$0xff]
                %379 = vst [vmem:[%s177 + $0x320] sm:$0xff] %v378
                %v380 = vld [vmem:[%s176 + $0x648] sm:$0xff]
                %381 = vst [vmem:[%s177 + $0x328] sm:$0xff] %v380
                %v382 = vld [vmem:[%s176 + $0x650] sm:$0xff]
                %383 = vst [vmem:[%s177 + $0x330] sm:$0xff] %v382
                %v384 = vld [vmem:[%s176 + $0x658] sm:$0xff]
                %385 = vst [vmem:[%s177 + $0x338] sm:$0xff] %v384
                %v386 = vld [vmem:[%s176 + $0x680] sm:$0xff]
                %387 = vst [vmem:[%s177 + $0x340] sm:$0xff] %v386
                %v388 = vld [vmem:[%s176 + $0x688] sm:$0xff]
                %389 = vst [vmem:[%s177 + $0x348] sm:$0xff] %v388
                %v390 = vld [vmem:[%s176 + $0x690] sm:$0xff]
                %391 = vst [vmem:[%s177 + $0x350] sm:$0xff] %v390
                %v392 = vld [vmem:[%s176 + $0x698] sm:$0xff]
                %393 = vst [vmem:[%s177 + $0x358] sm:$0xff] %v392
                %v394 = vld [vmem:[%s176 + $0x6c0] sm:$0xff]
                %395 = vst [vmem:[%s177 + $0x360] sm:$0xff] %v394
                %v396 = vld [vmem:[%s176 + $0x6c8] sm:$0xff]
                %397 = vst [vmem:[%s177 + $0x368] sm:$0xff] %v396
                %v398 = vld [vmem:[%s176 + $0x6d0] sm:$0xff]
                %399 = vst [vmem:[%s177 + $0x370] sm:$0xff] %v398
                %v400 = vld [vmem:[%s176 + $0x6d8] sm:$0xff]
                %401 = vst [vmem:[%s177 + $0x378] sm:$0xff] %v400
                %v402 = vld [vmem:[%s176 + $0x700] sm:$0xff]
                %403 = vst [vmem:[%s177 + $0x380] sm:$0xff] %v402
                %v404 = vld [vmem:[%s176 + $0x708] sm:$0xff]
                %405 = vst [vmem:[%s177 + $0x388] sm:$0xff] %v404
                %v406 = vld [vmem:[%s176 + $0x710] sm:$0xff]
                %407 = vst [vmem:[%s177 + $0x390] sm:$0xff] %v406
                %v408 = vld [vmem:[%s176 + $0x718] sm:$0xff]
                %409 = vst [vmem:[%s177 + $0x398] sm:$0xff] %v408
                %v410 = vld [vmem:[%s176 + $0x740] sm:$0xff]
                %411 = vst [vmem:[%s177 + $0x3a0] sm:$0xff] %v410
                %v412 = vld [vmem:[%s176 + $0x748] sm:$0xff]
                %413 = vst [vmem:[%s177 + $0x3a8] sm:$0xff] %v412
                %v414 = vld [vmem:[%s176 + $0x750] sm:$0xff]
                %415 = vst [vmem:[%s177 + $0x3b0] sm:$0xff] %v414
                %v416 = vld [vmem:[%s176 + $0x758] sm:$0xff]
                %417 = vst [vmem:[%s177 + $0x3b8] sm:$0xff] %v416
                %v418 = vld [vmem:[%s176 + $0x780] sm:$0xff]
                %419 = vst [vmem:[%s177 + $0x3c0] sm:$0xff] %v418
                %v420 = vld [vmem:[%s176 + $0x788] sm:$0xff]
                %421 = vst [vmem:[%s177 + $0x3c8] sm:$0xff] %v420
                %v422 = vld [vmem:[%s176 + $0x790] sm:$0xff]
                %423 = vst [vmem:[%s177 + $0x3d0] sm:$0xff] %v422
                %v424 = vld [vmem:[%s176 + $0x798] sm:$0xff]
                %425 = vst [vmem:[%s177 + $0x3d8] sm:$0xff] %v424
                %v426 = vld [vmem:[%s176 + $0x7c0] sm:$0xff]
                %427 = vst [vmem:[%s177 + $0x3e0] sm:$0xff] %v426
                %v428 = vld [vmem:[%s176 + $0x7c8] sm:$0xff]
                %429 = vst [vmem:[%s177 + $0x3e8] sm:$0xff] %v428
                %v430 = vld [vmem:[%s176 + $0x7d0] sm:$0xff]
                %431 = vst [vmem:[%s177 + $0x3f0] sm:$0xff] %v430
                %v432 = vld [vmem:[%s176 + $0x7d8] sm:$0xff]
                %433 = vst [vmem:[%s177 + $0x3f8] sm:$0xff] %v432
              $region37: #{encoder_forward.18} parent=31 // loop_footer
                %s175 = sadd.s32 1, %s171
              $region38: #{encoder_forward.18} parent=31 // loop_footer_branch
                %170 = sbr.rel target = $region34
              $region39: #{encoder_forward.18} parent=31 // loop_exit
                _
            $region32: #{encoder_forward.18} parent=27 // pred_fallthru
              _
            // Predicated region
            $region40: #{encoder_forward.18} parent=27 // pred_check
              _
            $region41: #{encoder_forward.18} parent=27 // pred_check_branch
              %435 = sbr.rel target = $region43
            $region42: #{encoder_forward.18} parent=27 // pred_region
              _
            $region43: #{encoder_forward.18} parent=27 // pred_fallthru
              _
          $region28: #{encoder_forward.18} parent=23 // pred_fallthru
            _
          %436 = vnop
        $region24: #{encoder_forward.18} parent=15 // pred_fallthru
          _
        // Predicated region
        $region44: #{encoder_forward.18} parent=15 // pred_check
          %p437 = pneg %p93
        $region45: #{encoder_forward.18} parent=15 // pred_check_branch
          %439 = sbr.rel (%p437) target = $region47
        $region46: #{encoder_forward.18} parent=15 // pred_region
          %s440 = smul.u32 8, %s17
          %p441 = scmp.lt.s32.totalorder %s440, 15
          %s442 = scalar_select %p441, %s440, 15
          %s443 = scalar_lea.vmem %s2, %s442
          %s444 = smul.u32 8, %s17
        $region47: #{encoder_forward.18} parent=15 // pred_fallthru
          _
      $region16: #{encoder_forward.18} parent=5 // pred_fallthru
        _
      %p445 = scmp.le.s32.totalorder 1, %s9
      %p446 = scmp.lt.s32.totalorder %s9, 5
      %p447 = pnand %p445, %p446
      %p448 = pneg %p447
      // Predicated region
      $region48: #{encoder_forward.18} parent=5 // pred_check
        _
      $region49: #{encoder_forward.18} parent=5 // pred_check_branch
        %450 = sbr.rel (%p447) target = $region51
      $region50: #{encoder_forward.18} parent=5 // pred_region
        %s451 = ssub.s32 %s9, 1
        %s452 = sand.u32 %s60, 1
        %s453 = sand.u32 %s60, 1
        %s454 = smul.addr %s453, 1024
        %s455 = scalar_lea.vmem [#allocation2], %s454
        // Predicated region
        $region52: #{encoder_forward.18} parent=50 // pred_check
          %p456 = pneg %p73
        $region53: #{encoder_forward.18} parent=50 // pred_check_branch
          %458 = sbr.rel (%p456) target = $region55
        $region54: #{encoder_forward.18} parent=50 // pred_region
          _
        $region55: #{encoder_forward.18} parent=50 // pred_fallthru
          _
        %s459 = smul.u32 2, %s18
        %p460 = scmp.lt.s32.totalorder %s459, 3
        %s461 = scalar_select %p460, %s459, 3
        %s462 = smul.addr %s461, 2
        %s463 = smul.addr %s462, 4
        %s464 = scalar_lea.vmem %s0, %s463
        %p465 = pneg %p47
        %p466 = pneg %p44
        %s467 = sand.u32 %s60, 1
        %s468 = sand.u32 %s60, 1
        %s469 = smul.addr %s468, 1024
        %s470 = scalar_lea.vmem [#allocation2], %s469
        %p471 = pneg %p73
        %p472 = pneg %p70
        %s473 = smul.u32 8, %s19
        %p474 = scmp.lt.s32.totalorder %s473, 15
        %s475 = scalar_select %p474, %s473, 15
        %s476 = scalar_lea.vmem %s2, %s475
        %p477 = pneg %p99
        %p478 = pneg %p96
        %p479 = pneg %p127
        %p480 = pneg %p124
        %s481 = sand.u32 %s114, 1
        %s482 = sand.u32 %s114, 1
        %s483 = smul.addr %s482, 64
        %s484 = scalar_lea.vmem [#allocation3], %s483
        %s485 = smul.u32 2, %s18
        %p486 = scmp.lt.s32.totalorder %s485, 3
        %s487 = scalar_select %p486, %s485, 3
        %s488 = smul.addr %s487, 2
        %s489 = smul.addr %s488, 4
        %s490 = scalar_lea.vmem %s0, %s489
        %s491 = smul.u32 2, %s18
        %s492 = smul.u32 8, %s19
        %s493 = smul.u32 8, %s19
        %p494 = scmp.lt.s32.totalorder %s493, 15
        %s495 = scalar_select %p494, %s493, 15
        %s496 = scalar_lea.vmem %s2, %s495
        %s497 = smul.u32 8, %s19
        %s498 = smul.u32 2, %s18
        %s499 = smul.u32 8, %s19
        %v500 = vld [vmem:[%s490] sm:$0xff]
        %v501 = vld [vmem:[%s490 + $0x8] sm:$0xff]
        %v502 = vld [vmem:[%s455] sm:$0xff]
        %v503 = vld [vmem:[%s455 + $0x8] sm:$0xff]
        %v504 = vld [vmem:[%s455 + $0x10] sm:$0xff]
        %v505 = vld [vmem:[%s455 + $0x18] sm:$0xff]
        %v506 = vld [vmem:[%s455 + $0x20] sm:$0xff]
        %v507 = vld [vmem:[%s455 + $0x28] sm:$0xff]
        %v508 = vld [vmem:[%s455 + $0x30] sm:$0xff]
        %v509 = vld [vmem:[%s455 + $0x38] sm:$0xff]
        %v510 = vld [vmem:[%s455 + $0x40] sm:$0xff]
        %v511 = vld [vmem:[%s455 + $0x48] sm:$0xff]
        %v512 = vld [vmem:[%s455 + $0x50] sm:$0xff]
        %v513 = vld [vmem:[%s455 + $0x58] sm:$0xff]
        %v514 = vld [vmem:[%s455 + $0x60] sm:$0xff]
        %v515 = vld [vmem:[%s455 + $0x68] sm:$0xff]
        %v516 = vld [vmem:[%s455 + $0x70] sm:$0xff]
        %v517 = vld [vmem:[%s455 + $0x78] sm:$0xff]
        %v518 = vld [vmem:[%s455 + $0x80] sm:$0xff]
        %v519 = vld [vmem:[%s455 + $0x88] sm:$0xff]
        %v520 = vld [vmem:[%s455 + $0x90] sm:$0xff]
        %v521 = vld [vmem:[%s455 + $0x98] sm:$0xff]
        %v522 = vld [vmem:[%s455 + $0xa0] sm:$0xff]
        %v523 = vld [vmem:[%s455 + $0xa8] sm:$0xff]
        %v524 = vld [vmem:[%s455 + $0xb0] sm:$0xff]
        %v525 = vld [vmem:[%s455 + $0xb8] sm:$0xff]
        %v526 = vld [vmem:[%s455 + $0xc0] sm:$0xff]
        %v527 = vld [vmem:[%s455 + $0xc8] sm:$0xff]
        %v528 = vld [vmem:[%s455 + $0xd0] sm:$0xff]
        %v529 = vld [vmem:[%s455 + $0xd8] sm:$0xff]
        %v530 = vld [vmem:[%s455 + $0xe0] sm:$0xff]
        %v531 = vld [vmem:[%s455 + $0xe8] sm:$0xff]
        %v532 = vld [vmem:[%s455 + $0xf0] sm:$0xff]
        %v533 = vld [vmem:[%s455 + $0xf8] sm:$0xff]
        %v534 = vld [vmem:[%s455 + $0x100] sm:$0xff]
        %v535 = vld [vmem:[%s455 + $0x108] sm:$0xff]
        %v536 = vld [vmem:[%s455 + $0x110] sm:$0xff]
        %v537 = vld [vmem:[%s455 + $0x118] sm:$0xff]
        %v538 = vld [vmem:[%s455 + $0x120] sm:$0xff]
        %v539 = vld [vmem:[%s455 + $0x128] sm:$0xff]
        %v540 = vld [vmem:[%s455 + $0x130] sm:$0xff]
        %v541 = vld [vmem:[%s455 + $0x138] sm:$0xff]
        %v542 = vld [vmem:[%s455 + $0x140] sm:$0xff]
        %v543 = vld [vmem:[%s455 + $0x148] sm:$0xff]
        %v544 = vld [vmem:[%s455 + $0x150] sm:$0xff]
        %v545 = vld [vmem:[%s455 + $0x158] sm:$0xff]
        %v546 = vld [vmem:[%s455 + $0x160] sm:$0xff]
        %v547 = vld [vmem:[%s455 + $0x168] sm:$0xff]
        %v548 = vld [vmem:[%s455 + $0x170] sm:$0xff]
        %v549 = vld [vmem:[%s455 + $0x178] sm:$0xff]
        %v550 = vld [vmem:[%s455 + $0x180] sm:$0xff]
        %v551 = vld [vmem:[%s455 + $0x188] sm:$0xff]
        %v552 = vld [vmem:[%s455 + $0x190] sm:$0xff]
        %v553 = vld [vmem:[%s455 + $0x198] sm:$0xff]
        %v554 = vld [vmem:[%s455 + $0x1a0] sm:$0xff]
        %v555 = vld [vmem:[%s455 + $0x1a8] sm:$0xff]
        %v556 = vld [vmem:[%s455 + $0x1b0] sm:$0xff]
        %v557 = vld [vmem:[%s455 + $0x1b8] sm:$0xff]
        %v558 = vld [vmem:[%s455 + $0x1c0] sm:$0xff]
        %v559 = vld [vmem:[%s455 + $0x1c8] sm:$0xff]
        %v560 = vld [vmem:[%s455 + $0x1d0] sm:$0xff]
        %v561 = vld [vmem:[%s455 + $0x1d8] sm:$0xff]
        %v562 = vld [vmem:[%s455 + $0x1e0] sm:$0xff]
        %v563 = vld [vmem:[%s455 + $0x1e8] sm:$0xff]
        %v564 = vld [vmem:[%s455 + $0x1f0] sm:$0xff]
        %v565 = vld [vmem:[%s455 + $0x1f8] sm:$0xff]
        %v566 = vld [vmem:[%s455 + $0x200] sm:$0xff]
        %v567 = vld [vmem:[%s455 + $0x208] sm:$0xff]
        %v568 = vld [vmem:[%s455 + $0x210] sm:$0xff]
        %v569 = vld [vmem:[%s455 + $0x218] sm:$0xff]
        %v570 = vld [vmem:[%s455 + $0x220] sm:$0xff]
        %v571 = vld [vmem:[%s455 + $0x228] sm:$0xff]
        %v572 = vld [vmem:[%s455 + $0x230] sm:$0xff]
        %v573 = vld [vmem:[%s455 + $0x238] sm:$0xff]
        %v574 = vld [vmem:[%s455 + $0x240] sm:$0xff]
        %v575 = vld [vmem:[%s455 + $0x248] sm:$0xff]
        %v576 = vld [vmem:[%s455 + $0x250] sm:$0xff]
        %v577 = vld [vmem:[%s455 + $0x258] sm:$0xff]
        %v578 = vld [vmem:[%s455 + $0x260] sm:$0xff]
        %v579 = vld [vmem:[%s455 + $0x268] sm:$0xff]
        %v580 = vld [vmem:[%s455 + $0x270] sm:$0xff]
        %v581 = vld [vmem:[%s455 + $0x278] sm:$0xff]
        %v582 = vld [vmem:[%s455 + $0x280] sm:$0xff]
        %v583 = vld [vmem:[%s455 + $0x288] sm:$0xff]
        %v584 = vld [vmem:[%s455 + $0x290] sm:$0xff]
        %v585 = vld [vmem:[%s455 + $0x298] sm:$0xff]
        %v586 = vld [vmem:[%s455 + $0x2a0] sm:$0xff]
        %v587 = vld [vmem:[%s455 + $0x2a8] sm:$0xff]
        %v588 = vld [vmem:[%s455 + $0x2b0] sm:$0xff]
        %v589 = vld [vmem:[%s455 + $0x2b8] sm:$0xff]
        %v590 = vld [vmem:[%s455 + $0x2c0] sm:$0xff]
        %v591 = vld [vmem:[%s455 + $0x2c8] sm:$0xff]
        %v592 = vld [vmem:[%s455 + $0x2d0] sm:$0xff]
        %v593 = vld [vmem:[%s455 + $0x2d8] sm:$0xff]
        %v594 = vld [vmem:[%s455 + $0x2e0] sm:$0xff]
        %v595 = vld [vmem:[%s455 + $0x2e8] sm:$0xff]
        %v596 = vld [vmem:[%s455 + $0x2f0] sm:$0xff]
        %v597 = vld [vmem:[%s455 + $0x2f8] sm:$0xff]
        %v598 = vld [vmem:[%s455 + $0x300] sm:$0xff]
        %v599 = vld [vmem:[%s455 + $0x308] sm:$0xff]
        %v600 = vld [vmem:[%s455 + $0x310] sm:$0xff]
        %v601 = vld [vmem:[%s455 + $0x318] sm:$0xff]
        %v602 = vld [vmem:[%s455 + $0x320] sm:$0xff]
        %v603 = vld [vmem:[%s455 + $0x328] sm:$0xff]
        %v604 = vld [vmem:[%s455 + $0x330] sm:$0xff]
        %v605 = vld [vmem:[%s455 + $0x338] sm:$0xff]
        %v606 = vld [vmem:[%s455 + $0x340] sm:$0xff]
        %v607 = vld [vmem:[%s455 + $0x348] sm:$0xff]
        %v608 = vld [vmem:[%s455 + $0x350] sm:$0xff]
        %v609 = vld [vmem:[%s455 + $0x358] sm:$0xff]
        %v610 = vld [vmem:[%s455 + $0x360] sm:$0xff]
        %v611 = vld [vmem:[%s455 + $0x368] sm:$0xff]
        %v612 = vld [vmem:[%s455 + $0x370] sm:$0xff]
        %v613 = vld [vmem:[%s455 + $0x378] sm:$0xff]
        %v614 = vld [vmem:[%s455 + $0x380] sm:$0xff]
        %v615 = vld [vmem:[%s455 + $0x388] sm:$0xff]
        %v616 = vld [vmem:[%s455 + $0x390] sm:$0xff]
        %v617 = vld [vmem:[%s455 + $0x398] sm:$0xff]
        %v618 = vld [vmem:[%s455 + $0x3a0] sm:$0xff]
        %v619 = vld [vmem:[%s455 + $0x3a8] sm:$0xff]
        %v620 = vld [vmem:[%s455 + $0x3b0] sm:$0xff]
        %v621 = vld [vmem:[%s455 + $0x3b8] sm:$0xff]
        %v622 = vld [vmem:[%s455 + $0x3c0] sm:$0xff]
        %v623 = vld [vmem:[%s455 + $0x3c8] sm:$0xff]
        %v624 = vld [vmem:[%s455 + $0x3d0] sm:$0xff]
        %v625 = vld [vmem:[%s455 + $0x3d8] sm:$0xff]
        %v626 = vld [vmem:[%s455 + $0x3e0] sm:$0xff]
        %v627 = vld [vmem:[%s455 + $0x3e8] sm:$0xff]
        %v628 = vld [vmem:[%s455 + $0x3f0] sm:$0xff]
        %v629 = vld [vmem:[%s455 + $0x3f8] sm:$0xff]
        %v630 = vld [vmem:[%s496] sm:$0xff]
        %v632 = vperm.slane %v630, 0
        %v633 = vperm.slane %v630, 1
        %v634 = vperm.slane %v630, 2
        %v635 = vperm.slane %v630, 3
        %v636 = vperm.slane %v630, 4
        %v637 = vperm.slane %v630, 5
        %v638 = vperm.slane %v630, 6
        %v639 = vperm.slane %v630, 7
        %v650 = vunpack.c.l.b16 %v500
        %v651 = vunpack.c.h.b16 %v500
        %v652 = vunpack.c.l.b16 %v501
        %v653 = vunpack.c.h.b16 %v501
        %v654 = vpack.c.b16 %v652, %v650
        %v655 = vpack.c.b16 %v653, %v651
        %v786 = vunpack.c.l.b16 %v502
        %v787 = vunpack.c.h.b16 %v502
        %v788 = vunpack.c.l.b16 %v503
        %v789 = vunpack.c.h.b16 %v503
        %v790 = vunpack.c.l.b16 %v504
        %v791 = vunpack.c.h.b16 %v504
        %v792 = vunpack.c.l.b16 %v505
        %v793 = vunpack.c.h.b16 %v505
        %v794 = vunpack.c.l.b16 %v506
        %v795 = vunpack.c.h.b16 %v506
        %v796 = vunpack.c.l.b16 %v507
        %v797 = vunpack.c.h.b16 %v507
        %v798 = vunpack.c.l.b16 %v508
        %v799 = vunpack.c.h.b16 %v508
        %v800 = vunpack.c.l.b16 %v509
        %v801 = vunpack.c.h.b16 %v509
        %v802 = vunpack.c.l.b16 %v510
        %v803 = vunpack.c.h.b16 %v510
        %v804 = vunpack.c.l.b16 %v511
        %v805 = vunpack.c.h.b16 %v511
        %v806 = vunpack.c.l.b16 %v512
        %v807 = vunpack.c.h.b16 %v512
        %v808 = vunpack.c.l.b16 %v513
        %v809 = vunpack.c.h.b16 %v513
        %v810 = vunpack.c.l.b16 %v514
        %v811 = vunpack.c.h.b16 %v514
        %v812 = vunpack.c.l.b16 %v515
        %v813 = vunpack.c.h.b16 %v515
        %v814 = vunpack.c.l.b16 %v516
        %v815 = vunpack.c.h.b16 %v516
        %v816 = vunpack.c.l.b16 %v517
        %v817 = vunpack.c.h.b16 %v517
        %v818 = vunpack.c.l.b16 %v518
        %v819 = vunpack.c.h.b16 %v518
        %v820 = vunpack.c.l.b16 %v519
        %v821 = vunpack.c.h.b16 %v519
        %v822 = vunpack.c.l.b16 %v520
        %v823 = vunpack.c.h.b16 %v520
        %v824 = vunpack.c.l.b16 %v521
        %v825 = vunpack.c.h.b16 %v521
        %v826 = vunpack.c.l.b16 %v522
        %v827 = vunpack.c.h.b16 %v522
        %v828 = vunpack.c.l.b16 %v523
        %v829 = vunpack.c.h.b16 %v523
        %v830 = vunpack.c.l.b16 %v524
        %v831 = vunpack.c.h.b16 %v524
        %v832 = vunpack.c.l.b16 %v525
        %v833 = vunpack.c.h.b16 %v525
        %v834 = vunpack.c.l.b16 %v526
        %v835 = vunpack.c.h.b16 %v526
        %v836 = vunpack.c.l.b16 %v527
        %v837 = vunpack.c.h.b16 %v527
        %v838 = vunpack.c.l.b16 %v528
        %v839 = vunpack.c.h.b16 %v528
        %v840 = vunpack.c.l.b16 %v529
        %v841 = vunpack.c.h.b16 %v529
        %v842 = vunpack.c.l.b16 %v530
        %v843 = vunpack.c.h.b16 %v530
        %v844 = vunpack.c.l.b16 %v531
        %v845 = vunpack.c.h.b16 %v531
        %v846 = vunpack.c.l.b16 %v532
        %v847 = vunpack.c.h.b16 %v532
        %v848 = vunpack.c.l.b16 %v533
        %v849 = vunpack.c.h.b16 %v533
        %v850 = vunpack.c.l.b16 %v534
        %v851 = vunpack.c.h.b16 %v534
        %v852 = vunpack.c.l.b16 %v535
        %v853 = vunpack.c.h.b16 %v535
        %v854 = vunpack.c.l.b16 %v536
        %v855 = vunpack.c.h.b16 %v536
        %v856 = vunpack.c.l.b16 %v537
        %v857 = vunpack.c.h.b16 %v537
        %v858 = vunpack.c.l.b16 %v538
        %v859 = vunpack.c.h.b16 %v538
        %v860 = vunpack.c.l.b16 %v539
        %v861 = vunpack.c.h.b16 %v539
        %v862 = vunpack.c.l.b16 %v540
        %v863 = vunpack.c.h.b16 %v540
        %v864 = vunpack.c.l.b16 %v541
        %v865 = vunpack.c.h.b16 %v541
        %v866 = vunpack.c.l.b16 %v542
        %v867 = vunpack.c.h.b16 %v542
        %v868 = vunpack.c.l.b16 %v543
        %v869 = vunpack.c.h.b16 %v543
        %v870 = vunpack.c.l.b16 %v544
        %v871 = vunpack.c.h.b16 %v544
        %v872 = vunpack.c.l.b16 %v545
        %v873 = vunpack.c.h.b16 %v545
        %v874 = vunpack.c.l.b16 %v546
        %v875 = vunpack.c.h.b16 %v546
        %v876 = vunpack.c.l.b16 %v547
        %v877 = vunpack.c.h.b16 %v547
        %v878 = vunpack.c.l.b16 %v548
        %v879 = vunpack.c.h.b16 %v548
        %v880 = vunpack.c.l.b16 %v549
        %v881 = vunpack.c.h.b16 %v549
        %v882 = vunpack.c.l.b16 %v550
        %v883 = vunpack.c.h.b16 %v550
        %v884 = vunpack.c.l.b16 %v551
        %v885 = vunpack.c.h.b16 %v551
        %v886 = vunpack.c.l.b16 %v552
        %v887 = vunpack.c.h.b16 %v552
        %v888 = vunpack.c.l.b16 %v553
        %v889 = vunpack.c.h.b16 %v553
        %v890 = vunpack.c.l.b16 %v554
        %v891 = vunpack.c.h.b16 %v554
        %v892 = vunpack.c.l.b16 %v555
        %v893 = vunpack.c.h.b16 %v555
        %v894 = vunpack.c.l.b16 %v556
        %v895 = vunpack.c.h.b16 %v556
        %v896 = vunpack.c.l.b16 %v557
        %v897 = vunpack.c.h.b16 %v557
        %v898 = vunpack.c.l.b16 %v558
        %v899 = vunpack.c.h.b16 %v558
        %v900 = vunpack.c.l.b16 %v559
        %v901 = vunpack.c.h.b16 %v559
        %v902 = vunpack.c.l.b16 %v560
        %v903 = vunpack.c.h.b16 %v560
        %v904 = vunpack.c.l.b16 %v561
        %v905 = vunpack.c.h.b16 %v561
        %v906 = vunpack.c.l.b16 %v562
        %v907 = vunpack.c.h.b16 %v562
        %v908 = vunpack.c.l.b16 %v563
        %v909 = vunpack.c.h.b16 %v563
        %v910 = vunpack.c.l.b16 %v564
        %v911 = vunpack.c.h.b16 %v564
        %v912 = vunpack.c.l.b16 %v565
        %v913 = vunpack.c.h.b16 %v565
        %v914 = vunpack.c.l.b16 %v566
        %v915 = vunpack.c.h.b16 %v566
        %v916 = vunpack.c.l.b16 %v567
        %v917 = vunpack.c.h.b16 %v567
        %v918 = vunpack.c.l.b16 %v568
        %v919 = vunpack.c.h.b16 %v568
        %v920 = vunpack.c.l.b16 %v569
        %v921 = vunpack.c.h.b16 %v569
        %v922 = vunpack.c.l.b16 %v570
        %v923 = vunpack.c.h.b16 %v570
        %v924 = vunpack.c.l.b16 %v571
        %v925 = vunpack.c.h.b16 %v571
        %v926 = vunpack.c.l.b16 %v572
        %v927 = vunpack.c.h.b16 %v572
        %v928 = vunpack.c.l.b16 %v573
        %v929 = vunpack.c.h.b16 %v573
        %v930 = vunpack.c.l.b16 %v574
        %v931 = vunpack.c.h.b16 %v574
        %v932 = vunpack.c.l.b16 %v575
        %v933 = vunpack.c.h.b16 %v575
        %v934 = vunpack.c.l.b16 %v576
        %v935 = vunpack.c.h.b16 %v576
        %v936 = vunpack.c.l.b16 %v577
        %v937 = vunpack.c.h.b16 %v577
        %v938 = vunpack.c.l.b16 %v578
        %v939 = vunpack.c.h.b16 %v578
        %v940 = vunpack.c.l.b16 %v579
        %v941 = vunpack.c.h.b16 %v579
        %v942 = vunpack.c.l.b16 %v580
        %v943 = vunpack.c.h.b16 %v580
        %v944 = vunpack.c.l.b16 %v581
        %v945 = vunpack.c.h.b16 %v581
        %v946 = vunpack.c.l.b16 %v582
        %v947 = vunpack.c.h.b16 %v582
        %v948 = vunpack.c.l.b16 %v583
        %v949 = vunpack.c.h.b16 %v583
        %v950 = vunpack.c.l.b16 %v584
        %v951 = vunpack.c.h.b16 %v584
        %v952 = vunpack.c.l.b16 %v585
        %v953 = vunpack.c.h.b16 %v585
        %v954 = vunpack.c.l.b16 %v586
        %v955 = vunpack.c.h.b16 %v586
        %v956 = vunpack.c.l.b16 %v587
        %v957 = vunpack.c.h.b16 %v587
        %v958 = vunpack.c.l.b16 %v588
        %v959 = vunpack.c.h.b16 %v588
        %v960 = vunpack.c.l.b16 %v589
        %v961 = vunpack.c.h.b16 %v589
        %v962 = vunpack.c.l.b16 %v590
        %v963 = vunpack.c.h.b16 %v590
        %v964 = vunpack.c.l.b16 %v591
        %v965 = vunpack.c.h.b16 %v591
        %v966 = vunpack.c.l.b16 %v592
        %v967 = vunpack.c.h.b16 %v592
        %v968 = vunpack.c.l.b16 %v593
        %v969 = vunpack.c.h.b16 %v593
        %v970 = vunpack.c.l.b16 %v594
        %v971 = vunpack.c.h.b16 %v594
        %v972 = vunpack.c.l.b16 %v595
        %v973 = vunpack.c.h.b16 %v595
        %v974 = vunpack.c.l.b16 %v596
        %v975 = vunpack.c.h.b16 %v596
        %v976 = vunpack.c.l.b16 %v597
        %v977 = vunpack.c.h.b16 %v597
        %v978 = vunpack.c.l.b16 %v598
        %v979 = vunpack.c.h.b16 %v598
        %v980 = vunpack.c.l.b16 %v599
        %v981 = vunpack.c.h.b16 %v599
        %v982 = vunpack.c.l.b16 %v600
        %v983 = vunpack.c.h.b16 %v600
        %v984 = vunpack.c.l.b16 %v601
        %v985 = vunpack.c.h.b16 %v601
        %v986 = vunpack.c.l.b16 %v602
        %v987 = vunpack.c.h.b16 %v602
        %v988 = vunpack.c.l.b16 %v603
        %v989 = vunpack.c.h.b16 %v603
        %v990 = vunpack.c.l.b16 %v604
        %v991 = vunpack.c.h.b16 %v604
        %v992 = vunpack.c.l.b16 %v605
        %v993 = vunpack.c.h.b16 %v605
        %v994 = vunpack.c.l.b16 %v606
        %v995 = vunpack.c.h.b16 %v606
        %v996 = vunpack.c.l.b16 %v607
        %v997 = vunpack.c.h.b16 %v607
        %v998 = vunpack.c.l.b16 %v608
        %v999 = vunpack.c.h.b16 %v608
        %v1000 = vunpack.c.l.b16 %v609
        %v1001 = vunpack.c.h.b16 %v609
        %v1002 = vunpack.c.l.b16 %v610
        %v1003 = vunpack.c.h.b16 %v610
        %v1004 = vunpack.c.l.b16 %v611
        %v1005 = vunpack.c.h.b16 %v611
        %v1006 = vunpack.c.l.b16 %v612
        %v1007 = vunpack.c.h.b16 %v612
        %v1008 = vunpack.c.l.b16 %v613
        %v1009 = vunpack.c.h.b16 %v613
        %v1010 = vunpack.c.l.b16 %v614
        %v1011 = vunpack.c.h.b16 %v614
        %v1012 = vunpack.c.l.b16 %v615
        %v1013 = vunpack.c.h.b16 %v615
        %v1014 = vunpack.c.l.b16 %v616
        %v1015 = vunpack.c.h.b16 %v616
        %v1016 = vunpack.c.l.b16 %v617
        %v1017 = vunpack.c.h.b16 %v617
        %v1018 = vunpack.c.l.b16 %v618
        %v1019 = vunpack.c.h.b16 %v618
        %v1020 = vunpack.c.l.b16 %v619
        %v1021 = vunpack.c.h.b16 %v619
        %v1022 = vunpack.c.l.b16 %v620
        %v1023 = vunpack.c.h.b16 %v620
        %v1024 = vunpack.c.l.b16 %v621
        %v1025 = vunpack.c.h.b16 %v621
        %v1026 = vunpack.c.l.b16 %v622
        %v1027 = vunpack.c.h.b16 %v622
        %v1028 = vunpack.c.l.b16 %v623
        %v1029 = vunpack.c.h.b16 %v623
        %v1030 = vunpack.c.l.b16 %v624
        %v1031 = vunpack.c.h.b16 %v624
        %v1032 = vunpack.c.l.b16 %v625
        %v1033 = vunpack.c.h.b16 %v625
        %v1034 = vunpack.c.l.b16 %v626
        %v1035 = vunpack.c.h.b16 %v626
        %v1036 = vunpack.c.l.b16 %v627
        %v1037 = vunpack.c.h.b16 %v627
        %v1038 = vunpack.c.l.b16 %v628
        %v1039 = vunpack.c.h.b16 %v628
        %v1040 = vunpack.c.l.b16 %v629
        %v1041 = vunpack.c.h.b16 %v629
        %v1042 = vpack.c.b16 %v794, %v786
        %v1043 = vpack.c.b16 %v795, %v787
        %v1044 = vpack.c.b16 %v796, %v788
        %v1045 = vpack.c.b16 %v797, %v789
        %v1046 = vpack.c.b16 %v798, %v790
        %v1047 = vpack.c.b16 %v799, %v791
        %v1048 = vpack.c.b16 %v800, %v792
        %v1049 = vpack.c.b16 %v801, %v793
        %v1050 = vpack.c.b16 %v810, %v802
        %v1051 = vpack.c.b16 %v811, %v803
        %v1052 = vpack.c.b16 %v812, %v804
        %v1053 = vpack.c.b16 %v813, %v805
        %v1054 = vpack.c.b16 %v814, %v806
        %v1055 = vpack.c.b16 %v815, %v807
        %v1056 = vpack.c.b16 %v816, %v808
        %v1057 = vpack.c.b16 %v817, %v809
        %v1058 = vpack.c.b16 %v826, %v818
        %v1059 = vpack.c.b16 %v827, %v819
        %v1060 = vpack.c.b16 %v828, %v820
        %v1061 = vpack.c.b16 %v829, %v821
        %v1062 = vpack.c.b16 %v830, %v822
        %v1063 = vpack.c.b16 %v831, %v823
        %v1064 = vpack.c.b16 %v832, %v824
        %v1065 = vpack.c.b16 %v833, %v825
        %v1066 = vpack.c.b16 %v842, %v834
        %v1067 = vpack.c.b16 %v843, %v835
        %v1068 = vpack.c.b16 %v844, %v836
        %v1069 = vpack.c.b16 %v845, %v837
        %v1070 = vpack.c.b16 %v846, %v838
        %v1071 = vpack.c.b16 %v847, %v839
        %v1072 = vpack.c.b16 %v848, %v840
        %v1073 = vpack.c.b16 %v849, %v841
        %v1074 = vpack.c.b16 %v858, %v850
        %v1075 = vpack.c.b16 %v859, %v851
        %v1076 = vpack.c.b16 %v860, %v852
        %v1077 = vpack.c.b16 %v861, %v853
        %v1078 = vpack.c.b16 %v862, %v854
        %v1079 = vpack.c.b16 %v863, %v855
        %v1080 = vpack.c.b16 %v864, %v856
        %v1081 = vpack.c.b16 %v865, %v857
        %v1082 = vpack.c.b16 %v874, %v866
        %v1083 = vpack.c.b16 %v875, %v867
        %v1084 = vpack.c.b16 %v876, %v868
        %v1085 = vpack.c.b16 %v877, %v869
        %v1086 = vpack.c.b16 %v878, %v870
        %v1087 = vpack.c.b16 %v879, %v871
        %v1088 = vpack.c.b16 %v880, %v872
        %v1089 = vpack.c.b16 %v881, %v873
        %v1090 = vpack.c.b16 %v890, %v882
        %v1091 = vpack.c.b16 %v891, %v883
        %v1092 = vpack.c.b16 %v892, %v884
        %v1093 = vpack.c.b16 %v893, %v885
        %v1094 = vpack.c.b16 %v894, %v886
        %v1095 = vpack.c.b16 %v895, %v887
        %v1096 = vpack.c.b16 %v896, %v888
        %v1097 = vpack.c.b16 %v897, %v889
        %v1098 = vpack.c.b16 %v906, %v898
        %v1099 = vpack.c.b16 %v907, %v899
        %v1100 = vpack.c.b16 %v908, %v900
        %v1101 = vpack.c.b16 %v909, %v901
        %v1102 = vpack.c.b16 %v910, %v902
        %v1103 = vpack.c.b16 %v911, %v903
        %v1104 = vpack.c.b16 %v912, %v904
        %v1105 = vpack.c.b16 %v913, %v905
        %v1106 = vpack.c.b16 %v922, %v914
        %v1107 = vpack.c.b16 %v923, %v915
        %v1108 = vpack.c.b16 %v924, %v916
        %v1109 = vpack.c.b16 %v925, %v917
        %v1110 = vpack.c.b16 %v926, %v918
        %v1111 = vpack.c.b16 %v927, %v919
        %v1112 = vpack.c.b16 %v928, %v920
        %v1113 = vpack.c.b16 %v929, %v921
        %v1114 = vpack.c.b16 %v938, %v930
        %v1115 = vpack.c.b16 %v939, %v931
        %v1116 = vpack.c.b16 %v940, %v932
        %v1117 = vpack.c.b16 %v941, %v933
        %v1118 = vpack.c.b16 %v942, %v934
        %v1119 = vpack.c.b16 %v943, %v935
        %v1120 = vpack.c.b16 %v944, %v936
        %v1121 = vpack.c.b16 %v945, %v937
        %v1122 = vpack.c.b16 %v954, %v946
        %v1123 = vpack.c.b16 %v955, %v947
        %v1124 = vpack.c.b16 %v956, %v948
        %v1125 = vpack.c.b16 %v957, %v949
        %v1126 = vpack.c.b16 %v958, %v950
        %v1127 = vpack.c.b16 %v959, %v951
        %v1128 = vpack.c.b16 %v960, %v952
        %v1129 = vpack.c.b16 %v961, %v953
        %v1130 = vpack.c.b16 %v970, %v962
        %v1131 = vpack.c.b16 %v971, %v963
        %v1132 = vpack.c.b16 %v972, %v964
        %v1133 = vpack.c.b16 %v973, %v965
        %v1134 = vpack.c.b16 %v974, %v966
        %v1135 = vpack.c.b16 %v975, %v967
        %v1136 = vpack.c.b16 %v976, %v968
        %v1137 = vpack.c.b16 %v977, %v969
        %v1138 = vpack.c.b16 %v986, %v978
        %v1139 = vpack.c.b16 %v987, %v979
        %v1140 = vpack.c.b16 %v988, %v980
        %v1141 = vpack.c.b16 %v989, %v981
        %v1142 = vpack.c.b16 %v990, %v982
        %v1143 = vpack.c.b16 %v991, %v983
        %v1144 = vpack.c.b16 %v992, %v984
        %v1145 = vpack.c.b16 %v993, %v985
        %v1146 = vpack.c.b16 %v1002, %v994
        %v1147 = vpack.c.b16 %v1003, %v995
        %v1148 = vpack.c.b16 %v1004, %v996
        %v1149 = vpack.c.b16 %v1005, %v997
        %v1150 = vpack.c.b16 %v1006, %v998
        %v1151 = vpack.c.b16 %v1007, %v999
        %v1152 = vpack.c.b16 %v1008, %v1000
        %v1153 = vpack.c.b16 %v1009, %v1001
        %v1154 = vpack.c.b16 %v1018, %v1010
        %v1155 = vpack.c.b16 %v1019, %v1011
        %v1156 = vpack.c.b16 %v1020, %v1012
        %v1157 = vpack.c.b16 %v1021, %v1013
        %v1158 = vpack.c.b16 %v1022, %v1014
        %v1159 = vpack.c.b16 %v1023, %v1015
        %v1160 = vpack.c.b16 %v1024, %v1016
        %v1161 = vpack.c.b16 %v1025, %v1017
        %v1162 = vpack.c.b16 %v1034, %v1026
        %v1163 = vpack.c.b16 %v1035, %v1027
        %v1164 = vpack.c.b16 %v1036, %v1028
        %v1165 = vpack.c.b16 %v1037, %v1029
        %v1166 = vpack.c.b16 %v1038, %v1030
        %v1167 = vpack.c.b16 %v1039, %v1031
        %v1168 = vpack.c.b16 %v1040, %v1032
        %v1169 = vpack.c.b16 %v1041, %v1033
        %1298 = vmatpush.bf16.msra.mxu0 %v1098
        %1299 = vmatpush.bf16.msra.mxu0 %v1090
        %1300 = vmatpush.bf16.msra.mxu0 %v1082
        %1301 = vmatpush.bf16.msra.mxu0 %v1074
        %1302 = vmatpush.bf16.msra.mxu0 %v1066
        %1303 = vmatpush.bf16.msra.mxu0 %v1058
        %1304 = vmatpush.bf16.msra.mxu0 %v1050
        %1305 = vmatpush.bf16.msra.mxu0 %v1042
        %1306 = vmatmul.bf16.gmra.mxu0 %v654
        %v1307 = vpop.f32.mrf.mxu0
        %v1308 = vadd.f32 %v632, %v1307
        %v1309 = vpop.f32.mrf.mxu0
        %v1310 = vadd.f32 %v632, %v1309
        %1311 = vdwg.mxu0
        %1312 = vmatpush.bf16.msra.mxu0 %v1162
        %1313 = vmatpush.bf16.msra.mxu0 %v1154
        %1314 = vmatpush.bf16.msra.mxu0 %v1146
        %1315 = vmatpush.bf16.msra.mxu0 %v1138
        %1316 = vmatpush.bf16.msra.mxu0 %v1130
        %1317 = vmatpush.bf16.msra.mxu0 %v1122
        %1318 = vmatpush.bf16.msra.mxu0 %v1114
        %1319 = vmatpush.bf16.msra.mxu0 %v1106
        %1320 = vmatmul.bf16.gmra.mxu0 %v655
        %v1321 = vpop.f32.mrf.mxu0
        %v1322 = vadd.f32 %v1308, %v1321
        %v1323 = vpop.f32.mrf.mxu0
        %v1324 = vadd.f32 %v1310, %v1323
        %1325 = vdwg.mxu0
        %1326 = vmatpush.bf16.msra.mxu0 %v1099
        %1327 = vmatpush.bf16.msra.mxu0 %v1091
        %1328 = vmatpush.bf16.msra.mxu0 %v1083
        %1329 = vmatpush.bf16.msra.mxu0 %v1075
        %1330 = vmatpush.bf16.msra.mxu0 %v1067
        %1331 = vmatpush.bf16.msra.mxu0 %v1059
        %1332 = vmatpush.bf16.msra.mxu0 %v1051
        %1333 = vmatpush.bf16.msra.mxu0 %v1043
        %1334 = vmatmul.bf16.gmra.mxu0 %v654
        %v1335 = vpop.f32.mrf.mxu0
        %v1336 = vadd.f32 %v633, %v1335
        %v1337 = vpop.f32.mrf.mxu0
        %v1338 = vadd.f32 %v633, %v1337
        %1339 = vdwg.mxu0
        %1340 = vmatpush.bf16.msra.mxu0 %v1163
        %1341 = vmatpush.bf16.msra.mxu0 %v1155
        %1342 = vmatpush.bf16.msra.mxu0 %v1147
        %1343 = vmatpush.bf16.msra.mxu0 %v1139
        %1344 = vmatpush.bf16.msra.mxu0 %v1131
        %1345 = vmatpush.bf16.msra.mxu0 %v1123
        %1346 = vmatpush.bf16.msra.mxu0 %v1115
        %1347 = vmatpush.bf16.msra.mxu0 %v1107
        %1348 = vmatmul.bf16.gmra.mxu0 %v655
        %v1349 = vpop.f32.mrf.mxu0
        %v1350 = vadd.f32 %v1336, %v1349
        %v1351 = vpop.f32.mrf.mxu0
        %v1352 = vadd.f32 %v1338, %v1351
        %1353 = vdwg.mxu0
        %1354 = vmatpush.bf16.msra.mxu0 %v1100
        %1355 = vmatpush.bf16.msra.mxu0 %v1092
        %1356 = vmatpush.bf16.msra.mxu0 %v1084
        %1357 = vmatpush.bf16.msra.mxu0 %v1076
        %1358 = vmatpush.bf16.msra.mxu0 %v1068
        %1359 = vmatpush.bf16.msra.mxu0 %v1060
        %1360 = vmatpush.bf16.msra.mxu0 %v1052
        %1361 = vmatpush.bf16.msra.mxu0 %v1044
        %1362 = vmatmul.bf16.gmra.mxu0 %v654
        %v1363 = vpop.f32.mrf.mxu0
        %v1364 = vadd.f32 %v634, %v1363
        %v1365 = vpop.f32.mrf.mxu0
        %v1366 = vadd.f32 %v634, %v1365
        %1367 = vdwg.mxu0
        %1368 = vmatpush.bf16.msra.mxu0 %v1164
        %1369 = vmatpush.bf16.msra.mxu0 %v1156
        %1370 = vmatpush.bf16.msra.mxu0 %v1148
        %1371 = vmatpush.bf16.msra.mxu0 %v1140
        %1372 = vmatpush.bf16.msra.mxu0 %v1132
        %1373 = vmatpush.bf16.msra.mxu0 %v1124
        %1374 = vmatpush.bf16.msra.mxu0 %v1116
        %1375 = vmatpush.bf16.msra.mxu0 %v1108
        %1376 = vmatmul.bf16.gmra.mxu0 %v655
        %v1377 = vpop.f32.mrf.mxu0
        %v1378 = vadd.f32 %v1364, %v1377
        %v1379 = vpop.f32.mrf.mxu0
        %v1380 = vadd.f32 %v1366, %v1379
        %1381 = vdwg.mxu0
        %1382 = vmatpush.bf16.msra.mxu0 %v1101
        %1383 = vmatpush.bf16.msra.mxu0 %v1093
        %1384 = vmatpush.bf16.msra.mxu0 %v1085
        %1385 = vmatpush.bf16.msra.mxu0 %v1077
        %1386 = vmatpush.bf16.msra.mxu0 %v1069
        %1387 = vmatpush.bf16.msra.mxu0 %v1061
        %1388 = vmatpush.bf16.msra.mxu0 %v1053
        %1389 = vmatpush.bf16.msra.mxu0 %v1045
        %1390 = vmatmul.bf16.gmra.mxu0 %v654
        %v1391 = vpop.f32.mrf.mxu0
        %v1392 = vadd.f32 %v635, %v1391
        %v1393 = vpop.f32.mrf.mxu0
        %v1394 = vadd.f32 %v635, %v1393
        %1395 = vdwg.mxu0
        %1396 = vmatpush.bf16.msra.mxu0 %v1165
        %1397 = vmatpush.bf16.msra.mxu0 %v1157
        %1398 = vmatpush.bf16.msra.mxu0 %v1149
        %1399 = vmatpush.bf16.msra.mxu0 %v1141
        %1400 = vmatpush.bf16.msra.mxu0 %v1133
        %1401 = vmatpush.bf16.msra.mxu0 %v1125
        %1402 = vmatpush.bf16.msra.mxu0 %v1117
        %1403 = vmatpush.bf16.msra.mxu0 %v1109
        %1404 = vmatmul.bf16.gmra.mxu0 %v655
        %v1405 = vpop.f32.mrf.mxu0
        %v1406 = vadd.f32 %v1392, %v1405
        %v1407 = vpop.f32.mrf.mxu0
        %v1408 = vadd.f32 %v1394, %v1407
        %1409 = vdwg.mxu0
        %1410 = vmatpush.bf16.msra.mxu0 %v1102
        %1411 = vmatpush.bf16.msra.mxu0 %v1094
        %1412 = vmatpush.bf16.msra.mxu0 %v1086
        %1413 = vmatpush.bf16.msra.mxu0 %v1078
        %1414 = vmatpush.bf16.msra.mxu0 %v1070
        %1415 = vmatpush.bf16.msra.mxu0 %v1062
        %1416 = vmatpush.bf16.msra.mxu0 %v1054
        %1417 = vmatpush.bf16.msra.mxu0 %v1046
        %1418 = vmatmul.bf16.gmra.mxu0 %v654
        %v1419 = vpop.f32.mrf.mxu0
        %v1420 = vadd.f32 %v636, %v1419
        %v1421 = vpop.f32.mrf.mxu0
        %v1422 = vadd.f32 %v636, %v1421
        %1423 = vdwg.mxu0
        %1424 = vmatpush.bf16.msra.mxu0 %v1166
        %1425 = vmatpush.bf16.msra.mxu0 %v1158
        %1426 = vmatpush.bf16.msra.mxu0 %v1150
        %1427 = vmatpush.bf16.msra.mxu0 %v1142
        %1428 = vmatpush.bf16.msra.mxu0 %v1134
        %1429 = vmatpush.bf16.msra.mxu0 %v1126
        %1430 = vmatpush.bf16.msra.mxu0 %v1118
        %1431 = vmatpush.bf16.msra.mxu0 %v1110
        %1432 = vmatmul.bf16.gmra.mxu0 %v655
        %v1433 = vpop.f32.mrf.mxu0
        %v1434 = vadd.f32 %v1420, %v1433
        %v1435 = vpop.f32.mrf.mxu0
        %v1436 = vadd.f32 %v1422, %v1435
        %1437 = vdwg.mxu0
        %1438 = vmatpush.bf16.msra.mxu0 %v1103
        %1439 = vmatpush.bf16.msra.mxu0 %v1095
        %1440 = vmatpush.bf16.msra.mxu0 %v1087
        %1441 = vmatpush.bf16.msra.mxu0 %v1079
        %1442 = vmatpush.bf16.msra.mxu0 %v1071
        %1443 = vmatpush.bf16.msra.mxu0 %v1063
        %1444 = vmatpush.bf16.msra.mxu0 %v1055
        %1445 = vmatpush.bf16.msra.mxu0 %v1047
        %1446 = vmatmul.bf16.gmra.mxu0 %v654
        %v1447 = vpop.f32.mrf.mxu0
        %v1448 = vadd.f32 %v637, %v1447
        %v1449 = vpop.f32.mrf.mxu0
        %v1450 = vadd.f32 %v637, %v1449
        %1451 = vdwg.mxu0
        %1452 = vmatpush.bf16.msra.mxu0 %v1167
        %1453 = vmatpush.bf16.msra.mxu0 %v1159
        %1454 = vmatpush.bf16.msra.mxu0 %v1151
        %1455 = vmatpush.bf16.msra.mxu0 %v1143
        %1456 = vmatpush.bf16.msra.mxu0 %v1135
        %1457 = vmatpush.bf16.msra.mxu0 %v1127
        %1458 = vmatpush.bf16.msra.mxu0 %v1119
        %1459 = vmatpush.bf16.msra.mxu0 %v1111
        %1460 = vmatmul.bf16.gmra.mxu0 %v655
        %v1461 = vpop.f32.mrf.mxu0
        %v1462 = vadd.f32 %v1448, %v1461
        %v1463 = vpop.f32.mrf.mxu0
        %v1464 = vadd.f32 %v1450, %v1463
        %1465 = vdwg.mxu0
        %1466 = vmatpush.bf16.msra.mxu0 %v1104
        %1467 = vmatpush.bf16.msra.mxu0 %v1096
        %1468 = vmatpush.bf16.msra.mxu0 %v1088
        %1469 = vmatpush.bf16.msra.mxu0 %v1080
        %1470 = vmatpush.bf16.msra.mxu0 %v1072
        %1471 = vmatpush.bf16.msra.mxu0 %v1064
        %1472 = vmatpush.bf16.msra.mxu0 %v1056
        %1473 = vmatpush.bf16.msra.mxu0 %v1048
        %1474 = vmatmul.bf16.gmra.mxu0 %v654
        %v1475 = vpop.f32.mrf.mxu0
        %v1476 = vadd.f32 %v638, %v1475
        %v1477 = vpop.f32.mrf.mxu0
        %v1478 = vadd.f32 %v638, %v1477
        %1479 = vdwg.mxu0
        %1480 = vmatpush.bf16.msra.mxu0 %v1168
        %1481 = vmatpush.bf16.msra.mxu0 %v1160
        %1482 = vmatpush.bf16.msra.mxu0 %v1152
        %1483 = vmatpush.bf16.msra.mxu0 %v1144
        %1484 = vmatpush.bf16.msra.mxu0 %v1136
        %1485 = vmatpush.bf16.msra.mxu0 %v1128
        %1486 = vmatpush.bf16.msra.mxu0 %v1120
        %1487 = vmatpush.bf16.msra.mxu0 %v1112
        %1488 = vmatmul.bf16.gmra.mxu0 %v655
        %v1489 = vpop.f32.mrf.mxu0
        %v1490 = vadd.f32 %v1476, %v1489
        %v1491 = vpop.f32.mrf.mxu0
        %v1492 = vadd.f32 %v1478, %v1491
        %1493 = vdwg.mxu0
        %1494 = vmatpush.bf16.msra.mxu0 %v1105
        %1495 = vmatpush.bf16.msra.mxu0 %v1097
        %1496 = vmatpush.bf16.msra.mxu0 %v1089
        %1497 = vmatpush.bf16.msra.mxu0 %v1081
        %1498 = vmatpush.bf16.msra.mxu0 %v1073
        %1499 = vmatpush.bf16.msra.mxu0 %v1065
        %1500 = vmatpush.bf16.msra.mxu0 %v1057
        %1501 = vmatpush.bf16.msra.mxu0 %v1049
        %1502 = vmatmul.bf16.gmra.mxu0 %v654
        %v1503 = vpop.f32.mrf.mxu0
        %v1504 = vadd.f32 %v639, %v1503
        %v1505 = vpop.f32.mrf.mxu0
        %v1506 = vadd.f32 %v639, %v1505
        %1507 = vdwg.mxu0
        %1508 = vmatpush.bf16.msra.mxu0 %v1169
        %1509 = vmatpush.bf16.msra.mxu0 %v1161
        %1510 = vmatpush.bf16.msra.mxu0 %v1153
        %1511 = vmatpush.bf16.msra.mxu0 %v1145
        %1512 = vmatpush.bf16.msra.mxu0 %v1137
        %1513 = vmatpush.bf16.msra.mxu0 %v1129
        %1514 = vmatpush.bf16.msra.mxu0 %v1121
        %1515 = vmatpush.bf16.msra.mxu0 %v1113
        %1516 = vmatmul.bf16.gmra.mxu0 %v655
        %v1517 = vpop.f32.mrf.mxu0
        %v1518 = vadd.f32 %v1504, %v1517
        %v1519 = vpop.f32.mrf.mxu0
        %v1520 = vadd.f32 %v1506, %v1519
        %1521 = vdwg.mxu0
        %v1522 = vpack.c.bf16 %v1350, %v1322
        %v1523 = vpack.c.bf16 %v1406, %v1378
        %v1524 = vpack.c.bf16 %v1462, %v1434
        %v1525 = vpack.c.bf16 %v1518, %v1490
        %v1526 = vpack.c.bf16 %v1352, %v1324
        %v1527 = vpack.c.bf16 %v1408, %v1380
        %v1528 = vpack.c.bf16 %v1464, %v1436
        %v1529 = vpack.c.bf16 %v1520, %v1492
        %1530 = vst [vmem:[%s484] sm:$0xff] %v1522
        %1531 = vst [vmem:[%s484 + $0x8] sm:$0xff] %v1523
        %1532 = vst [vmem:[%s484 + $0x10] sm:$0xff] %v1524
        %1533 = vst [vmem:[%s484 + $0x18] sm:$0xff] %v1525
        %1534 = vst [vmem:[%s484 + $0x20] sm:$0xff] %v1526
        %1535 = vst [vmem:[%s484 + $0x28] sm:$0xff] %v1527
        %1536 = vst [vmem:[%s484 + $0x30] sm:$0xff] %v1528
        %1537 = vst [vmem:[%s484 + $0x38] sm:$0xff] %v1529
        %s1538 = sand.u32 %s114, 1
        %s1539 = sand.u32 %s114, 1
        %s1540 = smul.addr %s1539, 64
        %s1541 = scalar_lea.vmem [#allocation3], %s1540
        // Predicated region
        $region56: #{encoder_forward.18} parent=50 // pred_check
          %p1542 = pneg %p124
        $region57: #{encoder_forward.18} parent=50 // pred_check_branch
          %1544 = sbr.rel (%p1542) target = $region59
        $region58: #{encoder_forward.18} parent=50 // pred_region
          %s1545 = smul.u32 2, %s18
          %s1546 = smul.u32 8, %s19
          %s1547 = smul.addr %s1545, 16
          %s1548 = sadd.s32 %s1546, %s1547
          %s1549 = smul.addr %s1548, 4
          %s1550 = scalar_lea.vmem %s3, %s1549
          // Predicated region
          $region60: #{encoder_forward.18} parent=58 // pred_check
            _
          $region61: #{encoder_forward.18} parent=58 // pred_check_branch
            %1552 = sbr.rel (0) target = $region63
          $region62: #{encoder_forward.18} parent=58 // pred_region
            // Predicated region
            $region64: #{encoder_forward.18} parent=62 // pred_check
              _
            $region65: #{encoder_forward.18} parent=62 // pred_check_branch
              %1554 = sbr.rel (0) target = $region67
            $region66: #{encoder_forward.18} parent=62 // pred_region
              loop: start=0, step=1, limit=1
              $region68: #{encoder_forward.18} parent=66 // loop_pre_header
                _
              $region69: #{encoder_forward.18} parent=66 // loop_header
                %s1556 = sphi 0, %s1560
                %p1557 = scmp.ge.s32.totalorder %s1556, 1
                %s1561 = sphi %s1541, %s1541
                %s1562 = sphi %s1550, %s1550
              $region70: #{encoder_forward.18} parent=66 // loop_header_branch
                %1559 = sbr.rel (%p1557) target = $region74
              $region71: #{encoder_forward.18} parent=66 // loop_body
                %v1563 = vld [vmem:[%s1561] sm:$0xff]
                %1564 = vst [vmem:[%s1562] sm:$0xff] %v1563
                %v1565 = vld [vmem:[%s1561 + $0x8] sm:$0xff]
                %1566 = vst [vmem:[%s1562 + $0x8] sm:$0xff] %v1565
                %v1567 = vld [vmem:[%s1561 + $0x10] sm:$0xff]
                %1568 = vst [vmem:[%s1562 + $0x10] sm:$0xff] %v1567
                %v1569 = vld [vmem:[%s1561 + $0x18] sm:$0xff]
                %1570 = vst [vmem:[%s1562 + $0x18] sm:$0xff] %v1569
                %v1571 = vld [vmem:[%s1561 + $0x20] sm:$0xff]
                %1572 = vst [vmem:[%s1562 + $0x40] sm:$0xff] %v1571
                %v1573 = vld [vmem:[%s1561 + $0x28] sm:$0xff]
                %1574 = vst [vmem:[%s1562 + $0x48] sm:$0xff] %v1573
                %v1575 = vld [vmem:[%s1561 + $0x30] sm:$0xff]
                %1576 = vst [vmem:[%s1562 + $0x50] sm:$0xff] %v1575
                %v1577 = vld [vmem:[%s1561 + $0x38] sm:$0xff]
                %1578 = vst [vmem:[%s1562 + $0x58] sm:$0xff] %v1577
              $region72: #{encoder_forward.18} parent=66 // loop_footer
                %s1560 = sadd.s32 1, %s1556
              $region73: #{encoder_forward.18} parent=66 // loop_footer_branch
                %1555 = sbr.rel target = $region69
              $region74: #{encoder_forward.18} parent=66 // loop_exit
                _
            $region67: #{encoder_forward.18} parent=62 // pred_fallthru
              _
            // Predicated region
            $region75: #{encoder_forward.18} parent=62 // pred_check
              _
            $region76: #{encoder_forward.18} parent=62 // pred_check_branch
              %1580 = sbr.rel target = $region78
            $region77: #{encoder_forward.18} parent=62 // pred_region
              _
            $region78: #{encoder_forward.18} parent=62 // pred_fallthru
              _
          $region63: #{encoder_forward.18} parent=58 // pred_fallthru
            _
          %1581 = vnop
        $region59: #{encoder_forward.18} parent=50 // pred_fallthru
          _
      $region51: #{encoder_forward.18} parent=5 // pred_fallthru
        _
      %p1582 = scmp.le.s32.totalorder 2, %s9
      // Predicated region
      $region79: #{encoder_forward.18} parent=5 // pred_check
        %p1583 = pneg %p1582
      $region80: #{encoder_forward.18} parent=5 // pred_check_branch
        %1585 = sbr.rel (%p1583) target = $region82
      $region81: #{encoder_forward.18} parent=5 // pred_region
        %s1586 = ssub.s32 %s9, 2
        // Predicated region
        $region83: #{encoder_forward.18} parent=81 // pred_check
          %p1587 = pneg %p130
        $region84: #{encoder_forward.18} parent=81 // pred_check_branch
          %1589 = sbr.rel (%p1587) target = $region86
        $region85: #{encoder_forward.18} parent=81 // pred_region
          %s1590 = sand.u32 %s115, 1
          %s1591 = sand.u32 %s115, 1
          %s1592 = smul.addr %s1591, 64
          %s1593 = scalar_lea.vmem [#allocation3], %s1592
        $region86: #{encoder_forward.18} parent=81 // pred_fallthru
          _
      $region82: #{encoder_forward.18} parent=5 // pred_fallthru
        _
    $region6: #{encoder_forward.18} parent=1 // loop_footer
      %s13 = sadd.s32 1, %s9
    $region7: #{encoder_forward.18} parent=1 // loop_footer_branch
      %8 = sbr.rel target = $region3
    $region8: #{encoder_forward.18} parent=1 // loop_exit
      _

</llo_original>
